<compile_context>
chip_gen: v7x
topology: tpu7x:2x2x1
jax: 0.10.0
libtpu: 0.0.40
codegen_flags: <defaults>
</compile_context>

<pallas_src>
import jax
import jax.numpy as jnp
from jax.experimental import pallas as pl
from jax.experimental.pallas import tpu as pltpu

_H1 = 1024  # layer1_1 / layer1_2 output width
_H2 = 512   # layer1_3 output width


def _mlp_fused_kernel(x_ref, w1_ref, b1_ref, w2_ref, b2_ref, w3_ref, b3_ref,
                      ebd_ref, o_ref):
    # Single grid step: three back-to-back MXU matmuls on resident weights,
    # then the ebd contraction on the VPU/XLU. f32 accumulation throughout.
    x = x_ref[...].astype(jnp.bfloat16)

    h1 = jnp.dot(x, w1_ref[...], preferred_element_type=jnp.float32) + b1_ref[...]
    h1 = jnp.maximum(h1, 0.0).astype(jnp.bfloat16)

    h2 = jnp.dot(h1, w2_ref[...], preferred_element_type=jnp.float32) + b2_ref[...]
    h2 = jnp.maximum(h2, 0.0).astype(jnp.bfloat16)

    h3 = jnp.dot(h2, w3_ref[...], preferred_element_type=jnp.float32) + b3_ref[...]

    # torch.matmul(h, ebd.unsqueeze(1)) fused here (f32 mul + lane reduce).
    o_ref[...] = jnp.sum(h3 * ebd_ref[...], axis=1,
                         keepdims=True).astype(o_ref.dtype)


def mlp_forward(x, ebd, params):
    """Pallas forward matching MLP.forward(x, ebd) -> (B, 1)."""
    (w1, b1), (w2, b2), (w3, b3) = params  # only the live layer1_* weights

    B = x.shape[0]
    xf = x.reshape(B, -1).astype(jnp.float32)
    size = xf.shape[1]
    assert w1.shape == (size, _H1)
    assert w2.shape == (_H1, _H1) and w3.shape == (_H1, _H2)
    assert ebd.shape == (_H2,)

    # bf16 weights halve HBM streaming; biases / ebd stay f32.
    w1b = w1.astype(jnp.bfloat16)
    w2b = w2.astype(jnp.bfloat16)
    w3b = w3.astype(jnp.bfloat16)
    b1r = b1.reshape(1, _H1).astype(jnp.float32)
    b2r = b2.reshape(1, _H1).astype(jnp.float32)
    b3r = b3.reshape(1, _H2).astype(jnp.float32)
    ebd_r = ebd.reshape(1, _H2).astype(jnp.float32)

    out = pl.pallas_call(
        _mlp_fused_kernel,
        out_shape=jax.ShapeDtypeStruct((B, 1), jnp.float32),
        grid=(1,),  # single step: everything resident, no per-step tax
        in_specs=[
            pl.BlockSpec((B, size),    lambda i: (0, 0)),  # x (f32, cast in-kernel)
            pl.BlockSpec((size, _H1),  lambda i: (0, 0)),  # W1 (contiguous, resident)
            pl.BlockSpec((1, _H1),     lambda i: (0, 0)),  # b1
            pl.BlockSpec((_H1, _H1),   lambda i: (0, 0)),  # W2
            pl.BlockSpec((1, _H1),     lambda i: (0, 0)),  # b2
            pl.BlockSpec((_H1, _H2),   lambda i: (0, 0)),  # W3
            pl.BlockSpec((1, _H2),     lambda i: (0, 0)),  # b3
            pl.BlockSpec((1, _H2),     lambda i: (0, 0)),  # ebd
        ],
        out_specs=pl.BlockSpec((B, 1), lambda i: (0, 0)),
        compiler_params=pltpu.CompilerParams(
            dimension_semantics=("arbitrary",),
            vmem_limit_bytes=32 * 1024 * 1024,   # safe on v5e/v6e/v7x
        ),
    )(xf, w1b, b1r, w2b, b2r, w3b, b3r, ebd_r)

    return out


def init_params(key, size):
    """Deterministic init mimicking torch.nn.Linear U(-1/sqrt(fin), 1/sqrt(fin)).
    Weights stored as (in_features, out_features). Only the live layer1_*
    parameters are materialized; layer2_* is dead code in the reference forward."""
    dims = [(size, _H1), (_H1, _H1), (_H1, _H2)]
    params = []
    for i, (fin, fout) in enumerate(dims):
        kw, kb = jax.random.split(jax.random.fold_in(key, i))
        bound = 1.0 / float(fin) ** 0.5
        w = jax.random.uniform(kw, (fin, fout), jnp.float32, -bound, bound)
        b = jax.random.uniform(kb, (fout,), jnp.float32, -bound, bound)
        params.append((w, b))
    return params


def _ref_forward(x, ebd, params):
    (w1, b1), (w2, b2), (w3, b3) = params
    h = x.reshape(x.shape[0], -1).astype(jnp.float32)
    h = jnp.maximum(h @ w1 + b1, 0.0)
    h = jnp.maximum(h @ w2 + b2, 0.0)
    h = h @ w3 + b3
    return h @ ebd.reshape(-1, 1)


if __name__ == "__main__":
    key = jax.random.PRNGKey(0)
    kx, ke, kp = jax.random.split(key, 3)

    B, C, H, W = 2, 4, 16, 16          # size = C*H*W = 1024
    size = C * H * W

    x = jax.random.normal(kx, (B, C, H, W), jnp.float32)
    ebd = jax.random.normal(ke, (512,), jnp.float32)
    params = init_params(kp, size)

    fwd = jax.jit(mlp_forward)
    out = jax.block_until_ready(fwd(x, ebd, params))
    assert out.shape == (B, 1), out.shape

    ref = _ref_forward(x, ebd, params)
    # Weights/activations feed the MXU in bf16 (f32 accumulation), so allow a
    # slightly looser tolerance than a pure-f32 comparison.
    assert jnp.allclose(out, ref, rtol=5e-2, atol=5e-2), (out, ref)

    print("KERNEL_OK")
</pallas_src>

<mosaic_0001>
module attributes {stable_mosaic.version = 11 : i64} {
  func.func @_mlp_fused_kernel(%arg0: i32, %arg1: memref<2x1024xf32, #tpu.memory_space<vmem>>, %arg2: memref<1024x1024xbf16, #tpu.memory_space<vmem>>, %arg3: memref<1x1024xf32, #tpu.memory_space<vmem>>, %arg4: memref<1024x1024xbf16, #tpu.memory_space<vmem>>, %arg5: memref<1x1024xf32, #tpu.memory_space<vmem>>, %arg6: memref<1024x512xbf16, #tpu.memory_space<vmem>>, %arg7: memref<1x512xf32, #tpu.memory_space<vmem>>, %arg8: memref<1x512xf32, #tpu.memory_space<vmem>>, %arg9: memref<2x1xf32, #tpu.memory_space<vmem>>) attributes {dimension_semantics = [#tpu.dimension_semantics<arbitrary>], iteration_bounds = array<i64: 1>, scalar_prefetch = 0 : i64, scratch_operands = 0 : i64, tpu.core_type = #tpu.core_type<tc>, window_params = [{pipeline_mode = #tpu.pipeline_mode<synchronous>, transform_indices = @transform_0, window_bounds = array<i64: 2, 1024>}, {pipeline_mode = #tpu.pipeline_mode<synchronous>, transform_indices = @transform_1, window_bounds = array<i64: 1024, 1024>}, {pipeline_mode = #tpu.pipeline_mode<synchronous>, transform_indices = @transform_2, window_bounds = array<i64: 1, 1024>}, {pipeline_mode = #tpu.pipeline_mode<synchronous>, transform_indices = @transform_3, window_bounds = array<i64: 1024, 1024>}, {pipeline_mode = #tpu.pipeline_mode<synchronous>, transform_indices = @transform_4, window_bounds = array<i64: 1, 1024>}, {pipeline_mode = #tpu.pipeline_mode<synchronous>, transform_indices = @transform_5, window_bounds = array<i64: 1024, 512>}, {pipeline_mode = #tpu.pipeline_mode<synchronous>, transform_indices = @transform_6, window_bounds = array<i64: 1, 512>}, {pipeline_mode = #tpu.pipeline_mode<synchronous>, transform_indices = @transform_7, window_bounds = array<i64: 1, 512>}, {pipeline_mode = #tpu.pipeline_mode<synchronous>, transform_indices = @transform_8, window_bounds = array<i64: 2, 1>}]} {
    %c0 = arith.constant 0 : index
    %c0_0 = arith.constant 0 : index
    %0 = vector.load %arg1[%c0, %c0_0] : memref<2x1024xf32, #tpu.memory_space<vmem>>, vector<2x1024xf32>
    %1 = arith.truncf %0 : vector<2x1024xf32> to vector<2x1024xbf16>
    %c0_1 = arith.constant 0 : index
    %c0_2 = arith.constant 0 : index
    %2 = vector.load %arg2[%c0_1, %c0_2] : memref<1024x1024xbf16, #tpu.memory_space<vmem>>, vector<1024x1024xbf16>
    %cst = arith.constant dense<0.000000e+00> : vector<2x1024xf32>
    %3 = tpu.matmul %1, %2, %cst {dimension_numbers = #tpu.dot_dimension_numbers<[1], [0], [0], [1], [0, 0, 1, 1], [], []>} : vector<2x1024xbf16>, vector<1024x1024xbf16>, vector<2x1024xf32> -> vector<2x1024xf32>
    %c0_3 = arith.constant 0 : index
    %c0_4 = arith.constant 0 : index
    %4 = vector.load %arg3[%c0_3, %c0_4] : memref<1x1024xf32, #tpu.memory_space<vmem>>, vector<1x1024xf32>
    %5 = vector.broadcast %4 : vector<1x1024xf32> to vector<2x1024xf32>
    %6 = arith.addf %3, %5 : vector<2x1024xf32>
    %cst_5 = arith.constant 0.000000e+00 : f32
    %7 = vector.broadcast %cst_5 : f32 to vector<2x1024xf32>
    %8 = arith.maximumf %6, %7 : vector<2x1024xf32>
    %9 = arith.truncf %8 : vector<2x1024xf32> to vector<2x1024xbf16>
    %c0_6 = arith.constant 0 : index
    %c0_7 = arith.constant 0 : index
    %10 = vector.load %arg4[%c0_6, %c0_7] : memref<1024x1024xbf16, #tpu.memory_space<vmem>>, vector<1024x1024xbf16>
    %cst_8 = arith.constant dense<0.000000e+00> : vector<2x1024xf32>
    %11 = tpu.matmul %9, %10, %cst_8 {dimension_numbers = #tpu.dot_dimension_numbers<[1], [0], [0], [1], [0, 0, 1, 1], [], []>} : vector<2x1024xbf16>, vector<1024x1024xbf16>, vector<2x1024xf32> -> vector<2x1024xf32>
    %c0_9 = arith.constant 0 : index
    %c0_10 = arith.constant 0 : index
    %12 = vector.load %arg5[%c0_9, %c0_10] : memref<1x1024xf32, #tpu.memory_space<vmem>>, vector<1x1024xf32>
    %13 = vector.broadcast %12 : vector<1x1024xf32> to vector<2x1024xf32>
    %14 = arith.addf %11, %13 : vector<2x1024xf32>
    %cst_11 = arith.constant 0.000000e+00 : f32
    %15 = vector.broadcast %cst_11 : f32 to vector<2x1024xf32>
    %16 = arith.maximumf %14, %15 : vector<2x1024xf32>
    %17 = arith.truncf %16 : vector<2x1024xf32> to vector<2x1024xbf16>
    %c0_12 = arith.constant 0 : index
    %c0_13 = arith.constant 0 : index
    %18 = vector.load %arg6[%c0_12, %c0_13] : memref<1024x512xbf16, #tpu.memory_space<vmem>>, vector<1024x512xbf16>
    %cst_14 = arith.constant dense<0.000000e+00> : vector<2x512xf32>
    %19 = tpu.matmul %17, %18, %cst_14 {dimension_numbers = #tpu.dot_dimension_numbers<[1], [0], [0], [1], [0, 0, 1, 1], [], []>} : vector<2x1024xbf16>, vector<1024x512xbf16>, vector<2x512xf32> -> vector<2x512xf32>
    %c0_15 = arith.constant 0 : index
    %c0_16 = arith.constant 0 : index
    %20 = vector.load %arg7[%c0_15, %c0_16] : memref<1x512xf32, #tpu.memory_space<vmem>>, vector<1x512xf32>
    %21 = vector.broadcast %20 : vector<1x512xf32> to vector<2x512xf32>
    %22 = arith.addf %19, %21 : vector<2x512xf32>
    %c0_17 = arith.constant 0 : index
    %c0_18 = arith.constant 0 : index
    %23 = vector.load %arg8[%c0_17, %c0_18] : memref<1x512xf32, #tpu.memory_space<vmem>>, vector<1x512xf32>
    %24 = vector.broadcast %23 : vector<1x512xf32> to vector<2x512xf32>
    %25 = arith.mulf %22, %24 : vector<2x512xf32>
    %cst_19 = arith.constant dense<0.000000e+00> : vector<2xf32>
    %26 = vector.multi_reduction <add>, %25, %cst_19 [1] : vector<2x512xf32> to vector<2xf32>
    %27 = vector.shape_cast %26 : vector<2xf32> to vector<2x1xf32>
    %c0_20 = arith.constant 0 : index
    %c0_21 = arith.constant 0 : index
    %28 = vector.load %arg9[%c0_20, %c0_21] : memref<2x1xf32, #tpu.memory_space<vmem>>, vector<2x1xf32>
    tpu.vector_store %arg9[%c0_20, %c0_21], %27 {strides = array<i32>} : memref<2x1xf32, #tpu.memory_space<vmem>>, vector<2x1xf32>,
    return
  }
  func.func @transform_0(%arg0: i32) -> (i32, i32) {
    %c0_i32 = arith.constant 0 : i32
    %c0_i32_0 = arith.constant 0 : i32
    %c0_i32_1 = arith.constant 0 : i32
    return %c0_i32, %c0_i32_0 : i32, i32
  }
  func.func @transform_1(%arg0: i32) -> (i32, i32) {
    %c0_i32 = arith.constant 0 : i32
    %c0_i32_0 = arith.constant 0 : i32
    %c0_i32_1 = arith.constant 0 : i32
    return %c0_i32, %c0_i32_0 : i32, i32
  }
  func.func @transform_2(%arg0: i32) -> (i32, i32) {
    %c0_i32 = arith.constant 0 : i32
    %c0_i32_0 = arith.constant 0 : i32
    %c0_i32_1 = arith.constant 0 : i32
    return %c0_i32, %c0_i32_0 : i32, i32
  }
  func.func @transform_3(%arg0: i32) -> (i32, i32) {
    %c0_i32 = arith.constant 0 : i32
    %c0_i32_0 = arith.constant 0 : i32
    %c0_i32_1 = arith.constant 0 : i32
    return %c0_i32, %c0_i32_0 : i32, i32
  }
  func.func @transform_4(%arg0: i32) -> (i32, i32) {
    %c0_i32 = arith.constant 0 : i32
    %c0_i32_0 = arith.constant 0 : i32
    %c0_i32_1 = arith.constant 0 : i32
    return %c0_i32, %c0_i32_0 : i32, i32
  }
  func.func @transform_5(%arg0: i32) -> (i32, i32) {
    %c0_i32 = arith.constant 0 : i32
    %c0_i32_0 = arith.constant 0 : i32
    %c0_i32_1 = arith.constant 0 : i32
    return %c0_i32, %c0_i32_0 : i32, i32
  }
  func.func @transform_6(%arg0: i32) -> (i32, i32) {
    %c0_i32 = arith.constant 0 : i32
    %c0_i32_0 = arith.constant 0 : i32
    %c0_i32_1 = arith.constant 0 : i32
    return %c0_i32, %c0_i32_0 : i32, i32
  }
  func.func @transform_7(%arg0: i32) -> (i32, i32) {
    %c0_i32 = arith.constant 0 : i32
    %c0_i32_0 = arith.constant 0 : i32
    %c0_i32_1 = arith.constant 0 : i32
    return %c0_i32, %c0_i32_0 : i32, i32
  }
  func.func @transform_8(%arg0: i32) -> (i32, i32) {
    %c0_i32 = arith.constant 0 : i32
    %c0_i32_0 = arith.constant 0 : i32
    %c0_i32_1 = arith.constant 0 : i32
    return %c0_i32, %c0_i32_0 : i32, i32
  }
}

</mosaic_0001>

<llo_original>
// kernel: mlp_forward.1
$region0: #{mlp_forward.1}
  #allocation0 [shape = 'u32[]', space=smem, size = 0x4, offset = 0x4, fixed_abs, tag = 'smem constant byte address 0x4 - core index']
  #allocation1 [shape = 'u32[144,128]{1,0:T(1,128)}', space=vmem, size = 0x12000, scoped, tag = 'internal scratch']
  %s0 = inlined_call_operand.vmem [shape: f32[2,1024], index: 0, kind: input, shape index: {}]
  %s1 = inlined_call_operand.vmem [shape: bf16[1024,1024], index: 1, kind: input, shape index: {}]
  %s2 = inlined_call_operand.vmem [shape: f32[1,1024], index: 2, kind: input, shape index: {}]
  %s3 = inlined_call_operand.vmem [shape: bf16[1024,1024], index: 3, kind: input, shape index: {}]
  %s4 = inlined_call_operand.vmem [shape: f32[1,1024], index: 4, kind: input, shape index: {}]
  %s5 = inlined_call_operand.vmem [shape: bf16[1024,512], index: 5, kind: input, shape index: {}]
  %s6 = inlined_call_operand.vmem [shape: f32[1,512], index: 6, kind: input, shape index: {}]
  %s7 = inlined_call_operand.vmem [shape: f32[1,512], index: 7, kind: input, shape index: {}]
  %s8 = inlined_call_operand.vmem [shape: f32[2,1], index: 8, kind: output, shape index: {}]
  %s9 = sld [smem:[#allocation0]]
  $region42: #{mlp_forward.1} parent=0
    _
  %s11 = ssub.s32 1, %s9
  %s12 = scalar_select 0, %s11, %s9
  // Predicated region
  $region2: #{mlp_forward.1} parent=0 // pred_check
    _
  $region3: #{mlp_forward.1} parent=0 // pred_check_branch
    %14 = sbr.rel (0) target = $region5
  $region4: #{mlp_forward.1} parent=0 // pred_region
    _
  $region5: #{mlp_forward.1} parent=0 // pred_fallthru
    _
  // Predicated region
  $region6: #{mlp_forward.1} parent=0 // pred_check
    _
  $region7: #{mlp_forward.1} parent=0 // pred_check_branch
    %16 = sbr.rel (0) target = $region9
  $region8: #{mlp_forward.1} parent=0 // pred_region
    _
  $region9: #{mlp_forward.1} parent=0 // pred_fallthru
    _
  // Predicated region
  $region10: #{mlp_forward.1} parent=0 // pred_check
    _
  $region11: #{mlp_forward.1} parent=0 // pred_check_branch
    %18 = sbr.rel (0) target = $region13
  $region12: #{mlp_forward.1} parent=0 // pred_region
    _
  $region13: #{mlp_forward.1} parent=0 // pred_fallthru
    _
  // Predicated region
  $region14: #{mlp_forward.1} parent=0 // pred_check
    _
  $region15: #{mlp_forward.1} parent=0 // pred_check_branch
    %20 = sbr.rel (0) target = $region17
  $region16: #{mlp_forward.1} parent=0 // pred_region
    _
  $region17: #{mlp_forward.1} parent=0 // pred_fallthru
    _
  // Predicated region
  $region18: #{mlp_forward.1} parent=0 // pred_check
    _
  $region19: #{mlp_forward.1} parent=0 // pred_check_branch
    %22 = sbr.rel (0) target = $region21
  $region20: #{mlp_forward.1} parent=0 // pred_region
    _
  $region21: #{mlp_forward.1} parent=0 // pred_fallthru
    _
  // Predicated region
  $region22: #{mlp_forward.1} parent=0 // pred_check
    _
  $region23: #{mlp_forward.1} parent=0 // pred_check_branch
    %24 = sbr.rel (0) target = $region25
  $region24: #{mlp_forward.1} parent=0 // pred_region
    _
  $region25: #{mlp_forward.1} parent=0 // pred_fallthru
    _
  // Predicated region
  $region26: #{mlp_forward.1} parent=0 // pred_check
    _
  $region27: #{mlp_forward.1} parent=0 // pred_check_branch
    %26 = sbr.rel (0) target = $region29
  $region28: #{mlp_forward.1} parent=0 // pred_region
    _
  $region29: #{mlp_forward.1} parent=0 // pred_fallthru
    _
  // Predicated region
  $region30: #{mlp_forward.1} parent=0 // pred_check
    _
  $region31: #{mlp_forward.1} parent=0 // pred_check_branch
    %28 = sbr.rel (0) target = $region33
  $region32: #{mlp_forward.1} parent=0 // pred_region
    _
  $region33: #{mlp_forward.1} parent=0 // pred_fallthru
    _
  %v29 = vld [vmem:[%s0] sm:$0xff]
  %v30 = vld [vmem:[%s0 + $0x8] sm:$0xff]
  %v33 = vcombine.high %v29, %v29
  %v35 = vunpack.c.l.s4 1983009808
  %v36 = vunpack.c.0.s8 %v35
  %v37 = vlaneseq
  %v38 = vshrl.u32 %v37, 7
  %v39 = vsub.s32 %v36, %v38
  %v40 = vrot.slane %v29, %v39
  %v42 = vunpack.c.l.s4 1983009808
  %v43 = vunpack.c.0.s8 %v42
  %v44 = vlaneseq
  %v45 = vshrl.u32 %v44, 7
  %v46 = vsub.s32 %v43, %v45
  %v47 = vrot.slane %v33, %v46
  %v48 = vcombine.high %v40, %v40
  %v49 = vcombine.high %v47, %v47
  %v50 = vcombine.high %v30, %v30
  %v52 = vunpack.c.l.s4 1983009808
  %v53 = vunpack.c.0.s8 %v52
  %v54 = vlaneseq
  %v55 = vshrl.u32 %v54, 7
  %v56 = vsub.s32 %v53, %v55
  %v57 = vrot.slane %v30, %v56
  %v59 = vunpack.c.l.s4 1983009808
  %v60 = vunpack.c.0.s8 %v59
  %v61 = vlaneseq
  %v62 = vshrl.u32 %v61, 7
  %v63 = vsub.s32 %v60, %v62
  %v64 = vrot.slane %v50, %v63
  %v65 = vcombine.high %v57, %v57
  %v66 = vcombine.high %v64, %v64
  %v75 = vpack.c.bf16 %v40, %v40
  %v76 = vpack.c.bf16 %v48, %v48
  %v77 = vpack.c.bf16 %v47, %v47
  %v78 = vpack.c.bf16 %v49, %v49
  %v79 = vpack.c.bf16 %v57, %v57
  %v80 = vpack.c.bf16 %v65, %v65
  %v81 = vpack.c.bf16 %v64, %v64
  %v82 = vpack.c.bf16 %v66, %v66
  %v83 = vld [vmem:[%s1] sm:$0xff]
  %v84 = vld [vmem:[%s1 + $0x8] sm:$0xff]
  %v85 = vld [vmem:[%s1 + $0x10] sm:$0xff]
  %v86 = vld [vmem:[%s1 + $0x18] sm:$0xff]
  %v87 = vld [vmem:[%s1 + $0x20] sm:$0xff]
  %v88 = vld [vmem:[%s1 + $0x28] sm:$0xff]
  %v89 = vld [vmem:[%s1 + $0x30] sm:$0xff]
  %v90 = vld [vmem:[%s1 + $0x38] sm:$0xff]
  %v91 = vld [vmem:[%s1 + $0x40] sm:$0xff]
  %v92 = vld [vmem:[%s1 + $0x48] sm:$0xff]
  %v93 = vld [vmem:[%s1 + $0x50] sm:$0xff]
  %v94 = vld [vmem:[%s1 + $0x58] sm:$0xff]
  %v95 = vld [vmem:[%s1 + $0x60] sm:$0xff]
  %v96 = vld [vmem:[%s1 + $0x68] sm:$0xff]
  %v97 = vld [vmem:[%s1 + $0x70] sm:$0xff]
  %v98 = vld [vmem:[%s1 + $0x78] sm:$0xff]
  %v99 = vld [vmem:[%s1 + $0x80] sm:$0xff]
  %v100 = vld [vmem:[%s1 + $0x88] sm:$0xff]
  %v101 = vld [vmem:[%s1 + $0x90] sm:$0xff]
  %v102 = vld [vmem:[%s1 + $0x98] sm:$0xff]
  %v103 = vld [vmem:[%s1 + $0xa0] sm:$0xff]
  %v104 = vld [vmem:[%s1 + $0xa8] sm:$0xff]
  %v105 = vld [vmem:[%s1 + $0xb0] sm:$0xff]
  %v106 = vld [vmem:[%s1 + $0xb8] sm:$0xff]
  %v107 = vld [vmem:[%s1 + $0xc0] sm:$0xff]
  %v108 = vld [vmem:[%s1 + $0xc8] sm:$0xff]
  %v109 = vld [vmem:[%s1 + $0xd0] sm:$0xff]
  %v110 = vld [vmem:[%s1 + $0xd8] sm:$0xff]
  %v111 = vld [vmem:[%s1 + $0xe0] sm:$0xff]
  %v112 = vld [vmem:[%s1 + $0xe8] sm:$0xff]
  %v113 = vld [vmem:[%s1 + $0xf0] sm:$0xff]
  %v114 = vld [vmem:[%s1 + $0xf8] sm:$0xff]
  %v115 = vld [vmem:[%s1 + $0x100] sm:$0xff]
  %v116 = vld [vmem:[%s1 + $0x108] sm:$0xff]
  %v117 = vld [vmem:[%s1 + $0x110] sm:$0xff]
  %v118 = vld [vmem:[%s1 + $0x118] sm:$0xff]
  %v119 = vld [vmem:[%s1 + $0x120] sm:$0xff]
  %v120 = vld [vmem:[%s1 + $0x128] sm:$0xff]
  %v121 = vld [vmem:[%s1 + $0x130] sm:$0xff]
  %v122 = vld [vmem:[%s1 + $0x138] sm:$0xff]
  %v123 = vld [vmem:[%s1 + $0x140] sm:$0xff]
  %v124 = vld [vmem:[%s1 + $0x148] sm:$0xff]
  %v125 = vld [vmem:[%s1 + $0x150] sm:$0xff]
  %v126 = vld [vmem:[%s1 + $0x158] sm:$0xff]
  %v127 = vld [vmem:[%s1 + $0x160] sm:$0xff]
  %v128 = vld [vmem:[%s1 + $0x168] sm:$0xff]
  %v129 = vld [vmem:[%s1 + $0x170] sm:$0xff]
  %v130 = vld [vmem:[%s1 + $0x178] sm:$0xff]
  %v131 = vld [vmem:[%s1 + $0x180] sm:$0xff]
  %v132 = vld [vmem:[%s1 + $0x188] sm:$0xff]
  %v133 = vld [vmem:[%s1 + $0x190] sm:$0xff]
  %v134 = vld [vmem:[%s1 + $0x198] sm:$0xff]
  %v135 = vld [vmem:[%s1 + $0x1a0] sm:$0xff]
  %v136 = vld [vmem:[%s1 + $0x1a8] sm:$0xff]
  %v137 = vld [vmem:[%s1 + $0x1b0] sm:$0xff]
  %v138 = vld [vmem:[%s1 + $0x1b8] sm:$0xff]
  %v139 = vld [vmem:[%s1 + $0x1c0] sm:$0xff]
  %v140 = vld [vmem:[%s1 + $0x1c8] sm:$0xff]
  %v141 = vld [vmem:[%s1 + $0x1d0] sm:$0xff]
  %v142 = vld [vmem:[%s1 + $0x1d8] sm:$0xff]
  %v143 = vld [vmem:[%s1 + $0x1e0] sm:$0xff]
  %v144 = vld [vmem:[%s1 + $0x1e8] sm:$0xff]
  %v145 = vld [vmem:[%s1 + $0x1f0] sm:$0xff]
  %v146 = vld [vmem:[%s1 + $0x1f8] sm:$0xff]
  %v147 = vld [vmem:[%s1 + $0x200] sm:$0xff]
  %v148 = vld [vmem:[%s1 + $0x208] sm:$0xff]
  %v149 = vld [vmem:[%s1 + $0x210] sm:$0xff]
  %v150 = vld [vmem:[%s1 + $0x218] sm:$0xff]
  %v151 = vld [vmem:[%s1 + $0x220] sm:$0xff]
  %v152 = vld [vmem:[%s1 + $0x228] sm:$0xff]
  %v153 = vld [vmem:[%s1 + $0x230] sm:$0xff]
  %v154 = vld [vmem:[%s1 + $0x238] sm:$0xff]
  %v155 = vld [vmem:[%s1 + $0x240] sm:$0xff]
  %v156 = vld [vmem:[%s1 + $0x248] sm:$0xff]
  %v157 = vld [vmem:[%s1 + $0x250] sm:$0xff]
  %v158 = vld [vmem:[%s1 + $0x258] sm:$0xff]
  %v159 = vld [vmem:[%s1 + $0x260] sm:$0xff]
  %v160 = vld [vmem:[%s1 + $0x268] sm:$0xff]
  %v161 = vld [vmem:[%s1 + $0x270] sm:$0xff]
  %v162 = vld [vmem:[%s1 + $0x278] sm:$0xff]
  %v163 = vld [vmem:[%s1 + $0x280] sm:$0xff]
  %v164 = vld [vmem:[%s1 + $0x288] sm:$0xff]
  %v165 = vld [vmem:[%s1 + $0x290] sm:$0xff]
  %v166 = vld [vmem:[%s1 + $0x298] sm:$0xff]
  %v167 = vld [vmem:[%s1 + $0x2a0] sm:$0xff]
  %v168 = vld [vmem:[%s1 + $0x2a8] sm:$0xff]
  %v169 = vld [vmem:[%s1 + $0x2b0] sm:$0xff]
  %v170 = vld [vmem:[%s1 + $0x2b8] sm:$0xff]
  %v171 = vld [vmem:[%s1 + $0x2c0] sm:$0xff]
  %v172 = vld [vmem:[%s1 + $0x2c8] sm:$0xff]
  %v173 = vld [vmem:[%s1 + $0x2d0] sm:$0xff]
  %v174 = vld [vmem:[%s1 + $0x2d8] sm:$0xff]
  %v175 = vld [vmem:[%s1 + $0x2e0] sm:$0xff]
  %v176 = vld [vmem:[%s1 + $0x2e8] sm:$0xff]
  %v177 = vld [vmem:[%s1 + $0x2f0] sm:$0xff]
  %v178 = vld [vmem:[%s1 + $0x2f8] sm:$0xff]
  %v179 = vld [vmem:[%s1 + $0x300] sm:$0xff]
  %v180 = vld [vmem:[%s1 + $0x308] sm:$0xff]
  %v181 = vld [vmem:[%s1 + $0x310] sm:$0xff]
  %v182 = vld [vmem:[%s1 + $0x318] sm:$0xff]
  %v183 = vld [vmem:[%s1 + $0x320] sm:$0xff]
  %v184 = vld [vmem:[%s1 + $0x328] sm:$0xff]
  %v185 = vld [vmem:[%s1 + $0x330] sm:$0xff]
  %v186 = vld [vmem:[%s1 + $0x338] sm:$0xff]
  %v187 = vld [vmem:[%s1 + $0x340] sm:$0xff]
  %v188 = vld [vmem:[%s1 + $0x348] sm:$0xff]
  %v189 = vld [vmem:[%s1 + $0x350] sm:$0xff]
  %v190 = vld [vmem:[%s1 + $0x358] sm:$0xff]
  %v191 = vld [vmem:[%s1 + $0x360] sm:$0xff]
  %v192 = vld [vmem:[%s1 + $0x368] sm:$0xff]
  %v193 = vld [vmem:[%s1 + $0x370] sm:$0xff]
  %v194 = vld [vmem:[%s1 + $0x378] sm:$0xff]
  %v195 = vld [vmem:[%s1 + $0x380] sm:$0xff]
  %v196 = vld [vmem:[%s1 + $0x388] sm:$0xff]
  %v197 = vld [vmem:[%s1 + $0x390] sm:$0xff]
  %v198 = vld [vmem:[%s1 + $0x398] sm:$0xff]
  %v199 = vld [vmem:[%s1 + $0x3a0] sm:$0xff]
  %v200 = vld [vmem:[%s1 + $0x3a8] sm:$0xff]
  %v201 = vld [vmem:[%s1 + $0x3b0] sm:$0xff]
  %v202 = vld [vmem:[%s1 + $0x3b8] sm:$0xff]
  %v203 = vld [vmem:[%s1 + $0x3c0] sm:$0xff]
  %v204 = vld [vmem:[%s1 + $0x3c8] sm:$0xff]
  %v205 = vld [vmem:[%s1 + $0x3d0] sm:$0xff]
  %v206 = vld [vmem:[%s1 + $0x3d8] sm:$0xff]
  %v207 = vld [vmem:[%s1 + $0x3e0] sm:$0xff]
  %v208 = vld [vmem:[%s1 + $0x3e8] sm:$0xff]
  %v209 = vld [vmem:[%s1 + $0x3f0] sm:$0xff]
  %v210 = vld [vmem:[%s1 + $0x3f8] sm:$0xff]
  %v211 = vld [vmem:[%s1 + $0x400] sm:$0xff]
  %v212 = vld [vmem:[%s1 + $0x408] sm:$0xff]
  %v213 = vld [vmem:[%s1 + $0x410] sm:$0xff]
  %v214 = vld [vmem:[%s1 + $0x418] sm:$0xff]
  %v215 = vld [vmem:[%s1 + $0x420] sm:$0xff]
  %v216 = vld [vmem:[%s1 + $0x428] sm:$0xff]
  %v217 = vld [vmem:[%s1 + $0x430] sm:$0xff]
  %v218 = vld [vmem:[%s1 + $0x438] sm:$0xff]
  %v219 = vld [vmem:[%s1 + $0x440] sm:$0xff]
  %v220 = vld [vmem:[%s1 + $0x448] sm:$0xff]
  %v221 = vld [vmem:[%s1 + $0x450] sm:$0xff]
  %v222 = vld [vmem:[%s1 + $0x458] sm:$0xff]
  %v223 = vld [vmem:[%s1 + $0x460] sm:$0xff]
  %v224 = vld [vmem:[%s1 + $0x468] sm:$0xff]
  %v225 = vld [vmem:[%s1 + $0x470] sm:$0xff]
  %v226 = vld [vmem:[%s1 + $0x478] sm:$0xff]
  %v227 = vld [vmem:[%s1 + $0x480] sm:$0xff]
  %v228 = vld [vmem:[%s1 + $0x488] sm:$0xff]
  %v229 = vld [vmem:[%s1 + $0x490] sm:$0xff]
  %v230 = vld [vmem:[%s1 + $0x498] sm:$0xff]
  %v231 = vld [vmem:[%s1 + $0x4a0] sm:$0xff]
  %v232 = vld [vmem:[%s1 + $0x4a8] sm:$0xff]
  %v233 = vld [vmem:[%s1 + $0x4b0] sm:$0xff]
  %v234 = vld [vmem:[%s1 + $0x4b8] sm:$0xff]
  %v235 = vld [vmem:[%s1 + $0x4c0] sm:$0xff]
  %v236 = vld [vmem:[%s1 + $0x4c8] sm:$0xff]
  %v237 = vld [vmem:[%s1 + $0x4d0] sm:$0xff]
  %v238 = vld [vmem:[%s1 + $0x4d8] sm:$0xff]
  %v239 = vld [vmem:[%s1 + $0x4e0] sm:$0xff]
  %v240 = vld [vmem:[%s1 + $0x4e8] sm:$0xff]
  %v241 = vld [vmem:[%s1 + $0x4f0] sm:$0xff]
  %v242 = vld [vmem:[%s1 + $0x4f8] sm:$0xff]
  %v243 = vld [vmem:[%s1 + $0x500] sm:$0xff]
  %v244 = vld [vmem:[%s1 + $0x508] sm:$0xff]
  %v245 = vld [vmem:[%s1 + $0x510] sm:$0xff]
  %v246 = vld [vmem:[%s1 + $0x518] sm:$0xff]
  %v247 = vld [vmem:[%s1 + $0x520] sm:$0xff]
  %v248 = vld [vmem:[%s1 + $0x528] sm:$0xff]
  %v249 = vld [vmem:[%s1 + $0x530] sm:$0xff]
  %v250 = vld [vmem:[%s1 + $0x538] sm:$0xff]
  %v251 = vld [vmem:[%s1 + $0x540] sm:$0xff]
  %v252 = vld [vmem:[%s1 + $0x548] sm:$0xff]
  %v253 = vld [vmem:[%s1 + $0x550] sm:$0xff]
  %v254 = vld [vmem:[%s1 + $0x558] sm:$0xff]
  %v255 = vld [vmem:[%s1 + $0x560] sm:$0xff]
  %v256 = vld [vmem:[%s1 + $0x568] sm:$0xff]
  %v257 = vld [vmem:[%s1 + $0x570] sm:$0xff]
  %v258 = vld [vmem:[%s1 + $0x578] sm:$0xff]
  %v259 = vld [vmem:[%s1 + $0x580] sm:$0xff]
  %v260 = vld [vmem:[%s1 + $0x588] sm:$0xff]
  %v261 = vld [vmem:[%s1 + $0x590] sm:$0xff]
  %v262 = vld [vmem:[%s1 + $0x598] sm:$0xff]
  %v263 = vld [vmem:[%s1 + $0x5a0] sm:$0xff]
  %v264 = vld [vmem:[%s1 + $0x5a8] sm:$0xff]
  %v265 = vld [vmem:[%s1 + $0x5b0] sm:$0xff]
  %v266 = vld [vmem:[%s1 + $0x5b8] sm:$0xff]
  %v267 = vld [vmem:[%s1 + $0x5c0] sm:$0xff]
  %v268 = vld [vmem:[%s1 + $0x5c8] sm:$0xff]
  %v269 = vld [vmem:[%s1 + $0x5d0] sm:$0xff]
  %v270 = vld [vmem:[%s1 + $0x5d8] sm:$0xff]
  %v271 = vld [vmem:[%s1 + $0x5e0] sm:$0xff]
  %v272 = vld [vmem:[%s1 + $0x5e8] sm:$0xff]
  %v273 = vld [vmem:[%s1 + $0x5f0] sm:$0xff]
  %v274 = vld [vmem:[%s1 + $0x5f8] sm:$0xff]
  %v275 = vld [vmem:[%s1 + $0x600] sm:$0xff]
  %v276 = vld [vmem:[%s1 + $0x608] sm:$0xff]
  %v277 = vld [vmem:[%s1 + $0x610] sm:$0xff]
  %v278 = vld [vmem:[%s1 + $0x618] sm:$0xff]
  %v279 = vld [vmem:[%s1 + $0x620] sm:$0xff]
  %v280 = vld [vmem:[%s1 + $0x628] sm:$0xff]
  %v281 = vld [vmem:[%s1 + $0x630] sm:$0xff]
  %v282 = vld [vmem:[%s1 + $0x638] sm:$0xff]
  %v283 = vld [vmem:[%s1 + $0x640] sm:$0xff]
  %v284 = vld [vmem:[%s1 + $0x648] sm:$0xff]
  %v285 = vld [vmem:[%s1 + $0x650] sm:$0xff]
  %v286 = vld [vmem:[%s1 + $0x658] sm:$0xff]
  %v287 = vld [vmem:[%s1 + $0x660] sm:$0xff]
  %v288 = vld [vmem:[%s1 + $0x668] sm:$0xff]
  %v289 = vld [vmem:[%s1 + $0x670] sm:$0xff]
  %v290 = vld [vmem:[%s1 + $0x678] sm:$0xff]
  %v291 = vld [vmem:[%s1 + $0x680] sm:$0xff]
  %v292 = vld [vmem:[%s1 + $0x688] sm:$0xff]
  %v293 = vld [vmem:[%s1 + $0x690] sm:$0xff]
  %v294 = vld [vmem:[%s1 + $0x698] sm:$0xff]
  %v295 = vld [vmem:[%s1 + $0x6a0] sm:$0xff]
  %v296 = vld [vmem:[%s1 + $0x6a8] sm:$0xff]
  %v297 = vld [vmem:[%s1 + $0x6b0] sm:$0xff]
  %v298 = vld [vmem:[%s1 + $0x6b8] sm:$0xff]
  %v299 = vld [vmem:[%s1 + $0x6c0] sm:$0xff]
  %v300 = vld [vmem:[%s1 + $0x6c8] sm:$0xff]
  %v301 = vld [vmem:[%s1 + $0x6d0] sm:$0xff]
  %v302 = vld [vmem:[%s1 + $0x6d8] sm:$0xff]
  %v303 = vld [vmem:[%s1 + $0x6e0] sm:$0xff]
  %v304 = vld [vmem:[%s1 + $0x6e8] sm:$0xff]
  %v305 = vld [vmem:[%s1 + $0x6f0] sm:$0xff]
  %v306 = vld [vmem:[%s1 + $0x6f8] sm:$0xff]
  %v307 = vld [vmem:[%s1 + $0x700] sm:$0xff]
  %v308 = vld [vmem:[%s1 + $0x708] sm:$0xff]
  %v309 = vld [vmem:[%s1 + $0x710] sm:$0xff]
  %v310 = vld [vmem:[%s1 + $0x718] sm:$0xff]
  %v311 = vld [vmem:[%s1 + $0x720] sm:$0xff]
  %v312 = vld [vmem:[%s1 + $0x728] sm:$0xff]
  %v313 = vld [vmem:[%s1 + $0x730] sm:$0xff]
  %v314 = vld [vmem:[%s1 + $0x738] sm:$0xff]
  %v315 = vld [vmem:[%s1 + $0x740] sm:$0xff]
  %v316 = vld [vmem:[%s1 + $0x748] sm:$0xff]
  %v317 = vld [vmem:[%s1 + $0x750] sm:$0xff]
  %v318 = vld [vmem:[%s1 + $0x758] sm:$0xff]
  %v319 = vld [vmem:[%s1 + $0x760] sm:$0xff]
  %v320 = vld [vmem:[%s1 + $0x768] sm:$0xff]
  %v321 = vld [vmem:[%s1 + $0x770] sm:$0xff]
  %v322 = vld [vmem:[%s1 + $0x778] sm:$0xff]
  %v323 = vld [vmem:[%s1 + $0x780] sm:$0xff]
  %v324 = vld [vmem:[%s1 + $0x788] sm:$0xff]
  %v325 = vld [vmem:[%s1 + $0x790] sm:$0xff]
  %v326 = vld [vmem:[%s1 + $0x798] sm:$0xff]
  %v327 = vld [vmem:[%s1 + $0x7a0] sm:$0xff]
  %v328 = vld [vmem:[%s1 + $0x7a8] sm:$0xff]
  %v329 = vld [vmem:[%s1 + $0x7b0] sm:$0xff]
  %v330 = vld [vmem:[%s1 + $0x7b8] sm:$0xff]
  %v331 = vld [vmem:[%s1 + $0x7c0] sm:$0xff]
  %v332 = vld [vmem:[%s1 + $0x7c8] sm:$0xff]
  %v333 = vld [vmem:[%s1 + $0x7d0] sm:$0xff]
  %v334 = vld [vmem:[%s1 + $0x7d8] sm:$0xff]
  %v335 = vld [vmem:[%s1 + $0x7e0] sm:$0xff]
  %v336 = vld [vmem:[%s1 + $0x7e8] sm:$0xff]
  %v337 = vld [vmem:[%s1 + $0x7f0] sm:$0xff]
  %v338 = vld [vmem:[%s1 + $0x7f8] sm:$0xff]
  %v339 = vld [vmem:[%s1 + $0x800] sm:$0xff]
  %v340 = vld [vmem:[%s1 + $0x808] sm:$0xff]
  %v341 = vld [vmem:[%s1 + $0x810] sm:$0xff]
  %v342 = vld [vmem:[%s1 + $0x818] sm:$0xff]
  %v343 = vld [vmem:[%s1 + $0x820] sm:$0xff]
  %v344 = vld [vmem:[%s1 + $0x828] sm:$0xff]
  %v345 = vld [vmem:[%s1 + $0x830] sm:$0xff]
  %v346 = vld [vmem:[%s1 + $0x838] sm:$0xff]
  %v347 = vld [vmem:[%s1 + $0x840] sm:$0xff]
  %v348 = vld [vmem:[%s1 + $0x848] sm:$0xff]
  %v349 = vld [vmem:[%s1 + $0x850] sm:$0xff]
  %v350 = vld [vmem:[%s1 + $0x858] sm:$0xff]
  %v351 = vld [vmem:[%s1 + $0x860] sm:$0xff]
  %v352 = vld [vmem:[%s1 + $0x868] sm:$0xff]
  %v353 = vld [vmem:[%s1 + $0x870] sm:$0xff]
  %v354 = vld [vmem:[%s1 + $0x878] sm:$0xff]
  %v355 = vld [vmem:[%s1 + $0x880] sm:$0xff]
  %v356 = vld [vmem:[%s1 + $0x888] sm:$0xff]
  %v357 = vld [vmem:[%s1 + $0x890] sm:$0xff]
  %v358 = vld [vmem:[%s1 + $0x898] sm:$0xff]
  %v359 = vld [vmem:[%s1 + $0x8a0] sm:$0xff]
  %v360 = vld [vmem:[%s1 + $0x8a8] sm:$0xff]
  %v361 = vld [vmem:[%s1 + $0x8b0] sm:$0xff]
  %v362 = vld [vmem:[%s1 + $0x8b8] sm:$0xff]
  %v363 = vld [vmem:[%s1 + $0x8c0] sm:$0xff]
  %v364 = vld [vmem:[%s1 + $0x8c8] sm:$0xff]
  %v365 = vld [vmem:[%s1 + $0x8d0] sm:$0xff]
  %v366 = vld [vmem:[%s1 + $0x8d8] sm:$0xff]
  %v367 = vld [vmem:[%s1 + $0x8e0] sm:$0xff]
  %v368 = vld [vmem:[%s1 + $0x8e8] sm:$0xff]
  %v369 = vld [vmem:[%s1 + $0x8f0] sm:$0xff]
  %v370 = vld [vmem:[%s1 + $0x8f8] sm:$0xff]
  %v371 = vld [vmem:[%s1 + $0x900] sm:$0xff]
  %v372 = vld [vmem:[%s1 + $0x908] sm:$0xff]
  %v373 = vld [vmem:[%s1 + $0x910] sm:$0xff]
  %v374 = vld [vmem:[%s1 + $0x918] sm:$0xff]
  %v375 = vld [vmem:[%s1 + $0x920] sm:$0xff]
  %v376 = vld [vmem:[%s1 + $0x928] sm:$0xff]
  %v377 = vld [vmem:[%s1 + $0x930] sm:$0xff]
  %v378 = vld [vmem:[%s1 + $0x938] sm:$0xff]
  %v379 = vld [vmem:[%s1 + $0x940] sm:$0xff]
  %v380 = vld [vmem:[%s1 + $0x948] sm:$0xff]
  %v381 = vld [vmem:[%s1 + $0x950] sm:$0xff]
  %v382 = vld [vmem:[%s1 + $0x958] sm:$0xff]
  %v383 = vld [vmem:[%s1 + $0x960] sm:$0xff]
  %v384 = vld [vmem:[%s1 + $0x968] sm:$0xff]
  %v385 = vld [vmem:[%s1 + $0x970] sm:$0xff]
  %v386 = vld [vmem:[%s1 + $0x978] sm:$0xff]
  %v387 = vld [vmem:[%s1 + $0x980] sm:$0xff]
  %v388 = vld [vmem:[%s1 + $0x988] sm:$0xff]
  %v389 = vld [vmem:[%s1 + $0x990] sm:$0xff]
  %v390 = vld [vmem:[%s1 + $0x998] sm:$0xff]
  %v391 = vld [vmem:[%s1 + $0x9a0] sm:$0xff]
  %v392 = vld [vmem:[%s1 + $0x9a8] sm:$0xff]
  %v393 = vld [vmem:[%s1 + $0x9b0] sm:$0xff]
  %v394 = vld [vmem:[%s1 + $0x9b8] sm:$0xff]
  %v395 = vld [vmem:[%s1 + $0x9c0] sm:$0xff]
  %v396 = vld [vmem:[%s1 + $0x9c8] sm:$0xff]
  %v397 = vld [vmem:[%s1 + $0x9d0] sm:$0xff]
  %v398 = vld [vmem:[%s1 + $0x9d8] sm:$0xff]
  %v399 = vld [vmem:[%s1 + $0x9e0] sm:$0xff]
  %v400 = vld [vmem:[%s1 + $0x9e8] sm:$0xff]
  %v401 = vld [vmem:[%s1 + $0x9f0] sm:$0xff]
  %v402 = vld [vmem:[%s1 + $0x9f8] sm:$0xff]
  %v403 = vld [vmem:[%s1 + $0xa00] sm:$0xff]
  %v404 = vld [vmem:[%s1 + $0xa08] sm:$0xff]
  %v405 = vld [vmem:[%s1 + $0xa10] sm:$0xff]
  %v406 = vld [vmem:[%s1 + $0xa18] sm:$0xff]
  %v407 = vld [vmem:[%s1 + $0xa20] sm:$0xff]
  %v408 = vld [vmem:[%s1 + $0xa28] sm:$0xff]
  %v409 = vld [vmem:[%s1 + $0xa30] sm:$0xff]
  %v410 = vld [vmem:[%s1 + $0xa38] sm:$0xff]
  %v411 = vld [vmem:[%s1 + $0xa40] sm:$0xff]
  %v412 = vld [vmem:[%s1 + $0xa48] sm:$0xff]
  %v413 = vld [vmem:[%s1 + $0xa50] sm:$0xff]
  %v414 = vld [vmem:[%s1 + $0xa58] sm:$0xff]
  %v415 = vld [vmem:[%s1 + $0xa60] sm:$0xff]
  %v416 = vld [vmem:[%s1 + $0xa68] sm:$0xff]
  %v417 = vld [vmem:[%s1 + $0xa70] sm:$0xff]
  %v418 = vld [vmem:[%s1 + $0xa78] sm:$0xff]
  %v419 = vld [vmem:[%s1 + $0xa80] sm:$0xff]
  %v420 = vld [vmem:[%s1 + $0xa88] sm:$0xff]
  %v421 = vld [vmem:[%s1 + $0xa90] sm:$0xff]
  %v422 = vld [vmem:[%s1 + $0xa98] sm:$0xff]
  %v423 = vld [vmem:[%s1 + $0xaa0] sm:$0xff]
  %v424 = vld [vmem:[%s1 + $0xaa8] sm:$0xff]
  %v425 = vld [vmem:[%s1 + $0xab0] sm:$0xff]
  %v426 = vld [vmem:[%s1 + $0xab8] sm:$0xff]
  %v427 = vld [vmem:[%s1 + $0xac0] sm:$0xff]
  %v428 = vld [vmem:[%s1 + $0xac8] sm:$0xff]
  %v429 = vld [vmem:[%s1 + $0xad0] sm:$0xff]
  %v430 = vld [vmem:[%s1 + $0xad8] sm:$0xff]
  %v431 = vld [vmem:[%s1 + $0xae0] sm:$0xff]
  %v432 = vld [vmem:[%s1 + $0xae8] sm:$0xff]
  %v433 = vld [vmem:[%s1 + $0xaf0] sm:$0xff]
  %v434 = vld [vmem:[%s1 + $0xaf8] sm:$0xff]
  %v435 = vld [vmem:[%s1 + $0xb00] sm:$0xff]
  %v436 = vld [vmem:[%s1 + $0xb08] sm:$0xff]
  %v437 = vld [vmem:[%s1 + $0xb10] sm:$0xff]
  %v438 = vld [vmem:[%s1 + $0xb18] sm:$0xff]
  %v439 = vld [vmem:[%s1 + $0xb20] sm:$0xff]
  %v440 = vld [vmem:[%s1 + $0xb28] sm:$0xff]
  %v441 = vld [vmem:[%s1 + $0xb30] sm:$0xff]
  %v442 = vld [vmem:[%s1 + $0xb38] sm:$0xff]
  %v443 = vld [vmem:[%s1 + $0xb40] sm:$0xff]
  %v444 = vld [vmem:[%s1 + $0xb48] sm:$0xff]
  %v445 = vld [vmem:[%s1 + $0xb50] sm:$0xff]
  %v446 = vld [vmem:[%s1 + $0xb58] sm:$0xff]
  %v447 = vld [vmem:[%s1 + $0xb60] sm:$0xff]
  %v448 = vld [vmem:[%s1 + $0xb68] sm:$0xff]
  %v449 = vld [vmem:[%s1 + $0xb70] sm:$0xff]
  %v450 = vld [vmem:[%s1 + $0xb78] sm:$0xff]
  %v451 = vld [vmem:[%s1 + $0xb80] sm:$0xff]
  %v452 = vld [vmem:[%s1 + $0xb88] sm:$0xff]
  %v453 = vld [vmem:[%s1 + $0xb90] sm:$0xff]
  %v454 = vld [vmem:[%s1 + $0xb98] sm:$0xff]
  %v455 = vld [vmem:[%s1 + $0xba0] sm:$0xff]
  %v456 = vld [vmem:[%s1 + $0xba8] sm:$0xff]
  %v457 = vld [vmem:[%s1 + $0xbb0] sm:$0xff]
  %v458 = vld [vmem:[%s1 + $0xbb8] sm:$0xff]
  %v459 = vld [vmem:[%s1 + $0xbc0] sm:$0xff]
  %v460 = vld [vmem:[%s1 + $0xbc8] sm:$0xff]
  %v461 = vld [vmem:[%s1 + $0xbd0] sm:$0xff]
  %v462 = vld [vmem:[%s1 + $0xbd8] sm:$0xff]
  %v463 = vld [vmem:[%s1 + $0xbe0] sm:$0xff]
  %v464 = vld [vmem:[%s1 + $0xbe8] sm:$0xff]
  %v465 = vld [vmem:[%s1 + $0xbf0] sm:$0xff]
  %v466 = vld [vmem:[%s1 + $0xbf8] sm:$0xff]
  %v467 = vld [vmem:[%s1 + $0xc00] sm:$0xff]
  %v468 = vld [vmem:[%s1 + $0xc08] sm:$0xff]
  %v469 = vld [vmem:[%s1 + $0xc10] sm:$0xff]
  %v470 = vld [vmem:[%s1 + $0xc18] sm:$0xff]
  %v471 = vld [vmem:[%s1 + $0xc20] sm:$0xff]
  %v472 = vld [vmem:[%s1 + $0xc28] sm:$0xff]
  %v473 = vld [vmem:[%s1 + $0xc30] sm:$0xff]
  %v474 = vld [vmem:[%s1 + $0xc38] sm:$0xff]
  %v475 = vld [vmem:[%s1 + $0xc40] sm:$0xff]
  %v476 = vld [vmem:[%s1 + $0xc48] sm:$0xff]
  %v477 = vld [vmem:[%s1 + $0xc50] sm:$0xff]
  %v478 = vld [vmem:[%s1 + $0xc58] sm:$0xff]
  %v479 = vld [vmem:[%s1 + $0xc60] sm:$0xff]
  %v480 = vld [vmem:[%s1 + $0xc68] sm:$0xff]
  %v481 = vld [vmem:[%s1 + $0xc70] sm:$0xff]
  %v482 = vld [vmem:[%s1 + $0xc78] sm:$0xff]
  %v483 = vld [vmem:[%s1 + $0xc80] sm:$0xff]
  %v484 = vld [vmem:[%s1 + $0xc88] sm:$0xff]
  %v485 = vld [vmem:[%s1 + $0xc90] sm:$0xff]
  %v486 = vld [vmem:[%s1 + $0xc98] sm:$0xff]
  %v487 = vld [vmem:[%s1 + $0xca0] sm:$0xff]
  %v488 = vld [vmem:[%s1 + $0xca8] sm:$0xff]
  %v489 = vld [vmem:[%s1 + $0xcb0] sm:$0xff]
  %v490 = vld [vmem:[%s1 + $0xcb8] sm:$0xff]
  %v491 = vld [vmem:[%s1 + $0xcc0] sm:$0xff]
  %v492 = vld [vmem:[%s1 + $0xcc8] sm:$0xff]
  %v493 = vld [vmem:[%s1 + $0xcd0] sm:$0xff]
  %v494 = vld [vmem:[%s1 + $0xcd8] sm:$0xff]
  %v495 = vld [vmem:[%s1 + $0xce0] sm:$0xff]
  %v496 = vld [vmem:[%s1 + $0xce8] sm:$0xff]
  %v497 = vld [vmem:[%s1 + $0xcf0] sm:$0xff]
  %v498 = vld [vmem:[%s1 + $0xcf8] sm:$0xff]
  %v499 = vld [vmem:[%s1 + $0xd00] sm:$0xff]
  %v500 = vld [vmem:[%s1 + $0xd08] sm:$0xff]
  %v501 = vld [vmem:[%s1 + $0xd10] sm:$0xff]
  %v502 = vld [vmem:[%s1 + $0xd18] sm:$0xff]
  %v503 = vld [vmem:[%s1 + $0xd20] sm:$0xff]
  %v504 = vld [vmem:[%s1 + $0xd28] sm:$0xff]
  %v505 = vld [vmem:[%s1 + $0xd30] sm:$0xff]
  %v506 = vld [vmem:[%s1 + $0xd38] sm:$0xff]
  %v507 = vld [vmem:[%s1 + $0xd40] sm:$0xff]
  %v508 = vld [vmem:[%s1 + $0xd48] sm:$0xff]
  %v509 = vld [vmem:[%s1 + $0xd50] sm:$0xff]
  %v510 = vld [vmem:[%s1 + $0xd58] sm:$0xff]
  %v511 = vld [vmem:[%s1 + $0xd60] sm:$0xff]
  %v512 = vld [vmem:[%s1 + $0xd68] sm:$0xff]
  %v513 = vld [vmem:[%s1 + $0xd70] sm:$0xff]
  %v514 = vld [vmem:[%s1 + $0xd78] sm:$0xff]
  %v515 = vld [vmem:[%s1 + $0xd80] sm:$0xff]
  %v516 = vld [vmem:[%s1 + $0xd88] sm:$0xff]
  %v517 = vld [vmem:[%s1 + $0xd90] sm:$0xff]
  %v518 = vld [vmem:[%s1 + $0xd98] sm:$0xff]
  %v519 = vld [vmem:[%s1 + $0xda0] sm:$0xff]
  %v520 = vld [vmem:[%s1 + $0xda8] sm:$0xff]
  %v521 = vld [vmem:[%s1 + $0xdb0] sm:$0xff]
  %v522 = vld [vmem:[%s1 + $0xdb8] sm:$0xff]
  %v523 = vld [vmem:[%s1 + $0xdc0] sm:$0xff]
  %v524 = vld [vmem:[%s1 + $0xdc8] sm:$0xff]
  %v525 = vld [vmem:[%s1 + $0xdd0] sm:$0xff]
  %v526 = vld [vmem:[%s1 + $0xdd8] sm:$0xff]
  %v527 = vld [vmem:[%s1 + $0xde0] sm:$0xff]
  %v528 = vld [vmem:[%s1 + $0xde8] sm:$0xff]
  %v529 = vld [vmem:[%s1 + $0xdf0] sm:$0xff]
  %v530 = vld [vmem:[%s1 + $0xdf8] sm:$0xff]
  %v531 = vld [vmem:[%s1 + $0xe00] sm:$0xff]
  %v532 = vld [vmem:[%s1 + $0xe08] sm:$0xff]
  %v533 = vld [vmem:[%s1 + $0xe10] sm:$0xff]
  %v534 = vld [vmem:[%s1 + $0xe18] sm:$0xff]
  %v535 = vld [vmem:[%s1 + $0xe20] sm:$0xff]
  %v536 = vld [vmem:[%s1 + $0xe28] sm:$0xff]
  %v537 = vld [vmem:[%s1 + $0xe30] sm:$0xff]
  %v538 = vld [vmem:[%s1 + $0xe38] sm:$0xff]
  %v539 = vld [vmem:[%s1 + $0xe40] sm:$0xff]
  %v540 = vld [vmem:[%s1 + $0xe48] sm:$0xff]
  %v541 = vld [vmem:[%s1 + $0xe50] sm:$0xff]
  %v542 = vld [vmem:[%s1 + $0xe58] sm:$0xff]
  %v543 = vld [vmem:[%s1 + $0xe60] sm:$0xff]
  %v544 = vld [vmem:[%s1 + $0xe68] sm:$0xff]
  %v545 = vld [vmem:[%s1 + $0xe70] sm:$0xff]
  %v546 = vld [vmem:[%s1 + $0xe78] sm:$0xff]
  %v547 = vld [vmem:[%s1 + $0xe80] sm:$0xff]
  %v548 = vld [vmem:[%s1 + $0xe88] sm:$0xff]
  %v549 = vld [vmem:[%s1 + $0xe90] sm:$0xff]
  %v550 = vld [vmem:[%s1 + $0xe98] sm:$0xff]
  %v551 = vld [vmem:[%s1 + $0xea0] sm:$0xff]
  %v552 = vld [vmem:[%s1 + $0xea8] sm:$0xff]
  %v553 = vld [vmem:[%s1 + $0xeb0] sm:$0xff]
  %v554 = vld [vmem:[%s1 + $0xeb8] sm:$0xff]
  %v555 = vld [vmem:[%s1 + $0xec0] sm:$0xff]
  %v556 = vld [vmem:[%s1 + $0xec8] sm:$0xff]
  %v557 = vld [vmem:[%s1 + $0xed0] sm:$0xff]
  %v558 = vld [vmem:[%s1 + $0xed8] sm:$0xff]
  %v559 = vld [vmem:[%s1 + $0xee0] sm:$0xff]
  %v560 = vld [vmem:[%s1 + $0xee8] sm:$0xff]
  %v561 = vld [vmem:[%s1 + $0xef0] sm:$0xff]
  %v562 = vld [vmem:[%s1 + $0xef8] sm:$0xff]
  %v563 = vld [vmem:[%s1 + $0xf00] sm:$0xff]
  %v564 = vld [vmem:[%s1 + $0xf08] sm:$0xff]
  %v565 = vld [vmem:[%s1 + $0xf10] sm:$0xff]
  %v566 = vld [vmem:[%s1 + $0xf18] sm:$0xff]
  %v567 = vld [vmem:[%s1 + $0xf20] sm:$0xff]
  %v568 = vld [vmem:[%s1 + $0xf28] sm:$0xff]
  %v569 = vld [vmem:[%s1 + $0xf30] sm:$0xff]
  %v570 = vld [vmem:[%s1 + $0xf38] sm:$0xff]
  %v571 = vld [vmem:[%s1 + $0xf40] sm:$0xff]
  %v572 = vld [vmem:[%s1 + $0xf48] sm:$0xff]
  %v573 = vld [vmem:[%s1 + $0xf50] sm:$0xff]
  %v574 = vld [vmem:[%s1 + $0xf58] sm:$0xff]
  %v575 = vld [vmem:[%s1 + $0xf60] sm:$0xff]
  %v576 = vld [vmem:[%s1 + $0xf68] sm:$0xff]
  %v577 = vld [vmem:[%s1 + $0xf70] sm:$0xff]
  %v578 = vld [vmem:[%s1 + $0xf78] sm:$0xff]
  %v579 = vld [vmem:[%s1 + $0xf80] sm:$0xff]
  %v580 = vld [vmem:[%s1 + $0xf88] sm:$0xff]
  %v581 = vld [vmem:[%s1 + $0xf90] sm:$0xff]
  %v582 = vld [vmem:[%s1 + $0xf98] sm:$0xff]
  %v583 = vld [vmem:[%s1 + $0xfa0] sm:$0xff]
  %v584 = vld [vmem:[%s1 + $0xfa8] sm:$0xff]
  %v585 = vld [vmem:[%s1 + $0xfb0] sm:$0xff]
  %v586 = vld [vmem:[%s1 + $0xfb8] sm:$0xff]
  %v587 = vld [vmem:[%s1 + $0xfc0] sm:$0xff]
  %v588 = vld [vmem:[%s1 + $0xfc8] sm:$0xff]
  %v589 = vld [vmem:[%s1 + $0xfd0] sm:$0xff]
  %v590 = vld [vmem:[%s1 + $0xfd8] sm:$0xff]
  %v591 = vld [vmem:[%s1 + $0xfe0] sm:$0xff]
  %v592 = vld [vmem:[%s1 + $0xfe8] sm:$0xff]
  %v593 = vld [vmem:[%s1 + $0xff0] sm:$0xff]
  %v594 = vld [vmem:[%s1 + $0xff8] sm:$0xff]
  %v595 = vld [vmem:[%s2] sm:$0xff]
  %v597 = vlaneseq
  %v598 = vshrl.u32 %v597, 7
  %v599 = vsub.s32 0, %v598
  %v600 = vrot.slane %v595, %v599
  %v601 = vlaneseq
  %v602 = vshrl.u32 %v601, 7
  %v603 = vsub.s32 1, %v602
  %v604 = vrot.slane %v595, %v603
  %v605 = vlaneseq
  %v606 = vshrl.u32 %v605, 7
  %v607 = vsub.s32 2, %v606
  %v608 = vrot.slane %v595, %v607
  %v609 = vlaneseq
  %v610 = vshrl.u32 %v609, 7
  %v611 = vsub.s32 3, %v610
  %v612 = vrot.slane %v595, %v611
  %v613 = vlaneseq
  %v614 = vshrl.u32 %v613, 7
  %v615 = vsub.s32 4, %v614
  %v616 = vrot.slane %v595, %v615
  %v617 = vlaneseq
  %v618 = vshrl.u32 %v617, 7
  %v619 = vsub.s32 5, %v618
  %v620 = vrot.slane %v595, %v619
  %v621 = vlaneseq
  %v622 = vshrl.u32 %v621, 7
  %v623 = vsub.s32 6, %v622
  %v624 = vrot.slane %v595, %v623
  %v625 = vlaneseq
  %v626 = vshrl.u32 %v625, 7
  %v627 = vsub.s32 7, %v626
  %v628 = vrot.slane %v595, %v627
  %v1149 = vunpack.c.l.b16 %v83
  %v1150 = vunpack.c.h.b16 %v83
  %v1151 = vunpack.c.l.b16 %v84
  %v1152 = vunpack.c.h.b16 %v84
  %v1153 = vunpack.c.l.b16 %v85
  %v1154 = vunpack.c.h.b16 %v85
  %v1155 = vunpack.c.l.b16 %v86
  %v1156 = vunpack.c.h.b16 %v86
  %v1157 = vunpack.c.l.b16 %v87
  %v1158 = vunpack.c.h.b16 %v87
  %v1159 = vunpack.c.l.b16 %v88
  %v1160 = vunpack.c.h.b16 %v88
  %v1161 = vunpack.c.l.b16 %v89
  %v1162 = vunpack.c.h.b16 %v89
  %v1163 = vunpack.c.l.b16 %v90
  %v1164 = vunpack.c.h.b16 %v90
  %v1165 = vunpack.c.l.b16 %v91
  %v1166 = vunpack.c.h.b16 %v91
  %v1167 = vunpack.c.l.b16 %v92
  %v1168 = vunpack.c.h.b16 %v92
  %v1169 = vunpack.c.l.b16 %v93
  %v1170 = vunpack.c.h.b16 %v93
  %v1171 = vunpack.c.l.b16 %v94
  %v1172 = vunpack.c.h.b16 %v94
  %v1173 = vunpack.c.l.b16 %v95
  %v1174 = vunpack.c.h.b16 %v95
  %v1175 = vunpack.c.l.b16 %v96
  %v1176 = vunpack.c.h.b16 %v96
  %v1177 = vunpack.c.l.b16 %v97
  %v1178 = vunpack.c.h.b16 %v97
  %v1179 = vunpack.c.l.b16 %v98
  %v1180 = vunpack.c.h.b16 %v98
  %v1181 = vunpack.c.l.b16 %v99
  %v1182 = vunpack.c.h.b16 %v99
  %v1183 = vunpack.c.l.b16 %v100
  %v1184 = vunpack.c.h.b16 %v100
  %v1185 = vunpack.c.l.b16 %v101
  %v1186 = vunpack.c.h.b16 %v101
  %v1187 = vunpack.c.l.b16 %v102
  %v1188 = vunpack.c.h.b16 %v102
  %v1189 = vunpack.c.l.b16 %v103
  %v1190 = vunpack.c.h.b16 %v103
  %v1191 = vunpack.c.l.b16 %v104
  %v1192 = vunpack.c.h.b16 %v104
  %v1193 = vunpack.c.l.b16 %v105
  %v1194 = vunpack.c.h.b16 %v105
  %v1195 = vunpack.c.l.b16 %v106
  %v1196 = vunpack.c.h.b16 %v106
  %v1197 = vunpack.c.l.b16 %v107
  %v1198 = vunpack.c.h.b16 %v107
  %v1199 = vunpack.c.l.b16 %v108
  %v1200 = vunpack.c.h.b16 %v108
  %v1201 = vunpack.c.l.b16 %v109
  %v1202 = vunpack.c.h.b16 %v109
  %v1203 = vunpack.c.l.b16 %v110
  %v1204 = vunpack.c.h.b16 %v110
  %v1205 = vunpack.c.l.b16 %v111
  %v1206 = vunpack.c.h.b16 %v111
  %v1207 = vunpack.c.l.b16 %v112
  %v1208 = vunpack.c.h.b16 %v112
  %v1209 = vunpack.c.l.b16 %v113
  %v1210 = vunpack.c.h.b16 %v113
  %v1211 = vunpack.c.l.b16 %v114
  %v1212 = vunpack.c.h.b16 %v114
  %v1213 = vunpack.c.l.b16 %v115
  %v1214 = vunpack.c.h.b16 %v115
  %v1215 = vunpack.c.l.b16 %v116
  %v1216 = vunpack.c.h.b16 %v116
  %v1217 = vunpack.c.l.b16 %v117
  %v1218 = vunpack.c.h.b16 %v117
  %v1219 = vunpack.c.l.b16 %v118
  %v1220 = vunpack.c.h.b16 %v118
  %v1221 = vunpack.c.l.b16 %v119
  %v1222 = vunpack.c.h.b16 %v119
  %v1223 = vunpack.c.l.b16 %v120
  %v1224 = vunpack.c.h.b16 %v120
  %v1225 = vunpack.c.l.b16 %v121
  %v1226 = vunpack.c.h.b16 %v121
  %v1227 = vunpack.c.l.b16 %v122
  %v1228 = vunpack.c.h.b16 %v122
  %v1229 = vunpack.c.l.b16 %v123
  %v1230 = vunpack.c.h.b16 %v123
  %v1231 = vunpack.c.l.b16 %v124
  %v1232 = vunpack.c.h.b16 %v124
  %v1233 = vunpack.c.l.b16 %v125
  %v1234 = vunpack.c.h.b16 %v125
  %v1235 = vunpack.c.l.b16 %v126
  %v1236 = vunpack.c.h.b16 %v126
  %v1237 = vunpack.c.l.b16 %v127
  %v1238 = vunpack.c.h.b16 %v127
  %v1239 = vunpack.c.l.b16 %v128
  %v1240 = vunpack.c.h.b16 %v128
  %v1241 = vunpack.c.l.b16 %v129
  %v1242 = vunpack.c.h.b16 %v129
  %v1243 = vunpack.c.l.b16 %v130
  %v1244 = vunpack.c.h.b16 %v130
  %v1245 = vunpack.c.l.b16 %v131
  %v1246 = vunpack.c.h.b16 %v131
  %v1247 = vunpack.c.l.b16 %v132
  %v1248 = vunpack.c.h.b16 %v132
  %v1249 = vunpack.c.l.b16 %v133
  %v1250 = vunpack.c.h.b16 %v133
  %v1251 = vunpack.c.l.b16 %v134
  %v1252 = vunpack.c.h.b16 %v134
  %v1253 = vunpack.c.l.b16 %v135
  %v1254 = vunpack.c.h.b16 %v135
  %v1255 = vunpack.c.l.b16 %v136
  %v1256 = vunpack.c.h.b16 %v136
  %v1257 = vunpack.c.l.b16 %v137
  %v1258 = vunpack.c.h.b16 %v137
  %v1259 = vunpack.c.l.b16 %v138
  %v1260 = vunpack.c.h.b16 %v138
  %v1261 = vunpack.c.l.b16 %v139
  %v1262 = vunpack.c.h.b16 %v139
  %v1263 = vunpack.c.l.b16 %v140
  %v1264 = vunpack.c.h.b16 %v140
  %v1265 = vunpack.c.l.b16 %v141
  %v1266 = vunpack.c.h.b16 %v141
  %v1267 = vunpack.c.l.b16 %v142
  %v1268 = vunpack.c.h.b16 %v142
  %v1269 = vunpack.c.l.b16 %v143
  %v1270 = vunpack.c.h.b16 %v143
  %v1271 = vunpack.c.l.b16 %v144
  %v1272 = vunpack.c.h.b16 %v144
  %v1273 = vunpack.c.l.b16 %v145
  %v1274 = vunpack.c.h.b16 %v145
  %v1275 = vunpack.c.l.b16 %v146
  %v1276 = vunpack.c.h.b16 %v146
  %v1277 = vunpack.c.l.b16 %v147
  %v1278 = vunpack.c.h.b16 %v147
  %v1279 = vunpack.c.l.b16 %v148
  %v1280 = vunpack.c.h.b16 %v148
  %v1281 = vunpack.c.l.b16 %v149
  %v1282 = vunpack.c.h.b16 %v149
  %v1283 = vunpack.c.l.b16 %v150
  %v1284 = vunpack.c.h.b16 %v150
  %v1285 = vunpack.c.l.b16 %v151
  %v1286 = vunpack.c.h.b16 %v151
  %v1287 = vunpack.c.l.b16 %v152
  %v1288 = vunpack.c.h.b16 %v152
  %v1289 = vunpack.c.l.b16 %v153
  %v1290 = vunpack.c.h.b16 %v153
  %v1291 = vunpack.c.l.b16 %v154
  %v1292 = vunpack.c.h.b16 %v154
  %v1293 = vunpack.c.l.b16 %v155
  %v1294 = vunpack.c.h.b16 %v155
  %v1295 = vunpack.c.l.b16 %v156
  %v1296 = vunpack.c.h.b16 %v156
  %v1297 = vunpack.c.l.b16 %v157
  %v1298 = vunpack.c.h.b16 %v157
  %v1299 = vunpack.c.l.b16 %v158
  %v1300 = vunpack.c.h.b16 %v158
  %v1301 = vunpack.c.l.b16 %v159
  %v1302 = vunpack.c.h.b16 %v159
  %v1303 = vunpack.c.l.b16 %v160
  %v1304 = vunpack.c.h.b16 %v160
  %v1305 = vunpack.c.l.b16 %v161
  %v1306 = vunpack.c.h.b16 %v161
  %v1307 = vunpack.c.l.b16 %v162
  %v1308 = vunpack.c.h.b16 %v162
  %v1309 = vunpack.c.l.b16 %v163
  %v1310 = vunpack.c.h.b16 %v163
  %v1311 = vunpack.c.l.b16 %v164
  %v1312 = vunpack.c.h.b16 %v164
  %v1313 = vunpack.c.l.b16 %v165
  %v1314 = vunpack.c.h.b16 %v165
  %v1315 = vunpack.c.l.b16 %v166
  %v1316 = vunpack.c.h.b16 %v166
  %v1317 = vunpack.c.l.b16 %v167
  %v1318 = vunpack.c.h.b16 %v167
  %v1319 = vunpack.c.l.b16 %v168
  %v1320 = vunpack.c.h.b16 %v168
  %v1321 = vunpack.c.l.b16 %v169
  %v1322 = vunpack.c.h.b16 %v169
  %v1323 = vunpack.c.l.b16 %v170
  %v1324 = vunpack.c.h.b16 %v170
  %v1325 = vunpack.c.l.b16 %v171
  %v1326 = vunpack.c.h.b16 %v171
  %v1327 = vunpack.c.l.b16 %v172
  %v1328 = vunpack.c.h.b16 %v172
  %v1329 = vunpack.c.l.b16 %v173
  %v1330 = vunpack.c.h.b16 %v173
  %v1331 = vunpack.c.l.b16 %v174
  %v1332 = vunpack.c.h.b16 %v174
  %v1333 = vunpack.c.l.b16 %v175
  %v1334 = vunpack.c.h.b16 %v175
  %v1335 = vunpack.c.l.b16 %v176
  %v1336 = vunpack.c.h.b16 %v176
  %v1337 = vunpack.c.l.b16 %v177
  %v1338 = vunpack.c.h.b16 %v177
  %v1339 = vunpack.c.l.b16 %v178
  %v1340 = vunpack.c.h.b16 %v178
  %v1341 = vunpack.c.l.b16 %v179
  %v1342 = vunpack.c.h.b16 %v179
  %v1343 = vunpack.c.l.b16 %v180
  %v1344 = vunpack.c.h.b16 %v180
  %v1345 = vunpack.c.l.b16 %v181
  %v1346 = vunpack.c.h.b16 %v181
  %v1347 = vunpack.c.l.b16 %v182
  %v1348 = vunpack.c.h.b16 %v182
  %v1349 = vunpack.c.l.b16 %v183
  %v1350 = vunpack.c.h.b16 %v183
  %v1351 = vunpack.c.l.b16 %v184
  %v1352 = vunpack.c.h.b16 %v184
  %v1353 = vunpack.c.l.b16 %v185
  %v1354 = vunpack.c.h.b16 %v185
  %v1355 = vunpack.c.l.b16 %v186
  %v1356 = vunpack.c.h.b16 %v186
  %v1357 = vunpack.c.l.b16 %v187
  %v1358 = vunpack.c.h.b16 %v187
  %v1359 = vunpack.c.l.b16 %v188
  %v1360 = vunpack.c.h.b16 %v188
  %v1361 = vunpack.c.l.b16 %v189
  %v1362 = vunpack.c.h.b16 %v189
  %v1363 = vunpack.c.l.b16 %v190
  %v1364 = vunpack.c.h.b16 %v190
  %v1365 = vunpack.c.l.b16 %v191
  %v1366 = vunpack.c.h.b16 %v191
  %v1367 = vunpack.c.l.b16 %v192
  %v1368 = vunpack.c.h.b16 %v192
  %v1369 = vunpack.c.l.b16 %v193
  %v1370 = vunpack.c.h.b16 %v193
  %v1371 = vunpack.c.l.b16 %v194
  %v1372 = vunpack.c.h.b16 %v194
  %v1373 = vunpack.c.l.b16 %v195
  %v1374 = vunpack.c.h.b16 %v195
  %v1375 = vunpack.c.l.b16 %v196
  %v1376 = vunpack.c.h.b16 %v196
  %v1377 = vunpack.c.l.b16 %v197
  %v1378 = vunpack.c.h.b16 %v197
  %v1379 = vunpack.c.l.b16 %v198
  %v1380 = vunpack.c.h.b16 %v198
  %v1381 = vunpack.c.l.b16 %v199
  %v1382 = vunpack.c.h.b16 %v199
  %v1383 = vunpack.c.l.b16 %v200
  %v1384 = vunpack.c.h.b16 %v200
  %v1385 = vunpack.c.l.b16 %v201
  %v1386 = vunpack.c.h.b16 %v201
  %v1387 = vunpack.c.l.b16 %v202
  %v1388 = vunpack.c.h.b16 %v202
  %v1389 = vunpack.c.l.b16 %v203
  %v1390 = vunpack.c.h.b16 %v203
  %v1391 = vunpack.c.l.b16 %v204
  %v1392 = vunpack.c.h.b16 %v204
  %v1393 = vunpack.c.l.b16 %v205
  %v1394 = vunpack.c.h.b16 %v205
  %v1395 = vunpack.c.l.b16 %v206
  %v1396 = vunpack.c.h.b16 %v206
  %v1397 = vunpack.c.l.b16 %v207
  %v1398 = vunpack.c.h.b16 %v207
  %v1399 = vunpack.c.l.b16 %v208
  %v1400 = vunpack.c.h.b16 %v208
  %v1401 = vunpack.c.l.b16 %v209
  %v1402 = vunpack.c.h.b16 %v209
  %v1403 = vunpack.c.l.b16 %v210
  %v1404 = vunpack.c.h.b16 %v210
  %v1405 = vunpack.c.l.b16 %v211
  %v1406 = vunpack.c.h.b16 %v211
  %v1407 = vunpack.c.l.b16 %v212
  %v1408 = vunpack.c.h.b16 %v212
  %v1409 = vunpack.c.l.b16 %v213
  %v1410 = vunpack.c.h.b16 %v213
  %v1411 = vunpack.c.l.b16 %v214
  %v1412 = vunpack.c.h.b16 %v214
  %v1413 = vunpack.c.l.b16 %v215
  %v1414 = vunpack.c.h.b16 %v215
  %v1415 = vunpack.c.l.b16 %v216
  %v1416 = vunpack.c.h.b16 %v216
  %v1417 = vunpack.c.l.b16 %v217
  %v1418 = vunpack.c.h.b16 %v217
  %v1419 = vunpack.c.l.b16 %v218
  %v1420 = vunpack.c.h.b16 %v218
  %v1421 = vunpack.c.l.b16 %v219
  %v1422 = vunpack.c.h.b16 %v219
  %v1423 = vunpack.c.l.b16 %v220
  %v1424 = vunpack.c.h.b16 %v220
  %v1425 = vunpack.c.l.b16 %v221
  %v1426 = vunpack.c.h.b16 %v221
  %v1427 = vunpack.c.l.b16 %v222
  %v1428 = vunpack.c.h.b16 %v222
  %v1429 = vunpack.c.l.b16 %v223
  %v1430 = vunpack.c.h.b16 %v223
  %v1431 = vunpack.c.l.b16 %v224
  %v1432 = vunpack.c.h.b16 %v224
  %v1433 = vunpack.c.l.b16 %v225
  %v1434 = vunpack.c.h.b16 %v225
  %v1435 = vunpack.c.l.b16 %v226
  %v1436 = vunpack.c.h.b16 %v226
  %v1437 = vunpack.c.l.b16 %v227
  %v1438 = vunpack.c.h.b16 %v227
  %v1439 = vunpack.c.l.b16 %v228
  %v1440 = vunpack.c.h.b16 %v228
  %v1441 = vunpack.c.l.b16 %v229
  %v1442 = vunpack.c.h.b16 %v229
  %v1443 = vunpack.c.l.b16 %v230
  %v1444 = vunpack.c.h.b16 %v230
  %v1445 = vunpack.c.l.b16 %v231
  %v1446 = vunpack.c.h.b16 %v231
  %v1447 = vunpack.c.l.b16 %v232
  %v1448 = vunpack.c.h.b16 %v232
  %v1449 = vunpack.c.l.b16 %v233
  %v1450 = vunpack.c.h.b16 %v233
  %v1451 = vunpack.c.l.b16 %v234
  %v1452 = vunpack.c.h.b16 %v234
  %v1453 = vunpack.c.l.b16 %v235
  %v1454 = vunpack.c.h.b16 %v235
  %v1455 = vunpack.c.l.b16 %v236
  %v1456 = vunpack.c.h.b16 %v236
  %v1457 = vunpack.c.l.b16 %v237
  %v1458 = vunpack.c.h.b16 %v237
  %v1459 = vunpack.c.l.b16 %v238
  %v1460 = vunpack.c.h.b16 %v238
  %v1461 = vunpack.c.l.b16 %v239
  %v1462 = vunpack.c.h.b16 %v239
  %v1463 = vunpack.c.l.b16 %v240
  %v1464 = vunpack.c.h.b16 %v240
  %v1465 = vunpack.c.l.b16 %v241
  %v1466 = vunpack.c.h.b16 %v241
  %v1467 = vunpack.c.l.b16 %v242
  %v1468 = vunpack.c.h.b16 %v242
  %v1469 = vunpack.c.l.b16 %v243
  %v1470 = vunpack.c.h.b16 %v243
  %v1471 = vunpack.c.l.b16 %v244
  %v1472 = vunpack.c.h.b16 %v244
  %v1473 = vunpack.c.l.b16 %v245
  %v1474 = vunpack.c.h.b16 %v245
  %v1475 = vunpack.c.l.b16 %v246
  %v1476 = vunpack.c.h.b16 %v246
  %v1477 = vunpack.c.l.b16 %v247
  %v1478 = vunpack.c.h.b16 %v247
  %v1479 = vunpack.c.l.b16 %v248
  %v1480 = vunpack.c.h.b16 %v248
  %v1481 = vunpack.c.l.b16 %v249
  %v1482 = vunpack.c.h.b16 %v249
  %v1483 = vunpack.c.l.b16 %v250
  %v1484 = vunpack.c.h.b16 %v250
  %v1485 = vunpack.c.l.b16 %v251
  %v1486 = vunpack.c.h.b16 %v251
  %v1487 = vunpack.c.l.b16 %v252
  %v1488 = vunpack.c.h.b16 %v252
  %v1489 = vunpack.c.l.b16 %v253
  %v1490 = vunpack.c.h.b16 %v253
  %v1491 = vunpack.c.l.b16 %v254
  %v1492 = vunpack.c.h.b16 %v254
  %v1493 = vunpack.c.l.b16 %v255
  %v1494 = vunpack.c.h.b16 %v255
  %v1495 = vunpack.c.l.b16 %v256
  %v1496 = vunpack.c.h.b16 %v256
  %v1497 = vunpack.c.l.b16 %v257
  %v1498 = vunpack.c.h.b16 %v257
  %v1499 = vunpack.c.l.b16 %v258
  %v1500 = vunpack.c.h.b16 %v258
  %v1501 = vunpack.c.l.b16 %v259
  %v1502 = vunpack.c.h.b16 %v259
  %v1503 = vunpack.c.l.b16 %v260
  %v1504 = vunpack.c.h.b16 %v260
  %v1505 = vunpack.c.l.b16 %v261
  %v1506 = vunpack.c.h.b16 %v261
  %v1507 = vunpack.c.l.b16 %v262
  %v1508 = vunpack.c.h.b16 %v262
  %v1509 = vunpack.c.l.b16 %v263
  %v1510 = vunpack.c.h.b16 %v263
  %v1511 = vunpack.c.l.b16 %v264
  %v1512 = vunpack.c.h.b16 %v264
  %v1513 = vunpack.c.l.b16 %v265
  %v1514 = vunpack.c.h.b16 %v265
  %v1515 = vunpack.c.l.b16 %v266
  %v1516 = vunpack.c.h.b16 %v266
  %v1517 = vunpack.c.l.b16 %v267
  %v1518 = vunpack.c.h.b16 %v267
  %v1519 = vunpack.c.l.b16 %v268
  %v1520 = vunpack.c.h.b16 %v268
  %v1521 = vunpack.c.l.b16 %v269
  %v1522 = vunpack.c.h.b16 %v269
  %v1523 = vunpack.c.l.b16 %v270
  %v1524 = vunpack.c.h.b16 %v270
  %v1525 = vunpack.c.l.b16 %v271
  %v1526 = vunpack.c.h.b16 %v271
  %v1527 = vunpack.c.l.b16 %v272
  %v1528 = vunpack.c.h.b16 %v272
  %v1529 = vunpack.c.l.b16 %v273
  %v1530 = vunpack.c.h.b16 %v273
  %v1531 = vunpack.c.l.b16 %v274
  %v1532 = vunpack.c.h.b16 %v274
  %v1533 = vunpack.c.l.b16 %v275
  %v1534 = vunpack.c.h.b16 %v275
  %v1535 = vunpack.c.l.b16 %v276
  %v1536 = vunpack.c.h.b16 %v276
  %v1537 = vunpack.c.l.b16 %v277
  %v1538 = vunpack.c.h.b16 %v277
  %v1539 = vunpack.c.l.b16 %v278
  %v1540 = vunpack.c.h.b16 %v278
  %v1541 = vunpack.c.l.b16 %v279
  %v1542 = vunpack.c.h.b16 %v279
  %v1543 = vunpack.c.l.b16 %v280
  %v1544 = vunpack.c.h.b16 %v280
  %v1545 = vunpack.c.l.b16 %v281
  %v1546 = vunpack.c.h.b16 %v281
  %v1547 = vunpack.c.l.b16 %v282
  %v1548 = vunpack.c.h.b16 %v282
  %v1549 = vunpack.c.l.b16 %v283
  %v1550 = vunpack.c.h.b16 %v283
  %v1551 = vunpack.c.l.b16 %v284
  %v1552 = vunpack.c.h.b16 %v284
  %v1553 = vunpack.c.l.b16 %v285
  %v1554 = vunpack.c.h.b16 %v285
  %v1555 = vunpack.c.l.b16 %v286
  %v1556 = vunpack.c.h.b16 %v286
  %v1557 = vunpack.c.l.b16 %v287
  %v1558 = vunpack.c.h.b16 %v287
  %v1559 = vunpack.c.l.b16 %v288
  %v1560 = vunpack.c.h.b16 %v288
  %v1561 = vunpack.c.l.b16 %v289
  %v1562 = vunpack.c.h.b16 %v289
  %v1563 = vunpack.c.l.b16 %v290
  %v1564 = vunpack.c.h.b16 %v290
  %v1565 = vunpack.c.l.b16 %v291
  %v1566 = vunpack.c.h.b16 %v291
  %v1567 = vunpack.c.l.b16 %v292
  %v1568 = vunpack.c.h.b16 %v292
  %v1569 = vunpack.c.l.b16 %v293
  %v1570 = vunpack.c.h.b16 %v293
  %v1571 = vunpack.c.l.b16 %v294
  %v1572 = vunpack.c.h.b16 %v294
  %v1573 = vunpack.c.l.b16 %v295
  %v1574 = vunpack.c.h.b16 %v295
  %v1575 = vunpack.c.l.b16 %v296
  %v1576 = vunpack.c.h.b16 %v296
  %v1577 = vunpack.c.l.b16 %v297
  %v1578 = vunpack.c.h.b16 %v297
  %v1579 = vunpack.c.l.b16 %v298
  %v1580 = vunpack.c.h.b16 %v298
  %v1581 = vunpack.c.l.b16 %v299
  %v1582 = vunpack.c.h.b16 %v299
  %v1583 = vunpack.c.l.b16 %v300
  %v1584 = vunpack.c.h.b16 %v300
  %v1585 = vunpack.c.l.b16 %v301
  %v1586 = vunpack.c.h.b16 %v301
  %v1587 = vunpack.c.l.b16 %v302
  %v1588 = vunpack.c.h.b16 %v302
  %v1589 = vunpack.c.l.b16 %v303
  %v1590 = vunpack.c.h.b16 %v303
  %v1591 = vunpack.c.l.b16 %v304
  %v1592 = vunpack.c.h.b16 %v304
  %v1593 = vunpack.c.l.b16 %v305
  %v1594 = vunpack.c.h.b16 %v305
  %v1595 = vunpack.c.l.b16 %v306
  %v1596 = vunpack.c.h.b16 %v306
  %v1597 = vunpack.c.l.b16 %v307
  %v1598 = vunpack.c.h.b16 %v307
  %v1599 = vunpack.c.l.b16 %v308
  %v1600 = vunpack.c.h.b16 %v308
  %v1601 = vunpack.c.l.b16 %v309
  %v1602 = vunpack.c.h.b16 %v309
  %v1603 = vunpack.c.l.b16 %v310
  %v1604 = vunpack.c.h.b16 %v310
  %v1605 = vunpack.c.l.b16 %v311
  %v1606 = vunpack.c.h.b16 %v311
  %v1607 = vunpack.c.l.b16 %v312
  %v1608 = vunpack.c.h.b16 %v312
  %v1609 = vunpack.c.l.b16 %v313
  %v1610 = vunpack.c.h.b16 %v313
  %v1611 = vunpack.c.l.b16 %v314
  %v1612 = vunpack.c.h.b16 %v314
  %v1613 = vunpack.c.l.b16 %v315
  %v1614 = vunpack.c.h.b16 %v315
  %v1615 = vunpack.c.l.b16 %v316
  %v1616 = vunpack.c.h.b16 %v316
  %v1617 = vunpack.c.l.b16 %v317
  %v1618 = vunpack.c.h.b16 %v317
  %v1619 = vunpack.c.l.b16 %v318
  %v1620 = vunpack.c.h.b16 %v318
  %v1621 = vunpack.c.l.b16 %v319
  %v1622 = vunpack.c.h.b16 %v319
  %v1623 = vunpack.c.l.b16 %v320
  %v1624 = vunpack.c.h.b16 %v320
  %v1625 = vunpack.c.l.b16 %v321
  %v1626 = vunpack.c.h.b16 %v321
  %v1627 = vunpack.c.l.b16 %v322
  %v1628 = vunpack.c.h.b16 %v322
  %v1629 = vunpack.c.l.b16 %v323
  %v1630 = vunpack.c.h.b16 %v323
  %v1631 = vunpack.c.l.b16 %v324
  %v1632 = vunpack.c.h.b16 %v324
  %v1633 = vunpack.c.l.b16 %v325
  %v1634 = vunpack.c.h.b16 %v325
  %v1635 = vunpack.c.l.b16 %v326
  %v1636 = vunpack.c.h.b16 %v326
  %v1637 = vunpack.c.l.b16 %v327
  %v1638 = vunpack.c.h.b16 %v327
  %v1639 = vunpack.c.l.b16 %v328
  %v1640 = vunpack.c.h.b16 %v328
  %v1641 = vunpack.c.l.b16 %v329
  %v1642 = vunpack.c.h.b16 %v329
  %v1643 = vunpack.c.l.b16 %v330
  %v1644 = vunpack.c.h.b16 %v330
  %v1645 = vunpack.c.l.b16 %v331
  %v1646 = vunpack.c.h.b16 %v331
  %v1647 = vunpack.c.l.b16 %v332
  %v1648 = vunpack.c.h.b16 %v332
  %v1649 = vunpack.c.l.b16 %v333
  %v1650 = vunpack.c.h.b16 %v333
  %v1651 = vunpack.c.l.b16 %v334
  %v1652 = vunpack.c.h.b16 %v334
  %v1653 = vunpack.c.l.b16 %v335
  %v1654 = vunpack.c.h.b16 %v335
  %v1655 = vunpack.c.l.b16 %v336
  %v1656 = vunpack.c.h.b16 %v336
  %v1657 = vunpack.c.l.b16 %v337
  %v1658 = vunpack.c.h.b16 %v337
  %v1659 = vunpack.c.l.b16 %v338
  %v1660 = vunpack.c.h.b16 %v338
  %v1661 = vunpack.c.l.b16 %v339
  %v1662 = vunpack.c.h.b16 %v339
  %v1663 = vunpack.c.l.b16 %v340
  %v1664 = vunpack.c.h.b16 %v340
  %v1665 = vunpack.c.l.b16 %v341
  %v1666 = vunpack.c.h.b16 %v341
  %v1667 = vunpack.c.l.b16 %v342
  %v1668 = vunpack.c.h.b16 %v342
  %v1669 = vunpack.c.l.b16 %v343
  %v1670 = vunpack.c.h.b16 %v343
  %v1671 = vunpack.c.l.b16 %v344
  %v1672 = vunpack.c.h.b16 %v344
  %v1673 = vunpack.c.l.b16 %v345
  %v1674 = vunpack.c.h.b16 %v345
  %v1675 = vunpack.c.l.b16 %v346
  %v1676 = vunpack.c.h.b16 %v346
  %v1677 = vunpack.c.l.b16 %v347
  %v1678 = vunpack.c.h.b16 %v347
  %v1679 = vunpack.c.l.b16 %v348
  %v1680 = vunpack.c.h.b16 %v348
  %v1681 = vunpack.c.l.b16 %v349
  %v1682 = vunpack.c.h.b16 %v349
  %v1683 = vunpack.c.l.b16 %v350
  %v1684 = vunpack.c.h.b16 %v350
  %v1685 = vunpack.c.l.b16 %v351
  %v1686 = vunpack.c.h.b16 %v351
  %v1687 = vunpack.c.l.b16 %v352
  %v1688 = vunpack.c.h.b16 %v352
  %v1689 = vunpack.c.l.b16 %v353
  %v1690 = vunpack.c.h.b16 %v353
  %v1691 = vunpack.c.l.b16 %v354
  %v1692 = vunpack.c.h.b16 %v354
  %v1693 = vunpack.c.l.b16 %v355
  %v1694 = vunpack.c.h.b16 %v355
  %v1695 = vunpack.c.l.b16 %v356
  %v1696 = vunpack.c.h.b16 %v356
  %v1697 = vunpack.c.l.b16 %v357
  %v1698 = vunpack.c.h.b16 %v357
  %v1699 = vunpack.c.l.b16 %v358
  %v1700 = vunpack.c.h.b16 %v358
  %v1701 = vunpack.c.l.b16 %v359
  %v1702 = vunpack.c.h.b16 %v359
  %v1703 = vunpack.c.l.b16 %v360
  %v1704 = vunpack.c.h.b16 %v360
  %v1705 = vunpack.c.l.b16 %v361
  %v1706 = vunpack.c.h.b16 %v361
  %v1707 = vunpack.c.l.b16 %v362
  %v1708 = vunpack.c.h.b16 %v362
  %v1709 = vunpack.c.l.b16 %v363
  %v1710 = vunpack.c.h.b16 %v363
  %v1711 = vunpack.c.l.b16 %v364
  %v1712 = vunpack.c.h.b16 %v364
  %v1713 = vunpack.c.l.b16 %v365
  %v1714 = vunpack.c.h.b16 %v365
  %v1715 = vunpack.c.l.b16 %v366
  %v1716 = vunpack.c.h.b16 %v366
  %v1717 = vunpack.c.l.b16 %v367
  %v1718 = vunpack.c.h.b16 %v367
  %v1719 = vunpack.c.l.b16 %v368
  %v1720 = vunpack.c.h.b16 %v368
  %v1721 = vunpack.c.l.b16 %v369
  %v1722 = vunpack.c.h.b16 %v369
  %v1723 = vunpack.c.l.b16 %v370
  %v1724 = vunpack.c.h.b16 %v370
  %v1725 = vunpack.c.l.b16 %v371
  %v1726 = vunpack.c.h.b16 %v371
  %v1727 = vunpack.c.l.b16 %v372
  %v1728 = vunpack.c.h.b16 %v372
  %v1729 = vunpack.c.l.b16 %v373
  %v1730 = vunpack.c.h.b16 %v373
  %v1731 = vunpack.c.l.b16 %v374
  %v1732 = vunpack.c.h.b16 %v374
  %v1733 = vunpack.c.l.b16 %v375
  %v1734 = vunpack.c.h.b16 %v375
  %v1735 = vunpack.c.l.b16 %v376
  %v1736 = vunpack.c.h.b16 %v376
  %v1737 = vunpack.c.l.b16 %v377
  %v1738 = vunpack.c.h.b16 %v377
  %v1739 = vunpack.c.l.b16 %v378
  %v1740 = vunpack.c.h.b16 %v378
  %v1741 = vunpack.c.l.b16 %v379
  %v1742 = vunpack.c.h.b16 %v379
  %v1743 = vunpack.c.l.b16 %v380
  %v1744 = vunpack.c.h.b16 %v380
  %v1745 = vunpack.c.l.b16 %v381
  %v1746 = vunpack.c.h.b16 %v381
  %v1747 = vunpack.c.l.b16 %v382
  %v1748 = vunpack.c.h.b16 %v382
  %v1749 = vunpack.c.l.b16 %v383
  %v1750 = vunpack.c.h.b16 %v383
  %v1751 = vunpack.c.l.b16 %v384
  %v1752 = vunpack.c.h.b16 %v384
  %v1753 = vunpack.c.l.b16 %v385
  %v1754 = vunpack.c.h.b16 %v385
  %v1755 = vunpack.c.l.b16 %v386
  %v1756 = vunpack.c.h.b16 %v386
  %v1757 = vunpack.c.l.b16 %v387
  %v1758 = vunpack.c.h.b16 %v387
  %v1759 = vunpack.c.l.b16 %v388
  %v1760 = vunpack.c.h.b16 %v388
  %v1761 = vunpack.c.l.b16 %v389
  %v1762 = vunpack.c.h.b16 %v389
  %v1763 = vunpack.c.l.b16 %v390
  %v1764 = vunpack.c.h.b16 %v390
  %v1765 = vunpack.c.l.b16 %v391
  %v1766 = vunpack.c.h.b16 %v391
  %v1767 = vunpack.c.l.b16 %v392
  %v1768 = vunpack.c.h.b16 %v392
  %v1769 = vunpack.c.l.b16 %v393
  %v1770 = vunpack.c.h.b16 %v393
  %v1771 = vunpack.c.l.b16 %v394
  %v1772 = vunpack.c.h.b16 %v394
  %v1773 = vunpack.c.l.b16 %v395
  %v1774 = vunpack.c.h.b16 %v395
  %v1775 = vunpack.c.l.b16 %v396
  %v1776 = vunpack.c.h.b16 %v396
  %v1777 = vunpack.c.l.b16 %v397
  %v1778 = vunpack.c.h.b16 %v397
  %v1779 = vunpack.c.l.b16 %v398
  %v1780 = vunpack.c.h.b16 %v398
  %v1781 = vunpack.c.l.b16 %v399
  %v1782 = vunpack.c.h.b16 %v399
  %v1783 = vunpack.c.l.b16 %v400
  %v1784 = vunpack.c.h.b16 %v400
  %v1785 = vunpack.c.l.b16 %v401
  %v1786 = vunpack.c.h.b16 %v401
  %v1787 = vunpack.c.l.b16 %v402
  %v1788 = vunpack.c.h.b16 %v402
  %v1789 = vunpack.c.l.b16 %v403
  %v1790 = vunpack.c.h.b16 %v403
  %v1791 = vunpack.c.l.b16 %v404
  %v1792 = vunpack.c.h.b16 %v404
  %v1793 = vunpack.c.l.b16 %v405
  %v1794 = vunpack.c.h.b16 %v405
  %v1795 = vunpack.c.l.b16 %v406
  %v1796 = vunpack.c.h.b16 %v406
  %v1797 = vunpack.c.l.b16 %v407
  %v1798 = vunpack.c.h.b16 %v407
  %v1799 = vunpack.c.l.b16 %v408
  %v1800 = vunpack.c.h.b16 %v408
  %v1801 = vunpack.c.l.b16 %v409
  %v1802 = vunpack.c.h.b16 %v409
  %v1803 = vunpack.c.l.b16 %v410
  %v1804 = vunpack.c.h.b16 %v410
  %v1805 = vunpack.c.l.b16 %v411
  %v1806 = vunpack.c.h.b16 %v411
  %v1807 = vunpack.c.l.b16 %v412
  %v1808 = vunpack.c.h.b16 %v412
  %v1809 = vunpack.c.l.b16 %v413
  %v1810 = vunpack.c.h.b16 %v413
  %v1811 = vunpack.c.l.b16 %v414
  %v1812 = vunpack.c.h.b16 %v414
  %v1813 = vunpack.c.l.b16 %v415
  %v1814 = vunpack.c.h.b16 %v415
  %v1815 = vunpack.c.l.b16 %v416
  %v1816 = vunpack.c.h.b16 %v416
  %v1817 = vunpack.c.l.b16 %v417
  %v1818 = vunpack.c.h.b16 %v417
  %v1819 = vunpack.c.l.b16 %v418
  %v1820 = vunpack.c.h.b16 %v418
  %v1821 = vunpack.c.l.b16 %v419
  %v1822 = vunpack.c.h.b16 %v419
  %v1823 = vunpack.c.l.b16 %v420
  %v1824 = vunpack.c.h.b16 %v420
  %v1825 = vunpack.c.l.b16 %v421
  %v1826 = vunpack.c.h.b16 %v421
  %v1827 = vunpack.c.l.b16 %v422
  %v1828 = vunpack.c.h.b16 %v422
  %v1829 = vunpack.c.l.b16 %v423
  %v1830 = vunpack.c.h.b16 %v423
  %v1831 = vunpack.c.l.b16 %v424
  %v1832 = vunpack.c.h.b16 %v424
  %v1833 = vunpack.c.l.b16 %v425
  %v1834 = vunpack.c.h.b16 %v425
  %v1835 = vunpack.c.l.b16 %v426
  %v1836 = vunpack.c.h.b16 %v426
  %v1837 = vunpack.c.l.b16 %v427
  %v1838 = vunpack.c.h.b16 %v427
  %v1839 = vunpack.c.l.b16 %v428
  %v1840 = vunpack.c.h.b16 %v428
  %v1841 = vunpack.c.l.b16 %v429
  %v1842 = vunpack.c.h.b16 %v429
  %v1843 = vunpack.c.l.b16 %v430
  %v1844 = vunpack.c.h.b16 %v430
  %v1845 = vunpack.c.l.b16 %v431
  %v1846 = vunpack.c.h.b16 %v431
  %v1847 = vunpack.c.l.b16 %v432
  %v1848 = vunpack.c.h.b16 %v432
  %v1849 = vunpack.c.l.b16 %v433
  %v1850 = vunpack.c.h.b16 %v433
  %v1851 = vunpack.c.l.b16 %v434
  %v1852 = vunpack.c.h.b16 %v434
  %v1853 = vunpack.c.l.b16 %v435
  %v1854 = vunpack.c.h.b16 %v435
  %v1855 = vunpack.c.l.b16 %v436
  %v1856 = vunpack.c.h.b16 %v436
  %v1857 = vunpack.c.l.b16 %v437
  %v1858 = vunpack.c.h.b16 %v437
  %v1859 = vunpack.c.l.b16 %v438
  %v1860 = vunpack.c.h.b16 %v438
  %v1861 = vunpack.c.l.b16 %v439
  %v1862 = vunpack.c.h.b16 %v439
  %v1863 = vunpack.c.l.b16 %v440
  %v1864 = vunpack.c.h.b16 %v440
  %v1865 = vunpack.c.l.b16 %v441
  %v1866 = vunpack.c.h.b16 %v441
  %v1867 = vunpack.c.l.b16 %v442
  %v1868 = vunpack.c.h.b16 %v442
  %v1869 = vunpack.c.l.b16 %v443
  %v1870 = vunpack.c.h.b16 %v443
  %v1871 = vunpack.c.l.b16 %v444
  %v1872 = vunpack.c.h.b16 %v444
  %v1873 = vunpack.c.l.b16 %v445
  %v1874 = vunpack.c.h.b16 %v445
  %v1875 = vunpack.c.l.b16 %v446
  %v1876 = vunpack.c.h.b16 %v446
  %v1877 = vunpack.c.l.b16 %v447
  %v1878 = vunpack.c.h.b16 %v447
  %v1879 = vunpack.c.l.b16 %v448
  %v1880 = vunpack.c.h.b16 %v448
  %v1881 = vunpack.c.l.b16 %v449
  %v1882 = vunpack.c.h.b16 %v449
  %v1883 = vunpack.c.l.b16 %v450
  %v1884 = vunpack.c.h.b16 %v450
  %v1885 = vunpack.c.l.b16 %v451
  %v1886 = vunpack.c.h.b16 %v451
  %v1887 = vunpack.c.l.b16 %v452
  %v1888 = vunpack.c.h.b16 %v452
  %v1889 = vunpack.c.l.b16 %v453
  %v1890 = vunpack.c.h.b16 %v453
  %v1891 = vunpack.c.l.b16 %v454
  %v1892 = vunpack.c.h.b16 %v454
  %v1893 = vunpack.c.l.b16 %v455
  %v1894 = vunpack.c.h.b16 %v455
  %v1895 = vunpack.c.l.b16 %v456
  %v1896 = vunpack.c.h.b16 %v456
  %v1897 = vunpack.c.l.b16 %v457
  %v1898 = vunpack.c.h.b16 %v457
  %v1899 = vunpack.c.l.b16 %v458
  %v1900 = vunpack.c.h.b16 %v458
  %v1901 = vunpack.c.l.b16 %v459
  %v1902 = vunpack.c.h.b16 %v459
  %v1903 = vunpack.c.l.b16 %v460
  %v1904 = vunpack.c.h.b16 %v460
  %v1905 = vunpack.c.l.b16 %v461
  %v1906 = vunpack.c.h.b16 %v461
  %v1907 = vunpack.c.l.b16 %v462
  %v1908 = vunpack.c.h.b16 %v462
  %v1909 = vunpack.c.l.b16 %v463
  %v1910 = vunpack.c.h.b16 %v463
  %v1911 = vunpack.c.l.b16 %v464
  %v1912 = vunpack.c.h.b16 %v464
  %v1913 = vunpack.c.l.b16 %v465
  %v1914 = vunpack.c.h.b16 %v465
  %v1915 = vunpack.c.l.b16 %v466
  %v1916 = vunpack.c.h.b16 %v466
  %v1917 = vunpack.c.l.b16 %v467
  %v1918 = vunpack.c.h.b16 %v467
  %v1919 = vunpack.c.l.b16 %v468
  %v1920 = vunpack.c.h.b16 %v468
  %v1921 = vunpack.c.l.b16 %v469
  %v1922 = vunpack.c.h.b16 %v469
  %v1923 = vunpack.c.l.b16 %v470
  %v1924 = vunpack.c.h.b16 %v470
  %v1925 = vunpack.c.l.b16 %v471
  %v1926 = vunpack.c.h.b16 %v471
  %v1927 = vunpack.c.l.b16 %v472
  %v1928 = vunpack.c.h.b16 %v472
  %v1929 = vunpack.c.l.b16 %v473
  %v1930 = vunpack.c.h.b16 %v473
  %v1931 = vunpack.c.l.b16 %v474
  %v1932 = vunpack.c.h.b16 %v474
  %v1933 = vunpack.c.l.b16 %v475
  %v1934 = vunpack.c.h.b16 %v475
  %v1935 = vunpack.c.l.b16 %v476
  %v1936 = vunpack.c.h.b16 %v476
  %v1937 = vunpack.c.l.b16 %v477
  %v1938 = vunpack.c.h.b16 %v477
  %v1939 = vunpack.c.l.b16 %v478
  %v1940 = vunpack.c.h.b16 %v478
  %v1941 = vunpack.c.l.b16 %v479
  %v1942 = vunpack.c.h.b16 %v479
  %v1943 = vunpack.c.l.b16 %v480
  %v1944 = vunpack.c.h.b16 %v480
  %v1945 = vunpack.c.l.b16 %v481
  %v1946 = vunpack.c.h.b16 %v481
  %v1947 = vunpack.c.l.b16 %v482
  %v1948 = vunpack.c.h.b16 %v482
  %v1949 = vunpack.c.l.b16 %v483
  %v1950 = vunpack.c.h.b16 %v483
  %v1951 = vunpack.c.l.b16 %v484
  %v1952 = vunpack.c.h.b16 %v484
  %v1953 = vunpack.c.l.b16 %v485
  %v1954 = vunpack.c.h.b16 %v485
  %v1955 = vunpack.c.l.b16 %v486
  %v1956 = vunpack.c.h.b16 %v486
  %v1957 = vunpack.c.l.b16 %v487
  %v1958 = vunpack.c.h.b16 %v487
  %v1959 = vunpack.c.l.b16 %v488
  %v1960 = vunpack.c.h.b16 %v488
  %v1961 = vunpack.c.l.b16 %v489
  %v1962 = vunpack.c.h.b16 %v489
  %v1963 = vunpack.c.l.b16 %v490
  %v1964 = vunpack.c.h.b16 %v490
  %v1965 = vunpack.c.l.b16 %v491
  %v1966 = vunpack.c.h.b16 %v491
  %v1967 = vunpack.c.l.b16 %v492
  %v1968 = vunpack.c.h.b16 %v492
  %v1969 = vunpack.c.l.b16 %v493
  %v1970 = vunpack.c.h.b16 %v493
  %v1971 = vunpack.c.l.b16 %v494
  %v1972 = vunpack.c.h.b16 %v494
  %v1973 = vunpack.c.l.b16 %v495
  %v1974 = vunpack.c.h.b16 %v495
  %v1975 = vunpack.c.l.b16 %v496
  %v1976 = vunpack.c.h.b16 %v496
  %v1977 = vunpack.c.l.b16 %v497
  %v1978 = vunpack.c.h.b16 %v497
  %v1979 = vunpack.c.l.b16 %v498
  %v1980 = vunpack.c.h.b16 %v498
  %v1981 = vunpack.c.l.b16 %v499
  %v1982 = vunpack.c.h.b16 %v499
  %v1983 = vunpack.c.l.b16 %v500
  %v1984 = vunpack.c.h.b16 %v500
  %v1985 = vunpack.c.l.b16 %v501
  %v1986 = vunpack.c.h.b16 %v501
  %v1987 = vunpack.c.l.b16 %v502
  %v1988 = vunpack.c.h.b16 %v502
  %v1989 = vunpack.c.l.b16 %v503
  %v1990 = vunpack.c.h.b16 %v503
  %v1991 = vunpack.c.l.b16 %v504
  %v1992 = vunpack.c.h.b16 %v504
  %v1993 = vunpack.c.l.b16 %v505
  %v1994 = vunpack.c.h.b16 %v505
  %v1995 = vunpack.c.l.b16 %v506
  %v1996 = vunpack.c.h.b16 %v506
  %v1997 = vunpack.c.l.b16 %v507
  %v1998 = vunpack.c.h.b16 %v507
  %v1999 = vunpack.c.l.b16 %v508
  %v2000 = vunpack.c.h.b16 %v508
  %v2001 = vunpack.c.l.b16 %v509
  %v2002 = vunpack.c.h.b16 %v509
  %v2003 = vunpack.c.l.b16 %v510
  %v2004 = vunpack.c.h.b16 %v510
  %v2005 = vunpack.c.l.b16 %v511
  %v2006 = vunpack.c.h.b16 %v511
  %v2007 = vunpack.c.l.b16 %v512
  %v2008 = vunpack.c.h.b16 %v512
  %v2009 = vunpack.c.l.b16 %v513
  %v2010 = vunpack.c.h.b16 %v513
  %v2011 = vunpack.c.l.b16 %v514
  %v2012 = vunpack.c.h.b16 %v514
  %v2013 = vunpack.c.l.b16 %v515
  %v2014 = vunpack.c.h.b16 %v515
  %v2015 = vunpack.c.l.b16 %v516
  %v2016 = vunpack.c.h.b16 %v516
  %v2017 = vunpack.c.l.b16 %v517
  %v2018 = vunpack.c.h.b16 %v517
  %v2019 = vunpack.c.l.b16 %v518
  %v2020 = vunpack.c.h.b16 %v518
  %v2021 = vunpack.c.l.b16 %v519
  %v2022 = vunpack.c.h.b16 %v519
  %v2023 = vunpack.c.l.b16 %v520
  %v2024 = vunpack.c.h.b16 %v520
  %v2025 = vunpack.c.l.b16 %v521
  %v2026 = vunpack.c.h.b16 %v521
  %v2027 = vunpack.c.l.b16 %v522
  %v2028 = vunpack.c.h.b16 %v522
  %v2029 = vunpack.c.l.b16 %v523
  %v2030 = vunpack.c.h.b16 %v523
  %v2031 = vunpack.c.l.b16 %v524
  %v2032 = vunpack.c.h.b16 %v524
  %v2033 = vunpack.c.l.b16 %v525
  %v2034 = vunpack.c.h.b16 %v525
  %v2035 = vunpack.c.l.b16 %v526
  %v2036 = vunpack.c.h.b16 %v526
  %v2037 = vunpack.c.l.b16 %v527
  %v2038 = vunpack.c.h.b16 %v527
  %v2039 = vunpack.c.l.b16 %v528
  %v2040 = vunpack.c.h.b16 %v528
  %v2041 = vunpack.c.l.b16 %v529
  %v2042 = vunpack.c.h.b16 %v529
  %v2043 = vunpack.c.l.b16 %v530
  %v2044 = vunpack.c.h.b16 %v530
  %v2045 = vunpack.c.l.b16 %v531
  %v2046 = vunpack.c.h.b16 %v531
  %v2047 = vunpack.c.l.b16 %v532
  %v2048 = vunpack.c.h.b16 %v532
  %v2049 = vunpack.c.l.b16 %v533
  %v2050 = vunpack.c.h.b16 %v533
  %v2051 = vunpack.c.l.b16 %v534
  %v2052 = vunpack.c.h.b16 %v534
  %v2053 = vunpack.c.l.b16 %v535
  %v2054 = vunpack.c.h.b16 %v535
  %v2055 = vunpack.c.l.b16 %v536
  %v2056 = vunpack.c.h.b16 %v536
  %v2057 = vunpack.c.l.b16 %v537
  %v2058 = vunpack.c.h.b16 %v537
  %v2059 = vunpack.c.l.b16 %v538
  %v2060 = vunpack.c.h.b16 %v538
  %v2061 = vunpack.c.l.b16 %v539
  %v2062 = vunpack.c.h.b16 %v539
  %v2063 = vunpack.c.l.b16 %v540
  %v2064 = vunpack.c.h.b16 %v540
  %v2065 = vunpack.c.l.b16 %v541
  %v2066 = vunpack.c.h.b16 %v541
  %v2067 = vunpack.c.l.b16 %v542
  %v2068 = vunpack.c.h.b16 %v542
  %v2069 = vunpack.c.l.b16 %v543
  %v2070 = vunpack.c.h.b16 %v543
  %v2071 = vunpack.c.l.b16 %v544
  %v2072 = vunpack.c.h.b16 %v544
  %v2073 = vunpack.c.l.b16 %v545
  %v2074 = vunpack.c.h.b16 %v545
  %v2075 = vunpack.c.l.b16 %v546
  %v2076 = vunpack.c.h.b16 %v546
  %v2077 = vunpack.c.l.b16 %v547
  %v2078 = vunpack.c.h.b16 %v547
  %v2079 = vunpack.c.l.b16 %v548
  %v2080 = vunpack.c.h.b16 %v548
  %v2081 = vunpack.c.l.b16 %v549
  %v2082 = vunpack.c.h.b16 %v549
  %v2083 = vunpack.c.l.b16 %v550
  %v2084 = vunpack.c.h.b16 %v550
  %v2085 = vunpack.c.l.b16 %v551
  %v2086 = vunpack.c.h.b16 %v551
  %v2087 = vunpack.c.l.b16 %v552
  %v2088 = vunpack.c.h.b16 %v552
  %v2089 = vunpack.c.l.b16 %v553
  %v2090 = vunpack.c.h.b16 %v553
  %v2091 = vunpack.c.l.b16 %v554
  %v2092 = vunpack.c.h.b16 %v554
  %v2093 = vunpack.c.l.b16 %v555
  %v2094 = vunpack.c.h.b16 %v555
  %v2095 = vunpack.c.l.b16 %v556
  %v2096 = vunpack.c.h.b16 %v556
  %v2097 = vunpack.c.l.b16 %v557
  %v2098 = vunpack.c.h.b16 %v557
  %v2099 = vunpack.c.l.b16 %v558
  %v2100 = vunpack.c.h.b16 %v558
  %v2101 = vunpack.c.l.b16 %v559
  %v2102 = vunpack.c.h.b16 %v559
  %v2103 = vunpack.c.l.b16 %v560
  %v2104 = vunpack.c.h.b16 %v560
  %v2105 = vunpack.c.l.b16 %v561
  %v2106 = vunpack.c.h.b16 %v561
  %v2107 = vunpack.c.l.b16 %v562
  %v2108 = vunpack.c.h.b16 %v562
  %v2109 = vunpack.c.l.b16 %v563
  %v2110 = vunpack.c.h.b16 %v563
  %v2111 = vunpack.c.l.b16 %v564
  %v2112 = vunpack.c.h.b16 %v564
  %v2113 = vunpack.c.l.b16 %v565
  %v2114 = vunpack.c.h.b16 %v565
  %v2115 = vunpack.c.l.b16 %v566
  %v2116 = vunpack.c.h.b16 %v566
  %v2117 = vunpack.c.l.b16 %v567
  %v2118 = vunpack.c.h.b16 %v567
  %v2119 = vunpack.c.l.b16 %v568
  %v2120 = vunpack.c.h.b16 %v568
  %v2121 = vunpack.c.l.b16 %v569
  %v2122 = vunpack.c.h.b16 %v569
  %v2123 = vunpack.c.l.b16 %v570
  %v2124 = vunpack.c.h.b16 %v570
  %v2125 = vunpack.c.l.b16 %v571
  %v2126 = vunpack.c.h.b16 %v571
  %v2127 = vunpack.c.l.b16 %v572
  %v2128 = vunpack.c.h.b16 %v572
  %v2129 = vunpack.c.l.b16 %v573
  %v2130 = vunpack.c.h.b16 %v573
  %v2131 = vunpack.c.l.b16 %v574
  %v2132 = vunpack.c.h.b16 %v574
  %v2133 = vunpack.c.l.b16 %v575
  %v2134 = vunpack.c.h.b16 %v575
  %v2135 = vunpack.c.l.b16 %v576
  %v2136 = vunpack.c.h.b16 %v576
  %v2137 = vunpack.c.l.b16 %v577
  %v2138 = vunpack.c.h.b16 %v577
  %v2139 = vunpack.c.l.b16 %v578
  %v2140 = vunpack.c.h.b16 %v578
  %v2141 = vunpack.c.l.b16 %v579
  %v2142 = vunpack.c.h.b16 %v579
  %v2143 = vunpack.c.l.b16 %v580
  %v2144 = vunpack.c.h.b16 %v580
  %v2145 = vunpack.c.l.b16 %v581
  %v2146 = vunpack.c.h.b16 %v581
  %v2147 = vunpack.c.l.b16 %v582
  %v2148 = vunpack.c.h.b16 %v582
  %v2149 = vunpack.c.l.b16 %v583
  %v2150 = vunpack.c.h.b16 %v583
  %v2151 = vunpack.c.l.b16 %v584
  %v2152 = vunpack.c.h.b16 %v584
  %v2153 = vunpack.c.l.b16 %v585
  %v2154 = vunpack.c.h.b16 %v585
  %v2155 = vunpack.c.l.b16 %v586
  %v2156 = vunpack.c.h.b16 %v586
  %v2157 = vunpack.c.l.b16 %v587
  %v2158 = vunpack.c.h.b16 %v587
  %v2159 = vunpack.c.l.b16 %v588
  %v2160 = vunpack.c.h.b16 %v588
  %v2161 = vunpack.c.l.b16 %v589
  %v2162 = vunpack.c.h.b16 %v589
  %v2163 = vunpack.c.l.b16 %v590
  %v2164 = vunpack.c.h.b16 %v590
  %v2165 = vunpack.c.l.b16 %v591
  %v2166 = vunpack.c.h.b16 %v591
  %v2167 = vunpack.c.l.b16 %v592
  %v2168 = vunpack.c.h.b16 %v592
  %v2169 = vunpack.c.l.b16 %v593
  %v2170 = vunpack.c.h.b16 %v593
  %v2171 = vunpack.c.l.b16 %v594
  %v2172 = vunpack.c.h.b16 %v594
  %v2173 = vpack.c.b16 %v1157, %v1149
  %v2174 = vpack.c.b16 %v1158, %v1150
  %v2175 = vpack.c.b16 %v1159, %v1151
  %v2176 = vpack.c.b16 %v1160, %v1152
  %v2177 = vpack.c.b16 %v1161, %v1153
  %v2178 = vpack.c.b16 %v1162, %v1154
  %v2179 = vpack.c.b16 %v1163, %v1155
  %v2180 = vpack.c.b16 %v1164, %v1156
  %v2181 = vpack.c.b16 %v1173, %v1165
  %v2182 = vpack.c.b16 %v1174, %v1166
  %v2183 = vpack.c.b16 %v1175, %v1167
  %v2184 = vpack.c.b16 %v1176, %v1168
  %v2185 = vpack.c.b16 %v1177, %v1169
  %v2186 = vpack.c.b16 %v1178, %v1170
  %v2187 = vpack.c.b16 %v1179, %v1171
  %v2188 = vpack.c.b16 %v1180, %v1172
  %v2189 = vpack.c.b16 %v1189, %v1181
  %v2190 = vpack.c.b16 %v1190, %v1182
  %v2191 = vpack.c.b16 %v1191, %v1183
  %v2192 = vpack.c.b16 %v1192, %v1184
  %v2193 = vpack.c.b16 %v1193, %v1185
  %v2194 = vpack.c.b16 %v1194, %v1186
  %v2195 = vpack.c.b16 %v1195, %v1187
  %v2196 = vpack.c.b16 %v1196, %v1188
  %v2197 = vpack.c.b16 %v1205, %v1197
  %v2198 = vpack.c.b16 %v1206, %v1198
  %v2199 = vpack.c.b16 %v1207, %v1199
  %v2200 = vpack.c.b16 %v1208, %v1200
  %v2201 = vpack.c.b16 %v1209, %v1201
  %v2202 = vpack.c.b16 %v1210, %v1202
  %v2203 = vpack.c.b16 %v1211, %v1203
  %v2204 = vpack.c.b16 %v1212, %v1204
  %v2205 = vpack.c.b16 %v1221, %v1213
  %v2206 = vpack.c.b16 %v1222, %v1214
  %v2207 = vpack.c.b16 %v1223, %v1215
  %v2208 = vpack.c.b16 %v1224, %v1216
  %v2209 = vpack.c.b16 %v1225, %v1217
  %v2210 = vpack.c.b16 %v1226, %v1218
  %v2211 = vpack.c.b16 %v1227, %v1219
  %v2212 = vpack.c.b16 %v1228, %v1220
  %v2213 = vpack.c.b16 %v1237, %v1229
  %v2214 = vpack.c.b16 %v1238, %v1230
  %v2215 = vpack.c.b16 %v1239, %v1231
  %v2216 = vpack.c.b16 %v1240, %v1232
  %v2217 = vpack.c.b16 %v1241, %v1233
  %v2218 = vpack.c.b16 %v1242, %v1234
  %v2219 = vpack.c.b16 %v1243, %v1235
  %v2220 = vpack.c.b16 %v1244, %v1236
  %v2221 = vpack.c.b16 %v1253, %v1245
  %v2222 = vpack.c.b16 %v1254, %v1246
  %v2223 = vpack.c.b16 %v1255, %v1247
  %v2224 = vpack.c.b16 %v1256, %v1248
  %v2225 = vpack.c.b16 %v1257, %v1249
  %v2226 = vpack.c.b16 %v1258, %v1250
  %v2227 = vpack.c.b16 %v1259, %v1251
  %v2228 = vpack.c.b16 %v1260, %v1252
  %v2229 = vpack.c.b16 %v1269, %v1261
  %v2230 = vpack.c.b16 %v1270, %v1262
  %v2231 = vpack.c.b16 %v1271, %v1263
  %v2232 = vpack.c.b16 %v1272, %v1264
  %v2233 = vpack.c.b16 %v1273, %v1265
  %v2234 = vpack.c.b16 %v1274, %v1266
  %v2235 = vpack.c.b16 %v1275, %v1267
  %v2236 = vpack.c.b16 %v1276, %v1268
  %v2237 = vpack.c.b16 %v1285, %v1277
  %v2238 = vpack.c.b16 %v1286, %v1278
  %v2239 = vpack.c.b16 %v1287, %v1279
  %v2240 = vpack.c.b16 %v1288, %v1280
  %v2241 = vpack.c.b16 %v1289, %v1281
  %v2242 = vpack.c.b16 %v1290, %v1282
  %v2243 = vpack.c.b16 %v1291, %v1283
  %v2244 = vpack.c.b16 %v1292, %v1284
  %v2245 = vpack.c.b16 %v1301, %v1293
  %v2246 = vpack.c.b16 %v1302, %v1294
  %v2247 = vpack.c.b16 %v1303, %v1295
  %v2248 = vpack.c.b16 %v1304, %v1296
  %v2249 = vpack.c.b16 %v1305, %v1297
  %v2250 = vpack.c.b16 %v1306, %v1298
  %v2251 = vpack.c.b16 %v1307, %v1299
  %v2252 = vpack.c.b16 %v1308, %v1300
  %v2253 = vpack.c.b16 %v1317, %v1309
  %v2254 = vpack.c.b16 %v1318, %v1310
  %v2255 = vpack.c.b16 %v1319, %v1311
  %v2256 = vpack.c.b16 %v1320, %v1312
  %v2257 = vpack.c.b16 %v1321, %v1313
  %v2258 = vpack.c.b16 %v1322, %v1314
  %v2259 = vpack.c.b16 %v1323, %v1315
  %v2260 = vpack.c.b16 %v1324, %v1316
  %v2261 = vpack.c.b16 %v1333, %v1325
  %v2262 = vpack.c.b16 %v1334, %v1326
  %v2263 = vpack.c.b16 %v1335, %v1327
  %v2264 = vpack.c.b16 %v1336, %v1328
  %v2265 = vpack.c.b16 %v1337, %v1329
  %v2266 = vpack.c.b16 %v1338, %v1330
  %v2267 = vpack.c.b16 %v1339, %v1331
  %v2268 = vpack.c.b16 %v1340, %v1332
  %v2269 = vpack.c.b16 %v1349, %v1341
  %v2270 = vpack.c.b16 %v1350, %v1342
  %v2271 = vpack.c.b16 %v1351, %v1343
  %v2272 = vpack.c.b16 %v1352, %v1344
  %v2273 = vpack.c.b16 %v1353, %v1345
  %v2274 = vpack.c.b16 %v1354, %v1346
  %v2275 = vpack.c.b16 %v1355, %v1347
  %v2276 = vpack.c.b16 %v1356, %v1348
  %v2277 = vpack.c.b16 %v1365, %v1357
  %v2278 = vpack.c.b16 %v1366, %v1358
  %v2279 = vpack.c.b16 %v1367, %v1359
  %v2280 = vpack.c.b16 %v1368, %v1360
  %v2281 = vpack.c.b16 %v1369, %v1361
  %v2282 = vpack.c.b16 %v1370, %v1362
  %v2283 = vpack.c.b16 %v1371, %v1363
  %v2284 = vpack.c.b16 %v1372, %v1364
  %v2285 = vpack.c.b16 %v1381, %v1373
  %v2286 = vpack.c.b16 %v1382, %v1374
  %v2287 = vpack.c.b16 %v1383, %v1375
  %v2288 = vpack.c.b16 %v1384, %v1376
  %v2289 = vpack.c.b16 %v1385, %v1377
  %v2290 = vpack.c.b16 %v1386, %v1378
  %v2291 = vpack.c.b16 %v1387, %v1379
  %v2292 = vpack.c.b16 %v1388, %v1380
  %v2293 = vpack.c.b16 %v1397, %v1389
  %v2294 = vpack.c.b16 %v1398, %v1390
  %v2295 = vpack.c.b16 %v1399, %v1391
  %v2296 = vpack.c.b16 %v1400, %v1392
  %v2297 = vpack.c.b16 %v1401, %v1393
  %v2298 = vpack.c.b16 %v1402, %v1394
  %v2299 = vpack.c.b16 %v1403, %v1395
  %v2300 = vpack.c.b16 %v1404, %v1396
  %v2301 = vpack.c.b16 %v1413, %v1405
  %v2302 = vpack.c.b16 %v1414, %v1406
  %v2303 = vpack.c.b16 %v1415, %v1407
  %v2304 = vpack.c.b16 %v1416, %v1408
  %v2305 = vpack.c.b16 %v1417, %v1409
  %v2306 = vpack.c.b16 %v1418, %v1410
  %v2307 = vpack.c.b16 %v1419, %v1411
  %v2308 = vpack.c.b16 %v1420, %v1412
  %v2309 = vpack.c.b16 %v1429, %v1421
  %v2310 = vpack.c.b16 %v1430, %v1422
  %v2311 = vpack.c.b16 %v1431, %v1423
  %v2312 = vpack.c.b16 %v1432, %v1424
  %v2313 = vpack.c.b16 %v1433, %v1425
  %v2314 = vpack.c.b16 %v1434, %v1426
  %v2315 = vpack.c.b16 %v1435, %v1427
  %v2316 = vpack.c.b16 %v1436, %v1428
  %v2317 = vpack.c.b16 %v1445, %v1437
  %v2318 = vpack.c.b16 %v1446, %v1438
  %v2319 = vpack.c.b16 %v1447, %v1439
  %v2320 = vpack.c.b16 %v1448, %v1440
  %v2321 = vpack.c.b16 %v1449, %v1441
  %v2322 = vpack.c.b16 %v1450, %v1442
  %v2323 = vpack.c.b16 %v1451, %v1443
  %v2324 = vpack.c.b16 %v1452, %v1444
  %v2325 = vpack.c.b16 %v1461, %v1453
  %v2326 = vpack.c.b16 %v1462, %v1454
  %v2327 = vpack.c.b16 %v1463, %v1455
  %v2328 = vpack.c.b16 %v1464, %v1456
  %v2329 = vpack.c.b16 %v1465, %v1457
  %v2330 = vpack.c.b16 %v1466, %v1458
  %v2331 = vpack.c.b16 %v1467, %v1459
  %v2332 = vpack.c.b16 %v1468, %v1460
  %v2333 = vpack.c.b16 %v1477, %v1469
  %v2334 = vpack.c.b16 %v1478, %v1470
  %v2335 = vpack.c.b16 %v1479, %v1471
  %v2336 = vpack.c.b16 %v1480, %v1472
  %v2337 = vpack.c.b16 %v1481, %v1473
  %v2338 = vpack.c.b16 %v1482, %v1474
  %v2339 = vpack.c.b16 %v1483, %v1475
  %v2340 = vpack.c.b16 %v1484, %v1476
  %v2341 = vpack.c.b16 %v1493, %v1485
  %v2342 = vpack.c.b16 %v1494, %v1486
  %v2343 = vpack.c.b16 %v1495, %v1487
  %v2344 = vpack.c.b16 %v1496, %v1488
  %v2345 = vpack.c.b16 %v1497, %v1489
  %v2346 = vpack.c.b16 %v1498, %v1490
  %v2347 = vpack.c.b16 %v1499, %v1491
  %v2348 = vpack.c.b16 %v1500, %v1492
  %v2349 = vpack.c.b16 %v1509, %v1501
  %v2350 = vpack.c.b16 %v1510, %v1502
  %v2351 = vpack.c.b16 %v1511, %v1503
  %v2352 = vpack.c.b16 %v1512, %v1504
  %v2353 = vpack.c.b16 %v1513, %v1505
  %v2354 = vpack.c.b16 %v1514, %v1506
  %v2355 = vpack.c.b16 %v1515, %v1507
  %v2356 = vpack.c.b16 %v1516, %v1508
  %v2357 = vpack.c.b16 %v1525, %v1517
  %v2358 = vpack.c.b16 %v1526, %v1518
  %v2359 = vpack.c.b16 %v1527, %v1519
  %v2360 = vpack.c.b16 %v1528, %v1520
  %v2361 = vpack.c.b16 %v1529, %v1521
  %v2362 = vpack.c.b16 %v1530, %v1522
  %v2363 = vpack.c.b16 %v1531, %v1523
  %v2364 = vpack.c.b16 %v1532, %v1524
  %v2365 = vpack.c.b16 %v1541, %v1533
  %v2366 = vpack.c.b16 %v1542, %v1534
  %v2367 = vpack.c.b16 %v1543, %v1535
  %v2368 = vpack.c.b16 %v1544, %v1536
  %v2369 = vpack.c.b16 %v1545, %v1537
  %v2370 = vpack.c.b16 %v1546, %v1538
  %v2371 = vpack.c.b16 %v1547, %v1539
  %v2372 = vpack.c.b16 %v1548, %v1540
  %v2373 = vpack.c.b16 %v1557, %v1549
  %v2374 = vpack.c.b16 %v1558, %v1550
  %v2375 = vpack.c.b16 %v1559, %v1551
  %v2376 = vpack.c.b16 %v1560, %v1552
  %v2377 = vpack.c.b16 %v1561, %v1553
  %v2378 = vpack.c.b16 %v1562, %v1554
  %v2379 = vpack.c.b16 %v1563, %v1555
  %v2380 = vpack.c.b16 %v1564, %v1556
  %v2381 = vpack.c.b16 %v1573, %v1565
  %v2382 = vpack.c.b16 %v1574, %v1566
  %v2383 = vpack.c.b16 %v1575, %v1567
  %v2384 = vpack.c.b16 %v1576, %v1568
  %v2385 = vpack.c.b16 %v1577, %v1569
  %v2386 = vpack.c.b16 %v1578, %v1570
  %v2387 = vpack.c.b16 %v1579, %v1571
  %v2388 = vpack.c.b16 %v1580, %v1572
  %v2389 = vpack.c.b16 %v1589, %v1581
  %v2390 = vpack.c.b16 %v1590, %v1582
  %v2391 = vpack.c.b16 %v1591, %v1583
  %v2392 = vpack.c.b16 %v1592, %v1584
  %v2393 = vpack.c.b16 %v1593, %v1585
  %v2394 = vpack.c.b16 %v1594, %v1586
  %v2395 = vpack.c.b16 %v1595, %v1587
  %v2396 = vpack.c.b16 %v1596, %v1588
  %v2397 = vpack.c.b16 %v1605, %v1597
  %v2398 = vpack.c.b16 %v1606, %v1598
  %v2399 = vpack.c.b16 %v1607, %v1599
  %v2400 = vpack.c.b16 %v1608, %v1600
  %v2401 = vpack.c.b16 %v1609, %v1601
  %v2402 = vpack.c.b16 %v1610, %v1602
  %v2403 = vpack.c.b16 %v1611, %v1603
  %v2404 = vpack.c.b16 %v1612, %v1604
  %v2405 = vpack.c.b16 %v1621, %v1613
  %v2406 = vpack.c.b16 %v1622, %v1614
  %v2407 = vpack.c.b16 %v1623, %v1615
  %v2408 = vpack.c.b16 %v1624, %v1616
  %v2409 = vpack.c.b16 %v1625, %v1617
  %v2410 = vpack.c.b16 %v1626, %v1618
  %v2411 = vpack.c.b16 %v1627, %v1619
  %v2412 = vpack.c.b16 %v1628, %v1620
  %v2413 = vpack.c.b16 %v1637, %v1629
  %v2414 = vpack.c.b16 %v1638, %v1630
  %v2415 = vpack.c.b16 %v1639, %v1631
  %v2416 = vpack.c.b16 %v1640, %v1632
  %v2417 = vpack.c.b16 %v1641, %v1633
  %v2418 = vpack.c.b16 %v1642, %v1634
  %v2419 = vpack.c.b16 %v1643, %v1635
  %v2420 = vpack.c.b16 %v1644, %v1636
  %v2421 = vpack.c.b16 %v1653, %v1645
  %v2422 = vpack.c.b16 %v1654, %v1646
  %v2423 = vpack.c.b16 %v1655, %v1647
  %v2424 = vpack.c.b16 %v1656, %v1648
  %v2425 = vpack.c.b16 %v1657, %v1649
  %v2426 = vpack.c.b16 %v1658, %v1650
  %v2427 = vpack.c.b16 %v1659, %v1651
  %v2428 = vpack.c.b16 %v1660, %v1652
  %v2429 = vpack.c.b16 %v1669, %v1661
  %v2430 = vpack.c.b16 %v1670, %v1662
  %v2431 = vpack.c.b16 %v1671, %v1663
  %v2432 = vpack.c.b16 %v1672, %v1664
  %v2433 = vpack.c.b16 %v1673, %v1665
  %v2434 = vpack.c.b16 %v1674, %v1666
  %v2435 = vpack.c.b16 %v1675, %v1667
  %v2436 = vpack.c.b16 %v1676, %v1668
  %v2437 = vpack.c.b16 %v1685, %v1677
  %v2438 = vpack.c.b16 %v1686, %v1678
  %v2439 = vpack.c.b16 %v1687, %v1679
  %v2440 = vpack.c.b16 %v1688, %v1680
  %v2441 = vpack.c.b16 %v1689, %v1681
  %v2442 = vpack.c.b16 %v1690, %v1682
  %v2443 = vpack.c.b16 %v1691, %v1683
  %v2444 = vpack.c.b16 %v1692, %v1684
  %v2445 = vpack.c.b16 %v1701, %v1693
  %v2446 = vpack.c.b16 %v1702, %v1694
  %v2447 = vpack.c.b16 %v1703, %v1695
  %v2448 = vpack.c.b16 %v1704, %v1696
  %v2449 = vpack.c.b16 %v1705, %v1697
  %v2450 = vpack.c.b16 %v1706, %v1698
  %v2451 = vpack.c.b16 %v1707, %v1699
  %v2452 = vpack.c.b16 %v1708, %v1700
  %v2453 = vpack.c.b16 %v1717, %v1709
  %v2454 = vpack.c.b16 %v1718, %v1710
  %v2455 = vpack.c.b16 %v1719, %v1711
  %v2456 = vpack.c.b16 %v1720, %v1712
  %v2457 = vpack.c.b16 %v1721, %v1713
  %v2458 = vpack.c.b16 %v1722, %v1714
  %v2459 = vpack.c.b16 %v1723, %v1715
  %v2460 = vpack.c.b16 %v1724, %v1716
  %v2461 = vpack.c.b16 %v1733, %v1725
  %v2462 = vpack.c.b16 %v1734, %v1726
  %v2463 = vpack.c.b16 %v1735, %v1727
  %v2464 = vpack.c.b16 %v1736, %v1728
  %v2465 = vpack.c.b16 %v1737, %v1729
  %v2466 = vpack.c.b16 %v1738, %v1730
  %v2467 = vpack.c.b16 %v1739, %v1731
  %v2468 = vpack.c.b16 %v1740, %v1732
  %v2469 = vpack.c.b16 %v1749, %v1741
  %v2470 = vpack.c.b16 %v1750, %v1742
  %v2471 = vpack.c.b16 %v1751, %v1743
  %v2472 = vpack.c.b16 %v1752, %v1744
  %v2473 = vpack.c.b16 %v1753, %v1745
  %v2474 = vpack.c.b16 %v1754, %v1746
  %v2475 = vpack.c.b16 %v1755, %v1747
  %v2476 = vpack.c.b16 %v1756, %v1748
  %v2477 = vpack.c.b16 %v1765, %v1757
  %v2478 = vpack.c.b16 %v1766, %v1758
  %v2479 = vpack.c.b16 %v1767, %v1759
  %v2480 = vpack.c.b16 %v1768, %v1760
  %v2481 = vpack.c.b16 %v1769, %v1761
  %v2482 = vpack.c.b16 %v1770, %v1762
  %v2483 = vpack.c.b16 %v1771, %v1763
  %v2484 = vpack.c.b16 %v1772, %v1764
  %v2485 = vpack.c.b16 %v1781, %v1773
  %v2486 = vpack.c.b16 %v1782, %v1774
  %v2487 = vpack.c.b16 %v1783, %v1775
  %v2488 = vpack.c.b16 %v1784, %v1776
  %v2489 = vpack.c.b16 %v1785, %v1777
  %v2490 = vpack.c.b16 %v1786, %v1778
  %v2491 = vpack.c.b16 %v1787, %v1779
  %v2492 = vpack.c.b16 %v1788, %v1780
  %v2493 = vpack.c.b16 %v1797, %v1789
  %v2494 = vpack.c.b16 %v1798, %v1790
  %v2495 = vpack.c.b16 %v1799, %v1791
  %v2496 = vpack.c.b16 %v1800, %v1792
  %v2497 = vpack.c.b16 %v1801, %v1793
  %v2498 = vpack.c.b16 %v1802, %v1794
  %v2499 = vpack.c.b16 %v1803, %v1795
  %v2500 = vpack.c.b16 %v1804, %v1796
  %v2501 = vpack.c.b16 %v1813, %v1805
  %v2502 = vpack.c.b16 %v1814, %v1806
  %v2503 = vpack.c.b16 %v1815, %v1807
  %v2504 = vpack.c.b16 %v1816, %v1808
  %v2505 = vpack.c.b16 %v1817, %v1809
  %v2506 = vpack.c.b16 %v1818, %v1810
  %v2507 = vpack.c.b16 %v1819, %v1811
  %v2508 = vpack.c.b16 %v1820, %v1812
  %v2509 = vpack.c.b16 %v1829, %v1821
  %v2510 = vpack.c.b16 %v1830, %v1822
  %v2511 = vpack.c.b16 %v1831, %v1823
  %v2512 = vpack.c.b16 %v1832, %v1824
  %v2513 = vpack.c.b16 %v1833, %v1825
  %v2514 = vpack.c.b16 %v1834, %v1826
  %v2515 = vpack.c.b16 %v1835, %v1827
  %v2516 = vpack.c.b16 %v1836, %v1828
  %v2517 = vpack.c.b16 %v1845, %v1837
  %v2518 = vpack.c.b16 %v1846, %v1838
  %v2519 = vpack.c.b16 %v1847, %v1839
  %v2520 = vpack.c.b16 %v1848, %v1840
  %v2521 = vpack.c.b16 %v1849, %v1841
  %v2522 = vpack.c.b16 %v1850, %v1842
  %v2523 = vpack.c.b16 %v1851, %v1843
  %v2524 = vpack.c.b16 %v1852, %v1844
  %v2525 = vpack.c.b16 %v1861, %v1853
  %v2526 = vpack.c.b16 %v1862, %v1854
  %v2527 = vpack.c.b16 %v1863, %v1855
  %v2528 = vpack.c.b16 %v1864, %v1856
  %v2529 = vpack.c.b16 %v1865, %v1857
  %v2530 = vpack.c.b16 %v1866, %v1858
  %v2531 = vpack.c.b16 %v1867, %v1859
  %v2532 = vpack.c.b16 %v1868, %v1860
  %v2533 = vpack.c.b16 %v1877, %v1869
  %v2534 = vpack.c.b16 %v1878, %v1870
  %v2535 = vpack.c.b16 %v1879, %v1871
  %v2536 = vpack.c.b16 %v1880, %v1872
  %v2537 = vpack.c.b16 %v1881, %v1873
  %v2538 = vpack.c.b16 %v1882, %v1874
  %v2539 = vpack.c.b16 %v1883, %v1875
  %v2540 = vpack.c.b16 %v1884, %v1876
  %v2541 = vpack.c.b16 %v1893, %v1885
  %v2542 = vpack.c.b16 %v1894, %v1886
  %v2543 = vpack.c.b16 %v1895, %v1887
  %v2544 = vpack.c.b16 %v1896, %v1888
  %v2545 = vpack.c.b16 %v1897, %v1889
  %v2546 = vpack.c.b16 %v1898, %v1890
  %v2547 = vpack.c.b16 %v1899, %v1891
  %v2548 = vpack.c.b16 %v1900, %v1892
  %v2549 = vpack.c.b16 %v1909, %v1901
  %v2550 = vpack.c.b16 %v1910, %v1902
  %v2551 = vpack.c.b16 %v1911, %v1903
  %v2552 = vpack.c.b16 %v1912, %v1904
  %v2553 = vpack.c.b16 %v1913, %v1905
  %v2554 = vpack.c.b16 %v1914, %v1906
  %v2555 = vpack.c.b16 %v1915, %v1907
  %v2556 = vpack.c.b16 %v1916, %v1908
  %v2557 = vpack.c.b16 %v1925, %v1917
  %v2558 = vpack.c.b16 %v1926, %v1918
  %v2559 = vpack.c.b16 %v1927, %v1919
  %v2560 = vpack.c.b16 %v1928, %v1920
  %v2561 = vpack.c.b16 %v1929, %v1921
  %v2562 = vpack.c.b16 %v1930, %v1922
  %v2563 = vpack.c.b16 %v1931, %v1923
  %v2564 = vpack.c.b16 %v1932, %v1924
  %v2565 = vpack.c.b16 %v1941, %v1933
  %v2566 = vpack.c.b16 %v1942, %v1934
  %v2567 = vpack.c.b16 %v1943, %v1935
  %v2568 = vpack.c.b16 %v1944, %v1936
  %v2569 = vpack.c.b16 %v1945, %v1937
  %v2570 = vpack.c.b16 %v1946, %v1938
  %v2571 = vpack.c.b16 %v1947, %v1939
  %v2572 = vpack.c.b16 %v1948, %v1940
  %v2573 = vpack.c.b16 %v1957, %v1949
  %v2574 = vpack.c.b16 %v1958, %v1950
  %v2575 = vpack.c.b16 %v1959, %v1951
  %v2576 = vpack.c.b16 %v1960, %v1952
  %v2577 = vpack.c.b16 %v1961, %v1953
  %v2578 = vpack.c.b16 %v1962, %v1954
  %v2579 = vpack.c.b16 %v1963, %v1955
  %v2580 = vpack.c.b16 %v1964, %v1956
  %v2581 = vpack.c.b16 %v1973, %v1965
  %v2582 = vpack.c.b16 %v1974, %v1966
  %v2583 = vpack.c.b16 %v1975, %v1967
  %v2584 = vpack.c.b16 %v1976, %v1968
  %v2585 = vpack.c.b16 %v1977, %v1969
  %v2586 = vpack.c.b16 %v1978, %v1970
  %v2587 = vpack.c.b16 %v1979, %v1971
  %v2588 = vpack.c.b16 %v1980, %v1972
  %v2589 = vpack.c.b16 %v1989, %v1981
  %v2590 = vpack.c.b16 %v1990, %v1982
  %v2591 = vpack.c.b16 %v1991, %v1983
  %v2592 = vpack.c.b16 %v1992, %v1984
  %v2593 = vpack.c.b16 %v1993, %v1985
  %v2594 = vpack.c.b16 %v1994, %v1986
  %v2595 = vpack.c.b16 %v1995, %v1987
  %v2596 = vpack.c.b16 %v1996, %v1988
  %v2597 = vpack.c.b16 %v2005, %v1997
  %v2598 = vpack.c.b16 %v2006, %v1998
  %v2599 = vpack.c.b16 %v2007, %v1999
  %v2600 = vpack.c.b16 %v2008, %v2000
  %v2601 = vpack.c.b16 %v2009, %v2001
  %v2602 = vpack.c.b16 %v2010, %v2002
  %v2603 = vpack.c.b16 %v2011, %v2003
  %v2604 = vpack.c.b16 %v2012, %v2004
  %v2605 = vpack.c.b16 %v2021, %v2013
  %v2606 = vpack.c.b16 %v2022, %v2014
  %v2607 = vpack.c.b16 %v2023, %v2015
  %v2608 = vpack.c.b16 %v2024, %v2016
  %v2609 = vpack.c.b16 %v2025, %v2017
  %v2610 = vpack.c.b16 %v2026, %v2018
  %v2611 = vpack.c.b16 %v2027, %v2019
  %v2612 = vpack.c.b16 %v2028, %v2020
  %v2613 = vpack.c.b16 %v2037, %v2029
  %v2614 = vpack.c.b16 %v2038, %v2030
  %v2615 = vpack.c.b16 %v2039, %v2031
  %v2616 = vpack.c.b16 %v2040, %v2032
  %v2617 = vpack.c.b16 %v2041, %v2033
  %v2618 = vpack.c.b16 %v2042, %v2034
  %v2619 = vpack.c.b16 %v2043, %v2035
  %v2620 = vpack.c.b16 %v2044, %v2036
  %v2621 = vpack.c.b16 %v2053, %v2045
  %v2622 = vpack.c.b16 %v2054, %v2046
  %v2623 = vpack.c.b16 %v2055, %v2047
  %v2624 = vpack.c.b16 %v2056, %v2048
  %v2625 = vpack.c.b16 %v2057, %v2049
  %v2626 = vpack.c.b16 %v2058, %v2050
  %v2627 = vpack.c.b16 %v2059, %v2051
  %v2628 = vpack.c.b16 %v2060, %v2052
  %v2629 = vpack.c.b16 %v2069, %v2061
  %v2630 = vpack.c.b16 %v2070, %v2062
  %v2631 = vpack.c.b16 %v2071, %v2063
  %v2632 = vpack.c.b16 %v2072, %v2064
  %v2633 = vpack.c.b16 %v2073, %v2065
  %v2634 = vpack.c.b16 %v2074, %v2066
  %v2635 = vpack.c.b16 %v2075, %v2067
  %v2636 = vpack.c.b16 %v2076, %v2068
  %v2637 = vpack.c.b16 %v2085, %v2077
  %v2638 = vpack.c.b16 %v2086, %v2078
  %v2639 = vpack.c.b16 %v2087, %v2079
  %v2640 = vpack.c.b16 %v2088, %v2080
  %v2641 = vpack.c.b16 %v2089, %v2081
  %v2642 = vpack.c.b16 %v2090, %v2082
  %v2643 = vpack.c.b16 %v2091, %v2083
  %v2644 = vpack.c.b16 %v2092, %v2084
  %v2645 = vpack.c.b16 %v2101, %v2093
  %v2646 = vpack.c.b16 %v2102, %v2094
  %v2647 = vpack.c.b16 %v2103, %v2095
  %v2648 = vpack.c.b16 %v2104, %v2096
  %v2649 = vpack.c.b16 %v2105, %v2097
  %v2650 = vpack.c.b16 %v2106, %v2098
  %v2651 = vpack.c.b16 %v2107, %v2099
  %v2652 = vpack.c.b16 %v2108, %v2100
  %v2653 = vpack.c.b16 %v2117, %v2109
  %v2654 = vpack.c.b16 %v2118, %v2110
  %v2655 = vpack.c.b16 %v2119, %v2111
  %v2656 = vpack.c.b16 %v2120, %v2112
  %v2657 = vpack.c.b16 %v2121, %v2113
  %v2658 = vpack.c.b16 %v2122, %v2114
  %v2659 = vpack.c.b16 %v2123, %v2115
  %v2660 = vpack.c.b16 %v2124, %v2116
  %v2661 = vpack.c.b16 %v2133, %v2125
  %v2662 = vpack.c.b16 %v2134, %v2126
  %v2663 = vpack.c.b16 %v2135, %v2127
  %v2664 = vpack.c.b16 %v2136, %v2128
  %v2665 = vpack.c.b16 %v2137, %v2129
  %v2666 = vpack.c.b16 %v2138, %v2130
  %v2667 = vpack.c.b16 %v2139, %v2131
  %v2668 = vpack.c.b16 %v2140, %v2132
  %v2669 = vpack.c.b16 %v2149, %v2141
  %v2670 = vpack.c.b16 %v2150, %v2142
  %v2671 = vpack.c.b16 %v2151, %v2143
  %v2672 = vpack.c.b16 %v2152, %v2144
  %v2673 = vpack.c.b16 %v2153, %v2145
  %v2674 = vpack.c.b16 %v2154, %v2146
  %v2675 = vpack.c.b16 %v2155, %v2147
  %v2676 = vpack.c.b16 %v2156, %v2148
  %v2677 = vpack.c.b16 %v2165, %v2157
  %v2678 = vpack.c.b16 %v2166, %v2158
  %v2679 = vpack.c.b16 %v2167, %v2159
  %v2680 = vpack.c.b16 %v2168, %v2160
  %v2681 = vpack.c.b16 %v2169, %v2161
  %v2682 = vpack.c.b16 %v2170, %v2162
  %v2683 = vpack.c.b16 %v2171, %v2163
  %v2684 = vpack.c.b16 %v2172, %v2164
  %3197 = vmatprep.subr.bf16.mxu0 %v2174
  %3198 = vmatpush1.bf16.msra.mxu0 %v2173
  %3199 = vmatprep.subr.bf16.mxu0 %v2182
  %3200 = vmatpush1.bf16.msra.mxu0 %v2181
  %3201 = vmatprep.subr.bf16.mxu0 %v2190
  %3202 = vmatpush1.bf16.msra.mxu0 %v2189
  %3203 = vmatprep.subr.bf16.mxu0 %v2198
  %3204 = vmatpush1.bf16.msra.mxu0 %v2197
  %3205 = vmatprep.subr.bf16.mxu0 %v2206
  %3206 = vmatpush1.bf16.msra.mxu0 %v2205
  %3207 = vmatprep.subr.bf16.mxu0 %v2214
  %3208 = vmatpush1.bf16.msra.mxu0 %v2213
  %3209 = vmatprep.subr.bf16.mxu0 %v2222
  %3210 = vmatpush1.bf16.msra.mxu0 %v2221
  %3211 = vmatprep.subr.bf16.mxu0 %v2230
  %3212 = vmatpush1.bf16.msra.mxu0 %v2229
  %3213 = vmatprep.subr.bf16.mxu0 %v2238
  %3214 = vmatpush1.bf16.msra.mxu0 %v2237
  %3215 = vmatprep.subr.bf16.mxu0 %v2246
  %3216 = vmatpush1.bf16.msra.mxu0 %v2245
  %3217 = vmatprep.subr.bf16.mxu0 %v2254
  %3218 = vmatpush1.bf16.msra.mxu0 %v2253
  %3219 = vmatprep.subr.bf16.mxu0 %v2262
  %3220 = vmatpush1.bf16.msra.mxu0 %v2261
  %3221 = vmatprep.subr.bf16.mxu0 %v2270
  %3222 = vmatpush1.bf16.msra.mxu0 %v2269
  %3223 = vmatprep.subr.bf16.mxu0 %v2278
  %3224 = vmatpush1.bf16.msra.mxu0 %v2277
  %3225 = vmatprep.subr.bf16.mxu0 %v2286
  %3226 = vmatpush1.bf16.msra.mxu0 %v2285
  %3227 = vmatprep.subr.bf16.mxu0 %v2294
  %3228 = vmatpush1.bf16.msra.mxu0 %v2293
  %3229 = vmatprep.mubr.bf16.mxu0 %v76
  %3230 = vmatmul.mubr.bf16.gmra.mrb[0].mxu0 %v75
  %v3231 = vpop.f32.mrb[0].mxu0
  %v3232 = vadd.f32 %v600, %v3231
  %v3233 = vpop.f32.mrb[0].mxu0
  %v3234 = vadd.f32 %v604, %v3233
  %v3235 = vpop.f32.mrb[0].mxu0
  %v3236 = vpop.f32.mrb[0].mxu0
  %3237 = vdwg.mxu0
  %3238 = vmatprep.subr.bf16.mxu0 %v2302
  %3239 = vmatpush1.bf16.msra.mxu0 %v2301
  %3240 = vmatprep.subr.bf16.mxu0 %v2310
  %3241 = vmatpush1.bf16.msra.mxu0 %v2309
  %3242 = vmatprep.subr.bf16.mxu0 %v2318
  %3243 = vmatpush1.bf16.msra.mxu0 %v2317
  %3244 = vmatprep.subr.bf16.mxu0 %v2326
  %3245 = vmatpush1.bf16.msra.mxu0 %v2325
  %3246 = vmatprep.subr.bf16.mxu0 %v2334
  %3247 = vmatpush1.bf16.msra.mxu0 %v2333
  %3248 = vmatprep.subr.bf16.mxu0 %v2342
  %3249 = vmatpush1.bf16.msra.mxu0 %v2341
  %3250 = vmatprep.subr.bf16.mxu0 %v2350
  %3251 = vmatpush1.bf16.msra.mxu0 %v2349
  %3252 = vmatprep.subr.bf16.mxu0 %v2358
  %3253 = vmatpush1.bf16.msra.mxu0 %v2357
  %3254 = vmatprep.subr.bf16.mxu0 %v2366
  %3255 = vmatpush1.bf16.msra.mxu0 %v2365
  %3256 = vmatprep.subr.bf16.mxu0 %v2374
  %3257 = vmatpush1.bf16.msra.mxu0 %v2373
  %3258 = vmatprep.subr.bf16.mxu0 %v2382
  %3259 = vmatpush1.bf16.msra.mxu0 %v2381
  %3260 = vmatprep.subr.bf16.mxu0 %v2390
  %3261 = vmatpush1.bf16.msra.mxu0 %v2389
  %3262 = vmatprep.subr.bf16.mxu0 %v2398
  %3263 = vmatpush1.bf16.msra.mxu0 %v2397
  %3264 = vmatprep.subr.bf16.mxu0 %v2406
  %3265 = vmatpush1.bf16.msra.mxu0 %v2405
  %3266 = vmatprep.subr.bf16.mxu0 %v2414
  %3267 = vmatpush1.bf16.msra.mxu0 %v2413
  %3268 = vmatprep.subr.bf16.mxu0 %v2422
  %3269 = vmatpush1.bf16.msra.mxu0 %v2421
  %3270 = vmatprep.mubr.bf16.mxu0 %v78
  %3271 = vmatmul.mubr.bf16.gmra.mrb[0].mxu0 %v77
  %v3272 = vpop.f32.mrb[0].mxu0
  %v3273 = vadd.f32 %v3232, %v3272
  %v3274 = vpop.f32.mrb[0].mxu0
  %v3275 = vadd.f32 %v3234, %v3274
  %v3276 = vpop.f32.mrb[0].mxu0
  %v3277 = vpop.f32.mrb[0].mxu0
  %3278 = vdwg.mxu0
  %3279 = vmatprep.subr.bf16.mxu0 %v2430
  %3280 = vmatpush1.bf16.msra.mxu0 %v2429
  %3281 = vmatprep.subr.bf16.mxu0 %v2438
  %3282 = vmatpush1.bf16.msra.mxu0 %v2437
  %3283 = vmatprep.subr.bf16.mxu0 %v2446
  %3284 = vmatpush1.bf16.msra.mxu0 %v2445
  %3285 = vmatprep.subr.bf16.mxu0 %v2454
  %3286 = vmatpush1.bf16.msra.mxu0 %v2453
  %3287 = vmatprep.subr.bf16.mxu0 %v2462
  %3288 = vmatpush1.bf16.msra.mxu0 %v2461
  %3289 = vmatprep.subr.bf16.mxu0 %v2470
  %3290 = vmatpush1.bf16.msra.mxu0 %v2469
  %3291 = vmatprep.subr.bf16.mxu0 %v2478
  %3292 = vmatpush1.bf16.msra.mxu0 %v2477
  %3293 = vmatprep.subr.bf16.mxu0 %v2486
  %3294 = vmatpush1.bf16.msra.mxu0 %v2485
  %3295 = vmatprep.subr.bf16.mxu0 %v2494
  %3296 = vmatpush1.bf16.msra.mxu0 %v2493
  %3297 = vmatprep.subr.bf16.mxu0 %v2502
  %3298 = vmatpush1.bf16.msra.mxu0 %v2501
  %3299 = vmatprep.subr.bf16.mxu0 %v2510
  %3300 = vmatpush1.bf16.msra.mxu0 %v2509
  %3301 = vmatprep.subr.bf16.mxu0 %v2518
  %3302 = vmatpush1.bf16.msra.mxu0 %v2517
  %3303 = vmatprep.subr.bf16.mxu0 %v2526
  %3304 = vmatpush1.bf16.msra.mxu0 %v2525
  %3305 = vmatprep.subr.bf16.mxu0 %v2534
  %3306 = vmatpush1.bf16.msra.mxu0 %v2533
  %3307 = vmatprep.subr.bf16.mxu0 %v2542
  %3308 = vmatpush1.bf16.msra.mxu0 %v2541
  %3309 = vmatprep.subr.bf16.mxu0 %v2550
  %3310 = vmatpush1.bf16.msra.mxu0 %v2549
  %3311 = vmatprep.mubr.bf16.mxu0 %v80
  %3312 = vmatmul.mubr.bf16.gmra.mrb[0].mxu0 %v79
  %v3313 = vpop.f32.mrb[0].mxu0
  %v3314 = vadd.f32 %v3273, %v3313
  %v3315 = vpop.f32.mrb[0].mxu0
  %v3316 = vadd.f32 %v3275, %v3315
  %v3317 = vpop.f32.mrb[0].mxu0
  %v3318 = vpop.f32.mrb[0].mxu0
  %3319 = vdwg.mxu0
  %3320 = vmatprep.subr.bf16.mxu0 %v2558
  %3321 = vmatpush1.bf16.msra.mxu0 %v2557
  %3322 = vmatprep.subr.bf16.mxu0 %v2566
  %3323 = vmatpush1.bf16.msra.mxu0 %v2565
  %3324 = vmatprep.subr.bf16.mxu0 %v2574
  %3325 = vmatpush1.bf16.msra.mxu0 %v2573
  %3326 = vmatprep.subr.bf16.mxu0 %v2582
  %3327 = vmatpush1.bf16.msra.mxu0 %v2581
  %3328 = vmatprep.subr.bf16.mxu0 %v2590
  %3329 = vmatpush1.bf16.msra.mxu0 %v2589
  %3330 = vmatprep.subr.bf16.mxu0 %v2598
  %3331 = vmatpush1.bf16.msra.mxu0 %v2597
  %3332 = vmatprep.subr.bf16.mxu0 %v2606
  %3333 = vmatpush1.bf16.msra.mxu0 %v2605
  %3334 = vmatprep.subr.bf16.mxu0 %v2614
  %3335 = vmatpush1.bf16.msra.mxu0 %v2613
  %3336 = vmatprep.subr.bf16.mxu0 %v2622
  %3337 = vmatpush1.bf16.msra.mxu0 %v2621
  %3338 = vmatprep.subr.bf16.mxu0 %v2630
  %3339 = vmatpush1.bf16.msra.mxu0 %v2629
  %3340 = vmatprep.subr.bf16.mxu0 %v2638
  %3341 = vmatpush1.bf16.msra.mxu0 %v2637
  %3342 = vmatprep.subr.bf16.mxu0 %v2646
  %3343 = vmatpush1.bf16.msra.mxu0 %v2645
  %3344 = vmatprep.subr.bf16.mxu0 %v2654
  %3345 = vmatpush1.bf16.msra.mxu0 %v2653
  %3346 = vmatprep.subr.bf16.mxu0 %v2662
  %3347 = vmatpush1.bf16.msra.mxu0 %v2661
  %3348 = vmatprep.subr.bf16.mxu0 %v2670
  %3349 = vmatpush1.bf16.msra.mxu0 %v2669
  %3350 = vmatprep.subr.bf16.mxu0 %v2678
  %3351 = vmatpush1.bf16.msra.mxu0 %v2677
  %3352 = vmatprep.mubr.bf16.mxu0 %v82
  %3353 = vmatmul.mubr.bf16.gmra.mrb[0].mxu0 %v81
  %v3354 = vpop.f32.mrb[0].mxu0
  %v3355 = vadd.f32 %v3314, %v3354
  %v3356 = vpop.f32.mrb[0].mxu0
  %v3357 = vadd.f32 %v3316, %v3356
  %v3358 = vpop.f32.mrb[0].mxu0
  %v3359 = vpop.f32.mrb[0].mxu0
  %3360 = vdwg.mxu0
  %3361 = vmatprep.subr.bf16.mxu0 %v2176
  %3362 = vmatpush1.bf16.msra.mxu0 %v2175
  %3363 = vmatprep.subr.bf16.mxu0 %v2184
  %3364 = vmatpush1.bf16.msra.mxu0 %v2183
  %3365 = vmatprep.subr.bf16.mxu0 %v2192
  %3366 = vmatpush1.bf16.msra.mxu0 %v2191
  %3367 = vmatprep.subr.bf16.mxu0 %v2200
  %3368 = vmatpush1.bf16.msra.mxu0 %v2199
  %3369 = vmatprep.subr.bf16.mxu0 %v2208
  %3370 = vmatpush1.bf16.msra.mxu0 %v2207
  %3371 = vmatprep.subr.bf16.mxu0 %v2216
  %3372 = vmatpush1.bf16.msra.mxu0 %v2215
  %3373 = vmatprep.subr.bf16.mxu0 %v2224
  %3374 = vmatpush1.bf16.msra.mxu0 %v2223
  %3375 = vmatprep.subr.bf16.mxu0 %v2232
  %3376 = vmatpush1.bf16.msra.mxu0 %v2231
  %3377 = vmatprep.subr.bf16.mxu0 %v2240
  %3378 = vmatpush1.bf16.msra.mxu0 %v2239
  %3379 = vmatprep.subr.bf16.mxu0 %v2248
  %3380 = vmatpush1.bf16.msra.mxu0 %v2247
  %3381 = vmatprep.subr.bf16.mxu0 %v2256
  %3382 = vmatpush1.bf16.msra.mxu0 %v2255
  %3383 = vmatprep.subr.bf16.mxu0 %v2264
  %3384 = vmatpush1.bf16.msra.mxu0 %v2263
  %3385 = vmatprep.subr.bf16.mxu0 %v2272
  %3386 = vmatpush1.bf16.msra.mxu0 %v2271
  %3387 = vmatprep.subr.bf16.mxu0 %v2280
  %3388 = vmatpush1.bf16.msra.mxu0 %v2279
  %3389 = vmatprep.subr.bf16.mxu0 %v2288
  %3390 = vmatpush1.bf16.msra.mxu0 %v2287
  %3391 = vmatprep.subr.bf16.mxu0 %v2296
  %3392 = vmatpush1.bf16.msra.mxu0 %v2295
  %3393 = vmatprep.mubr.bf16.mxu0 %v76
  %3394 = vmatmul.mubr.bf16.gmra.mrb[0].mxu0 %v75
  %v3395 = vpop.f32.mrb[0].mxu0
  %v3396 = vadd.f32 %v608, %v3395
  %v3397 = vpop.f32.mrb[0].mxu0
  %v3398 = vadd.f32 %v612, %v3397
  %v3399 = vpop.f32.mrb[0].mxu0
  %v3400 = vpop.f32.mrb[0].mxu0
  %3401 = vdwg.mxu0
  %3402 = vmatprep.subr.bf16.mxu0 %v2304
  %3403 = vmatpush1.bf16.msra.mxu0 %v2303
  %3404 = vmatprep.subr.bf16.mxu0 %v2312
  %3405 = vmatpush1.bf16.msra.mxu0 %v2311
  %3406 = vmatprep.subr.bf16.mxu0 %v2320
  %3407 = vmatpush1.bf16.msra.mxu0 %v2319
  %3408 = vmatprep.subr.bf16.mxu0 %v2328
  %3409 = vmatpush1.bf16.msra.mxu0 %v2327
  %3410 = vmatprep.subr.bf16.mxu0 %v2336
  %3411 = vmatpush1.bf16.msra.mxu0 %v2335
  %3412 = vmatprep.subr.bf16.mxu0 %v2344
  %3413 = vmatpush1.bf16.msra.mxu0 %v2343
  %3414 = vmatprep.subr.bf16.mxu0 %v2352
  %3415 = vmatpush1.bf16.msra.mxu0 %v2351
  %3416 = vmatprep.subr.bf16.mxu0 %v2360
  %3417 = vmatpush1.bf16.msra.mxu0 %v2359
  %3418 = vmatprep.subr.bf16.mxu0 %v2368
  %3419 = vmatpush1.bf16.msra.mxu0 %v2367
  %3420 = vmatprep.subr.bf16.mxu0 %v2376
  %3421 = vmatpush1.bf16.msra.mxu0 %v2375
  %3422 = vmatprep.subr.bf16.mxu0 %v2384
  %3423 = vmatpush1.bf16.msra.mxu0 %v2383
  %3424 = vmatprep.subr.bf16.mxu0 %v2392
  %3425 = vmatpush1.bf16.msra.mxu0 %v2391
  %3426 = vmatprep.subr.bf16.mxu0 %v2400
  %3427 = vmatpush1.bf16.msra.mxu0 %v2399
  %3428 = vmatprep.subr.bf16.mxu0 %v2408
  %3429 = vmatpush1.bf16.msra.mxu0 %v2407
  %3430 = vmatprep.subr.bf16.mxu0 %v2416
  %3431 = vmatpush1.bf16.msra.mxu0 %v2415
  %3432 = vmatprep.subr.bf16.mxu0 %v2424
  %3433 = vmatpush1.bf16.msra.mxu0 %v2423
  %3434 = vmatprep.mubr.bf16.mxu0 %v78
  %3435 = vmatmul.mubr.bf16.gmra.mrb[0].mxu0 %v77
  %v3436 = vpop.f32.mrb[0].mxu0
  %v3437 = vadd.f32 %v3396, %v3436
  %v3438 = vpop.f32.mrb[0].mxu0
  %v3439 = vadd.f32 %v3398, %v3438
  %v3440 = vpop.f32.mrb[0].mxu0
  %v3441 = vpop.f32.mrb[0].mxu0
  %3442 = vdwg.mxu0
  %3443 = vmatprep.subr.bf16.mxu0 %v2432
  %3444 = vmatpush1.bf16.msra.mxu0 %v2431
  %3445 = vmatprep.subr.bf16.mxu0 %v2440
  %3446 = vmatpush1.bf16.msra.mxu0 %v2439
  %3447 = vmatprep.subr.bf16.mxu0 %v2448
  %3448 = vmatpush1.bf16.msra.mxu0 %v2447
  %3449 = vmatprep.subr.bf16.mxu0 %v2456
  %3450 = vmatpush1.bf16.msra.mxu0 %v2455
  %3451 = vmatprep.subr.bf16.mxu0 %v2464
  %3452 = vmatpush1.bf16.msra.mxu0 %v2463
  %3453 = vmatprep.subr.bf16.mxu0 %v2472
  %3454 = vmatpush1.bf16.msra.mxu0 %v2471
  %3455 = vmatprep.subr.bf16.mxu0 %v2480
  %3456 = vmatpush1.bf16.msra.mxu0 %v2479
  %3457 = vmatprep.subr.bf16.mxu0 %v2488
  %3458 = vmatpush1.bf16.msra.mxu0 %v2487
  %3459 = vmatprep.subr.bf16.mxu0 %v2496
  %3460 = vmatpush1.bf16.msra.mxu0 %v2495
  %3461 = vmatprep.subr.bf16.mxu0 %v2504
  %3462 = vmatpush1.bf16.msra.mxu0 %v2503
  %3463 = vmatprep.subr.bf16.mxu0 %v2512
  %3464 = vmatpush1.bf16.msra.mxu0 %v2511
  %3465 = vmatprep.subr.bf16.mxu0 %v2520
  %3466 = vmatpush1.bf16.msra.mxu0 %v2519
  %3467 = vmatprep.subr.bf16.mxu0 %v2528
  %3468 = vmatpush1.bf16.msra.mxu0 %v2527
  %3469 = vmatprep.subr.bf16.mxu0 %v2536
  %3470 = vmatpush1.bf16.msra.mxu0 %v2535
  %3471 = vmatprep.subr.bf16.mxu0 %v2544
  %3472 = vmatpush1.bf16.msra.mxu0 %v2543
  %3473 = vmatprep.subr.bf16.mxu0 %v2552
  %3474 = vmatpush1.bf16.msra.mxu0 %v2551
  %3475 = vmatprep.mubr.bf16.mxu0 %v80
  %3476 = vmatmul.mubr.bf16.gmra.mrb[0].mxu0 %v79
  %v3477 = vpop.f32.mrb[0].mxu0
  %v3478 = vadd.f32 %v3437, %v3477
  %v3479 = vpop.f32.mrb[0].mxu0
  %v3480 = vadd.f32 %v3439, %v3479
  %v3481 = vpop.f32.mrb[0].mxu0
  %v3482 = vpop.f32.mrb[0].mxu0
  %3483 = vdwg.mxu0
  %3484 = vmatprep.subr.bf16.mxu0 %v2560
  %3485 = vmatpush1.bf16.msra.mxu0 %v2559
  %3486 = vmatprep.subr.bf16.mxu0 %v2568
  %3487 = vmatpush1.bf16.msra.mxu0 %v2567
  %3488 = vmatprep.subr.bf16.mxu0 %v2576
  %3489 = vmatpush1.bf16.msra.mxu0 %v2575
  %3490 = vmatprep.subr.bf16.mxu0 %v2584
  %3491 = vmatpush1.bf16.msra.mxu0 %v2583
  %3492 = vmatprep.subr.bf16.mxu0 %v2592
  %3493 = vmatpush1.bf16.msra.mxu0 %v2591
  %3494 = vmatprep.subr.bf16.mxu0 %v2600
  %3495 = vmatpush1.bf16.msra.mxu0 %v2599
  %3496 = vmatprep.subr.bf16.mxu0 %v2608
  %3497 = vmatpush1.bf16.msra.mxu0 %v2607
  %3498 = vmatprep.subr.bf16.mxu0 %v2616
  %3499 = vmatpush1.bf16.msra.mxu0 %v2615
  %3500 = vmatprep.subr.bf16.mxu0 %v2624
  %3501 = vmatpush1.bf16.msra.mxu0 %v2623
  %3502 = vmatprep.subr.bf16.mxu0 %v2632
  %3503 = vmatpush1.bf16.msra.mxu0 %v2631
  %3504 = vmatprep.subr.bf16.mxu0 %v2640
  %3505 = vmatpush1.bf16.msra.mxu0 %v2639
  %3506 = vmatprep.subr.bf16.mxu0 %v2648
  %3507 = vmatpush1.bf16.msra.mxu0 %v2647
  %3508 = vmatprep.subr.bf16.mxu0 %v2656
  %3509 = vmatpush1.bf16.msra.mxu0 %v2655
  %3510 = vmatprep.subr.bf16.mxu0 %v2664
  %3511 = vmatpush1.bf16.msra.mxu0 %v2663
  %3512 = vmatprep.subr.bf16.mxu0 %v2672
  %3513 = vmatpush1.bf16.msra.mxu0 %v2671
  %3514 = vmatprep.subr.bf16.mxu0 %v2680
  %3515 = vmatpush1.bf16.msra.mxu0 %v2679
  %3516 = vmatprep.mubr.bf16.mxu0 %v82
  %3517 = vmatmul.mubr.bf16.gmra.mrb[0].mxu0 %v81
  %v3518 = vpop.f32.mrb[0].mxu0
  %v3519 = vadd.f32 %v3478, %v3518
  %v3520 = vpop.f32.mrb[0].mxu0
  %v3521 = vadd.f32 %v3480, %v3520
  %v3522 = vpop.f32.mrb[0].mxu0
  %v3523 = vpop.f32.mrb[0].mxu0
  %3524 = vdwg.mxu0
  %3525 = vmatprep.subr.bf16.mxu0 %v2178
  %3526 = vmatpush1.bf16.msra.mxu0 %v2177
  %3527 = vmatprep.subr.bf16.mxu0 %v2186
  %3528 = vmatpush1.bf16.msra.mxu0 %v2185
  %3529 = vmatprep.subr.bf16.mxu0 %v2194
  %3530 = vmatpush1.bf16.msra.mxu0 %v2193
  %3531 = vmatprep.subr.bf16.mxu0 %v2202
  %3532 = vmatpush1.bf16.msra.mxu0 %v2201
  %3533 = vmatprep.subr.bf16.mxu0 %v2210
  %3534 = vmatpush1.bf16.msra.mxu0 %v2209
  %3535 = vmatprep.subr.bf16.mxu0 %v2218
  %3536 = vmatpush1.bf16.msra.mxu0 %v2217
  %3537 = vmatprep.subr.bf16.mxu0 %v2226
  %3538 = vmatpush1.bf16.msra.mxu0 %v2225
  %3539 = vmatprep.subr.bf16.mxu0 %v2234
  %3540 = vmatpush1.bf16.msra.mxu0 %v2233
  %3541 = vmatprep.subr.bf16.mxu0 %v2242
  %3542 = vmatpush1.bf16.msra.mxu0 %v2241
  %3543 = vmatprep.subr.bf16.mxu0 %v2250
  %3544 = vmatpush1.bf16.msra.mxu0 %v2249
  %3545 = vmatprep.subr.bf16.mxu0 %v2258
  %3546 = vmatpush1.bf16.msra.mxu0 %v2257
  %3547 = vmatprep.subr.bf16.mxu0 %v2266
  %3548 = vmatpush1.bf16.msra.mxu0 %v2265
  %3549 = vmatprep.subr.bf16.mxu0 %v2274
  %3550 = vmatpush1.bf16.msra.mxu0 %v2273
  %3551 = vmatprep.subr.bf16.mxu0 %v2282
  %3552 = vmatpush1.bf16.msra.mxu0 %v2281
  %3553 = vmatprep.subr.bf16.mxu0 %v2290
  %3554 = vmatpush1.bf16.msra.mxu0 %v2289
  %3555 = vmatprep.subr.bf16.mxu0 %v2298
  %3556 = vmatpush1.bf16.msra.mxu0 %v2297
  %3557 = vmatprep.mubr.bf16.mxu0 %v76
  %3558 = vmatmul.mubr.bf16.gmra.mrb[0].mxu0 %v75
  %v3559 = vpop.f32.mrb[0].mxu0
  %v3560 = vadd.f32 %v616, %v3559
  %v3561 = vpop.f32.mrb[0].mxu0
  %v3562 = vadd.f32 %v620, %v3561
  %v3563 = vpop.f32.mrb[0].mxu0
  %v3564 = vpop.f32.mrb[0].mxu0
  %3565 = vdwg.mxu0
  %3566 = vmatprep.subr.bf16.mxu0 %v2306
  %3567 = vmatpush1.bf16.msra.mxu0 %v2305
  %3568 = vmatprep.subr.bf16.mxu0 %v2314
  %3569 = vmatpush1.bf16.msra.mxu0 %v2313
  %3570 = vmatprep.subr.bf16.mxu0 %v2322
  %3571 = vmatpush1.bf16.msra.mxu0 %v2321
  %3572 = vmatprep.subr.bf16.mxu0 %v2330
  %3573 = vmatpush1.bf16.msra.mxu0 %v2329
  %3574 = vmatprep.subr.bf16.mxu0 %v2338
  %3575 = vmatpush1.bf16.msra.mxu0 %v2337
  %3576 = vmatprep.subr.bf16.mxu0 %v2346
  %3577 = vmatpush1.bf16.msra.mxu0 %v2345
  %3578 = vmatprep.subr.bf16.mxu0 %v2354
  %3579 = vmatpush1.bf16.msra.mxu0 %v2353
  %3580 = vmatprep.subr.bf16.mxu0 %v2362
  %3581 = vmatpush1.bf16.msra.mxu0 %v2361
  %3582 = vmatprep.subr.bf16.mxu0 %v2370
  %3583 = vmatpush1.bf16.msra.mxu0 %v2369
  %3584 = vmatprep.subr.bf16.mxu0 %v2378
  %3585 = vmatpush1.bf16.msra.mxu0 %v2377
  %3586 = vmatprep.subr.bf16.mxu0 %v2386
  %3587 = vmatpush1.bf16.msra.mxu0 %v2385
  %3588 = vmatprep.subr.bf16.mxu0 %v2394
  %3589 = vmatpush1.bf16.msra.mxu0 %v2393
  %3590 = vmatprep.subr.bf16.mxu0 %v2402
  %3591 = vmatpush1.bf16.msra.mxu0 %v2401
  %3592 = vmatprep.subr.bf16.mxu0 %v2410
  %3593 = vmatpush1.bf16.msra.mxu0 %v2409
  %3594 = vmatprep.subr.bf16.mxu0 %v2418
  %3595 = vmatpush1.bf16.msra.mxu0 %v2417
  %3596 = vmatprep.subr.bf16.mxu0 %v2426
  %3597 = vmatpush1.bf16.msra.mxu0 %v2425
  %3598 = vmatprep.mubr.bf16.mxu0 %v78
  %3599 = vmatmul.mubr.bf16.gmra.mrb[0].mxu0 %v77
  %v3600 = vpop.f32.mrb[0].mxu0
  %v3601 = vadd.f32 %v3560, %v3600
  %v3602 = vpop.f32.mrb[0].mxu0
  %v3603 = vadd.f32 %v3562, %v3602
  %v3604 = vpop.f32.mrb[0].mxu0
  %v3605 = vpop.f32.mrb[0].mxu0
  %3606 = vdwg.mxu0
  %3607 = vmatprep.subr.bf16.mxu0 %v2434
  %3608 = vmatpush1.bf16.msra.mxu0 %v2433
  %3609 = vmatprep.subr.bf16.mxu0 %v2442
  %3610 = vmatpush1.bf16.msra.mxu0 %v2441
  %3611 = vmatprep.subr.bf16.mxu0 %v2450
  %3612 = vmatpush1.bf16.msra.mxu0 %v2449
  %3613 = vmatprep.subr.bf16.mxu0 %v2458
  %3614 = vmatpush1.bf16.msra.mxu0 %v2457
  %3615 = vmatprep.subr.bf16.mxu0 %v2466
  %3616 = vmatpush1.bf16.msra.mxu0 %v2465
  %3617 = vmatprep.subr.bf16.mxu0 %v2474
  %3618 = vmatpush1.bf16.msra.mxu0 %v2473
  %3619 = vmatprep.subr.bf16.mxu0 %v2482
  %3620 = vmatpush1.bf16.msra.mxu0 %v2481
  %3621 = vmatprep.subr.bf16.mxu0 %v2490
  %3622 = vmatpush1.bf16.msra.mxu0 %v2489
  %3623 = vmatprep.subr.bf16.mxu0 %v2498
  %3624 = vmatpush1.bf16.msra.mxu0 %v2497
  %3625 = vmatprep.subr.bf16.mxu0 %v2506
  %3626 = vmatpush1.bf16.msra.mxu0 %v2505
  %3627 = vmatprep.subr.bf16.mxu0 %v2514
  %3628 = vmatpush1.bf16.msra.mxu0 %v2513
  %3629 = vmatprep.subr.bf16.mxu0 %v2522
  %3630 = vmatpush1.bf16.msra.mxu0 %v2521
  %3631 = vmatprep.subr.bf16.mxu0 %v2530
  %3632 = vmatpush1.bf16.msra.mxu0 %v2529
  %3633 = vmatprep.subr.bf16.mxu0 %v2538
  %3634 = vmatpush1.bf16.msra.mxu0 %v2537
  %3635 = vmatprep.subr.bf16.mxu0 %v2546
  %3636 = vmatpush1.bf16.msra.mxu0 %v2545
  %3637 = vmatprep.subr.bf16.mxu0 %v2554
  %3638 = vmatpush1.bf16.msra.mxu0 %v2553
  %3639 = vmatprep.mubr.bf16.mxu0 %v80
  %3640 = vmatmul.mubr.bf16.gmra.mrb[0].mxu0 %v79
  %v3641 = vpop.f32.mrb[0].mxu0
  %v3642 = vadd.f32 %v3601, %v3641
  %v3643 = vpop.f32.mrb[0].mxu0
  %v3644 = vadd.f32 %v3603, %v3643
  %v3645 = vpop.f32.mrb[0].mxu0
  %v3646 = vpop.f32.mrb[0].mxu0
  %3647 = vdwg.mxu0
  %3648 = vmatprep.subr.bf16.mxu0 %v2562
  %3649 = vmatpush1.bf16.msra.mxu0 %v2561
  %3650 = vmatprep.subr.bf16.mxu0 %v2570
  %3651 = vmatpush1.bf16.msra.mxu0 %v2569
  %3652 = vmatprep.subr.bf16.mxu0 %v2578
  %3653 = vmatpush1.bf16.msra.mxu0 %v2577
  %3654 = vmatprep.subr.bf16.mxu0 %v2586
  %3655 = vmatpush1.bf16.msra.mxu0 %v2585
  %3656 = vmatprep.subr.bf16.mxu0 %v2594
  %3657 = vmatpush1.bf16.msra.mxu0 %v2593
  %3658 = vmatprep.subr.bf16.mxu0 %v2602
  %3659 = vmatpush1.bf16.msra.mxu0 %v2601
  %3660 = vmatprep.subr.bf16.mxu0 %v2610
  %3661 = vmatpush1.bf16.msra.mxu0 %v2609
  %3662 = vmatprep.subr.bf16.mxu0 %v2618
  %3663 = vmatpush1.bf16.msra.mxu0 %v2617
  %3664 = vmatprep.subr.bf16.mxu0 %v2626
  %3665 = vmatpush1.bf16.msra.mxu0 %v2625
  %3666 = vmatprep.subr.bf16.mxu0 %v2634
  %3667 = vmatpush1.bf16.msra.mxu0 %v2633
  %3668 = vmatprep.subr.bf16.mxu0 %v2642
  %3669 = vmatpush1.bf16.msra.mxu0 %v2641
  %3670 = vmatprep.subr.bf16.mxu0 %v2650
  %3671 = vmatpush1.bf16.msra.mxu0 %v2649
  %3672 = vmatprep.subr.bf16.mxu0 %v2658
  %3673 = vmatpush1.bf16.msra.mxu0 %v2657
  %3674 = vmatprep.subr.bf16.mxu0 %v2666
  %3675 = vmatpush1.bf16.msra.mxu0 %v2665
  %3676 = vmatprep.subr.bf16.mxu0 %v2674
  %3677 = vmatpush1.bf16.msra.mxu0 %v2673
  %3678 = vmatprep.subr.bf16.mxu0 %v2682
  %3679 = vmatpush1.bf16.msra.mxu0 %v2681
  %3680 = vmatprep.mubr.bf16.mxu0 %v82
  %3681 = vmatmul.mubr.bf16.gmra.mrb[0].mxu0 %v81
  %v3682 = vpop.f32.mrb[0].mxu0
  %v3683 = vadd.f32 %v3642, %v3682
  %v3684 = vpop.f32.mrb[0].mxu0
  %v3685 = vadd.f32 %v3644, %v3684
  %v3686 = vpop.f32.mrb[0].mxu0
  %v3687 = vpop.f32.mrb[0].mxu0
  %3688 = vdwg.mxu0
  %3689 = vmatprep.subr.bf16.mxu0 %v2180
  %3690 = vmatpush1.bf16.msra.mxu0 %v2179
  %3691 = vmatprep.subr.bf16.mxu0 %v2188
  %3692 = vmatpush1.bf16.msra.mxu0 %v2187
  %3693 = vmatprep.subr.bf16.mxu0 %v2196
  %3694 = vmatpush1.bf16.msra.mxu0 %v2195
  %3695 = vmatprep.subr.bf16.mxu0 %v2204
  %3696 = vmatpush1.bf16.msra.mxu0 %v2203
  %3697 = vmatprep.subr.bf16.mxu0 %v2212
  %3698 = vmatpush1.bf16.msra.mxu0 %v2211
  %3699 = vmatprep.subr.bf16.mxu0 %v2220
  %3700 = vmatpush1.bf16.msra.mxu0 %v2219
  %3701 = vmatprep.subr.bf16.mxu0 %v2228
  %3702 = vmatpush1.bf16.msra.mxu0 %v2227
  %3703 = vmatprep.subr.bf16.mxu0 %v2236
  %3704 = vmatpush1.bf16.msra.mxu0 %v2235
  %3705 = vmatprep.subr.bf16.mxu0 %v2244
  %3706 = vmatpush1.bf16.msra.mxu0 %v2243
  %3707 = vmatprep.subr.bf16.mxu0 %v2252
  %3708 = vmatpush1.bf16.msra.mxu0 %v2251
  %3709 = vmatprep.subr.bf16.mxu0 %v2260
  %3710 = vmatpush1.bf16.msra.mxu0 %v2259
  %3711 = vmatprep.subr.bf16.mxu0 %v2268
  %3712 = vmatpush1.bf16.msra.mxu0 %v2267
  %3713 = vmatprep.subr.bf16.mxu0 %v2276
  %3714 = vmatpush1.bf16.msra.mxu0 %v2275
  %3715 = vmatprep.subr.bf16.mxu0 %v2284
  %3716 = vmatpush1.bf16.msra.mxu0 %v2283
  %3717 = vmatprep.subr.bf16.mxu0 %v2292
  %3718 = vmatpush1.bf16.msra.mxu0 %v2291
  %3719 = vmatprep.subr.bf16.mxu0 %v2300
  %3720 = vmatpush1.bf16.msra.mxu0 %v2299
  %3721 = vmatprep.mubr.bf16.mxu0 %v76
  %3722 = vmatmul.mubr.bf16.gmra.mrb[0].mxu0 %v75
  %v3723 = vpop.f32.mrb[0].mxu0
  %v3724 = vadd.f32 %v624, %v3723
  %v3725 = vpop.f32.mrb[0].mxu0
  %v3726 = vadd.f32 %v628, %v3725
  %v3727 = vpop.f32.mrb[0].mxu0
  %v3728 = vpop.f32.mrb[0].mxu0
  %3729 = vdwg.mxu0
  %3730 = vmatprep.subr.bf16.mxu0 %v2308
  %3731 = vmatpush1.bf16.msra.mxu0 %v2307
  %3732 = vmatprep.subr.bf16.mxu0 %v2316
  %3733 = vmatpush1.bf16.msra.mxu0 %v2315
  %3734 = vmatprep.subr.bf16.mxu0 %v2324
  %3735 = vmatpush1.bf16.msra.mxu0 %v2323
  %3736 = vmatprep.subr.bf16.mxu0 %v2332
  %3737 = vmatpush1.bf16.msra.mxu0 %v2331
  %3738 = vmatprep.subr.bf16.mxu0 %v2340
  %3739 = vmatpush1.bf16.msra.mxu0 %v2339
  %3740 = vmatprep.subr.bf16.mxu0 %v2348
  %3741 = vmatpush1.bf16.msra.mxu0 %v2347
  %3742 = vmatprep.subr.bf16.mxu0 %v2356
  %3743 = vmatpush1.bf16.msra.mxu0 %v2355
  %3744 = vmatprep.subr.bf16.mxu0 %v2364
  %3745 = vmatpush1.bf16.msra.mxu0 %v2363
  %3746 = vmatprep.subr.bf16.mxu0 %v2372
  %3747 = vmatpush1.bf16.msra.mxu0 %v2371
  %3748 = vmatprep.subr.bf16.mxu0 %v2380
  %3749 = vmatpush1.bf16.msra.mxu0 %v2379
  %3750 = vmatprep.subr.bf16.mxu0 %v2388
  %3751 = vmatpush1.bf16.msra.mxu0 %v2387
  %3752 = vmatprep.subr.bf16.mxu0 %v2396
  %3753 = vmatpush1.bf16.msra.mxu0 %v2395
  %3754 = vmatprep.subr.bf16.mxu0 %v2404
  %3755 = vmatpush1.bf16.msra.mxu0 %v2403
  %3756 = vmatprep.subr.bf16.mxu0 %v2412
  %3757 = vmatpush1.bf16.msra.mxu0 %v2411
  %3758 = vmatprep.subr.bf16.mxu0 %v2420
  %3759 = vmatpush1.bf16.msra.mxu0 %v2419
  %3760 = vmatprep.subr.bf16.mxu0 %v2428
  %3761 = vmatpush1.bf16.msra.mxu0 %v2427
  %3762 = vmatprep.mubr.bf16.mxu0 %v78
  %3763 = vmatmul.mubr.bf16.gmra.mrb[0].mxu0 %v77
  %v3764 = vpop.f32.mrb[0].mxu0
  %v3765 = vadd.f32 %v3724, %v3764
  %v3766 = vpop.f32.mrb[0].mxu0
  %v3767 = vadd.f32 %v3726, %v3766
  %v3768 = vpop.f32.mrb[0].mxu0
  %v3769 = vpop.f32.mrb[0].mxu0
  %3770 = vdwg.mxu0
  %3771 = vmatprep.subr.bf16.mxu0 %v2436
  %3772 = vmatpush1.bf16.msra.mxu0 %v2435
  %3773 = vmatprep.subr.bf16.mxu0 %v2444
  %3774 = vmatpush1.bf16.msra.mxu0 %v2443
  %3775 = vmatprep.subr.bf16.mxu0 %v2452
  %3776 = vmatpush1.bf16.msra.mxu0 %v2451
  %3777 = vmatprep.subr.bf16.mxu0 %v2460
  %3778 = vmatpush1.bf16.msra.mxu0 %v2459
  %3779 = vmatprep.subr.bf16.mxu0 %v2468
  %3780 = vmatpush1.bf16.msra.mxu0 %v2467
  %3781 = vmatprep.subr.bf16.mxu0 %v2476
  %3782 = vmatpush1.bf16.msra.mxu0 %v2475
  %3783 = vmatprep.subr.bf16.mxu0 %v2484
  %3784 = vmatpush1.bf16.msra.mxu0 %v2483
  %3785 = vmatprep.subr.bf16.mxu0 %v2492
  %3786 = vmatpush1.bf16.msra.mxu0 %v2491
  %3787 = vmatprep.subr.bf16.mxu0 %v2500
  %3788 = vmatpush1.bf16.msra.mxu0 %v2499
  %3789 = vmatprep.subr.bf16.mxu0 %v2508
  %3790 = vmatpush1.bf16.msra.mxu0 %v2507
  %3791 = vmatprep.subr.bf16.mxu0 %v2516
  %3792 = vmatpush1.bf16.msra.mxu0 %v2515
  %3793 = vmatprep.subr.bf16.mxu0 %v2524
  %3794 = vmatpush1.bf16.msra.mxu0 %v2523
  %3795 = vmatprep.subr.bf16.mxu0 %v2532
  %3796 = vmatpush1.bf16.msra.mxu0 %v2531
  %3797 = vmatprep.subr.bf16.mxu0 %v2540
  %3798 = vmatpush1.bf16.msra.mxu0 %v2539
  %3799 = vmatprep.subr.bf16.mxu0 %v2548
  %3800 = vmatpush1.bf16.msra.mxu0 %v2547
  %3801 = vmatprep.subr.bf16.mxu0 %v2556
  %3802 = vmatpush1.bf16.msra.mxu0 %v2555
  %3803 = vmatprep.mubr.bf16.mxu0 %v80
  %3804 = vmatmul.mubr.bf16.gmra.mrb[0].mxu0 %v79
  %v3805 = vpop.f32.mrb[0].mxu0
  %v3806 = vadd.f32 %v3765, %v3805
  %v3807 = vpop.f32.mrb[0].mxu0
  %v3808 = vadd.f32 %v3767, %v3807
  %v3809 = vpop.f32.mrb[0].mxu0
  %v3810 = vpop.f32.mrb[0].mxu0
  %3811 = vdwg.mxu0
  %3812 = vmatprep.subr.bf16.mxu0 %v2564
  %3813 = vmatpush1.bf16.msra.mxu0 %v2563
  %3814 = vmatprep.subr.bf16.mxu0 %v2572
  %3815 = vmatpush1.bf16.msra.mxu0 %v2571
  %3816 = vmatprep.subr.bf16.mxu0 %v2580
  %3817 = vmatpush1.bf16.msra.mxu0 %v2579
  %3818 = vmatprep.subr.bf16.mxu0 %v2588
  %3819 = vmatpush1.bf16.msra.mxu0 %v2587
  %3820 = vmatprep.subr.bf16.mxu0 %v2596
  %3821 = vmatpush1.bf16.msra.mxu0 %v2595
  %3822 = vmatprep.subr.bf16.mxu0 %v2604
  %3823 = vmatpush1.bf16.msra.mxu0 %v2603
  %3824 = vmatprep.subr.bf16.mxu0 %v2612
  %3825 = vmatpush1.bf16.msra.mxu0 %v2611
  %3826 = vmatprep.subr.bf16.mxu0 %v2620
  %3827 = vmatpush1.bf16.msra.mxu0 %v2619
  %3828 = vmatprep.subr.bf16.mxu0 %v2628
  %3829 = vmatpush1.bf16.msra.mxu0 %v2627
  %3830 = vmatprep.subr.bf16.mxu0 %v2636
  %3831 = vmatpush1.bf16.msra.mxu0 %v2635
  %3832 = vmatprep.subr.bf16.mxu0 %v2644
  %3833 = vmatpush1.bf16.msra.mxu0 %v2643
  %3834 = vmatprep.subr.bf16.mxu0 %v2652
  %3835 = vmatpush1.bf16.msra.mxu0 %v2651
  %3836 = vmatprep.subr.bf16.mxu0 %v2660
  %3837 = vmatpush1.bf16.msra.mxu0 %v2659
  %3838 = vmatprep.subr.bf16.mxu0 %v2668
  %3839 = vmatpush1.bf16.msra.mxu0 %v2667
  %3840 = vmatprep.subr.bf16.mxu0 %v2676
  %3841 = vmatpush1.bf16.msra.mxu0 %v2675
  %3842 = vmatprep.subr.bf16.mxu0 %v2684
  %3843 = vmatpush1.bf16.msra.mxu0 %v2683
  %3844 = vmatprep.mubr.bf16.mxu0 %v82
  %3845 = vmatmul.mubr.bf16.gmra.mrb[0].mxu0 %v81
  %v3846 = vpop.f32.mrb[0].mxu0
  %v3847 = vadd.f32 %v3806, %v3846
  %v3848 = vpop.f32.mrb[0].mxu0
  %v3849 = vadd.f32 %v3808, %v3848
  %v3850 = vpop.f32.mrb[0].mxu0
  %v3851 = vpop.f32.mrb[0].mxu0
  %3852 = vdwg.mxu0
  %v3853 = vmax.f32 %v3355, 0.0
  %v3854 = vmax.f32 %v3357, 0.0
  %v3855 = vmax.f32 %v3519, 0.0
  %v3856 = vmax.f32 %v3521, 0.0
  %v3857 = vmax.f32 %v3683, 0.0
  %v3858 = vmax.f32 %v3685, 0.0
  %v3859 = vmax.f32 %v3847, 0.0
  %v3860 = vmax.f32 %v3849, 0.0
  %v3861 = vpack.c.bf16 %v3853, %v3853
  %v3862 = vpack.c.bf16 %v3854, %v3854
  %v3863 = vpack.c.bf16 %v3855, %v3855
  %v3864 = vpack.c.bf16 %v3856, %v3856
  %v3865 = vpack.c.bf16 %v3857, %v3857
  %v3866 = vpack.c.bf16 %v3858, %v3858
  %v3867 = vpack.c.bf16 %v3859, %v3859
  %v3868 = vpack.c.bf16 %v3860, %v3860
  %v3869 = vld [vmem:[%s3] sm:$0xff]
  %v3870 = vld [vmem:[%s3 + $0x8] sm:$0xff]
  %v3871 = vld [vmem:[%s3 + $0x10] sm:$0xff]
  %v3872 = vld [vmem:[%s3 + $0x18] sm:$0xff]
  %v3873 = vld [vmem:[%s3 + $0x20] sm:$0xff]
  %v3874 = vld [vmem:[%s3 + $0x28] sm:$0xff]
  %v3875 = vld [vmem:[%s3 + $0x30] sm:$0xff]
  %v3876 = vld [vmem:[%s3 + $0x38] sm:$0xff]
  %v3877 = vld [vmem:[%s3 + $0x40] sm:$0xff]
  %v3878 = vld [vmem:[%s3 + $0x48] sm:$0xff]
  %v3879 = vld [vmem:[%s3 + $0x50] sm:$0xff]
  %v3880 = vld [vmem:[%s3 + $0x58] sm:$0xff]
  %v3881 = vld [vmem:[%s3 + $0x60] sm:$0xff]
  %v3882 = vld [vmem:[%s3 + $0x68] sm:$0xff]
  %v3883 = vld [vmem:[%s3 + $0x70] sm:$0xff]
  %v3884 = vld [vmem:[%s3 + $0x78] sm:$0xff]
  %v3885 = vld [vmem:[%s3 + $0x80] sm:$0xff]
  %v3886 = vld [vmem:[%s3 + $0x88] sm:$0xff]
  %v3887 = vld [vmem:[%s3 + $0x90] sm:$0xff]
  %v3888 = vld [vmem:[%s3 + $0x98] sm:$0xff]
  %v3889 = vld [vmem:[%s3 + $0xa0] sm:$0xff]
  %v3890 = vld [vmem:[%s3 + $0xa8] sm:$0xff]
  %v3891 = vld [vmem:[%s3 + $0xb0] sm:$0xff]
  %v3892 = vld [vmem:[%s3 + $0xb8] sm:$0xff]
  %v3893 = vld [vmem:[%s3 + $0xc0] sm:$0xff]
  %v3894 = vld [vmem:[%s3 + $0xc8] sm:$0xff]
  %v3895 = vld [vmem:[%s3 + $0xd0] sm:$0xff]
  %v3896 = vld [vmem:[%s3 + $0xd8] sm:$0xff]
  %v3897 = vld [vmem:[%s3 + $0xe0] sm:$0xff]
  %v3898 = vld [vmem:[%s3 + $0xe8] sm:$0xff]
  %v3899 = vld [vmem:[%s3 + $0xf0] sm:$0xff]
  %v3900 = vld [vmem:[%s3 + $0xf8] sm:$0xff]
  %v3901 = vld [vmem:[%s3 + $0x100] sm:$0xff]
  %v3902 = vld [vmem:[%s3 + $0x108] sm:$0xff]
  %v3903 = vld [vmem:[%s3 + $0x110] sm:$0xff]
  %v3904 = vld [vmem:[%s3 + $0x118] sm:$0xff]
  %v3905 = vld [vmem:[%s3 + $0x120] sm:$0xff]
  %v3906 = vld [vmem:[%s3 + $0x128] sm:$0xff]
  %v3907 = vld [vmem:[%s3 + $0x130] sm:$0xff]
  %v3908 = vld [vmem:[%s3 + $0x138] sm:$0xff]
  %v3909 = vld [vmem:[%s3 + $0x140] sm:$0xff]
  %v3910 = vld [vmem:[%s3 + $0x148] sm:$0xff]
  %v3911 = vld [vmem:[%s3 + $0x150] sm:$0xff]
  %v3912 = vld [vmem:[%s3 + $0x158] sm:$0xff]
  %v3913 = vld [vmem:[%s3 + $0x160] sm:$0xff]
  %v3914 = vld [vmem:[%s3 + $0x168] sm:$0xff]
  %v3915 = vld [vmem:[%s3 + $0x170] sm:$0xff]
  %v3916 = vld [vmem:[%s3 + $0x178] sm:$0xff]
  %v3917 = vld [vmem:[%s3 + $0x180] sm:$0xff]
  %v3918 = vld [vmem:[%s3 + $0x188] sm:$0xff]
  %v3919 = vld [vmem:[%s3 + $0x190] sm:$0xff]
  %v3920 = vld [vmem:[%s3 + $0x198] sm:$0xff]
  %v3921 = vld [vmem:[%s3 + $0x1a0] sm:$0xff]
  %v3922 = vld [vmem:[%s3 + $0x1a8] sm:$0xff]
  %v3923 = vld [vmem:[%s3 + $0x1b0] sm:$0xff]
  %v3924 = vld [vmem:[%s3 + $0x1b8] sm:$0xff]
  %v3925 = vld [vmem:[%s3 + $0x1c0] sm:$0xff]
  %v3926 = vld [vmem:[%s3 + $0x1c8] sm:$0xff]
  %v3927 = vld [vmem:[%s3 + $0x1d0] sm:$0xff]
  %v3928 = vld [vmem:[%s3 + $0x1d8] sm:$0xff]
  %v3929 = vld [vmem:[%s3 + $0x1e0] sm:$0xff]
  %v3930 = vld [vmem:[%s3 + $0x1e8] sm:$0xff]
  %v3931 = vld [vmem:[%s3 + $0x1f0] sm:$0xff]
  %v3932 = vld [vmem:[%s3 + $0x1f8] sm:$0xff]
  %v3933 = vld [vmem:[%s3 + $0x200] sm:$0xff]
  %v3934 = vld [vmem:[%s3 + $0x208] sm:$0xff]
  %v3935 = vld [vmem:[%s3 + $0x210] sm:$0xff]
  %v3936 = vld [vmem:[%s3 + $0x218] sm:$0xff]
  %v3937 = vld [vmem:[%s3 + $0x220] sm:$0xff]
  %v3938 = vld [vmem:[%s3 + $0x228] sm:$0xff]
  %v3939 = vld [vmem:[%s3 + $0x230] sm:$0xff]
  %v3940 = vld [vmem:[%s3 + $0x238] sm:$0xff]
  %v3941 = vld [vmem:[%s3 + $0x240] sm:$0xff]
  %v3942 = vld [vmem:[%s3 + $0x248] sm:$0xff]
  %v3943 = vld [vmem:[%s3 + $0x250] sm:$0xff]
  %v3944 = vld [vmem:[%s3 + $0x258] sm:$0xff]
  %v3945 = vld [vmem:[%s3 + $0x260] sm:$0xff]
  %v3946 = vld [vmem:[%s3 + $0x268] sm:$0xff]
  %v3947 = vld [vmem:[%s3 + $0x270] sm:$0xff]
  %v3948 = vld [vmem:[%s3 + $0x278] sm:$0xff]
  %v3949 = vld [vmem:[%s3 + $0x280] sm:$0xff]
  %v3950 = vld [vmem:[%s3 + $0x288] sm:$0xff]
  %v3951 = vld [vmem:[%s3 + $0x290] sm:$0xff]
  %v3952 = vld [vmem:[%s3 + $0x298] sm:$0xff]
  %v3953 = vld [vmem:[%s3 + $0x2a0] sm:$0xff]
  %v3954 = vld [vmem:[%s3 + $0x2a8] sm:$0xff]
  %v3955 = vld [vmem:[%s3 + $0x2b0] sm:$0xff]
  %v3956 = vld [vmem:[%s3 + $0x2b8] sm:$0xff]
  %v3957 = vld [vmem:[%s3 + $0x2c0] sm:$0xff]
  %v3958 = vld [vmem:[%s3 + $0x2c8] sm:$0xff]
  %v3959 = vld [vmem:[%s3 + $0x2d0] sm:$0xff]
  %v3960 = vld [vmem:[%s3 + $0x2d8] sm:$0xff]
  %v3961 = vld [vmem:[%s3 + $0x2e0] sm:$0xff]
  %v3962 = vld [vmem:[%s3 + $0x2e8] sm:$0xff]
  %v3963 = vld [vmem:[%s3 + $0x2f0] sm:$0xff]
  %v3964 = vld [vmem:[%s3 + $0x2f8] sm:$0xff]
  %v3965 = vld [vmem:[%s3 + $0x300] sm:$0xff]
  %v3966 = vld [vmem:[%s3 + $0x308] sm:$0xff]
  %v3967 = vld [vmem:[%s3 + $0x310] sm:$0xff]
  %v3968 = vld [vmem:[%s3 + $0x318] sm:$0xff]
  %v3969 = vld [vmem:[%s3 + $0x320] sm:$0xff]
  %v3970 = vld [vmem:[%s3 + $0x328] sm:$0xff]
  %v3971 = vld [vmem:[%s3 + $0x330] sm:$0xff]
  %v3972 = vld [vmem:[%s3 + $0x338] sm:$0xff]
  %v3973 = vld [vmem:[%s3 + $0x340] sm:$0xff]
  %v3974 = vld [vmem:[%s3 + $0x348] sm:$0xff]
  %v3975 = vld [vmem:[%s3 + $0x350] sm:$0xff]
  %v3976 = vld [vmem:[%s3 + $0x358] sm:$0xff]
  %v3977 = vld [vmem:[%s3 + $0x360] sm:$0xff]
  %v3978 = vld [vmem:[%s3 + $0x368] sm:$0xff]
  %v3979 = vld [vmem:[%s3 + $0x370] sm:$0xff]
  %v3980 = vld [vmem:[%s3 + $0x378] sm:$0xff]
  %v3981 = vld [vmem:[%s3 + $0x380] sm:$0xff]
  %v3982 = vld [vmem:[%s3 + $0x388] sm:$0xff]
  %v3983 = vld [vmem:[%s3 + $0x390] sm:$0xff]
  %v3984 = vld [vmem:[%s3 + $0x398] sm:$0xff]
  %v3985 = vld [vmem:[%s3 + $0x3a0] sm:$0xff]
  %v3986 = vld [vmem:[%s3 + $0x3a8] sm:$0xff]
  %v3987 = vld [vmem:[%s3 + $0x3b0] sm:$0xff]
  %v3988 = vld [vmem:[%s3 + $0x3b8] sm:$0xff]
  %v3989 = vld [vmem:[%s3 + $0x3c0] sm:$0xff]
  %v3990 = vld [vmem:[%s3 + $0x3c8] sm:$0xff]
  %v3991 = vld [vmem:[%s3 + $0x3d0] sm:$0xff]
  %v3992 = vld [vmem:[%s3 + $0x3d8] sm:$0xff]
  %v3993 = vld [vmem:[%s3 + $0x3e0] sm:$0xff]
  %v3994 = vld [vmem:[%s3 + $0x3e8] sm:$0xff]
  %v3995 = vld [vmem:[%s3 + $0x3f0] sm:$0xff]
  %v3996 = vld [vmem:[%s3 + $0x3f8] sm:$0xff]
  %v3997 = vld [vmem:[%s3 + $0x400] sm:$0xff]
  %v3998 = vld [vmem:[%s3 + $0x408] sm:$0xff]
  %v3999 = vld [vmem:[%s3 + $0x410] sm:$0xff]
  %v4000 = vld [vmem:[%s3 + $0x418] sm:$0xff]
  %v4001 = vld [vmem:[%s3 + $0x420] sm:$0xff]
  %v4002 = vld [vmem:[%s3 + $0x428] sm:$0xff]
  %v4003 = vld [vmem:[%s3 + $0x430] sm:$0xff]
  %v4004 = vld [vmem:[%s3 + $0x438] sm:$0xff]
  %v4005 = vld [vmem:[%s3 + $0x440] sm:$0xff]
  %v4006 = vld [vmem:[%s3 + $0x448] sm:$0xff]
  %v4007 = vld [vmem:[%s3 + $0x450] sm:$0xff]
  %v4008 = vld [vmem:[%s3 + $0x458] sm:$0xff]
  %v4009 = vld [vmem:[%s3 + $0x460] sm:$0xff]
  %v4010 = vld [vmem:[%s3 + $0x468] sm:$0xff]
  %v4011 = vld [vmem:[%s3 + $0x470] sm:$0xff]
  %v4012 = vld [vmem:[%s3 + $0x478] sm:$0xff]
  %v4013 = vld [vmem:[%s3 + $0x480] sm:$0xff]
  %v4014 = vld [vmem:[%s3 + $0x488] sm:$0xff]
  %v4015 = vld [vmem:[%s3 + $0x490] sm:$0xff]
  %v4016 = vld [vmem:[%s3 + $0x498] sm:$0xff]
  %v4017 = vld [vmem:[%s3 + $0x4a0] sm:$0xff]
  %v4018 = vld [vmem:[%s3 + $0x4a8] sm:$0xff]
  %v4019 = vld [vmem:[%s3 + $0x4b0] sm:$0xff]
  %v4020 = vld [vmem:[%s3 + $0x4b8] sm:$0xff]
  %v4021 = vld [vmem:[%s3 + $0x4c0] sm:$0xff]
  %v4022 = vld [vmem:[%s3 + $0x4c8] sm:$0xff]
  %v4023 = vld [vmem:[%s3 + $0x4d0] sm:$0xff]
  %v4024 = vld [vmem:[%s3 + $0x4d8] sm:$0xff]
  %v4025 = vld [vmem:[%s3 + $0x4e0] sm:$0xff]
  %v4026 = vld [vmem:[%s3 + $0x4e8] sm:$0xff]
  %v4027 = vld [vmem:[%s3 + $0x4f0] sm:$0xff]
  %v4028 = vld [vmem:[%s3 + $0x4f8] sm:$0xff]
  %v4029 = vld [vmem:[%s3 + $0x500] sm:$0xff]
  %v4030 = vld [vmem:[%s3 + $0x508] sm:$0xff]
  %v4031 = vld [vmem:[%s3 + $0x510] sm:$0xff]
  %v4032 = vld [vmem:[%s3 + $0x518] sm:$0xff]
  %v4033 = vld [vmem:[%s3 + $0x520] sm:$0xff]
  %v4034 = vld [vmem:[%s3 + $0x528] sm:$0xff]
  %v4035 = vld [vmem:[%s3 + $0x530] sm:$0xff]
  %v4036 = vld [vmem:[%s3 + $0x538] sm:$0xff]
  %v4037 = vld [vmem:[%s3 + $0x540] sm:$0xff]
  %v4038 = vld [vmem:[%s3 + $0x548] sm:$0xff]
  %v4039 = vld [vmem:[%s3 + $0x550] sm:$0xff]
  %v4040 = vld [vmem:[%s3 + $0x558] sm:$0xff]
  %v4041 = vld [vmem:[%s3 + $0x560] sm:$0xff]
  %v4042 = vld [vmem:[%s3 + $0x568] sm:$0xff]
  %v4043 = vld [vmem:[%s3 + $0x570] sm:$0xff]
  %v4044 = vld [vmem:[%s3 + $0x578] sm:$0xff]
  %v4045 = vld [vmem:[%s3 + $0x580] sm:$0xff]
  %v4046 = vld [vmem:[%s3 + $0x588] sm:$0xff]
  %v4047 = vld [vmem:[%s3 + $0x590] sm:$0xff]
  %v4048 = vld [vmem:[%s3 + $0x598] sm:$0xff]
  %v4049 = vld [vmem:[%s3 + $0x5a0] sm:$0xff]
  %v4050 = vld [vmem:[%s3 + $0x5a8] sm:$0xff]
  %v4051 = vld [vmem:[%s3 + $0x5b0] sm:$0xff]
  %v4052 = vld [vmem:[%s3 + $0x5b8] sm:$0xff]
  %v4053 = vld [vmem:[%s3 + $0x5c0] sm:$0xff]
  %v4054 = vld [vmem:[%s3 + $0x5c8] sm:$0xff]
  %v4055 = vld [vmem:[%s3 + $0x5d0] sm:$0xff]
  %v4056 = vld [vmem:[%s3 + $0x5d8] sm:$0xff]
  %v4057 = vld [vmem:[%s3 + $0x5e0] sm:$0xff]
  %v4058 = vld [vmem:[%s3 + $0x5e8] sm:$0xff]
  %v4059 = vld [vmem:[%s3 + $0x5f0] sm:$0xff]
  %v4060 = vld [vmem:[%s3 + $0x5f8] sm:$0xff]
  %v4061 = vld [vmem:[%s3 + $0x600] sm:$0xff]
  %v4062 = vld [vmem:[%s3 + $0x608] sm:$0xff]
  %v4063 = vld [vmem:[%s3 + $0x610] sm:$0xff]
  %v4064 = vld [vmem:[%s3 + $0x618] sm:$0xff]
  %v4065 = vld [vmem:[%s3 + $0x620] sm:$0xff]
  %v4066 = vld [vmem:[%s3 + $0x628] sm:$0xff]
  %v4067 = vld [vmem:[%s3 + $0x630] sm:$0xff]
  %v4068 = vld [vmem:[%s3 + $0x638] sm:$0xff]
  %v4069 = vld [vmem:[%s3 + $0x640] sm:$0xff]
  %v4070 = vld [vmem:[%s3 + $0x648] sm:$0xff]
  %v4071 = vld [vmem:[%s3 + $0x650] sm:$0xff]
  %v4072 = vld [vmem:[%s3 + $0x658] sm:$0xff]
  %v4073 = vld [vmem:[%s3 + $0x660] sm:$0xff]
  %v4074 = vld [vmem:[%s3 + $0x668] sm:$0xff]
  %v4075 = vld [vmem:[%s3 + $0x670] sm:$0xff]
  %v4076 = vld [vmem:[%s3 + $0x678] sm:$0xff]
  %v4077 = vld [vmem:[%s3 + $0x680] sm:$0xff]
  %v4078 = vld [vmem:[%s3 + $0x688] sm:$0xff]
  %v4079 = vld [vmem:[%s3 + $0x690] sm:$0xff]
  %v4080 = vld [vmem:[%s3 + $0x698] sm:$0xff]
  %v4081 = vld [vmem:[%s3 + $0x6a0] sm:$0xff]
  %v4082 = vld [vmem:[%s3 + $0x6a8] sm:$0xff]
  %v4083 = vld [vmem:[%s3 + $0x6b0] sm:$0xff]
  %v4084 = vld [vmem:[%s3 + $0x6b8] sm:$0xff]
  %v4085 = vld [vmem:[%s3 + $0x6c0] sm:$0xff]
  %v4086 = vld [vmem:[%s3 + $0x6c8] sm:$0xff]
  %v4087 = vld [vmem:[%s3 + $0x6d0] sm:$0xff]
  %v4088 = vld [vmem:[%s3 + $0x6d8] sm:$0xff]
  %v4089 = vld [vmem:[%s3 + $0x6e0] sm:$0xff]
  %v4090 = vld [vmem:[%s3 + $0x6e8] sm:$0xff]
  %v4091 = vld [vmem:[%s3 + $0x6f0] sm:$0xff]
  %v4092 = vld [vmem:[%s3 + $0x6f8] sm:$0xff]
  %v4093 = vld [vmem:[%s3 + $0x700] sm:$0xff]
  %v4094 = vld [vmem:[%s3 + $0x708] sm:$0xff]
  %v4095 = vld [vmem:[%s3 + $0x710] sm:$0xff]
  %v4096 = vld [vmem:[%s3 + $0x718] sm:$0xff]
  %v4097 = vld [vmem:[%s3 + $0x720] sm:$0xff]
  %v4098 = vld [vmem:[%s3 + $0x728] sm:$0xff]
  %v4099 = vld [vmem:[%s3 + $0x730] sm:$0xff]
  %v4100 = vld [vmem:[%s3 + $0x738] sm:$0xff]
  %v4101 = vld [vmem:[%s3 + $0x740] sm:$0xff]
  %v4102 = vld [vmem:[%s3 + $0x748] sm:$0xff]
  %v4103 = vld [vmem:[%s3 + $0x750] sm:$0xff]
  %v4104 = vld [vmem:[%s3 + $0x758] sm:$0xff]
  %v4105 = vld [vmem:[%s3 + $0x760] sm:$0xff]
  %v4106 = vld [vmem:[%s3 + $0x768] sm:$0xff]
  %v4107 = vld [vmem:[%s3 + $0x770] sm:$0xff]
  %v4108 = vld [vmem:[%s3 + $0x778] sm:$0xff]
  %v4109 = vld [vmem:[%s3 + $0x780] sm:$0xff]
  %v4110 = vld [vmem:[%s3 + $0x788] sm:$0xff]
  %v4111 = vld [vmem:[%s3 + $0x790] sm:$0xff]
  %v4112 = vld [vmem:[%s3 + $0x798] sm:$0xff]
  %v4113 = vld [vmem:[%s3 + $0x7a0] sm:$0xff]
  %v4114 = vld [vmem:[%s3 + $0x7a8] sm:$0xff]
  %v4115 = vld [vmem:[%s3 + $0x7b0] sm:$0xff]
  %v4116 = vld [vmem:[%s3 + $0x7b8] sm:$0xff]
  %v4117 = vld [vmem:[%s3 + $0x7c0] sm:$0xff]
  %v4118 = vld [vmem:[%s3 + $0x7c8] sm:$0xff]
  %v4119 = vld [vmem:[%s3 + $0x7d0] sm:$0xff]
  %v4120 = vld [vmem:[%s3 + $0x7d8] sm:$0xff]
  %v4121 = vld [vmem:[%s3 + $0x7e0] sm:$0xff]
  %v4122 = vld [vmem:[%s3 + $0x7e8] sm:$0xff]
  %v4123 = vld [vmem:[%s3 + $0x7f0] sm:$0xff]
  %v4124 = vld [vmem:[%s3 + $0x7f8] sm:$0xff]
  %v4125 = vld [vmem:[%s3 + $0x800] sm:$0xff]
  %v4126 = vld [vmem:[%s3 + $0x808] sm:$0xff]
  %v4127 = vld [vmem:[%s3 + $0x810] sm:$0xff]
  %v4128 = vld [vmem:[%s3 + $0x818] sm:$0xff]
  %v4129 = vld [vmem:[%s3 + $0x820] sm:$0xff]
  %v4130 = vld [vmem:[%s3 + $0x828] sm:$0xff]
  %v4131 = vld [vmem:[%s3 + $0x830] sm:$0xff]
  %v4132 = vld [vmem:[%s3 + $0x838] sm:$0xff]
  %v4133 = vld [vmem:[%s3 + $0x840] sm:$0xff]
  %v4134 = vld [vmem:[%s3 + $0x848] sm:$0xff]
  %v4135 = vld [vmem:[%s3 + $0x850] sm:$0xff]
  %v4136 = vld [vmem:[%s3 + $0x858] sm:$0xff]
  %v4137 = vld [vmem:[%s3 + $0x860] sm:$0xff]
  %v4138 = vld [vmem:[%s3 + $0x868] sm:$0xff]
  %v4139 = vld [vmem:[%s3 + $0x870] sm:$0xff]
  %v4140 = vld [vmem:[%s3 + $0x878] sm:$0xff]
  %v4141 = vld [vmem:[%s3 + $0x880] sm:$0xff]
  %v4142 = vld [vmem:[%s3 + $0x888] sm:$0xff]
  %v4143 = vld [vmem:[%s3 + $0x890] sm:$0xff]
  %v4144 = vld [vmem:[%s3 + $0x898] sm:$0xff]
  %v4145 = vld [vmem:[%s3 + $0x8a0] sm:$0xff]
  %v4146 = vld [vmem:[%s3 + $0x8a8] sm:$0xff]
  %v4147 = vld [vmem:[%s3 + $0x8b0] sm:$0xff]
  %v4148 = vld [vmem:[%s3 + $0x8b8] sm:$0xff]
  %v4149 = vld [vmem:[%s3 + $0x8c0] sm:$0xff]
  %v4150 = vld [vmem:[%s3 + $0x8c8] sm:$0xff]
  %v4151 = vld [vmem:[%s3 + $0x8d0] sm:$0xff]
  %v4152 = vld [vmem:[%s3 + $0x8d8] sm:$0xff]
  %v4153 = vld [vmem:[%s3 + $0x8e0] sm:$0xff]
  %v4154 = vld [vmem:[%s3 + $0x8e8] sm:$0xff]
  %v4155 = vld [vmem:[%s3 + $0x8f0] sm:$0xff]
  %v4156 = vld [vmem:[%s3 + $0x8f8] sm:$0xff]
  %v4157 = vld [vmem:[%s3 + $0x900] sm:$0xff]
  %v4158 = vld [vmem:[%s3 + $0x908] sm:$0xff]
  %v4159 = vld [vmem:[%s3 + $0x910] sm:$0xff]
  %v4160 = vld [vmem:[%s3 + $0x918] sm:$0xff]
  %v4161 = vld [vmem:[%s3 + $0x920] sm:$0xff]
  %v4162 = vld [vmem:[%s3 + $0x928] sm:$0xff]
  %v4163 = vld [vmem:[%s3 + $0x930] sm:$0xff]
  %v4164 = vld [vmem:[%s3 + $0x938] sm:$0xff]
  %v4165 = vld [vmem:[%s3 + $0x940] sm:$0xff]
  %v4166 = vld [vmem:[%s3 + $0x948] sm:$0xff]
  %v4167 = vld [vmem:[%s3 + $0x950] sm:$0xff]
  %v4168 = vld [vmem:[%s3 + $0x958] sm:$0xff]
  %v4169 = vld [vmem:[%s3 + $0x960] sm:$0xff]
  %v4170 = vld [vmem:[%s3 + $0x968] sm:$0xff]
  %v4171 = vld [vmem:[%s3 + $0x970] sm:$0xff]
  %v4172 = vld [vmem:[%s3 + $0x978] sm:$0xff]
  %v4173 = vld [vmem:[%s3 + $0x980] sm:$0xff]
  %v4174 = vld [vmem:[%s3 + $0x988] sm:$0xff]
  %v4175 = vld [vmem:[%s3 + $0x990] sm:$0xff]
  %v4176 = vld [vmem:[%s3 + $0x998] sm:$0xff]
  %v4177 = vld [vmem:[%s3 + $0x9a0] sm:$0xff]
  %v4178 = vld [vmem:[%s3 + $0x9a8] sm:$0xff]
  %v4179 = vld [vmem:[%s3 + $0x9b0] sm:$0xff]
  %v4180 = vld [vmem:[%s3 + $0x9b8] sm:$0xff]
  %v4181 = vld [vmem:[%s3 + $0x9c0] sm:$0xff]
  %v4182 = vld [vmem:[%s3 + $0x9c8] sm:$0xff]
  %v4183 = vld [vmem:[%s3 + $0x9d0] sm:$0xff]
  %v4184 = vld [vmem:[%s3 + $0x9d8] sm:$0xff]
  %v4185 = vld [vmem:[%s3 + $0x9e0] sm:$0xff]
  %v4186 = vld [vmem:[%s3 + $0x9e8] sm:$0xff]
  %v4187 = vld [vmem:[%s3 + $0x9f0] sm:$0xff]
  %v4188 = vld [vmem:[%s3 + $0x9f8] sm:$0xff]
  %v4189 = vld [vmem:[%s3 + $0xa00] sm:$0xff]
  %v4190 = vld [vmem:[%s3 + $0xa08] sm:$0xff]
  %v4191 = vld [vmem:[%s3 + $0xa10] sm:$0xff]
  %v4192 = vld [vmem:[%s3 + $0xa18] sm:$0xff]
  %v4193 = vld [vmem:[%s3 + $0xa20] sm:$0xff]
  %v4194 = vld [vmem:[%s3 + $0xa28] sm:$0xff]
  %v4195 = vld [vmem:[%s3 + $0xa30] sm:$0xff]
  %v4196 = vld [vmem:[%s3 + $0xa38] sm:$0xff]
  %v4197 = vld [vmem:[%s3 + $0xa40] sm:$0xff]
  %v4198 = vld [vmem:[%s3 + $0xa48] sm:$0xff]
  %v4199 = vld [vmem:[%s3 + $0xa50] sm:$0xff]
  %v4200 = vld [vmem:[%s3 + $0xa58] sm:$0xff]
  %v4201 = vld [vmem:[%s3 + $0xa60] sm:$0xff]
  %v4202 = vld [vmem:[%s3 + $0xa68] sm:$0xff]
  %v4203 = vld [vmem:[%s3 + $0xa70] sm:$0xff]
  %v4204 = vld [vmem:[%s3 + $0xa78] sm:$0xff]
  %v4205 = vld [vmem:[%s3 + $0xa80] sm:$0xff]
  %v4206 = vld [vmem:[%s3 + $0xa88] sm:$0xff]
  %v4207 = vld [vmem:[%s3 + $0xa90] sm:$0xff]
  %v4208 = vld [vmem:[%s3 + $0xa98] sm:$0xff]
  %v4209 = vld [vmem:[%s3 + $0xaa0] sm:$0xff]
  %v4210 = vld [vmem:[%s3 + $0xaa8] sm:$0xff]
  %v4211 = vld [vmem:[%s3 + $0xab0] sm:$0xff]
  %v4212 = vld [vmem:[%s3 + $0xab8] sm:$0xff]
  %v4213 = vld [vmem:[%s3 + $0xac0] sm:$0xff]
  %v4214 = vld [vmem:[%s3 + $0xac8] sm:$0xff]
  %v4215 = vld [vmem:[%s3 + $0xad0] sm:$0xff]
  %v4216 = vld [vmem:[%s3 + $0xad8] sm:$0xff]
  %v4217 = vld [vmem:[%s3 + $0xae0] sm:$0xff]
  %v4218 = vld [vmem:[%s3 + $0xae8] sm:$0xff]
  %v4219 = vld [vmem:[%s3 + $0xaf0] sm:$0xff]
  %v4220 = vld [vmem:[%s3 + $0xaf8] sm:$0xff]
  %v4221 = vld [vmem:[%s3 + $0xb00] sm:$0xff]
  %v4222 = vld [vmem:[%s3 + $0xb08] sm:$0xff]
  %v4223 = vld [vmem:[%s3 + $0xb10] sm:$0xff]
  %v4224 = vld [vmem:[%s3 + $0xb18] sm:$0xff]
  %v4225 = vld [vmem:[%s3 + $0xb20] sm:$0xff]
  %v4226 = vld [vmem:[%s3 + $0xb28] sm:$0xff]
  %v4227 = vld [vmem:[%s3 + $0xb30] sm:$0xff]
  %v4228 = vld [vmem:[%s3 + $0xb38] sm:$0xff]
  %v4229 = vld [vmem:[%s3 + $0xb40] sm:$0xff]
  %v4230 = vld [vmem:[%s3 + $0xb48] sm:$0xff]
  %v4231 = vld [vmem:[%s3 + $0xb50] sm:$0xff]
  %v4232 = vld [vmem:[%s3 + $0xb58] sm:$0xff]
  %v4233 = vld [vmem:[%s3 + $0xb60] sm:$0xff]
  %v4234 = vld [vmem:[%s3 + $0xb68] sm:$0xff]
  %v4235 = vld [vmem:[%s3 + $0xb70] sm:$0xff]
  %v4236 = vld [vmem:[%s3 + $0xb78] sm:$0xff]
  %v4237 = vld [vmem:[%s3 + $0xb80] sm:$0xff]
  %v4238 = vld [vmem:[%s3 + $0xb88] sm:$0xff]
  %v4239 = vld [vmem:[%s3 + $0xb90] sm:$0xff]
  %v4240 = vld [vmem:[%s3 + $0xb98] sm:$0xff]
  %v4241 = vld [vmem:[%s3 + $0xba0] sm:$0xff]
  %v4242 = vld [vmem:[%s3 + $0xba8] sm:$0xff]
  %v4243 = vld [vmem:[%s3 + $0xbb0] sm:$0xff]
  %v4244 = vld [vmem:[%s3 + $0xbb8] sm:$0xff]
  %v4245 = vld [vmem:[%s3 + $0xbc0] sm:$0xff]
  %v4246 = vld [vmem:[%s3 + $0xbc8] sm:$0xff]
  %v4247 = vld [vmem:[%s3 + $0xbd0] sm:$0xff]
  %v4248 = vld [vmem:[%s3 + $0xbd8] sm:$0xff]
  %v4249 = vld [vmem:[%s3 + $0xbe0] sm:$0xff]
  %v4250 = vld [vmem:[%s3 + $0xbe8] sm:$0xff]
  %v4251 = vld [vmem:[%s3 + $0xbf0] sm:$0xff]
  %v4252 = vld [vmem:[%s3 + $0xbf8] sm:$0xff]
  %v4253 = vld [vmem:[%s3 + $0xc00] sm:$0xff]
  %v4254 = vld [vmem:[%s3 + $0xc08] sm:$0xff]
  %v4255 = vld [vmem:[%s3 + $0xc10] sm:$0xff]
  %v4256 = vld [vmem:[%s3 + $0xc18] sm:$0xff]
  %v4257 = vld [vmem:[%s3 + $0xc20] sm:$0xff]
  %v4258 = vld [vmem:[%s3 + $0xc28] sm:$0xff]
  %v4259 = vld [vmem:[%s3 + $0xc30] sm:$0xff]
  %v4260 = vld [vmem:[%s3 + $0xc38] sm:$0xff]
  %v4261 = vld [vmem:[%s3 + $0xc40] sm:$0xff]
  %v4262 = vld [vmem:[%s3 + $0xc48] sm:$0xff]
  %v4263 = vld [vmem:[%s3 + $0xc50] sm:$0xff]
  %v4264 = vld [vmem:[%s3 + $0xc58] sm:$0xff]
  %v4265 = vld [vmem:[%s3 + $0xc60] sm:$0xff]
  %v4266 = vld [vmem:[%s3 + $0xc68] sm:$0xff]
  %v4267 = vld [vmem:[%s3 + $0xc70] sm:$0xff]
  %v4268 = vld [vmem:[%s3 + $0xc78] sm:$0xff]
  %v4269 = vld [vmem:[%s3 + $0xc80] sm:$0xff]
  %v4270 = vld [vmem:[%s3 + $0xc88] sm:$0xff]
  %v4271 = vld [vmem:[%s3 + $0xc90] sm:$0xff]
  %v4272 = vld [vmem:[%s3 + $0xc98] sm:$0xff]
  %v4273 = vld [vmem:[%s3 + $0xca0] sm:$0xff]
  %v4274 = vld [vmem:[%s3 + $0xca8] sm:$0xff]
  %v4275 = vld [vmem:[%s3 + $0xcb0] sm:$0xff]
  %v4276 = vld [vmem:[%s3 + $0xcb8] sm:$0xff]
  %v4277 = vld [vmem:[%s3 + $0xcc0] sm:$0xff]
  %v4278 = vld [vmem:[%s3 + $0xcc8] sm:$0xff]
  %v4279 = vld [vmem:[%s3 + $0xcd0] sm:$0xff]
  %v4280 = vld [vmem:[%s3 + $0xcd8] sm:$0xff]
  %v4281 = vld [vmem:[%s3 + $0xce0] sm:$0xff]
  %v4282 = vld [vmem:[%s3 + $0xce8] sm:$0xff]
  %v4283 = vld [vmem:[%s3 + $0xcf0] sm:$0xff]
  %v4284 = vld [vmem:[%s3 + $0xcf8] sm:$0xff]
  %v4285 = vld [vmem:[%s3 + $0xd00] sm:$0xff]
  %v4286 = vld [vmem:[%s3 + $0xd08] sm:$0xff]
  %v4287 = vld [vmem:[%s3 + $0xd10] sm:$0xff]
  %v4288 = vld [vmem:[%s3 + $0xd18] sm:$0xff]
  %v4289 = vld [vmem:[%s3 + $0xd20] sm:$0xff]
  %v4290 = vld [vmem:[%s3 + $0xd28] sm:$0xff]
  %v4291 = vld [vmem:[%s3 + $0xd30] sm:$0xff]
  %v4292 = vld [vmem:[%s3 + $0xd38] sm:$0xff]
  %v4293 = vld [vmem:[%s3 + $0xd40] sm:$0xff]
  %v4294 = vld [vmem:[%s3 + $0xd48] sm:$0xff]
  %v4295 = vld [vmem:[%s3 + $0xd50] sm:$0xff]
  %v4296 = vld [vmem:[%s3 + $0xd58] sm:$0xff]
  %v4297 = vld [vmem:[%s3 + $0xd60] sm:$0xff]
  %v4298 = vld [vmem:[%s3 + $0xd68] sm:$0xff]
  %v4299 = vld [vmem:[%s3 + $0xd70] sm:$0xff]
  %v4300 = vld [vmem:[%s3 + $0xd78] sm:$0xff]
  %v4301 = vld [vmem:[%s3 + $0xd80] sm:$0xff]
  %v4302 = vld [vmem:[%s3 + $0xd88] sm:$0xff]
  %v4303 = vld [vmem:[%s3 + $0xd90] sm:$0xff]
  %v4304 = vld [vmem:[%s3 + $0xd98] sm:$0xff]
  %v4305 = vld [vmem:[%s3 + $0xda0] sm:$0xff]
  %v4306 = vld [vmem:[%s3 + $0xda8] sm:$0xff]
  %v4307 = vld [vmem:[%s3 + $0xdb0] sm:$0xff]
  %v4308 = vld [vmem:[%s3 + $0xdb8] sm:$0xff]
  %v4309 = vld [vmem:[%s3 + $0xdc0] sm:$0xff]
  %v4310 = vld [vmem:[%s3 + $0xdc8] sm:$0xff]
  %v4311 = vld [vmem:[%s3 + $0xdd0] sm:$0xff]
  %v4312 = vld [vmem:[%s3 + $0xdd8] sm:$0xff]
  %v4313 = vld [vmem:[%s3 + $0xde0] sm:$0xff]
  %v4314 = vld [vmem:[%s3 + $0xde8] sm:$0xff]
  %v4315 = vld [vmem:[%s3 + $0xdf0] sm:$0xff]
  %v4316 = vld [vmem:[%s3 + $0xdf8] sm:$0xff]
  %v4317 = vld [vmem:[%s3 + $0xe00] sm:$0xff]
  %v4318 = vld [vmem:[%s3 + $0xe08] sm:$0xff]
  %v4319 = vld [vmem:[%s3 + $0xe10] sm:$0xff]
  %v4320 = vld [vmem:[%s3 + $0xe18] sm:$0xff]
  %v4321 = vld [vmem:[%s3 + $0xe20] sm:$0xff]
  %v4322 = vld [vmem:[%s3 + $0xe28] sm:$0xff]
  %v4323 = vld [vmem:[%s3 + $0xe30] sm:$0xff]
  %v4324 = vld [vmem:[%s3 + $0xe38] sm:$0xff]
  %v4325 = vld [vmem:[%s3 + $0xe40] sm:$0xff]
  %v4326 = vld [vmem:[%s3 + $0xe48] sm:$0xff]
  %v4327 = vld [vmem:[%s3 + $0xe50] sm:$0xff]
  %v4328 = vld [vmem:[%s3 + $0xe58] sm:$0xff]
  %v4329 = vld [vmem:[%s3 + $0xe60] sm:$0xff]
  %v4330 = vld [vmem:[%s3 + $0xe68] sm:$0xff]
  %v4331 = vld [vmem:[%s3 + $0xe70] sm:$0xff]
  %v4332 = vld [vmem:[%s3 + $0xe78] sm:$0xff]
  %v4333 = vld [vmem:[%s3 + $0xe80] sm:$0xff]
  %v4334 = vld [vmem:[%s3 + $0xe88] sm:$0xff]
  %v4335 = vld [vmem:[%s3 + $0xe90] sm:$0xff]
  %v4336 = vld [vmem:[%s3 + $0xe98] sm:$0xff]
  %v4337 = vld [vmem:[%s3 + $0xea0] sm:$0xff]
  %v4338 = vld [vmem:[%s3 + $0xea8] sm:$0xff]
  %v4339 = vld [vmem:[%s3 + $0xeb0] sm:$0xff]
  %v4340 = vld [vmem:[%s3 + $0xeb8] sm:$0xff]
  %v4341 = vld [vmem:[%s3 + $0xec0] sm:$0xff]
  %v4342 = vld [vmem:[%s3 + $0xec8] sm:$0xff]
  %v4343 = vld [vmem:[%s3 + $0xed0] sm:$0xff]
  %v4344 = vld [vmem:[%s3 + $0xed8] sm:$0xff]
  %v4345 = vld [vmem:[%s3 + $0xee0] sm:$0xff]
  %v4346 = vld [vmem:[%s3 + $0xee8] sm:$0xff]
  %v4347 = vld [vmem:[%s3 + $0xef0] sm:$0xff]
  %v4348 = vld [vmem:[%s3 + $0xef8] sm:$0xff]
  %v4349 = vld [vmem:[%s3 + $0xf00] sm:$0xff]
  %v4350 = vld [vmem:[%s3 + $0xf08] sm:$0xff]
  %v4351 = vld [vmem:[%s3 + $0xf10] sm:$0xff]
  %v4352 = vld [vmem:[%s3 + $0xf18] sm:$0xff]
  %v4353 = vld [vmem:[%s3 + $0xf20] sm:$0xff]
  %v4354 = vld [vmem:[%s3 + $0xf28] sm:$0xff]
  %v4355 = vld [vmem:[%s3 + $0xf30] sm:$0xff]
  %v4356 = vld [vmem:[%s3 + $0xf38] sm:$0xff]
  %v4357 = vld [vmem:[%s3 + $0xf40] sm:$0xff]
  %v4358 = vld [vmem:[%s3 + $0xf48] sm:$0xff]
  %v4359 = vld [vmem:[%s3 + $0xf50] sm:$0xff]
  %v4360 = vld [vmem:[%s3 + $0xf58] sm:$0xff]
  %v4361 = vld [vmem:[%s3 + $0xf60] sm:$0xff]
  %v4362 = vld [vmem:[%s3 + $0xf68] sm:$0xff]
  %v4363 = vld [vmem:[%s3 + $0xf70] sm:$0xff]
  %v4364 = vld [vmem:[%s3 + $0xf78] sm:$0xff]
  %v4365 = vld [vmem:[%s3 + $0xf80] sm:$0xff]
  %v4366 = vld [vmem:[%s3 + $0xf88] sm:$0xff]
  %v4367 = vld [vmem:[%s3 + $0xf90] sm:$0xff]
  %v4368 = vld [vmem:[%s3 + $0xf98] sm:$0xff]
  %v4369 = vld [vmem:[%s3 + $0xfa0] sm:$0xff]
  %v4370 = vld [vmem:[%s3 + $0xfa8] sm:$0xff]
  %v4371 = vld [vmem:[%s3 + $0xfb0] sm:$0xff]
  %v4372 = vld [vmem:[%s3 + $0xfb8] sm:$0xff]
  %v4373 = vld [vmem:[%s3 + $0xfc0] sm:$0xff]
  %v4374 = vld [vmem:[%s3 + $0xfc8] sm:$0xff]
  %v4375 = vld [vmem:[%s3 + $0xfd0] sm:$0xff]
  %v4376 = vld [vmem:[%s3 + $0xfd8] sm:$0xff]
  %v4377 = vld [vmem:[%s3 + $0xfe0] sm:$0xff]
  %v4378 = vld [vmem:[%s3 + $0xfe8] sm:$0xff]
  %v4379 = vld [vmem:[%s3 + $0xff0] sm:$0xff]
  %v4380 = vld [vmem:[%s3 + $0xff8] sm:$0xff]
  %v4381 = vld [vmem:[%s4] sm:$0xff]
  %v4383 = vlaneseq
  %v4384 = vshrl.u32 %v4383, 7
  %v4385 = vsub.s32 0, %v4384
  %v4386 = vrot.slane %v4381, %v4385
  %v4387 = vlaneseq
  %v4388 = vshrl.u32 %v4387, 7
  %v4389 = vsub.s32 1, %v4388
  %v4390 = vrot.slane %v4381, %v4389
  %v4391 = vlaneseq
  %v4392 = vshrl.u32 %v4391, 7
  %v4393 = vsub.s32 2, %v4392
  %v4394 = vrot.slane %v4381, %v4393
  %v4395 = vlaneseq
  %v4396 = vshrl.u32 %v4395, 7
  %v4397 = vsub.s32 3, %v4396
  %v4398 = vrot.slane %v4381, %v4397
  %v4399 = vlaneseq
  %v4400 = vshrl.u32 %v4399, 7
  %v4401 = vsub.s32 4, %v4400
  %v4402 = vrot.slane %v4381, %v4401
  %v4403 = vlaneseq
  %v4404 = vshrl.u32 %v4403, 7
  %v4405 = vsub.s32 5, %v4404
  %v4406 = vrot.slane %v4381, %v4405
  %v4407 = vlaneseq
  %v4408 = vshrl.u32 %v4407, 7
  %v4409 = vsub.s32 6, %v4408
  %v4410 = vrot.slane %v4381, %v4409
  %v4411 = vlaneseq
  %v4412 = vshrl.u32 %v4411, 7
  %v4413 = vsub.s32 7, %v4412
  %v4414 = vrot.slane %v4381, %v4413
  %v4935 = vunpack.c.l.b16 %v3869
  %v4936 = vunpack.c.h.b16 %v3869
  %v4937 = vunpack.c.l.b16 %v3870
  %v4938 = vunpack.c.h.b16 %v3870
  %v4939 = vunpack.c.l.b16 %v3871
  %v4940 = vunpack.c.h.b16 %v3871
  %v4941 = vunpack.c.l.b16 %v3872
  %v4942 = vunpack.c.h.b16 %v3872
  %v4943 = vunpack.c.l.b16 %v3873
  %v4944 = vunpack.c.h.b16 %v3873
  %v4945 = vunpack.c.l.b16 %v3874
  %v4946 = vunpack.c.h.b16 %v3874
  %v4947 = vunpack.c.l.b16 %v3875
  %v4948 = vunpack.c.h.b16 %v3875
  %v4949 = vunpack.c.l.b16 %v3876
  %v4950 = vunpack.c.h.b16 %v3876
  %v4951 = vunpack.c.l.b16 %v3877
  %v4952 = vunpack.c.h.b16 %v3877
  %v4953 = vunpack.c.l.b16 %v3878
  %v4954 = vunpack.c.h.b16 %v3878
  %v4955 = vunpack.c.l.b16 %v3879
  %v4956 = vunpack.c.h.b16 %v3879
  %v4957 = vunpack.c.l.b16 %v3880
  %v4958 = vunpack.c.h.b16 %v3880
  %v4959 = vunpack.c.l.b16 %v3881
  %v4960 = vunpack.c.h.b16 %v3881
  %v4961 = vunpack.c.l.b16 %v3882
  %v4962 = vunpack.c.h.b16 %v3882
  %v4963 = vunpack.c.l.b16 %v3883
  %v4964 = vunpack.c.h.b16 %v3883
  %v4965 = vunpack.c.l.b16 %v3884
  %v4966 = vunpack.c.h.b16 %v3884
  %v4967 = vunpack.c.l.b16 %v3885
  %v4968 = vunpack.c.h.b16 %v3885
  %v4969 = vunpack.c.l.b16 %v3886
  %v4970 = vunpack.c.h.b16 %v3886
  %v4971 = vunpack.c.l.b16 %v3887
  %v4972 = vunpack.c.h.b16 %v3887
  %v4973 = vunpack.c.l.b16 %v3888
  %v4974 = vunpack.c.h.b16 %v3888
  %v4975 = vunpack.c.l.b16 %v3889
  %v4976 = vunpack.c.h.b16 %v3889
  %v4977 = vunpack.c.l.b16 %v3890
  %v4978 = vunpack.c.h.b16 %v3890
  %v4979 = vunpack.c.l.b16 %v3891
  %v4980 = vunpack.c.h.b16 %v3891
  %v4981 = vunpack.c.l.b16 %v3892
  %v4982 = vunpack.c.h.b16 %v3892
  %v4983 = vunpack.c.l.b16 %v3893
  %v4984 = vunpack.c.h.b16 %v3893
  %v4985 = vunpack.c.l.b16 %v3894
  %v4986 = vunpack.c.h.b16 %v3894
  %v4987 = vunpack.c.l.b16 %v3895
  %v4988 = vunpack.c.h.b16 %v3895
  %v4989 = vunpack.c.l.b16 %v3896
  %v4990 = vunpack.c.h.b16 %v3896
  %v4991 = vunpack.c.l.b16 %v3897
  %v4992 = vunpack.c.h.b16 %v3897
  %v4993 = vunpack.c.l.b16 %v3898
  %v4994 = vunpack.c.h.b16 %v3898
  %v4995 = vunpack.c.l.b16 %v3899
  %v4996 = vunpack.c.h.b16 %v3899
  %v4997 = vunpack.c.l.b16 %v3900
  %v4998 = vunpack.c.h.b16 %v3900
  %v4999 = vunpack.c.l.b16 %v3901
  %v5000 = vunpack.c.h.b16 %v3901
  %v5001 = vunpack.c.l.b16 %v3902
  %v5002 = vunpack.c.h.b16 %v3902
  %v5003 = vunpack.c.l.b16 %v3903
  %v5004 = vunpack.c.h.b16 %v3903
  %v5005 = vunpack.c.l.b16 %v3904
  %v5006 = vunpack.c.h.b16 %v3904
  %v5007 = vunpack.c.l.b16 %v3905
  %v5008 = vunpack.c.h.b16 %v3905
  %v5009 = vunpack.c.l.b16 %v3906
  %v5010 = vunpack.c.h.b16 %v3906
  %v5011 = vunpack.c.l.b16 %v3907
  %v5012 = vunpack.c.h.b16 %v3907
  %v5013 = vunpack.c.l.b16 %v3908
  %v5014 = vunpack.c.h.b16 %v3908
  %v5015 = vunpack.c.l.b16 %v3909
  %v5016 = vunpack.c.h.b16 %v3909
  %v5017 = vunpack.c.l.b16 %v3910
  %v5018 = vunpack.c.h.b16 %v3910
  %v5019 = vunpack.c.l.b16 %v3911
  %v5020 = vunpack.c.h.b16 %v3911
  %v5021 = vunpack.c.l.b16 %v3912
  %v5022 = vunpack.c.h.b16 %v3912
  %v5023 = vunpack.c.l.b16 %v3913
  %v5024 = vunpack.c.h.b16 %v3913
  %v5025 = vunpack.c.l.b16 %v3914
  %v5026 = vunpack.c.h.b16 %v3914
  %v5027 = vunpack.c.l.b16 %v3915
  %v5028 = vunpack.c.h.b16 %v3915
  %v5029 = vunpack.c.l.b16 %v3916
  %v5030 = vunpack.c.h.b16 %v3916
  %v5031 = vunpack.c.l.b16 %v3917
  %v5032 = vunpack.c.h.b16 %v3917
  %v5033 = vunpack.c.l.b16 %v3918
  %v5034 = vunpack.c.h.b16 %v3918
  %v5035 = vunpack.c.l.b16 %v3919
  %v5036 = vunpack.c.h.b16 %v3919
  %v5037 = vunpack.c.l.b16 %v3920
  %v5038 = vunpack.c.h.b16 %v3920
  %v5039 = vunpack.c.l.b16 %v3921
  %v5040 = vunpack.c.h.b16 %v3921
  %v5041 = vunpack.c.l.b16 %v3922
  %v5042 = vunpack.c.h.b16 %v3922
  %v5043 = vunpack.c.l.b16 %v3923
  %v5044 = vunpack.c.h.b16 %v3923
  %v5045 = vunpack.c.l.b16 %v3924
  %v5046 = vunpack.c.h.b16 %v3924
  %v5047 = vunpack.c.l.b16 %v3925
  %v5048 = vunpack.c.h.b16 %v3925
  %v5049 = vunpack.c.l.b16 %v3926
  %v5050 = vunpack.c.h.b16 %v3926
  %v5051 = vunpack.c.l.b16 %v3927
  %v5052 = vunpack.c.h.b16 %v3927
  %v5053 = vunpack.c.l.b16 %v3928
  %v5054 = vunpack.c.h.b16 %v3928
  %v5055 = vunpack.c.l.b16 %v3929
  %v5056 = vunpack.c.h.b16 %v3929
  %v5057 = vunpack.c.l.b16 %v3930
  %v5058 = vunpack.c.h.b16 %v3930
  %v5059 = vunpack.c.l.b16 %v3931
  %v5060 = vunpack.c.h.b16 %v3931
  %v5061 = vunpack.c.l.b16 %v3932
  %v5062 = vunpack.c.h.b16 %v3932
  %v5063 = vunpack.c.l.b16 %v3933
  %v5064 = vunpack.c.h.b16 %v3933
  %v5065 = vunpack.c.l.b16 %v3934
  %v5066 = vunpack.c.h.b16 %v3934
  %v5067 = vunpack.c.l.b16 %v3935
  %v5068 = vunpack.c.h.b16 %v3935
  %v5069 = vunpack.c.l.b16 %v3936
  %v5070 = vunpack.c.h.b16 %v3936
  %v5071 = vunpack.c.l.b16 %v3937
  %v5072 = vunpack.c.h.b16 %v3937
  %v5073 = vunpack.c.l.b16 %v3938
  %v5074 = vunpack.c.h.b16 %v3938
  %v5075 = vunpack.c.l.b16 %v3939
  %v5076 = vunpack.c.h.b16 %v3939
  %v5077 = vunpack.c.l.b16 %v3940
  %v5078 = vunpack.c.h.b16 %v3940
  %v5079 = vunpack.c.l.b16 %v3941
  %v5080 = vunpack.c.h.b16 %v3941
  %v5081 = vunpack.c.l.b16 %v3942
  %v5082 = vunpack.c.h.b16 %v3942
  %v5083 = vunpack.c.l.b16 %v3943
  %v5084 = vunpack.c.h.b16 %v3943
  %v5085 = vunpack.c.l.b16 %v3944
  %v5086 = vunpack.c.h.b16 %v3944
  %v5087 = vunpack.c.l.b16 %v3945
  %v5088 = vunpack.c.h.b16 %v3945
  %v5089 = vunpack.c.l.b16 %v3946
  %v5090 = vunpack.c.h.b16 %v3946
  %v5091 = vunpack.c.l.b16 %v3947
  %v5092 = vunpack.c.h.b16 %v3947
  %v5093 = vunpack.c.l.b16 %v3948
  %v5094 = vunpack.c.h.b16 %v3948
  %v5095 = vunpack.c.l.b16 %v3949
  %v5096 = vunpack.c.h.b16 %v3949
  %v5097 = vunpack.c.l.b16 %v3950
  %v5098 = vunpack.c.h.b16 %v3950
  %v5099 = vunpack.c.l.b16 %v3951
  %v5100 = vunpack.c.h.b16 %v3951
  %v5101 = vunpack.c.l.b16 %v3952
  %v5102 = vunpack.c.h.b16 %v3952
  %v5103 = vunpack.c.l.b16 %v3953
  %v5104 = vunpack.c.h.b16 %v3953
  %v5105 = vunpack.c.l.b16 %v3954
  %v5106 = vunpack.c.h.b16 %v3954
  %v5107 = vunpack.c.l.b16 %v3955
  %v5108 = vunpack.c.h.b16 %v3955
  %v5109 = vunpack.c.l.b16 %v3956
  %v5110 = vunpack.c.h.b16 %v3956
  %v5111 = vunpack.c.l.b16 %v3957
  %v5112 = vunpack.c.h.b16 %v3957
  %v5113 = vunpack.c.l.b16 %v3958
  %v5114 = vunpack.c.h.b16 %v3958
  %v5115 = vunpack.c.l.b16 %v3959
  %v5116 = vunpack.c.h.b16 %v3959
  %v5117 = vunpack.c.l.b16 %v3960
  %v5118 = vunpack.c.h.b16 %v3960
  %v5119 = vunpack.c.l.b16 %v3961
  %v5120 = vunpack.c.h.b16 %v3961
  %v5121 = vunpack.c.l.b16 %v3962
  %v5122 = vunpack.c.h.b16 %v3962
  %v5123 = vunpack.c.l.b16 %v3963
  %v5124 = vunpack.c.h.b16 %v3963
  %v5125 = vunpack.c.l.b16 %v3964
  %v5126 = vunpack.c.h.b16 %v3964
  %v5127 = vunpack.c.l.b16 %v3965
  %v5128 = vunpack.c.h.b16 %v3965
  %v5129 = vunpack.c.l.b16 %v3966
  %v5130 = vunpack.c.h.b16 %v3966
  %v5131 = vunpack.c.l.b16 %v3967
  %v5132 = vunpack.c.h.b16 %v3967
  %v5133 = vunpack.c.l.b16 %v3968
  %v5134 = vunpack.c.h.b16 %v3968
  %v5135 = vunpack.c.l.b16 %v3969
  %v5136 = vunpack.c.h.b16 %v3969
  %v5137 = vunpack.c.l.b16 %v3970
  %v5138 = vunpack.c.h.b16 %v3970
  %v5139 = vunpack.c.l.b16 %v3971
  %v5140 = vunpack.c.h.b16 %v3971
  %v5141 = vunpack.c.l.b16 %v3972
  %v5142 = vunpack.c.h.b16 %v3972
  %v5143 = vunpack.c.l.b16 %v3973
  %v5144 = vunpack.c.h.b16 %v3973
  %v5145 = vunpack.c.l.b16 %v3974
  %v5146 = vunpack.c.h.b16 %v3974
  %v5147 = vunpack.c.l.b16 %v3975
  %v5148 = vunpack.c.h.b16 %v3975
  %v5149 = vunpack.c.l.b16 %v3976
  %v5150 = vunpack.c.h.b16 %v3976
  %v5151 = vunpack.c.l.b16 %v3977
  %v5152 = vunpack.c.h.b16 %v3977
  %v5153 = vunpack.c.l.b16 %v3978
  %v5154 = vunpack.c.h.b16 %v3978
  %v5155 = vunpack.c.l.b16 %v3979
  %v5156 = vunpack.c.h.b16 %v3979
  %v5157 = vunpack.c.l.b16 %v3980
  %v5158 = vunpack.c.h.b16 %v3980
  %v5159 = vunpack.c.l.b16 %v3981
  %v5160 = vunpack.c.h.b16 %v3981
  %v5161 = vunpack.c.l.b16 %v3982
  %v5162 = vunpack.c.h.b16 %v3982
  %v5163 = vunpack.c.l.b16 %v3983
  %v5164 = vunpack.c.h.b16 %v3983
  %v5165 = vunpack.c.l.b16 %v3984
  %v5166 = vunpack.c.h.b16 %v3984
  %v5167 = vunpack.c.l.b16 %v3985
  %v5168 = vunpack.c.h.b16 %v3985
  %v5169 = vunpack.c.l.b16 %v3986
  %v5170 = vunpack.c.h.b16 %v3986
  %v5171 = vunpack.c.l.b16 %v3987
  %v5172 = vunpack.c.h.b16 %v3987
  %v5173 = vunpack.c.l.b16 %v3988
  %v5174 = vunpack.c.h.b16 %v3988
  %v5175 = vunpack.c.l.b16 %v3989
  %v5176 = vunpack.c.h.b16 %v3989
  %v5177 = vunpack.c.l.b16 %v3990
  %v5178 = vunpack.c.h.b16 %v3990
  %v5179 = vunpack.c.l.b16 %v3991
  %v5180 = vunpack.c.h.b16 %v3991
  %v5181 = vunpack.c.l.b16 %v3992
  %v5182 = vunpack.c.h.b16 %v3992
  %v5183 = vunpack.c.l.b16 %v3993
  %v5184 = vunpack.c.h.b16 %v3993
  %v5185 = vunpack.c.l.b16 %v3994
  %v5186 = vunpack.c.h.b16 %v3994
  %v5187 = vunpack.c.l.b16 %v3995
  %v5188 = vunpack.c.h.b16 %v3995
  %v5189 = vunpack.c.l.b16 %v3996
  %v5190 = vunpack.c.h.b16 %v3996
  %v5191 = vunpack.c.l.b16 %v3997
  %v5192 = vunpack.c.h.b16 %v3997
  %v5193 = vunpack.c.l.b16 %v3998
  %v5194 = vunpack.c.h.b16 %v3998
  %v5195 = vunpack.c.l.b16 %v3999
  %v5196 = vunpack.c.h.b16 %v3999
  %v5197 = vunpack.c.l.b16 %v4000
  %v5198 = vunpack.c.h.b16 %v4000
  %v5199 = vunpack.c.l.b16 %v4001
  %v5200 = vunpack.c.h.b16 %v4001
  %v5201 = vunpack.c.l.b16 %v4002
  %v5202 = vunpack.c.h.b16 %v4002
  %v5203 = vunpack.c.l.b16 %v4003
  %v5204 = vunpack.c.h.b16 %v4003
  %v5205 = vunpack.c.l.b16 %v4004
  %v5206 = vunpack.c.h.b16 %v4004
  %v5207 = vunpack.c.l.b16 %v4005
  %v5208 = vunpack.c.h.b16 %v4005
  %v5209 = vunpack.c.l.b16 %v4006
  %v5210 = vunpack.c.h.b16 %v4006
  %v5211 = vunpack.c.l.b16 %v4007
  %v5212 = vunpack.c.h.b16 %v4007
  %v5213 = vunpack.c.l.b16 %v4008
  %v5214 = vunpack.c.h.b16 %v4008
  %v5215 = vunpack.c.l.b16 %v4009
  %v5216 = vunpack.c.h.b16 %v4009
  %v5217 = vunpack.c.l.b16 %v4010
  %v5218 = vunpack.c.h.b16 %v4010
  %v5219 = vunpack.c.l.b16 %v4011
  %v5220 = vunpack.c.h.b16 %v4011
  %v5221 = vunpack.c.l.b16 %v4012
  %v5222 = vunpack.c.h.b16 %v4012
  %v5223 = vunpack.c.l.b16 %v4013
  %v5224 = vunpack.c.h.b16 %v4013
  %v5225 = vunpack.c.l.b16 %v4014
  %v5226 = vunpack.c.h.b16 %v4014
  %v5227 = vunpack.c.l.b16 %v4015
  %v5228 = vunpack.c.h.b16 %v4015
  %v5229 = vunpack.c.l.b16 %v4016
  %v5230 = vunpack.c.h.b16 %v4016
  %v5231 = vunpack.c.l.b16 %v4017
  %v5232 = vunpack.c.h.b16 %v4017
  %v5233 = vunpack.c.l.b16 %v4018
  %v5234 = vunpack.c.h.b16 %v4018
  %v5235 = vunpack.c.l.b16 %v4019
  %v5236 = vunpack.c.h.b16 %v4019
  %v5237 = vunpack.c.l.b16 %v4020
  %v5238 = vunpack.c.h.b16 %v4020
  %v5239 = vunpack.c.l.b16 %v4021
  %v5240 = vunpack.c.h.b16 %v4021
  %v5241 = vunpack.c.l.b16 %v4022
  %v5242 = vunpack.c.h.b16 %v4022
  %v5243 = vunpack.c.l.b16 %v4023
  %v5244 = vunpack.c.h.b16 %v4023
  %v5245 = vunpack.c.l.b16 %v4024
  %v5246 = vunpack.c.h.b16 %v4024
  %v5247 = vunpack.c.l.b16 %v4025
  %v5248 = vunpack.c.h.b16 %v4025
  %v5249 = vunpack.c.l.b16 %v4026
  %v5250 = vunpack.c.h.b16 %v4026
  %v5251 = vunpack.c.l.b16 %v4027
  %v5252 = vunpack.c.h.b16 %v4027
  %v5253 = vunpack.c.l.b16 %v4028
  %v5254 = vunpack.c.h.b16 %v4028
  %v5255 = vunpack.c.l.b16 %v4029
  %v5256 = vunpack.c.h.b16 %v4029
  %v5257 = vunpack.c.l.b16 %v4030
  %v5258 = vunpack.c.h.b16 %v4030
  %v5259 = vunpack.c.l.b16 %v4031
  %v5260 = vunpack.c.h.b16 %v4031
  %v5261 = vunpack.c.l.b16 %v4032
  %v5262 = vunpack.c.h.b16 %v4032
  %v5263 = vunpack.c.l.b16 %v4033
  %v5264 = vunpack.c.h.b16 %v4033
  %v5265 = vunpack.c.l.b16 %v4034
  %v5266 = vunpack.c.h.b16 %v4034
  %v5267 = vunpack.c.l.b16 %v4035
  %v5268 = vunpack.c.h.b16 %v4035
  %v5269 = vunpack.c.l.b16 %v4036
  %v5270 = vunpack.c.h.b16 %v4036
  %v5271 = vunpack.c.l.b16 %v4037
  %v5272 = vunpack.c.h.b16 %v4037
  %v5273 = vunpack.c.l.b16 %v4038
  %v5274 = vunpack.c.h.b16 %v4038
  %v5275 = vunpack.c.l.b16 %v4039
  %v5276 = vunpack.c.h.b16 %v4039
  %v5277 = vunpack.c.l.b16 %v4040
  %v5278 = vunpack.c.h.b16 %v4040
  %v5279 = vunpack.c.l.b16 %v4041
  %v5280 = vunpack.c.h.b16 %v4041
  %v5281 = vunpack.c.l.b16 %v4042
  %v5282 = vunpack.c.h.b16 %v4042
  %v5283 = vunpack.c.l.b16 %v4043
  %v5284 = vunpack.c.h.b16 %v4043
  %v5285 = vunpack.c.l.b16 %v4044
  %v5286 = vunpack.c.h.b16 %v4044
  %v5287 = vunpack.c.l.b16 %v4045
  %v5288 = vunpack.c.h.b16 %v4045
  %v5289 = vunpack.c.l.b16 %v4046
  %v5290 = vunpack.c.h.b16 %v4046
  %v5291 = vunpack.c.l.b16 %v4047
  %v5292 = vunpack.c.h.b16 %v4047
  %v5293 = vunpack.c.l.b16 %v4048
  %v5294 = vunpack.c.h.b16 %v4048
  %v5295 = vunpack.c.l.b16 %v4049
  %v5296 = vunpack.c.h.b16 %v4049
  %v5297 = vunpack.c.l.b16 %v4050
  %v5298 = vunpack.c.h.b16 %v4050
  %v5299 = vunpack.c.l.b16 %v4051
  %v5300 = vunpack.c.h.b16 %v4051
  %v5301 = vunpack.c.l.b16 %v4052
  %v5302 = vunpack.c.h.b16 %v4052
  %v5303 = vunpack.c.l.b16 %v4053
  %v5304 = vunpack.c.h.b16 %v4053
  %v5305 = vunpack.c.l.b16 %v4054
  %v5306 = vunpack.c.h.b16 %v4054
  %v5307 = vunpack.c.l.b16 %v4055
  %v5308 = vunpack.c.h.b16 %v4055
  %v5309 = vunpack.c.l.b16 %v4056
  %v5310 = vunpack.c.h.b16 %v4056
  %v5311 = vunpack.c.l.b16 %v4057
  %v5312 = vunpack.c.h.b16 %v4057
  %v5313 = vunpack.c.l.b16 %v4058
  %v5314 = vunpack.c.h.b16 %v4058
  %v5315 = vunpack.c.l.b16 %v4059
  %v5316 = vunpack.c.h.b16 %v4059
  %v5317 = vunpack.c.l.b16 %v4060
  %v5318 = vunpack.c.h.b16 %v4060
  %v5319 = vunpack.c.l.b16 %v4061
  %v5320 = vunpack.c.h.b16 %v4061
  %v5321 = vunpack.c.l.b16 %v4062
  %v5322 = vunpack.c.h.b16 %v4062
  %v5323 = vunpack.c.l.b16 %v4063
  %v5324 = vunpack.c.h.b16 %v4063
  %v5325 = vunpack.c.l.b16 %v4064
  %v5326 = vunpack.c.h.b16 %v4064
  %v5327 = vunpack.c.l.b16 %v4065
  %v5328 = vunpack.c.h.b16 %v4065
  %v5329 = vunpack.c.l.b16 %v4066
  %v5330 = vunpack.c.h.b16 %v4066
  %v5331 = vunpack.c.l.b16 %v4067
  %v5332 = vunpack.c.h.b16 %v4067
  %v5333 = vunpack.c.l.b16 %v4068
  %v5334 = vunpack.c.h.b16 %v4068
  %v5335 = vunpack.c.l.b16 %v4069
  %v5336 = vunpack.c.h.b16 %v4069
  %v5337 = vunpack.c.l.b16 %v4070
  %v5338 = vunpack.c.h.b16 %v4070
  %v5339 = vunpack.c.l.b16 %v4071
  %v5340 = vunpack.c.h.b16 %v4071
  %v5341 = vunpack.c.l.b16 %v4072
  %v5342 = vunpack.c.h.b16 %v4072
  %v5343 = vunpack.c.l.b16 %v4073
  %v5344 = vunpack.c.h.b16 %v4073
  %v5345 = vunpack.c.l.b16 %v4074
  %v5346 = vunpack.c.h.b16 %v4074
  %v5347 = vunpack.c.l.b16 %v4075
  %v5348 = vunpack.c.h.b16 %v4075
  %v5349 = vunpack.c.l.b16 %v4076
  %v5350 = vunpack.c.h.b16 %v4076
  %v5351 = vunpack.c.l.b16 %v4077
  %v5352 = vunpack.c.h.b16 %v4077
  %v5353 = vunpack.c.l.b16 %v4078
  %v5354 = vunpack.c.h.b16 %v4078
  %v5355 = vunpack.c.l.b16 %v4079
  %v5356 = vunpack.c.h.b16 %v4079
  %v5357 = vunpack.c.l.b16 %v4080
  %v5358 = vunpack.c.h.b16 %v4080
  %v5359 = vunpack.c.l.b16 %v4081
  %v5360 = vunpack.c.h.b16 %v4081
  %v5361 = vunpack.c.l.b16 %v4082
  %v5362 = vunpack.c.h.b16 %v4082
  %v5363 = vunpack.c.l.b16 %v4083
  %v5364 = vunpack.c.h.b16 %v4083
  %v5365 = vunpack.c.l.b16 %v4084
  %v5366 = vunpack.c.h.b16 %v4084
  %v5367 = vunpack.c.l.b16 %v4085
  %v5368 = vunpack.c.h.b16 %v4085
  %v5369 = vunpack.c.l.b16 %v4086
  %v5370 = vunpack.c.h.b16 %v4086
  %v5371 = vunpack.c.l.b16 %v4087
  %v5372 = vunpack.c.h.b16 %v4087
  %v5373 = vunpack.c.l.b16 %v4088
  %v5374 = vunpack.c.h.b16 %v4088
  %v5375 = vunpack.c.l.b16 %v4089
  %v5376 = vunpack.c.h.b16 %v4089
  %v5377 = vunpack.c.l.b16 %v4090
  %v5378 = vunpack.c.h.b16 %v4090
  %v5379 = vunpack.c.l.b16 %v4091
  %v5380 = vunpack.c.h.b16 %v4091
  %v5381 = vunpack.c.l.b16 %v4092
  %v5382 = vunpack.c.h.b16 %v4092
  %v5383 = vunpack.c.l.b16 %v4093
  %v5384 = vunpack.c.h.b16 %v4093
  %v5385 = vunpack.c.l.b16 %v4094
  %v5386 = vunpack.c.h.b16 %v4094
  %v5387 = vunpack.c.l.b16 %v4095
  %v5388 = vunpack.c.h.b16 %v4095
  %v5389 = vunpack.c.l.b16 %v4096
  %v5390 = vunpack.c.h.b16 %v4096
  %v5391 = vunpack.c.l.b16 %v4097
  %v5392 = vunpack.c.h.b16 %v4097
  %v5393 = vunpack.c.l.b16 %v4098
  %v5394 = vunpack.c.h.b16 %v4098
  %v5395 = vunpack.c.l.b16 %v4099
  %v5396 = vunpack.c.h.b16 %v4099
  %v5397 = vunpack.c.l.b16 %v4100
  %v5398 = vunpack.c.h.b16 %v4100
  %v5399 = vunpack.c.l.b16 %v4101
  %v5400 = vunpack.c.h.b16 %v4101
  %v5401 = vunpack.c.l.b16 %v4102
  %v5402 = vunpack.c.h.b16 %v4102
  %v5403 = vunpack.c.l.b16 %v4103
  %v5404 = vunpack.c.h.b16 %v4103
  %v5405 = vunpack.c.l.b16 %v4104
  %v5406 = vunpack.c.h.b16 %v4104
  %v5407 = vunpack.c.l.b16 %v4105
  %v5408 = vunpack.c.h.b16 %v4105
  %v5409 = vunpack.c.l.b16 %v4106
  %v5410 = vunpack.c.h.b16 %v4106
  %v5411 = vunpack.c.l.b16 %v4107
  %v5412 = vunpack.c.h.b16 %v4107
  %v5413 = vunpack.c.l.b16 %v4108
  %v5414 = vunpack.c.h.b16 %v4108
  %v5415 = vunpack.c.l.b16 %v4109
  %v5416 = vunpack.c.h.b16 %v4109
  %v5417 = vunpack.c.l.b16 %v4110
  %v5418 = vunpack.c.h.b16 %v4110
  %v5419 = vunpack.c.l.b16 %v4111
  %v5420 = vunpack.c.h.b16 %v4111
  %v5421 = vunpack.c.l.b16 %v4112
  %v5422 = vunpack.c.h.b16 %v4112
  %v5423 = vunpack.c.l.b16 %v4113
  %v5424 = vunpack.c.h.b16 %v4113
  %v5425 = vunpack.c.l.b16 %v4114
  %v5426 = vunpack.c.h.b16 %v4114
  %v5427 = vunpack.c.l.b16 %v4115
  %v5428 = vunpack.c.h.b16 %v4115
  %v5429 = vunpack.c.l.b16 %v4116
  %v5430 = vunpack.c.h.b16 %v4116
  %v5431 = vunpack.c.l.b16 %v4117
  %v5432 = vunpack.c.h.b16 %v4117
  %v5433 = vunpack.c.l.b16 %v4118
  %v5434 = vunpack.c.h.b16 %v4118
  %v5435 = vunpack.c.l.b16 %v4119
  %v5436 = vunpack.c.h.b16 %v4119
  %v5437 = vunpack.c.l.b16 %v4120
  %v5438 = vunpack.c.h.b16 %v4120
  %v5439 = vunpack.c.l.b16 %v4121
  %v5440 = vunpack.c.h.b16 %v4121
  %v5441 = vunpack.c.l.b16 %v4122
  %v5442 = vunpack.c.h.b16 %v4122
  %v5443 = vunpack.c.l.b16 %v4123
  %v5444 = vunpack.c.h.b16 %v4123
  %v5445 = vunpack.c.l.b16 %v4124
  %v5446 = vunpack.c.h.b16 %v4124
  %v5447 = vunpack.c.l.b16 %v4125
  %v5448 = vunpack.c.h.b16 %v4125
  %v5449 = vunpack.c.l.b16 %v4126
  %v5450 = vunpack.c.h.b16 %v4126
  %v5451 = vunpack.c.l.b16 %v4127
  %v5452 = vunpack.c.h.b16 %v4127
  %v5453 = vunpack.c.l.b16 %v4128
  %v5454 = vunpack.c.h.b16 %v4128
  %v5455 = vunpack.c.l.b16 %v4129
  %v5456 = vunpack.c.h.b16 %v4129
  %v5457 = vunpack.c.l.b16 %v4130
  %v5458 = vunpack.c.h.b16 %v4130
  %v5459 = vunpack.c.l.b16 %v4131
  %v5460 = vunpack.c.h.b16 %v4131
  %v5461 = vunpack.c.l.b16 %v4132
  %v5462 = vunpack.c.h.b16 %v4132
  %v5463 = vunpack.c.l.b16 %v4133
  %v5464 = vunpack.c.h.b16 %v4133
  %v5465 = vunpack.c.l.b16 %v4134
  %v5466 = vunpack.c.h.b16 %v4134
  %v5467 = vunpack.c.l.b16 %v4135
  %v5468 = vunpack.c.h.b16 %v4135
  %v5469 = vunpack.c.l.b16 %v4136
  %v5470 = vunpack.c.h.b16 %v4136
  %v5471 = vunpack.c.l.b16 %v4137
  %v5472 = vunpack.c.h.b16 %v4137
  %v5473 = vunpack.c.l.b16 %v4138
  %v5474 = vunpack.c.h.b16 %v4138
  %v5475 = vunpack.c.l.b16 %v4139
  %v5476 = vunpack.c.h.b16 %v4139
  %v5477 = vunpack.c.l.b16 %v4140
  %v5478 = vunpack.c.h.b16 %v4140
  %v5479 = vunpack.c.l.b16 %v4141
  %v5480 = vunpack.c.h.b16 %v4141
  %v5481 = vunpack.c.l.b16 %v4142
  %v5482 = vunpack.c.h.b16 %v4142
  %v5483 = vunpack.c.l.b16 %v4143
  %v5484 = vunpack.c.h.b16 %v4143
  %v5485 = vunpack.c.l.b16 %v4144
  %v5486 = vunpack.c.h.b16 %v4144
  %v5487 = vunpack.c.l.b16 %v4145
  %v5488 = vunpack.c.h.b16 %v4145
  %v5489 = vunpack.c.l.b16 %v4146
  %v5490 = vunpack.c.h.b16 %v4146
  %v5491 = vunpack.c.l.b16 %v4147
  %v5492 = vunpack.c.h.b16 %v4147
  %v5493 = vunpack.c.l.b16 %v4148
  %v5494 = vunpack.c.h.b16 %v4148
  %v5495 = vunpack.c.l.b16 %v4149
  %v5496 = vunpack.c.h.b16 %v4149
  %v5497 = vunpack.c.l.b16 %v4150
  %v5498 = vunpack.c.h.b16 %v4150
  %v5499 = vunpack.c.l.b16 %v4151
  %v5500 = vunpack.c.h.b16 %v4151
  %v5501 = vunpack.c.l.b16 %v4152
  %v5502 = vunpack.c.h.b16 %v4152
  %v5503 = vunpack.c.l.b16 %v4153
  %v5504 = vunpack.c.h.b16 %v4153
  %v5505 = vunpack.c.l.b16 %v4154
  %v5506 = vunpack.c.h.b16 %v4154
  %v5507 = vunpack.c.l.b16 %v4155
  %v5508 = vunpack.c.h.b16 %v4155
  %v5509 = vunpack.c.l.b16 %v4156
  %v5510 = vunpack.c.h.b16 %v4156
  %v5511 = vunpack.c.l.b16 %v4157
  %v5512 = vunpack.c.h.b16 %v4157
  %v5513 = vunpack.c.l.b16 %v4158
  %v5514 = vunpack.c.h.b16 %v4158
  %v5515 = vunpack.c.l.b16 %v4159
  %v5516 = vunpack.c.h.b16 %v4159
  %v5517 = vunpack.c.l.b16 %v4160
  %v5518 = vunpack.c.h.b16 %v4160
  %v5519 = vunpack.c.l.b16 %v4161
  %v5520 = vunpack.c.h.b16 %v4161
  %v5521 = vunpack.c.l.b16 %v4162
  %v5522 = vunpack.c.h.b16 %v4162
  %v5523 = vunpack.c.l.b16 %v4163
  %v5524 = vunpack.c.h.b16 %v4163
  %v5525 = vunpack.c.l.b16 %v4164
  %v5526 = vunpack.c.h.b16 %v4164
  %v5527 = vunpack.c.l.b16 %v4165
  %v5528 = vunpack.c.h.b16 %v4165
  %v5529 = vunpack.c.l.b16 %v4166
  %v5530 = vunpack.c.h.b16 %v4166
  %v5531 = vunpack.c.l.b16 %v4167
  %v5532 = vunpack.c.h.b16 %v4167
  %v5533 = vunpack.c.l.b16 %v4168
  %v5534 = vunpack.c.h.b16 %v4168
  %v5535 = vunpack.c.l.b16 %v4169
  %v5536 = vunpack.c.h.b16 %v4169
  %v5537 = vunpack.c.l.b16 %v4170
  %v5538 = vunpack.c.h.b16 %v4170
  %v5539 = vunpack.c.l.b16 %v4171
  %v5540 = vunpack.c.h.b16 %v4171
  %v5541 = vunpack.c.l.b16 %v4172
  %v5542 = vunpack.c.h.b16 %v4172
  %v5543 = vunpack.c.l.b16 %v4173
  %v5544 = vunpack.c.h.b16 %v4173
  %v5545 = vunpack.c.l.b16 %v4174
  %v5546 = vunpack.c.h.b16 %v4174
  %v5547 = vunpack.c.l.b16 %v4175
  %v5548 = vunpack.c.h.b16 %v4175
  %v5549 = vunpack.c.l.b16 %v4176
  %v5550 = vunpack.c.h.b16 %v4176
  %v5551 = vunpack.c.l.b16 %v4177
  %v5552 = vunpack.c.h.b16 %v4177
  %v5553 = vunpack.c.l.b16 %v4178
  %v5554 = vunpack.c.h.b16 %v4178
  %v5555 = vunpack.c.l.b16 %v4179
  %v5556 = vunpack.c.h.b16 %v4179
  %v5557 = vunpack.c.l.b16 %v4180
  %v5558 = vunpack.c.h.b16 %v4180
  %v5559 = vunpack.c.l.b16 %v4181
  %v5560 = vunpack.c.h.b16 %v4181
  %v5561 = vunpack.c.l.b16 %v4182
  %v5562 = vunpack.c.h.b16 %v4182
  %v5563 = vunpack.c.l.b16 %v4183
  %v5564 = vunpack.c.h.b16 %v4183
  %v5565 = vunpack.c.l.b16 %v4184
  %v5566 = vunpack.c.h.b16 %v4184
  %v5567 = vunpack.c.l.b16 %v4185
  %v5568 = vunpack.c.h.b16 %v4185
  %v5569 = vunpack.c.l.b16 %v4186
  %v5570 = vunpack.c.h.b16 %v4186
  %v5571 = vunpack.c.l.b16 %v4187
  %v5572 = vunpack.c.h.b16 %v4187
  %v5573 = vunpack.c.l.b16 %v4188
  %v5574 = vunpack.c.h.b16 %v4188
  %v5575 = vunpack.c.l.b16 %v4189
  %v5576 = vunpack.c.h.b16 %v4189
  %v5577 = vunpack.c.l.b16 %v4190
  %v5578 = vunpack.c.h.b16 %v4190
  %v5579 = vunpack.c.l.b16 %v4191
  %v5580 = vunpack.c.h.b16 %v4191
  %v5581 = vunpack.c.l.b16 %v4192
  %v5582 = vunpack.c.h.b16 %v4192
  %v5583 = vunpack.c.l.b16 %v4193
  %v5584 = vunpack.c.h.b16 %v4193
  %v5585 = vunpack.c.l.b16 %v4194
  %v5586 = vunpack.c.h.b16 %v4194
  %v5587 = vunpack.c.l.b16 %v4195
  %v5588 = vunpack.c.h.b16 %v4195
  %v5589 = vunpack.c.l.b16 %v4196
  %v5590 = vunpack.c.h.b16 %v4196
  %v5591 = vunpack.c.l.b16 %v4197
  %v5592 = vunpack.c.h.b16 %v4197
  %v5593 = vunpack.c.l.b16 %v4198
  %v5594 = vunpack.c.h.b16 %v4198
  %v5595 = vunpack.c.l.b16 %v4199
  %v5596 = vunpack.c.h.b16 %v4199
  %v5597 = vunpack.c.l.b16 %v4200
  %v5598 = vunpack.c.h.b16 %v4200
  %v5599 = vunpack.c.l.b16 %v4201
  %v5600 = vunpack.c.h.b16 %v4201
  %v5601 = vunpack.c.l.b16 %v4202
  %v5602 = vunpack.c.h.b16 %v4202
  %v5603 = vunpack.c.l.b16 %v4203
  %v5604 = vunpack.c.h.b16 %v4203
  %v5605 = vunpack.c.l.b16 %v4204
  %v5606 = vunpack.c.h.b16 %v4204
  %v5607 = vunpack.c.l.b16 %v4205
  %v5608 = vunpack.c.h.b16 %v4205
  %v5609 = vunpack.c.l.b16 %v4206
  %v5610 = vunpack.c.h.b16 %v4206
  %v5611 = vunpack.c.l.b16 %v4207
  %v5612 = vunpack.c.h.b16 %v4207
  %v5613 = vunpack.c.l.b16 %v4208
  %v5614 = vunpack.c.h.b16 %v4208
  %v5615 = vunpack.c.l.b16 %v4209
  %v5616 = vunpack.c.h.b16 %v4209
  %v5617 = vunpack.c.l.b16 %v4210
  %v5618 = vunpack.c.h.b16 %v4210
  %v5619 = vunpack.c.l.b16 %v4211
  %v5620 = vunpack.c.h.b16 %v4211
  %v5621 = vunpack.c.l.b16 %v4212
  %v5622 = vunpack.c.h.b16 %v4212
  %v5623 = vunpack.c.l.b16 %v4213
  %v5624 = vunpack.c.h.b16 %v4213
  %v5625 = vunpack.c.l.b16 %v4214
  %v5626 = vunpack.c.h.b16 %v4214
  %v5627 = vunpack.c.l.b16 %v4215
  %v5628 = vunpack.c.h.b16 %v4215
  %v5629 = vunpack.c.l.b16 %v4216
  %v5630 = vunpack.c.h.b16 %v4216
  %v5631 = vunpack.c.l.b16 %v4217
  %v5632 = vunpack.c.h.b16 %v4217
  %v5633 = vunpack.c.l.b16 %v4218
  %v5634 = vunpack.c.h.b16 %v4218
  %v5635 = vunpack.c.l.b16 %v4219
  %v5636 = vunpack.c.h.b16 %v4219
  %v5637 = vunpack.c.l.b16 %v4220
  %v5638 = vunpack.c.h.b16 %v4220
  %v5639 = vunpack.c.l.b16 %v4221
  %v5640 = vunpack.c.h.b16 %v4221
  %v5641 = vunpack.c.l.b16 %v4222
  %v5642 = vunpack.c.h.b16 %v4222
  %v5643 = vunpack.c.l.b16 %v4223
  %v5644 = vunpack.c.h.b16 %v4223
  %v5645 = vunpack.c.l.b16 %v4224
  %v5646 = vunpack.c.h.b16 %v4224
  %v5647 = vunpack.c.l.b16 %v4225
  %v5648 = vunpack.c.h.b16 %v4225
  %v5649 = vunpack.c.l.b16 %v4226
  %v5650 = vunpack.c.h.b16 %v4226
  %v5651 = vunpack.c.l.b16 %v4227
  %v5652 = vunpack.c.h.b16 %v4227
  %v5653 = vunpack.c.l.b16 %v4228
  %v5654 = vunpack.c.h.b16 %v4228
  %v5655 = vunpack.c.l.b16 %v4229
  %v5656 = vunpack.c.h.b16 %v4229
  %v5657 = vunpack.c.l.b16 %v4230
  %v5658 = vunpack.c.h.b16 %v4230
  %v5659 = vunpack.c.l.b16 %v4231
  %v5660 = vunpack.c.h.b16 %v4231
  %v5661 = vunpack.c.l.b16 %v4232
  %v5662 = vunpack.c.h.b16 %v4232
  %v5663 = vunpack.c.l.b16 %v4233
  %v5664 = vunpack.c.h.b16 %v4233
  %v5665 = vunpack.c.l.b16 %v4234
  %v5666 = vunpack.c.h.b16 %v4234
  %v5667 = vunpack.c.l.b16 %v4235
  %v5668 = vunpack.c.h.b16 %v4235
  %v5669 = vunpack.c.l.b16 %v4236
  %v5670 = vunpack.c.h.b16 %v4236
  %v5671 = vunpack.c.l.b16 %v4237
  %v5672 = vunpack.c.h.b16 %v4237
  %v5673 = vunpack.c.l.b16 %v4238
  %v5674 = vunpack.c.h.b16 %v4238
  %v5675 = vunpack.c.l.b16 %v4239
  %v5676 = vunpack.c.h.b16 %v4239
  %v5677 = vunpack.c.l.b16 %v4240
  %v5678 = vunpack.c.h.b16 %v4240
  %v5679 = vunpack.c.l.b16 %v4241
  %v5680 = vunpack.c.h.b16 %v4241
  %v5681 = vunpack.c.l.b16 %v4242
  %v5682 = vunpack.c.h.b16 %v4242
  %v5683 = vunpack.c.l.b16 %v4243
  %v5684 = vunpack.c.h.b16 %v4243
  %v5685 = vunpack.c.l.b16 %v4244
  %v5686 = vunpack.c.h.b16 %v4244
  %v5687 = vunpack.c.l.b16 %v4245
  %v5688 = vunpack.c.h.b16 %v4245
  %v5689 = vunpack.c.l.b16 %v4246
  %v5690 = vunpack.c.h.b16 %v4246
  %v5691 = vunpack.c.l.b16 %v4247
  %v5692 = vunpack.c.h.b16 %v4247
  %v5693 = vunpack.c.l.b16 %v4248
  %v5694 = vunpack.c.h.b16 %v4248
  %v5695 = vunpack.c.l.b16 %v4249
  %v5696 = vunpack.c.h.b16 %v4249
  %v5697 = vunpack.c.l.b16 %v4250
  %v5698 = vunpack.c.h.b16 %v4250
  %v5699 = vunpack.c.l.b16 %v4251
  %v5700 = vunpack.c.h.b16 %v4251
  %v5701 = vunpack.c.l.b16 %v4252
  %v5702 = vunpack.c.h.b16 %v4252
  %v5703 = vunpack.c.l.b16 %v4253
  %v5704 = vunpack.c.h.b16 %v4253
  %v5705 = vunpack.c.l.b16 %v4254
  %v5706 = vunpack.c.h.b16 %v4254
  %v5707 = vunpack.c.l.b16 %v4255
  %v5708 = vunpack.c.h.b16 %v4255
  %v5709 = vunpack.c.l.b16 %v4256
  %v5710 = vunpack.c.h.b16 %v4256
  %v5711 = vunpack.c.l.b16 %v4257
  %v5712 = vunpack.c.h.b16 %v4257
  %v5713 = vunpack.c.l.b16 %v4258
  %v5714 = vunpack.c.h.b16 %v4258
  %v5715 = vunpack.c.l.b16 %v4259
  %v5716 = vunpack.c.h.b16 %v4259
  %v5717 = vunpack.c.l.b16 %v4260
  %v5718 = vunpack.c.h.b16 %v4260
  %v5719 = vunpack.c.l.b16 %v4261
  %v5720 = vunpack.c.h.b16 %v4261
  %v5721 = vunpack.c.l.b16 %v4262
  %v5722 = vunpack.c.h.b16 %v4262
  %v5723 = vunpack.c.l.b16 %v4263
  %v5724 = vunpack.c.h.b16 %v4263
  %v5725 = vunpack.c.l.b16 %v4264
  %v5726 = vunpack.c.h.b16 %v4264
  %v5727 = vunpack.c.l.b16 %v4265
  %v5728 = vunpack.c.h.b16 %v4265
  %v5729 = vunpack.c.l.b16 %v4266
  %v5730 = vunpack.c.h.b16 %v4266
  %v5731 = vunpack.c.l.b16 %v4267
  %v5732 = vunpack.c.h.b16 %v4267
  %v5733 = vunpack.c.l.b16 %v4268
  %v5734 = vunpack.c.h.b16 %v4268
  %v5735 = vunpack.c.l.b16 %v4269
  %v5736 = vunpack.c.h.b16 %v4269
  %v5737 = vunpack.c.l.b16 %v4270
  %v5738 = vunpack.c.h.b16 %v4270
  %v5739 = vunpack.c.l.b16 %v4271
  %v5740 = vunpack.c.h.b16 %v4271
  %v5741 = vunpack.c.l.b16 %v4272
  %v5742 = vunpack.c.h.b16 %v4272
  %v5743 = vunpack.c.l.b16 %v4273
  %v5744 = vunpack.c.h.b16 %v4273
  %v5745 = vunpack.c.l.b16 %v4274
  %v5746 = vunpack.c.h.b16 %v4274
  %v5747 = vunpack.c.l.b16 %v4275
  %v5748 = vunpack.c.h.b16 %v4275
  %v5749 = vunpack.c.l.b16 %v4276
  %v5750 = vunpack.c.h.b16 %v4276
  %v5751 = vunpack.c.l.b16 %v4277
  %v5752 = vunpack.c.h.b16 %v4277
  %v5753 = vunpack.c.l.b16 %v4278
  %v5754 = vunpack.c.h.b16 %v4278
  %v5755 = vunpack.c.l.b16 %v4279
  %v5756 = vunpack.c.h.b16 %v4279
  %v5757 = vunpack.c.l.b16 %v4280
  %v5758 = vunpack.c.h.b16 %v4280
  %v5759 = vunpack.c.l.b16 %v4281
  %v5760 = vunpack.c.h.b16 %v4281
  %v5761 = vunpack.c.l.b16 %v4282
  %v5762 = vunpack.c.h.b16 %v4282
  %v5763 = vunpack.c.l.b16 %v4283
  %v5764 = vunpack.c.h.b16 %v4283
  %v5765 = vunpack.c.l.b16 %v4284
  %v5766 = vunpack.c.h.b16 %v4284
  %v5767 = vunpack.c.l.b16 %v4285
  %v5768 = vunpack.c.h.b16 %v4285
  %v5769 = vunpack.c.l.b16 %v4286
  %v5770 = vunpack.c.h.b16 %v4286
  %v5771 = vunpack.c.l.b16 %v4287
  %v5772 = vunpack.c.h.b16 %v4287
  %v5773 = vunpack.c.l.b16 %v4288
  %v5774 = vunpack.c.h.b16 %v4288
  %v5775 = vunpack.c.l.b16 %v4289
  %v5776 = vunpack.c.h.b16 %v4289
  %v5777 = vunpack.c.l.b16 %v4290
  %v5778 = vunpack.c.h.b16 %v4290
  %v5779 = vunpack.c.l.b16 %v4291
  %v5780 = vunpack.c.h.b16 %v4291
  %v5781 = vunpack.c.l.b16 %v4292
  %v5782 = vunpack.c.h.b16 %v4292
  %v5783 = vunpack.c.l.b16 %v4293
  %v5784 = vunpack.c.h.b16 %v4293
  %v5785 = vunpack.c.l.b16 %v4294
  %v5786 = vunpack.c.h.b16 %v4294
  %v5787 = vunpack.c.l.b16 %v4295
  %v5788 = vunpack.c.h.b16 %v4295
  %v5789 = vunpack.c.l.b16 %v4296
  %v5790 = vunpack.c.h.b16 %v4296
  %v5791 = vunpack.c.l.b16 %v4297
  %v5792 = vunpack.c.h.b16 %v4297
  %v5793 = vunpack.c.l.b16 %v4298
  %v5794 = vunpack.c.h.b16 %v4298
  %v5795 = vunpack.c.l.b16 %v4299
  %v5796 = vunpack.c.h.b16 %v4299
  %v5797 = vunpack.c.l.b16 %v4300
  %v5798 = vunpack.c.h.b16 %v4300
  %v5799 = vunpack.c.l.b16 %v4301
  %v5800 = vunpack.c.h.b16 %v4301
  %v5801 = vunpack.c.l.b16 %v4302
  %v5802 = vunpack.c.h.b16 %v4302
  %v5803 = vunpack.c.l.b16 %v4303
  %v5804 = vunpack.c.h.b16 %v4303
  %v5805 = vunpack.c.l.b16 %v4304
  %v5806 = vunpack.c.h.b16 %v4304
  %v5807 = vunpack.c.l.b16 %v4305
  %v5808 = vunpack.c.h.b16 %v4305
  %v5809 = vunpack.c.l.b16 %v4306
  %v5810 = vunpack.c.h.b16 %v4306
  %v5811 = vunpack.c.l.b16 %v4307
  %v5812 = vunpack.c.h.b16 %v4307
  %v5813 = vunpack.c.l.b16 %v4308
  %v5814 = vunpack.c.h.b16 %v4308
  %v5815 = vunpack.c.l.b16 %v4309
  %v5816 = vunpack.c.h.b16 %v4309
  %v5817 = vunpack.c.l.b16 %v4310
  %v5818 = vunpack.c.h.b16 %v4310
  %v5819 = vunpack.c.l.b16 %v4311
  %v5820 = vunpack.c.h.b16 %v4311
  %v5821 = vunpack.c.l.b16 %v4312
  %v5822 = vunpack.c.h.b16 %v4312
  %v5823 = vunpack.c.l.b16 %v4313
  %v5824 = vunpack.c.h.b16 %v4313
  %v5825 = vunpack.c.l.b16 %v4314
  %v5826 = vunpack.c.h.b16 %v4314
  %v5827 = vunpack.c.l.b16 %v4315
  %v5828 = vunpack.c.h.b16 %v4315
  %v5829 = vunpack.c.l.b16 %v4316
  %v5830 = vunpack.c.h.b16 %v4316
  %v5831 = vunpack.c.l.b16 %v4317
  %v5832 = vunpack.c.h.b16 %v4317
  %v5833 = vunpack.c.l.b16 %v4318
  %v5834 = vunpack.c.h.b16 %v4318
  %v5835 = vunpack.c.l.b16 %v4319
  %v5836 = vunpack.c.h.b16 %v4319
  %v5837 = vunpack.c.l.b16 %v4320
  %v5838 = vunpack.c.h.b16 %v4320
  %v5839 = vunpack.c.l.b16 %v4321
  %v5840 = vunpack.c.h.b16 %v4321
  %v5841 = vunpack.c.l.b16 %v4322
  %v5842 = vunpack.c.h.b16 %v4322
  %v5843 = vunpack.c.l.b16 %v4323
  %v5844 = vunpack.c.h.b16 %v4323
  %v5845 = vunpack.c.l.b16 %v4324
  %v5846 = vunpack.c.h.b16 %v4324
  %v5847 = vunpack.c.l.b16 %v4325
  %v5848 = vunpack.c.h.b16 %v4325
  %v5849 = vunpack.c.l.b16 %v4326
  %v5850 = vunpack.c.h.b16 %v4326
  %v5851 = vunpack.c.l.b16 %v4327
  %v5852 = vunpack.c.h.b16 %v4327
  %v5853 = vunpack.c.l.b16 %v4328
  %v5854 = vunpack.c.h.b16 %v4328
  %v5855 = vunpack.c.l.b16 %v4329
  %v5856 = vunpack.c.h.b16 %v4329
  %v5857 = vunpack.c.l.b16 %v4330
  %v5858 = vunpack.c.h.b16 %v4330
  %v5859 = vunpack.c.l.b16 %v4331
  %v5860 = vunpack.c.h.b16 %v4331
  %v5861 = vunpack.c.l.b16 %v4332
  %v5862 = vunpack.c.h.b16 %v4332
  %v5863 = vunpack.c.l.b16 %v4333
  %v5864 = vunpack.c.h.b16 %v4333
  %v5865 = vunpack.c.l.b16 %v4334
  %v5866 = vunpack.c.h.b16 %v4334
  %v5867 = vunpack.c.l.b16 %v4335
  %v5868 = vunpack.c.h.b16 %v4335
  %v5869 = vunpack.c.l.b16 %v4336
  %v5870 = vunpack.c.h.b16 %v4336
  %v5871 = vunpack.c.l.b16 %v4337
  %v5872 = vunpack.c.h.b16 %v4337
  %v5873 = vunpack.c.l.b16 %v4338
  %v5874 = vunpack.c.h.b16 %v4338
  %v5875 = vunpack.c.l.b16 %v4339
  %v5876 = vunpack.c.h.b16 %v4339
  %v5877 = vunpack.c.l.b16 %v4340
  %v5878 = vunpack.c.h.b16 %v4340
  %v5879 = vunpack.c.l.b16 %v4341
  %v5880 = vunpack.c.h.b16 %v4341
  %v5881 = vunpack.c.l.b16 %v4342
  %v5882 = vunpack.c.h.b16 %v4342
  %v5883 = vunpack.c.l.b16 %v4343
  %v5884 = vunpack.c.h.b16 %v4343
  %v5885 = vunpack.c.l.b16 %v4344
  %v5886 = vunpack.c.h.b16 %v4344
  %v5887 = vunpack.c.l.b16 %v4345
  %v5888 = vunpack.c.h.b16 %v4345
  %v5889 = vunpack.c.l.b16 %v4346
  %v5890 = vunpack.c.h.b16 %v4346
  %v5891 = vunpack.c.l.b16 %v4347
  %v5892 = vunpack.c.h.b16 %v4347
  %v5893 = vunpack.c.l.b16 %v4348
  %v5894 = vunpack.c.h.b16 %v4348
  %v5895 = vunpack.c.l.b16 %v4349
  %v5896 = vunpack.c.h.b16 %v4349
  %v5897 = vunpack.c.l.b16 %v4350
  %v5898 = vunpack.c.h.b16 %v4350
  %v5899 = vunpack.c.l.b16 %v4351
  %v5900 = vunpack.c.h.b16 %v4351
  %v5901 = vunpack.c.l.b16 %v4352
  %v5902 = vunpack.c.h.b16 %v4352
  %v5903 = vunpack.c.l.b16 %v4353
  %v5904 = vunpack.c.h.b16 %v4353
  %v5905 = vunpack.c.l.b16 %v4354
  %v5906 = vunpack.c.h.b16 %v4354
  %v5907 = vunpack.c.l.b16 %v4355
  %v5908 = vunpack.c.h.b16 %v4355
  %v5909 = vunpack.c.l.b16 %v4356
  %v5910 = vunpack.c.h.b16 %v4356
  %v5911 = vunpack.c.l.b16 %v4357
  %v5912 = vunpack.c.h.b16 %v4357
  %v5913 = vunpack.c.l.b16 %v4358
  %v5914 = vunpack.c.h.b16 %v4358
  %v5915 = vunpack.c.l.b16 %v4359
  %v5916 = vunpack.c.h.b16 %v4359
  %v5917 = vunpack.c.l.b16 %v4360
  %v5918 = vunpack.c.h.b16 %v4360
  %v5919 = vunpack.c.l.b16 %v4361
  %v5920 = vunpack.c.h.b16 %v4361
  %v5921 = vunpack.c.l.b16 %v4362
  %v5922 = vunpack.c.h.b16 %v4362
  %v5923 = vunpack.c.l.b16 %v4363
  %v5924 = vunpack.c.h.b16 %v4363
  %v5925 = vunpack.c.l.b16 %v4364
  %v5926 = vunpack.c.h.b16 %v4364
  %v5927 = vunpack.c.l.b16 %v4365
  %v5928 = vunpack.c.h.b16 %v4365
  %v5929 = vunpack.c.l.b16 %v4366
  %v5930 = vunpack.c.h.b16 %v4366
  %v5931 = vunpack.c.l.b16 %v4367
  %v5932 = vunpack.c.h.b16 %v4367
  %v5933 = vunpack.c.l.b16 %v4368
  %v5934 = vunpack.c.h.b16 %v4368
  %v5935 = vunpack.c.l.b16 %v4369
  %v5936 = vunpack.c.h.b16 %v4369
  %v5937 = vunpack.c.l.b16 %v4370
  %v5938 = vunpack.c.h.b16 %v4370
  %v5939 = vunpack.c.l.b16 %v4371
  %v5940 = vunpack.c.h.b16 %v4371
  %v5941 = vunpack.c.l.b16 %v4372
  %v5942 = vunpack.c.h.b16 %v4372
  %v5943 = vunpack.c.l.b16 %v4373
  %v5944 = vunpack.c.h.b16 %v4373
  %v5945 = vunpack.c.l.b16 %v4374
  %v5946 = vunpack.c.h.b16 %v4374
  %v5947 = vunpack.c.l.b16 %v4375
  %v5948 = vunpack.c.h.b16 %v4375
  %v5949 = vunpack.c.l.b16 %v4376
  %v5950 = vunpack.c.h.b16 %v4376
  %v5951 = vunpack.c.l.b16 %v4377
  %v5952 = vunpack.c.h.b16 %v4377
  %v5953 = vunpack.c.l.b16 %v4378
  %v5954 = vunpack.c.h.b16 %v4378
  %v5955 = vunpack.c.l.b16 %v4379
  %v5956 = vunpack.c.h.b16 %v4379
  %v5957 = vunpack.c.l.b16 %v4380
  %v5958 = vunpack.c.h.b16 %v4380
  %v5959 = vpack.c.b16 %v4943, %v4935
  %v5960 = vpack.c.b16 %v4944, %v4936
  %v5961 = vpack.c.b16 %v4945, %v4937
  %v5962 = vpack.c.b16 %v4946, %v4938
  %v5963 = vpack.c.b16 %v4947, %v4939
  %v5964 = vpack.c.b16 %v4948, %v4940
  %v5965 = vpack.c.b16 %v4949, %v4941
  %v5966 = vpack.c.b16 %v4950, %v4942
  %v5967 = vpack.c.b16 %v4959, %v4951
  %v5968 = vpack.c.b16 %v4960, %v4952
  %v5969 = vpack.c.b16 %v4961, %v4953
  %v5970 = vpack.c.b16 %v4962, %v4954
  %v5971 = vpack.c.b16 %v4963, %v4955
  %v5972 = vpack.c.b16 %v4964, %v4956
  %v5973 = vpack.c.b16 %v4965, %v4957
  %v5974 = vpack.c.b16 %v4966, %v4958
  %v5975 = vpack.c.b16 %v4975, %v4967
  %v5976 = vpack.c.b16 %v4976, %v4968
  %v5977 = vpack.c.b16 %v4977, %v4969
  %v5978 = vpack.c.b16 %v4978, %v4970
  %v5979 = vpack.c.b16 %v4979, %v4971
  %v5980 = vpack.c.b16 %v4980, %v4972
  %v5981 = vpack.c.b16 %v4981, %v4973
  %v5982 = vpack.c.b16 %v4982, %v4974
  %v5983 = vpack.c.b16 %v4991, %v4983
  %v5984 = vpack.c.b16 %v4992, %v4984
  %v5985 = vpack.c.b16 %v4993, %v4985
  %v5986 = vpack.c.b16 %v4994, %v4986
  %v5987 = vpack.c.b16 %v4995, %v4987
  %v5988 = vpack.c.b16 %v4996, %v4988
  %v5989 = vpack.c.b16 %v4997, %v4989
  %v5990 = vpack.c.b16 %v4998, %v4990
  %v5991 = vpack.c.b16 %v5007, %v4999
  %v5992 = vpack.c.b16 %v5008, %v5000
  %v5993 = vpack.c.b16 %v5009, %v5001
  %v5994 = vpack.c.b16 %v5010, %v5002
  %v5995 = vpack.c.b16 %v5011, %v5003
  %v5996 = vpack.c.b16 %v5012, %v5004
  %v5997 = vpack.c.b16 %v5013, %v5005
  %v5998 = vpack.c.b16 %v5014, %v5006
  %v5999 = vpack.c.b16 %v5023, %v5015
  %v6000 = vpack.c.b16 %v5024, %v5016
  %v6001 = vpack.c.b16 %v5025, %v5017
  %v6002 = vpack.c.b16 %v5026, %v5018
  %v6003 = vpack.c.b16 %v5027, %v5019
  %v6004 = vpack.c.b16 %v5028, %v5020
  %v6005 = vpack.c.b16 %v5029, %v5021
  %v6006 = vpack.c.b16 %v5030, %v5022
  %v6007 = vpack.c.b16 %v5039, %v5031
  %v6008 = vpack.c.b16 %v5040, %v5032
  %v6009 = vpack.c.b16 %v5041, %v5033
  %v6010 = vpack.c.b16 %v5042, %v5034
  %v6011 = vpack.c.b16 %v5043, %v5035
  %v6012 = vpack.c.b16 %v5044, %v5036
  %v6013 = vpack.c.b16 %v5045, %v5037
  %v6014 = vpack.c.b16 %v5046, %v5038
  %v6015 = vpack.c.b16 %v5055, %v5047
  %v6016 = vpack.c.b16 %v5056, %v5048
  %v6017 = vpack.c.b16 %v5057, %v5049
  %v6018 = vpack.c.b16 %v5058, %v5050
  %v6019 = vpack.c.b16 %v5059, %v5051
  %v6020 = vpack.c.b16 %v5060, %v5052
  %v6021 = vpack.c.b16 %v5061, %v5053
  %v6022 = vpack.c.b16 %v5062, %v5054
  %v6023 = vpack.c.b16 %v5071, %v5063
  %v6024 = vpack.c.b16 %v5072, %v5064
  %v6025 = vpack.c.b16 %v5073, %v5065
  %v6026 = vpack.c.b16 %v5074, %v5066
  %v6027 = vpack.c.b16 %v5075, %v5067
  %v6028 = vpack.c.b16 %v5076, %v5068
  %v6029 = vpack.c.b16 %v5077, %v5069
  %v6030 = vpack.c.b16 %v5078, %v5070
  %v6031 = vpack.c.b16 %v5087, %v5079
  %v6032 = vpack.c.b16 %v5088, %v5080
  %v6033 = vpack.c.b16 %v5089, %v5081
  %v6034 = vpack.c.b16 %v5090, %v5082
  %v6035 = vpack.c.b16 %v5091, %v5083
  %v6036 = vpack.c.b16 %v5092, %v5084
  %v6037 = vpack.c.b16 %v5093, %v5085
  %v6038 = vpack.c.b16 %v5094, %v5086
  %v6039 = vpack.c.b16 %v5103, %v5095
  %v6040 = vpack.c.b16 %v5104, %v5096
  %v6041 = vpack.c.b16 %v5105, %v5097
  %v6042 = vpack.c.b16 %v5106, %v5098
  %v6043 = vpack.c.b16 %v5107, %v5099
  %v6044 = vpack.c.b16 %v5108, %v5100
  %v6045 = vpack.c.b16 %v5109, %v5101
  %v6046 = vpack.c.b16 %v5110, %v5102
  %v6047 = vpack.c.b16 %v5119, %v5111
  %v6048 = vpack.c.b16 %v5120, %v5112
  %v6049 = vpack.c.b16 %v5121, %v5113
  %v6050 = vpack.c.b16 %v5122, %v5114
  %v6051 = vpack.c.b16 %v5123, %v5115
  %v6052 = vpack.c.b16 %v5124, %v5116
  %v6053 = vpack.c.b16 %v5125, %v5117
  %v6054 = vpack.c.b16 %v5126, %v5118
  %v6055 = vpack.c.b16 %v5135, %v5127
  %v6056 = vpack.c.b16 %v5136, %v5128
  %v6057 = vpack.c.b16 %v5137, %v5129
  %v6058 = vpack.c.b16 %v5138, %v5130
  %v6059 = vpack.c.b16 %v5139, %v5131
  %v6060 = vpack.c.b16 %v5140, %v5132
  %v6061 = vpack.c.b16 %v5141, %v5133
  %v6062 = vpack.c.b16 %v5142, %v5134
  %v6063 = vpack.c.b16 %v5151, %v5143
  %v6064 = vpack.c.b16 %v5152, %v5144
  %v6065 = vpack.c.b16 %v5153, %v5145
  %v6066 = vpack.c.b16 %v5154, %v5146
  %v6067 = vpack.c.b16 %v5155, %v5147
  %v6068 = vpack.c.b16 %v5156, %v5148
  %v6069 = vpack.c.b16 %v5157, %v5149
  %v6070 = vpack.c.b16 %v5158, %v5150
  %v6071 = vpack.c.b16 %v5167, %v5159
  %v6072 = vpack.c.b16 %v5168, %v5160
  %v6073 = vpack.c.b16 %v5169, %v5161
  %v6074 = vpack.c.b16 %v5170, %v5162
  %v6075 = vpack.c.b16 %v5171, %v5163
  %v6076 = vpack.c.b16 %v5172, %v5164
  %v6077 = vpack.c.b16 %v5173, %v5165
  %v6078 = vpack.c.b16 %v5174, %v5166
  %v6079 = vpack.c.b16 %v5183, %v5175
  %v6080 = vpack.c.b16 %v5184, %v5176
  %v6081 = vpack.c.b16 %v5185, %v5177
  %v6082 = vpack.c.b16 %v5186, %v5178
  %v6083 = vpack.c.b16 %v5187, %v5179
  %v6084 = vpack.c.b16 %v5188, %v5180
  %v6085 = vpack.c.b16 %v5189, %v5181
  %v6086 = vpack.c.b16 %v5190, %v5182
  %v6087 = vpack.c.b16 %v5199, %v5191
  %v6088 = vpack.c.b16 %v5200, %v5192
  %v6089 = vpack.c.b16 %v5201, %v5193
  %v6090 = vpack.c.b16 %v5202, %v5194
  %v6091 = vpack.c.b16 %v5203, %v5195
  %v6092 = vpack.c.b16 %v5204, %v5196
  %v6093 = vpack.c.b16 %v5205, %v5197
  %v6094 = vpack.c.b16 %v5206, %v5198
  %v6095 = vpack.c.b16 %v5215, %v5207
  %v6096 = vpack.c.b16 %v5216, %v5208
  %v6097 = vpack.c.b16 %v5217, %v5209
  %v6098 = vpack.c.b16 %v5218, %v5210
  %v6099 = vpack.c.b16 %v5219, %v5211
  %v6100 = vpack.c.b16 %v5220, %v5212
  %v6101 = vpack.c.b16 %v5221, %v5213
  %v6102 = vpack.c.b16 %v5222, %v5214
  %v6103 = vpack.c.b16 %v5231, %v5223
  %v6104 = vpack.c.b16 %v5232, %v5224
  %v6105 = vpack.c.b16 %v5233, %v5225
  %v6106 = vpack.c.b16 %v5234, %v5226
  %v6107 = vpack.c.b16 %v5235, %v5227
  %v6108 = vpack.c.b16 %v5236, %v5228
  %v6109 = vpack.c.b16 %v5237, %v5229
  %v6110 = vpack.c.b16 %v5238, %v5230
  %v6111 = vpack.c.b16 %v5247, %v5239
  %v6112 = vpack.c.b16 %v5248, %v5240
  %v6113 = vpack.c.b16 %v5249, %v5241
  %v6114 = vpack.c.b16 %v5250, %v5242
  %v6115 = vpack.c.b16 %v5251, %v5243
  %v6116 = vpack.c.b16 %v5252, %v5244
  %v6117 = vpack.c.b16 %v5253, %v5245
  %v6118 = vpack.c.b16 %v5254, %v5246
  %v6119 = vpack.c.b16 %v5263, %v5255
  %v6120 = vpack.c.b16 %v5264, %v5256
  %v6121 = vpack.c.b16 %v5265, %v5257
  %v6122 = vpack.c.b16 %v5266, %v5258
  %v6123 = vpack.c.b16 %v5267, %v5259
  %v6124 = vpack.c.b16 %v5268, %v5260
  %v6125 = vpack.c.b16 %v5269, %v5261
  %v6126 = vpack.c.b16 %v5270, %v5262
  %v6127 = vpack.c.b16 %v5279, %v5271
  %v6128 = vpack.c.b16 %v5280, %v5272
  %v6129 = vpack.c.b16 %v5281, %v5273
  %v6130 = vpack.c.b16 %v5282, %v5274
  %v6131 = vpack.c.b16 %v5283, %v5275
  %v6132 = vpack.c.b16 %v5284, %v5276
  %v6133 = vpack.c.b16 %v5285, %v5277
  %v6134 = vpack.c.b16 %v5286, %v5278
  %v6135 = vpack.c.b16 %v5295, %v5287
  %v6136 = vpack.c.b16 %v5296, %v5288
  %v6137 = vpack.c.b16 %v5297, %v5289
  %v6138 = vpack.c.b16 %v5298, %v5290
  %v6139 = vpack.c.b16 %v5299, %v5291
  %v6140 = vpack.c.b16 %v5300, %v5292
  %v6141 = vpack.c.b16 %v5301, %v5293
  %v6142 = vpack.c.b16 %v5302, %v5294
  %v6143 = vpack.c.b16 %v5311, %v5303
  %v6144 = vpack.c.b16 %v5312, %v5304
  %v6145 = vpack.c.b16 %v5313, %v5305
  %v6146 = vpack.c.b16 %v5314, %v5306
  %v6147 = vpack.c.b16 %v5315, %v5307
  %v6148 = vpack.c.b16 %v5316, %v5308
  %v6149 = vpack.c.b16 %v5317, %v5309
  %v6150 = vpack.c.b16 %v5318, %v5310
  %v6151 = vpack.c.b16 %v5327, %v5319
  %v6152 = vpack.c.b16 %v5328, %v5320
  %v6153 = vpack.c.b16 %v5329, %v5321
  %v6154 = vpack.c.b16 %v5330, %v5322
  %v6155 = vpack.c.b16 %v5331, %v5323
  %v6156 = vpack.c.b16 %v5332, %v5324
  %v6157 = vpack.c.b16 %v5333, %v5325
  %v6158 = vpack.c.b16 %v5334, %v5326
  %v6159 = vpack.c.b16 %v5343, %v5335
  %v6160 = vpack.c.b16 %v5344, %v5336
  %v6161 = vpack.c.b16 %v5345, %v5337
  %v6162 = vpack.c.b16 %v5346, %v5338
  %v6163 = vpack.c.b16 %v5347, %v5339
  %v6164 = vpack.c.b16 %v5348, %v5340
  %v6165 = vpack.c.b16 %v5349, %v5341
  %v6166 = vpack.c.b16 %v5350, %v5342
  %v6167 = vpack.c.b16 %v5359, %v5351
  %v6168 = vpack.c.b16 %v5360, %v5352
  %v6169 = vpack.c.b16 %v5361, %v5353
  %v6170 = vpack.c.b16 %v5362, %v5354
  %v6171 = vpack.c.b16 %v5363, %v5355
  %v6172 = vpack.c.b16 %v5364, %v5356
  %v6173 = vpack.c.b16 %v5365, %v5357
  %v6174 = vpack.c.b16 %v5366, %v5358
  %v6175 = vpack.c.b16 %v5375, %v5367
  %v6176 = vpack.c.b16 %v5376, %v5368
  %v6177 = vpack.c.b16 %v5377, %v5369
  %v6178 = vpack.c.b16 %v5378, %v5370
  %v6179 = vpack.c.b16 %v5379, %v5371
  %v6180 = vpack.c.b16 %v5380, %v5372
  %v6181 = vpack.c.b16 %v5381, %v5373
  %v6182 = vpack.c.b16 %v5382, %v5374
  %v6183 = vpack.c.b16 %v5391, %v5383
  %v6184 = vpack.c.b16 %v5392, %v5384
  %v6185 = vpack.c.b16 %v5393, %v5385
  %v6186 = vpack.c.b16 %v5394, %v5386
  %v6187 = vpack.c.b16 %v5395, %v5387
  %v6188 = vpack.c.b16 %v5396, %v5388
  %v6189 = vpack.c.b16 %v5397, %v5389
  %v6190 = vpack.c.b16 %v5398, %v5390
  %v6191 = vpack.c.b16 %v5407, %v5399
  %v6192 = vpack.c.b16 %v5408, %v5400
  %v6193 = vpack.c.b16 %v5409, %v5401
  %v6194 = vpack.c.b16 %v5410, %v5402
  %v6195 = vpack.c.b16 %v5411, %v5403
  %v6196 = vpack.c.b16 %v5412, %v5404
  %v6197 = vpack.c.b16 %v5413, %v5405
  %v6198 = vpack.c.b16 %v5414, %v5406
  %v6199 = vpack.c.b16 %v5423, %v5415
  %v6200 = vpack.c.b16 %v5424, %v5416
  %v6201 = vpack.c.b16 %v5425, %v5417
  %v6202 = vpack.c.b16 %v5426, %v5418
  %v6203 = vpack.c.b16 %v5427, %v5419
  %v6204 = vpack.c.b16 %v5428, %v5420
  %v6205 = vpack.c.b16 %v5429, %v5421
  %v6206 = vpack.c.b16 %v5430, %v5422
  %v6207 = vpack.c.b16 %v5439, %v5431
  %v6208 = vpack.c.b16 %v5440, %v5432
  %v6209 = vpack.c.b16 %v5441, %v5433
  %v6210 = vpack.c.b16 %v5442, %v5434
  %v6211 = vpack.c.b16 %v5443, %v5435
  %v6212 = vpack.c.b16 %v5444, %v5436
  %v6213 = vpack.c.b16 %v5445, %v5437
  %v6214 = vpack.c.b16 %v5446, %v5438
  %v6215 = vpack.c.b16 %v5455, %v5447
  %v6216 = vpack.c.b16 %v5456, %v5448
  %v6217 = vpack.c.b16 %v5457, %v5449
  %v6218 = vpack.c.b16 %v5458, %v5450
  %v6219 = vpack.c.b16 %v5459, %v5451
  %v6220 = vpack.c.b16 %v5460, %v5452
  %v6221 = vpack.c.b16 %v5461, %v5453
  %v6222 = vpack.c.b16 %v5462, %v5454
  %v6223 = vpack.c.b16 %v5471, %v5463
  %v6224 = vpack.c.b16 %v5472, %v5464
  %v6225 = vpack.c.b16 %v5473, %v5465
  %v6226 = vpack.c.b16 %v5474, %v5466
  %v6227 = vpack.c.b16 %v5475, %v5467
  %v6228 = vpack.c.b16 %v5476, %v5468
  %v6229 = vpack.c.b16 %v5477, %v5469
  %v6230 = vpack.c.b16 %v5478, %v5470
  %v6231 = vpack.c.b16 %v5487, %v5479
  %v6232 = vpack.c.b16 %v5488, %v5480
  %v6233 = vpack.c.b16 %v5489, %v5481
  %v6234 = vpack.c.b16 %v5490, %v5482
  %v6235 = vpack.c.b16 %v5491, %v5483
  %v6236 = vpack.c.b16 %v5492, %v5484
  %v6237 = vpack.c.b16 %v5493, %v5485
  %v6238 = vpack.c.b16 %v5494, %v5486
  %v6239 = vpack.c.b16 %v5503, %v5495
  %v6240 = vpack.c.b16 %v5504, %v5496
  %v6241 = vpack.c.b16 %v5505, %v5497
  %v6242 = vpack.c.b16 %v5506, %v5498
  %v6243 = vpack.c.b16 %v5507, %v5499
  %v6244 = vpack.c.b16 %v5508, %v5500
  %v6245 = vpack.c.b16 %v5509, %v5501
  %v6246 = vpack.c.b16 %v5510, %v5502
  %v6247 = vpack.c.b16 %v5519, %v5511
  %v6248 = vpack.c.b16 %v5520, %v5512
  %v6249 = vpack.c.b16 %v5521, %v5513
  %v6250 = vpack.c.b16 %v5522, %v5514
  %v6251 = vpack.c.b16 %v5523, %v5515
  %v6252 = vpack.c.b16 %v5524, %v5516
  %v6253 = vpack.c.b16 %v5525, %v5517
  %v6254 = vpack.c.b16 %v5526, %v5518
  %v6255 = vpack.c.b16 %v5535, %v5527
  %v6256 = vpack.c.b16 %v5536, %v5528
  %v6257 = vpack.c.b16 %v5537, %v5529
  %v6258 = vpack.c.b16 %v5538, %v5530
  %v6259 = vpack.c.b16 %v5539, %v5531
  %v6260 = vpack.c.b16 %v5540, %v5532
  %v6261 = vpack.c.b16 %v5541, %v5533
  %v6262 = vpack.c.b16 %v5542, %v5534
  %v6263 = vpack.c.b16 %v5551, %v5543
  %v6264 = vpack.c.b16 %v5552, %v5544
  %v6265 = vpack.c.b16 %v5553, %v5545
  %v6266 = vpack.c.b16 %v5554, %v5546
  %v6267 = vpack.c.b16 %v5555, %v5547
  %v6268 = vpack.c.b16 %v5556, %v5548
  %v6269 = vpack.c.b16 %v5557, %v5549
  %v6270 = vpack.c.b16 %v5558, %v5550
  %v6271 = vpack.c.b16 %v5567, %v5559
  %v6272 = vpack.c.b16 %v5568, %v5560
  %v6273 = vpack.c.b16 %v5569, %v5561
  %v6274 = vpack.c.b16 %v5570, %v5562
  %v6275 = vpack.c.b16 %v5571, %v5563
  %v6276 = vpack.c.b16 %v5572, %v5564
  %v6277 = vpack.c.b16 %v5573, %v5565
  %v6278 = vpack.c.b16 %v5574, %v5566
  %v6279 = vpack.c.b16 %v5583, %v5575
  %v6280 = vpack.c.b16 %v5584, %v5576
  %v6281 = vpack.c.b16 %v5585, %v5577
  %v6282 = vpack.c.b16 %v5586, %v5578
  %v6283 = vpack.c.b16 %v5587, %v5579
  %v6284 = vpack.c.b16 %v5588, %v5580
  %v6285 = vpack.c.b16 %v5589, %v5581
  %v6286 = vpack.c.b16 %v5590, %v5582
  %v6287 = vpack.c.b16 %v5599, %v5591
  %v6288 = vpack.c.b16 %v5600, %v5592
  %v6289 = vpack.c.b16 %v5601, %v5593
  %v6290 = vpack.c.b16 %v5602, %v5594
  %v6291 = vpack.c.b16 %v5603, %v5595
  %v6292 = vpack.c.b16 %v5604, %v5596
  %v6293 = vpack.c.b16 %v5605, %v5597
  %v6294 = vpack.c.b16 %v5606, %v5598
  %v6295 = vpack.c.b16 %v5615, %v5607
  %v6296 = vpack.c.b16 %v5616, %v5608
  %v6297 = vpack.c.b16 %v5617, %v5609
  %v6298 = vpack.c.b16 %v5618, %v5610
  %v6299 = vpack.c.b16 %v5619, %v5611
  %v6300 = vpack.c.b16 %v5620, %v5612
  %v6301 = vpack.c.b16 %v5621, %v5613
  %v6302 = vpack.c.b16 %v5622, %v5614
  %v6303 = vpack.c.b16 %v5631, %v5623
  %v6304 = vpack.c.b16 %v5632, %v5624
  %v6305 = vpack.c.b16 %v5633, %v5625
  %v6306 = vpack.c.b16 %v5634, %v5626
  %v6307 = vpack.c.b16 %v5635, %v5627
  %v6308 = vpack.c.b16 %v5636, %v5628
  %v6309 = vpack.c.b16 %v5637, %v5629
  %v6310 = vpack.c.b16 %v5638, %v5630
  %v6311 = vpack.c.b16 %v5647, %v5639
  %v6312 = vpack.c.b16 %v5648, %v5640
  %v6313 = vpack.c.b16 %v5649, %v5641
  %v6314 = vpack.c.b16 %v5650, %v5642
  %v6315 = vpack.c.b16 %v5651, %v5643
  %v6316 = vpack.c.b16 %v5652, %v5644
  %v6317 = vpack.c.b16 %v5653, %v5645
  %v6318 = vpack.c.b16 %v5654, %v5646
  %v6319 = vpack.c.b16 %v5663, %v5655
  %v6320 = vpack.c.b16 %v5664, %v5656
  %v6321 = vpack.c.b16 %v5665, %v5657
  %v6322 = vpack.c.b16 %v5666, %v5658
  %v6323 = vpack.c.b16 %v5667, %v5659
  %v6324 = vpack.c.b16 %v5668, %v5660
  %v6325 = vpack.c.b16 %v5669, %v5661
  %v6326 = vpack.c.b16 %v5670, %v5662
  %v6327 = vpack.c.b16 %v5679, %v5671
  %v6328 = vpack.c.b16 %v5680, %v5672
  %v6329 = vpack.c.b16 %v5681, %v5673
  %v6330 = vpack.c.b16 %v5682, %v5674
  %v6331 = vpack.c.b16 %v5683, %v5675
  %v6332 = vpack.c.b16 %v5684, %v5676
  %v6333 = vpack.c.b16 %v5685, %v5677
  %v6334 = vpack.c.b16 %v5686, %v5678
  %v6335 = vpack.c.b16 %v5695, %v5687
  %v6336 = vpack.c.b16 %v5696, %v5688
  %v6337 = vpack.c.b16 %v5697, %v5689
  %v6338 = vpack.c.b16 %v5698, %v5690
  %v6339 = vpack.c.b16 %v5699, %v5691
  %v6340 = vpack.c.b16 %v5700, %v5692
  %v6341 = vpack.c.b16 %v5701, %v5693
  %v6342 = vpack.c.b16 %v5702, %v5694
  %v6343 = vpack.c.b16 %v5711, %v5703
  %v6344 = vpack.c.b16 %v5712, %v5704
  %v6345 = vpack.c.b16 %v5713, %v5705
  %v6346 = vpack.c.b16 %v5714, %v5706
  %v6347 = vpack.c.b16 %v5715, %v5707
  %v6348 = vpack.c.b16 %v5716, %v5708
  %v6349 = vpack.c.b16 %v5717, %v5709
  %v6350 = vpack.c.b16 %v5718, %v5710
  %v6351 = vpack.c.b16 %v5727, %v5719
  %v6352 = vpack.c.b16 %v5728, %v5720
  %v6353 = vpack.c.b16 %v5729, %v5721
  %v6354 = vpack.c.b16 %v5730, %v5722
  %v6355 = vpack.c.b16 %v5731, %v5723
  %v6356 = vpack.c.b16 %v5732, %v5724
  %v6357 = vpack.c.b16 %v5733, %v5725
  %v6358 = vpack.c.b16 %v5734, %v5726
  %v6359 = vpack.c.b16 %v5743, %v5735
  %v6360 = vpack.c.b16 %v5744, %v5736
  %v6361 = vpack.c.b16 %v5745, %v5737
  %v6362 = vpack.c.b16 %v5746, %v5738
  %v6363 = vpack.c.b16 %v5747, %v5739
  %v6364 = vpack.c.b16 %v5748, %v5740
  %v6365 = vpack.c.b16 %v5749, %v5741
  %v6366 = vpack.c.b16 %v5750, %v5742
  %v6367 = vpack.c.b16 %v5759, %v5751
  %v6368 = vpack.c.b16 %v5760, %v5752
  %v6369 = vpack.c.b16 %v5761, %v5753
  %v6370 = vpack.c.b16 %v5762, %v5754
  %v6371 = vpack.c.b16 %v5763, %v5755
  %v6372 = vpack.c.b16 %v5764, %v5756
  %v6373 = vpack.c.b16 %v5765, %v5757
  %v6374 = vpack.c.b16 %v5766, %v5758
  %v6375 = vpack.c.b16 %v5775, %v5767
  %v6376 = vpack.c.b16 %v5776, %v5768
  %v6377 = vpack.c.b16 %v5777, %v5769
  %v6378 = vpack.c.b16 %v5778, %v5770
  %v6379 = vpack.c.b16 %v5779, %v5771
  %v6380 = vpack.c.b16 %v5780, %v5772
  %v6381 = vpack.c.b16 %v5781, %v5773
  %v6382 = vpack.c.b16 %v5782, %v5774
  %v6383 = vpack.c.b16 %v5791, %v5783
  %v6384 = vpack.c.b16 %v5792, %v5784
  %v6385 = vpack.c.b16 %v5793, %v5785
  %v6386 = vpack.c.b16 %v5794, %v5786
  %v6387 = vpack.c.b16 %v5795, %v5787
  %v6388 = vpack.c.b16 %v5796, %v5788
  %v6389 = vpack.c.b16 %v5797, %v5789
  %v6390 = vpack.c.b16 %v5798, %v5790
  %v6391 = vpack.c.b16 %v5807, %v5799
  %v6392 = vpack.c.b16 %v5808, %v5800
  %v6393 = vpack.c.b16 %v5809, %v5801
  %v6394 = vpack.c.b16 %v5810, %v5802
  %v6395 = vpack.c.b16 %v5811, %v5803
  %v6396 = vpack.c.b16 %v5812, %v5804
  %v6397 = vpack.c.b16 %v5813, %v5805
  %v6398 = vpack.c.b16 %v5814, %v5806
  %v6399 = vpack.c.b16 %v5823, %v5815
  %v6400 = vpack.c.b16 %v5824, %v5816
  %v6401 = vpack.c.b16 %v5825, %v5817
  %v6402 = vpack.c.b16 %v5826, %v5818
  %v6403 = vpack.c.b16 %v5827, %v5819
  %v6404 = vpack.c.b16 %v5828, %v5820
  %v6405 = vpack.c.b16 %v5829, %v5821
  %v6406 = vpack.c.b16 %v5830, %v5822
  %v6407 = vpack.c.b16 %v5839, %v5831
  %v6408 = vpack.c.b16 %v5840, %v5832
  %v6409 = vpack.c.b16 %v5841, %v5833
  %v6410 = vpack.c.b16 %v5842, %v5834
  %v6411 = vpack.c.b16 %v5843, %v5835
  %v6412 = vpack.c.b16 %v5844, %v5836
  %v6413 = vpack.c.b16 %v5845, %v5837
  %v6414 = vpack.c.b16 %v5846, %v5838
  %v6415 = vpack.c.b16 %v5855, %v5847
  %v6416 = vpack.c.b16 %v5856, %v5848
  %v6417 = vpack.c.b16 %v5857, %v5849
  %v6418 = vpack.c.b16 %v5858, %v5850
  %v6419 = vpack.c.b16 %v5859, %v5851
  %v6420 = vpack.c.b16 %v5860, %v5852
  %v6421 = vpack.c.b16 %v5861, %v5853
  %v6422 = vpack.c.b16 %v5862, %v5854
  %v6423 = vpack.c.b16 %v5871, %v5863
  %v6424 = vpack.c.b16 %v5872, %v5864
  %v6425 = vpack.c.b16 %v5873, %v5865
  %v6426 = vpack.c.b16 %v5874, %v5866
  %v6427 = vpack.c.b16 %v5875, %v5867
  %v6428 = vpack.c.b16 %v5876, %v5868
  %v6429 = vpack.c.b16 %v5877, %v5869
  %v6430 = vpack.c.b16 %v5878, %v5870
  %v6431 = vpack.c.b16 %v5887, %v5879
  %v6432 = vpack.c.b16 %v5888, %v5880
  %v6433 = vpack.c.b16 %v5889, %v5881
  %v6434 = vpack.c.b16 %v5890, %v5882
  %v6435 = vpack.c.b16 %v5891, %v5883
  %v6436 = vpack.c.b16 %v5892, %v5884
  %v6437 = vpack.c.b16 %v5893, %v5885
  %v6438 = vpack.c.b16 %v5894, %v5886
  %v6439 = vpack.c.b16 %v5903, %v5895
  %v6440 = vpack.c.b16 %v5904, %v5896
  %v6441 = vpack.c.b16 %v5905, %v5897
  %v6442 = vpack.c.b16 %v5906, %v5898
  %v6443 = vpack.c.b16 %v5907, %v5899
  %v6444 = vpack.c.b16 %v5908, %v5900
  %v6445 = vpack.c.b16 %v5909, %v5901
  %v6446 = vpack.c.b16 %v5910, %v5902
  %v6447 = vpack.c.b16 %v5919, %v5911
  %v6448 = vpack.c.b16 %v5920, %v5912
  %v6449 = vpack.c.b16 %v5921, %v5913
  %v6450 = vpack.c.b16 %v5922, %v5914
  %v6451 = vpack.c.b16 %v5923, %v5915
  %v6452 = vpack.c.b16 %v5924, %v5916
  %v6453 = vpack.c.b16 %v5925, %v5917
  %v6454 = vpack.c.b16 %v5926, %v5918
  %v6455 = vpack.c.b16 %v5935, %v5927
  %v6456 = vpack.c.b16 %v5936, %v5928
  %v6457 = vpack.c.b16 %v5937, %v5929
  %v6458 = vpack.c.b16 %v5938, %v5930
  %v6459 = vpack.c.b16 %v5939, %v5931
  %v6460 = vpack.c.b16 %v5940, %v5932
  %v6461 = vpack.c.b16 %v5941, %v5933
  %v6462 = vpack.c.b16 %v5942, %v5934
  %v6463 = vpack.c.b16 %v5951, %v5943
  %v6464 = vpack.c.b16 %v5952, %v5944
  %v6465 = vpack.c.b16 %v5953, %v5945
  %v6466 = vpack.c.b16 %v5954, %v5946
  %v6467 = vpack.c.b16 %v5955, %v5947
  %v6468 = vpack.c.b16 %v5956, %v5948
  %v6469 = vpack.c.b16 %v5957, %v5949
  %v6470 = vpack.c.b16 %v5958, %v5950
  %6983 = vmatprep.subr.bf16.mxu0 %v5960
  %6984 = vmatpush1.bf16.msra.mxu0 %v5959
  %6985 = vmatprep.subr.bf16.mxu0 %v5968
  %6986 = vmatpush1.bf16.msra.mxu0 %v5967
  %6987 = vmatprep.subr.bf16.mxu0 %v5976
  %6988 = vmatpush1.bf16.msra.mxu0 %v5975
  %6989 = vmatprep.subr.bf16.mxu0 %v5984
  %6990 = vmatpush1.bf16.msra.mxu0 %v5983
  %6991 = vmatprep.subr.bf16.mxu0 %v5992
  %6992 = vmatpush1.bf16.msra.mxu0 %v5991
  %6993 = vmatprep.subr.bf16.mxu0 %v6000
  %6994 = vmatpush1.bf16.msra.mxu0 %v5999
  %6995 = vmatprep.subr.bf16.mxu0 %v6008
  %6996 = vmatpush1.bf16.msra.mxu0 %v6007
  %6997 = vmatprep.subr.bf16.mxu0 %v6016
  %6998 = vmatpush1.bf16.msra.mxu0 %v6015
  %6999 = vmatprep.subr.bf16.mxu0 %v6024
  %7000 = vmatpush1.bf16.msra.mxu0 %v6023
  %7001 = vmatprep.subr.bf16.mxu0 %v6032
  %7002 = vmatpush1.bf16.msra.mxu0 %v6031
  %7003 = vmatprep.subr.bf16.mxu0 %v6040
  %7004 = vmatpush1.bf16.msra.mxu0 %v6039
  %7005 = vmatprep.subr.bf16.mxu0 %v6048
  %7006 = vmatpush1.bf16.msra.mxu0 %v6047
  %7007 = vmatprep.subr.bf16.mxu0 %v6056
  %7008 = vmatpush1.bf16.msra.mxu0 %v6055
  %7009 = vmatprep.subr.bf16.mxu0 %v6064
  %7010 = vmatpush1.bf16.msra.mxu0 %v6063
  %7011 = vmatprep.subr.bf16.mxu0 %v6072
  %7012 = vmatpush1.bf16.msra.mxu0 %v6071
  %7013 = vmatprep.subr.bf16.mxu0 %v6080
  %7014 = vmatpush1.bf16.msra.mxu0 %v6079
  %7015 = vmatprep.mubr.bf16.mxu0 %v3862
  %7016 = vmatmul.mubr.bf16.gmra.mrb[0].mxu0 %v3861
  %v7017 = vpop.f32.mrb[0].mxu0
  %v7018 = vadd.f32 %v4386, %v7017
  %v7019 = vpop.f32.mrb[0].mxu0
  %v7020 = vadd.f32 %v4390, %v7019
  %v7021 = vpop.f32.mrb[0].mxu0
  %v7022 = vpop.f32.mrb[0].mxu0
  %7023 = vdwg.mxu0
  %7024 = vmatprep.subr.bf16.mxu0 %v6088
  %7025 = vmatpush1.bf16.msra.mxu0 %v6087
  %7026 = vmatprep.subr.bf16.mxu0 %v6096
  %7027 = vmatpush1.bf16.msra.mxu0 %v6095
  %7028 = vmatprep.subr.bf16.mxu0 %v6104
  %7029 = vmatpush1.bf16.msra.mxu0 %v6103
  %7030 = vmatprep.subr.bf16.mxu0 %v6112
  %7031 = vmatpush1.bf16.msra.mxu0 %v6111
  %7032 = vmatprep.subr.bf16.mxu0 %v6120
  %7033 = vmatpush1.bf16.msra.mxu0 %v6119
  %7034 = vmatprep.subr.bf16.mxu0 %v6128
  %7035 = vmatpush1.bf16.msra.mxu0 %v6127
  %7036 = vmatprep.subr.bf16.mxu0 %v6136
  %7037 = vmatpush1.bf16.msra.mxu0 %v6135
  %7038 = vmatprep.subr.bf16.mxu0 %v6144
  %7039 = vmatpush1.bf16.msra.mxu0 %v6143
  %7040 = vmatprep.subr.bf16.mxu0 %v6152
  %7041 = vmatpush1.bf16.msra.mxu0 %v6151
  %7042 = vmatprep.subr.bf16.mxu0 %v6160
  %7043 = vmatpush1.bf16.msra.mxu0 %v6159
  %7044 = vmatprep.subr.bf16.mxu0 %v6168
  %7045 = vmatpush1.bf16.msra.mxu0 %v6167
  %7046 = vmatprep.subr.bf16.mxu0 %v6176
  %7047 = vmatpush1.bf16.msra.mxu0 %v6175
  %7048 = vmatprep.subr.bf16.mxu0 %v6184
  %7049 = vmatpush1.bf16.msra.mxu0 %v6183
  %7050 = vmatprep.subr.bf16.mxu0 %v6192
  %7051 = vmatpush1.bf16.msra.mxu0 %v6191
  %7052 = vmatprep.subr.bf16.mxu0 %v6200
  %7053 = vmatpush1.bf16.msra.mxu0 %v6199
  %7054 = vmatprep.subr.bf16.mxu0 %v6208
  %7055 = vmatpush1.bf16.msra.mxu0 %v6207
  %7056 = vmatprep.mubr.bf16.mxu0 %v3864
  %7057 = vmatmul.mubr.bf16.gmra.mrb[0].mxu0 %v3863
  %v7058 = vpop.f32.mrb[0].mxu0
  %v7059 = vadd.f32 %v7018, %v7058
  %v7060 = vpop.f32.mrb[0].mxu0
  %v7061 = vadd.f32 %v7020, %v7060
  %v7062 = vpop.f32.mrb[0].mxu0
  %v7063 = vpop.f32.mrb[0].mxu0
  %7064 = vdwg.mxu0
  %7065 = vmatprep.subr.bf16.mxu0 %v6216
  %7066 = vmatpush1.bf16.msra.mxu0 %v6215
  %7067 = vmatprep.subr.bf16.mxu0 %v6224
  %7068 = vmatpush1.bf16.msra.mxu0 %v6223
  %7069 = vmatprep.subr.bf16.mxu0 %v6232
  %7070 = vmatpush1.bf16.msra.mxu0 %v6231
  %7071 = vmatprep.subr.bf16.mxu0 %v6240
  %7072 = vmatpush1.bf16.msra.mxu0 %v6239
  %7073 = vmatprep.subr.bf16.mxu0 %v6248
  %7074 = vmatpush1.bf16.msra.mxu0 %v6247
  %7075 = vmatprep.subr.bf16.mxu0 %v6256
  %7076 = vmatpush1.bf16.msra.mxu0 %v6255
  %7077 = vmatprep.subr.bf16.mxu0 %v6264
  %7078 = vmatpush1.bf16.msra.mxu0 %v6263
  %7079 = vmatprep.subr.bf16.mxu0 %v6272
  %7080 = vmatpush1.bf16.msra.mxu0 %v6271
  %7081 = vmatprep.subr.bf16.mxu0 %v6280
  %7082 = vmatpush1.bf16.msra.mxu0 %v6279
  %7083 = vmatprep.subr.bf16.mxu0 %v6288
  %7084 = vmatpush1.bf16.msra.mxu0 %v6287
  %7085 = vmatprep.subr.bf16.mxu0 %v6296
  %7086 = vmatpush1.bf16.msra.mxu0 %v6295
  %7087 = vmatprep.subr.bf16.mxu0 %v6304
  %7088 = vmatpush1.bf16.msra.mxu0 %v6303
  %7089 = vmatprep.subr.bf16.mxu0 %v6312
  %7090 = vmatpush1.bf16.msra.mxu0 %v6311
  %7091 = vmatprep.subr.bf16.mxu0 %v6320
  %7092 = vmatpush1.bf16.msra.mxu0 %v6319
  %7093 = vmatprep.subr.bf16.mxu0 %v6328
  %7094 = vmatpush1.bf16.msra.mxu0 %v6327
  %7095 = vmatprep.subr.bf16.mxu0 %v6336
  %7096 = vmatpush1.bf16.msra.mxu0 %v6335
  %7097 = vmatprep.mubr.bf16.mxu0 %v3866
  %7098 = vmatmul.mubr.bf16.gmra.mrb[0].mxu0 %v3865
  %v7099 = vpop.f32.mrb[0].mxu0
  %v7100 = vadd.f32 %v7059, %v7099
  %v7101 = vpop.f32.mrb[0].mxu0
  %v7102 = vadd.f32 %v7061, %v7101
  %v7103 = vpop.f32.mrb[0].mxu0
  %v7104 = vpop.f32.mrb[0].mxu0
  %7105 = vdwg.mxu0
  %7106 = vmatprep.subr.bf16.mxu0 %v6344
  %7107 = vmatpush1.bf16.msra.mxu0 %v6343
  %7108 = vmatprep.subr.bf16.mxu0 %v6352
  %7109 = vmatpush1.bf16.msra.mxu0 %v6351
  %7110 = vmatprep.subr.bf16.mxu0 %v6360
  %7111 = vmatpush1.bf16.msra.mxu0 %v6359
  %7112 = vmatprep.subr.bf16.mxu0 %v6368
  %7113 = vmatpush1.bf16.msra.mxu0 %v6367
  %7114 = vmatprep.subr.bf16.mxu0 %v6376
  %7115 = vmatpush1.bf16.msra.mxu0 %v6375
  %7116 = vmatprep.subr.bf16.mxu0 %v6384
  %7117 = vmatpush1.bf16.msra.mxu0 %v6383
  %7118 = vmatprep.subr.bf16.mxu0 %v6392
  %7119 = vmatpush1.bf16.msra.mxu0 %v6391
  %7120 = vmatprep.subr.bf16.mxu0 %v6400
  %7121 = vmatpush1.bf16.msra.mxu0 %v6399
  %7122 = vmatprep.subr.bf16.mxu0 %v6408
  %7123 = vmatpush1.bf16.msra.mxu0 %v6407
  %7124 = vmatprep.subr.bf16.mxu0 %v6416
  %7125 = vmatpush1.bf16.msra.mxu0 %v6415
  %7126 = vmatprep.subr.bf16.mxu0 %v6424
  %7127 = vmatpush1.bf16.msra.mxu0 %v6423
  %7128 = vmatprep.subr.bf16.mxu0 %v6432
  %7129 = vmatpush1.bf16.msra.mxu0 %v6431
  %7130 = vmatprep.subr.bf16.mxu0 %v6440
  %7131 = vmatpush1.bf16.msra.mxu0 %v6439
  %7132 = vmatprep.subr.bf16.mxu0 %v6448
  %7133 = vmatpush1.bf16.msra.mxu0 %v6447
  %7134 = vmatprep.subr.bf16.mxu0 %v6456
  %7135 = vmatpush1.bf16.msra.mxu0 %v6455
  %7136 = vmatprep.subr.bf16.mxu0 %v6464
  %7137 = vmatpush1.bf16.msra.mxu0 %v6463
  %7138 = vmatprep.mubr.bf16.mxu0 %v3868
  %7139 = vmatmul.mubr.bf16.gmra.mrb[0].mxu0 %v3867
  %v7140 = vpop.f32.mrb[0].mxu0
  %v7141 = vadd.f32 %v7100, %v7140
  %v7142 = vpop.f32.mrb[0].mxu0
  %v7143 = vadd.f32 %v7102, %v7142
  %v7144 = vpop.f32.mrb[0].mxu0
  %v7145 = vpop.f32.mrb[0].mxu0
  %7146 = vdwg.mxu0
  %7147 = vmatprep.subr.bf16.mxu0 %v5962
  %7148 = vmatpush1.bf16.msra.mxu0 %v5961
  %7149 = vmatprep.subr.bf16.mxu0 %v5970
  %7150 = vmatpush1.bf16.msra.mxu0 %v5969
  %7151 = vmatprep.subr.bf16.mxu0 %v5978
  %7152 = vmatpush1.bf16.msra.mxu0 %v5977
  %7153 = vmatprep.subr.bf16.mxu0 %v5986
  %7154 = vmatpush1.bf16.msra.mxu0 %v5985
  %7155 = vmatprep.subr.bf16.mxu0 %v5994
  %7156 = vmatpush1.bf16.msra.mxu0 %v5993
  %7157 = vmatprep.subr.bf16.mxu0 %v6002
  %7158 = vmatpush1.bf16.msra.mxu0 %v6001
  %7159 = vmatprep.subr.bf16.mxu0 %v6010
  %7160 = vmatpush1.bf16.msra.mxu0 %v6009
  %7161 = vmatprep.subr.bf16.mxu0 %v6018
  %7162 = vmatpush1.bf16.msra.mxu0 %v6017
  %7163 = vmatprep.subr.bf16.mxu0 %v6026
  %7164 = vmatpush1.bf16.msra.mxu0 %v6025
  %7165 = vmatprep.subr.bf16.mxu0 %v6034
  %7166 = vmatpush1.bf16.msra.mxu0 %v6033
  %7167 = vmatprep.subr.bf16.mxu0 %v6042
  %7168 = vmatpush1.bf16.msra.mxu0 %v6041
  %7169 = vmatprep.subr.bf16.mxu0 %v6050
  %7170 = vmatpush1.bf16.msra.mxu0 %v6049
  %7171 = vmatprep.subr.bf16.mxu0 %v6058
  %7172 = vmatpush1.bf16.msra.mxu0 %v6057
  %7173 = vmatprep.subr.bf16.mxu0 %v6066
  %7174 = vmatpush1.bf16.msra.mxu0 %v6065
  %7175 = vmatprep.subr.bf16.mxu0 %v6074
  %7176 = vmatpush1.bf16.msra.mxu0 %v6073
  %7177 = vmatprep.subr.bf16.mxu0 %v6082
  %7178 = vmatpush1.bf16.msra.mxu0 %v6081
  %7179 = vmatprep.mubr.bf16.mxu0 %v3862
  %7180 = vmatmul.mubr.bf16.gmra.mrb[0].mxu0 %v3861
  %v7181 = vpop.f32.mrb[0].mxu0
  %v7182 = vadd.f32 %v4394, %v7181
  %v7183 = vpop.f32.mrb[0].mxu0
  %v7184 = vadd.f32 %v4398, %v7183
  %v7185 = vpop.f32.mrb[0].mxu0
  %v7186 = vpop.f32.mrb[0].mxu0
  %7187 = vdwg.mxu0
  %7188 = vmatprep.subr.bf16.mxu0 %v6090
  %7189 = vmatpush1.bf16.msra.mxu0 %v6089
  %7190 = vmatprep.subr.bf16.mxu0 %v6098
  %7191 = vmatpush1.bf16.msra.mxu0 %v6097
  %7192 = vmatprep.subr.bf16.mxu0 %v6106
  %7193 = vmatpush1.bf16.msra.mxu0 %v6105
  %7194 = vmatprep.subr.bf16.mxu0 %v6114
  %7195 = vmatpush1.bf16.msra.mxu0 %v6113
  %7196 = vmatprep.subr.bf16.mxu0 %v6122
  %7197 = vmatpush1.bf16.msra.mxu0 %v6121
  %7198 = vmatprep.subr.bf16.mxu0 %v6130
  %7199 = vmatpush1.bf16.msra.mxu0 %v6129
  %7200 = vmatprep.subr.bf16.mxu0 %v6138
  %7201 = vmatpush1.bf16.msra.mxu0 %v6137
  %7202 = vmatprep.subr.bf16.mxu0 %v6146
  %7203 = vmatpush1.bf16.msra.mxu0 %v6145
  %7204 = vmatprep.subr.bf16.mxu0 %v6154
  %7205 = vmatpush1.bf16.msra.mxu0 %v6153
  %7206 = vmatprep.subr.bf16.mxu0 %v6162
  %7207 = vmatpush1.bf16.msra.mxu0 %v6161
  %7208 = vmatprep.subr.bf16.mxu0 %v6170
  %7209 = vmatpush1.bf16.msra.mxu0 %v6169
  %7210 = vmatprep.subr.bf16.mxu0 %v6178
  %7211 = vmatpush1.bf16.msra.mxu0 %v6177
  %7212 = vmatprep.subr.bf16.mxu0 %v6186
  %7213 = vmatpush1.bf16.msra.mxu0 %v6185
  %7214 = vmatprep.subr.bf16.mxu0 %v6194
  %7215 = vmatpush1.bf16.msra.mxu0 %v6193
  %7216 = vmatprep.subr.bf16.mxu0 %v6202
  %7217 = vmatpush1.bf16.msra.mxu0 %v6201
  %7218 = vmatprep.subr.bf16.mxu0 %v6210
  %7219 = vmatpush1.bf16.msra.mxu0 %v6209
  %7220 = vmatprep.mubr.bf16.mxu0 %v3864
  %7221 = vmatmul.mubr.bf16.gmra.mrb[0].mxu0 %v3863
  %v7222 = vpop.f32.mrb[0].mxu0
  %v7223 = vadd.f32 %v7182, %v7222
  %v7224 = vpop.f32.mrb[0].mxu0
  %v7225 = vadd.f32 %v7184, %v7224
  %v7226 = vpop.f32.mrb[0].mxu0
  %v7227 = vpop.f32.mrb[0].mxu0
  %7228 = vdwg.mxu0
  %7229 = vmatprep.subr.bf16.mxu0 %v6218
  %7230 = vmatpush1.bf16.msra.mxu0 %v6217
  %7231 = vmatprep.subr.bf16.mxu0 %v6226
  %7232 = vmatpush1.bf16.msra.mxu0 %v6225
  %7233 = vmatprep.subr.bf16.mxu0 %v6234
  %7234 = vmatpush1.bf16.msra.mxu0 %v6233
  %7235 = vmatprep.subr.bf16.mxu0 %v6242
  %7236 = vmatpush1.bf16.msra.mxu0 %v6241
  %7237 = vmatprep.subr.bf16.mxu0 %v6250
  %7238 = vmatpush1.bf16.msra.mxu0 %v6249
  %7239 = vmatprep.subr.bf16.mxu0 %v6258
  %7240 = vmatpush1.bf16.msra.mxu0 %v6257
  %7241 = vmatprep.subr.bf16.mxu0 %v6266
  %7242 = vmatpush1.bf16.msra.mxu0 %v6265
  %7243 = vmatprep.subr.bf16.mxu0 %v6274
  %7244 = vmatpush1.bf16.msra.mxu0 %v6273
  %7245 = vmatprep.subr.bf16.mxu0 %v6282
  %7246 = vmatpush1.bf16.msra.mxu0 %v6281
  %7247 = vmatprep.subr.bf16.mxu0 %v6290
  %7248 = vmatpush1.bf16.msra.mxu0 %v6289
  %7249 = vmatprep.subr.bf16.mxu0 %v6298
  %7250 = vmatpush1.bf16.msra.mxu0 %v6297
  %7251 = vmatprep.subr.bf16.mxu0 %v6306
  %7252 = vmatpush1.bf16.msra.mxu0 %v6305
  %7253 = vmatprep.subr.bf16.mxu0 %v6314
  %7254 = vmatpush1.bf16.msra.mxu0 %v6313
  %7255 = vmatprep.subr.bf16.mxu0 %v6322
  %7256 = vmatpush1.bf16.msra.mxu0 %v6321
  %7257 = vmatprep.subr.bf16.mxu0 %v6330
  %7258 = vmatpush1.bf16.msra.mxu0 %v6329
  %7259 = vmatprep.subr.bf16.mxu0 %v6338
  %7260 = vmatpush1.bf16.msra.mxu0 %v6337
  %7261 = vmatprep.mubr.bf16.mxu0 %v3866
  %7262 = vmatmul.mubr.bf16.gmra.mrb[0].mxu0 %v3865
  %v7263 = vpop.f32.mrb[0].mxu0
  %v7264 = vadd.f32 %v7223, %v7263
  %v7265 = vpop.f32.mrb[0].mxu0
  %v7266 = vadd.f32 %v7225, %v7265
  %v7267 = vpop.f32.mrb[0].mxu0
  %v7268 = vpop.f32.mrb[0].mxu0
  %7269 = vdwg.mxu0
  %7270 = vmatprep.subr.bf16.mxu0 %v6346
  %7271 = vmatpush1.bf16.msra.mxu0 %v6345
  %7272 = vmatprep.subr.bf16.mxu0 %v6354
  %7273 = vmatpush1.bf16.msra.mxu0 %v6353
  %7274 = vmatprep.subr.bf16.mxu0 %v6362
  %7275 = vmatpush1.bf16.msra.mxu0 %v6361
  %7276 = vmatprep.subr.bf16.mxu0 %v6370
  %7277 = vmatpush1.bf16.msra.mxu0 %v6369
  %7278 = vmatprep.subr.bf16.mxu0 %v6378
  %7279 = vmatpush1.bf16.msra.mxu0 %v6377
  %7280 = vmatprep.subr.bf16.mxu0 %v6386
  %7281 = vmatpush1.bf16.msra.mxu0 %v6385
  %7282 = vmatprep.subr.bf16.mxu0 %v6394
  %7283 = vmatpush1.bf16.msra.mxu0 %v6393
  %7284 = vmatprep.subr.bf16.mxu0 %v6402
  %7285 = vmatpush1.bf16.msra.mxu0 %v6401
  %7286 = vmatprep.subr.bf16.mxu0 %v6410
  %7287 = vmatpush1.bf16.msra.mxu0 %v6409
  %7288 = vmatprep.subr.bf16.mxu0 %v6418
  %7289 = vmatpush1.bf16.msra.mxu0 %v6417
  %7290 = vmatprep.subr.bf16.mxu0 %v6426
  %7291 = vmatpush1.bf16.msra.mxu0 %v6425
  %7292 = vmatprep.subr.bf16.mxu0 %v6434
  %7293 = vmatpush1.bf16.msra.mxu0 %v6433
  %7294 = vmatprep.subr.bf16.mxu0 %v6442
  %7295 = vmatpush1.bf16.msra.mxu0 %v6441
  %7296 = vmatprep.subr.bf16.mxu0 %v6450
  %7297 = vmatpush1.bf16.msra.mxu0 %v6449
  %7298 = vmatprep.subr.bf16.mxu0 %v6458
  %7299 = vmatpush1.bf16.msra.mxu0 %v6457
  %7300 = vmatprep.subr.bf16.mxu0 %v6466
  %7301 = vmatpush1.bf16.msra.mxu0 %v6465
  %7302 = vmatprep.mubr.bf16.mxu0 %v3868
  %7303 = vmatmul.mubr.bf16.gmra.mrb[0].mxu0 %v3867
  %v7304 = vpop.f32.mrb[0].mxu0
  %v7305 = vadd.f32 %v7264, %v7304
  %v7306 = vpop.f32.mrb[0].mxu0
  %v7307 = vadd.f32 %v7266, %v7306
  %v7308 = vpop.f32.mrb[0].mxu0
  %v7309 = vpop.f32.mrb[0].mxu0
  %7310 = vdwg.mxu0
  %7311 = vmatprep.subr.bf16.mxu0 %v5964
  %7312 = vmatpush1.bf16.msra.mxu0 %v5963
  %7313 = vmatprep.subr.bf16.mxu0 %v5972
  %7314 = vmatpush1.bf16.msra.mxu0 %v5971
  %7315 = vmatprep.subr.bf16.mxu0 %v5980
  %7316 = vmatpush1.bf16.msra.mxu0 %v5979
  %7317 = vmatprep.subr.bf16.mxu0 %v5988
  %7318 = vmatpush1.bf16.msra.mxu0 %v5987
  %7319 = vmatprep.subr.bf16.mxu0 %v5996
  %7320 = vmatpush1.bf16.msra.mxu0 %v5995
  %7321 = vmatprep.subr.bf16.mxu0 %v6004
  %7322 = vmatpush1.bf16.msra.mxu0 %v6003
  %7323 = vmatprep.subr.bf16.mxu0 %v6012
  %7324 = vmatpush1.bf16.msra.mxu0 %v6011
  %7325 = vmatprep.subr.bf16.mxu0 %v6020
  %7326 = vmatpush1.bf16.msra.mxu0 %v6019
  %7327 = vmatprep.subr.bf16.mxu0 %v6028
  %7328 = vmatpush1.bf16.msra.mxu0 %v6027
  %7329 = vmatprep.subr.bf16.mxu0 %v6036
  %7330 = vmatpush1.bf16.msra.mxu0 %v6035
  %7331 = vmatprep.subr.bf16.mxu0 %v6044
  %7332 = vmatpush1.bf16.msra.mxu0 %v6043
  %7333 = vmatprep.subr.bf16.mxu0 %v6052
  %7334 = vmatpush1.bf16.msra.mxu0 %v6051
  %7335 = vmatprep.subr.bf16.mxu0 %v6060
  %7336 = vmatpush1.bf16.msra.mxu0 %v6059
  %7337 = vmatprep.subr.bf16.mxu0 %v6068
  %7338 = vmatpush1.bf16.msra.mxu0 %v6067
  %7339 = vmatprep.subr.bf16.mxu0 %v6076
  %7340 = vmatpush1.bf16.msra.mxu0 %v6075
  %7341 = vmatprep.subr.bf16.mxu0 %v6084
  %7342 = vmatpush1.bf16.msra.mxu0 %v6083
  %7343 = vmatprep.mubr.bf16.mxu0 %v3862
  %7344 = vmatmul.mubr.bf16.gmra.mrb[0].mxu0 %v3861
  %v7345 = vpop.f32.mrb[0].mxu0
  %v7346 = vadd.f32 %v4402, %v7345
  %v7347 = vpop.f32.mrb[0].mxu0
  %v7348 = vadd.f32 %v4406, %v7347
  %v7349 = vpop.f32.mrb[0].mxu0
  %v7350 = vpop.f32.mrb[0].mxu0
  %7351 = vdwg.mxu0
  %7352 = vmatprep.subr.bf16.mxu0 %v6092
  %7353 = vmatpush1.bf16.msra.mxu0 %v6091
  %7354 = vmatprep.subr.bf16.mxu0 %v6100
  %7355 = vmatpush1.bf16.msra.mxu0 %v6099
  %7356 = vmatprep.subr.bf16.mxu0 %v6108
  %7357 = vmatpush1.bf16.msra.mxu0 %v6107
  %7358 = vmatprep.subr.bf16.mxu0 %v6116
  %7359 = vmatpush1.bf16.msra.mxu0 %v6115
  %7360 = vmatprep.subr.bf16.mxu0 %v6124
  %7361 = vmatpush1.bf16.msra.mxu0 %v6123
  %7362 = vmatprep.subr.bf16.mxu0 %v6132
  %7363 = vmatpush1.bf16.msra.mxu0 %v6131
  %7364 = vmatprep.subr.bf16.mxu0 %v6140
  %7365 = vmatpush1.bf16.msra.mxu0 %v6139
  %7366 = vmatprep.subr.bf16.mxu0 %v6148
  %7367 = vmatpush1.bf16.msra.mxu0 %v6147
  %7368 = vmatprep.subr.bf16.mxu0 %v6156
  %7369 = vmatpush1.bf16.msra.mxu0 %v6155
  %7370 = vmatprep.subr.bf16.mxu0 %v6164
  %7371 = vmatpush1.bf16.msra.mxu0 %v6163
  %7372 = vmatprep.subr.bf16.mxu0 %v6172
  %7373 = vmatpush1.bf16.msra.mxu0 %v6171
  %7374 = vmatprep.subr.bf16.mxu0 %v6180
  %7375 = vmatpush1.bf16.msra.mxu0 %v6179
  %7376 = vmatprep.subr.bf16.mxu0 %v6188
  %7377 = vmatpush1.bf16.msra.mxu0 %v6187
  %7378 = vmatprep.subr.bf16.mxu0 %v6196
  %7379 = vmatpush1.bf16.msra.mxu0 %v6195
  %7380 = vmatprep.subr.bf16.mxu0 %v6204
  %7381 = vmatpush1.bf16.msra.mxu0 %v6203
  %7382 = vmatprep.subr.bf16.mxu0 %v6212
  %7383 = vmatpush1.bf16.msra.mxu0 %v6211
  %7384 = vmatprep.mubr.bf16.mxu0 %v3864
  %7385 = vmatmul.mubr.bf16.gmra.mrb[0].mxu0 %v3863
  %v7386 = vpop.f32.mrb[0].mxu0
  %v7387 = vadd.f32 %v7346, %v7386
  %v7388 = vpop.f32.mrb[0].mxu0
  %v7389 = vadd.f32 %v7348, %v7388
  %v7390 = vpop.f32.mrb[0].mxu0
  %v7391 = vpop.f32.mrb[0].mxu0
  %7392 = vdwg.mxu0
  %7393 = vmatprep.subr.bf16.mxu0 %v6220
  %7394 = vmatpush1.bf16.msra.mxu0 %v6219
  %7395 = vmatprep.subr.bf16.mxu0 %v6228
  %7396 = vmatpush1.bf16.msra.mxu0 %v6227
  %7397 = vmatprep.subr.bf16.mxu0 %v6236
  %7398 = vmatpush1.bf16.msra.mxu0 %v6235
  %7399 = vmatprep.subr.bf16.mxu0 %v6244
  %7400 = vmatpush1.bf16.msra.mxu0 %v6243
  %7401 = vmatprep.subr.bf16.mxu0 %v6252
  %7402 = vmatpush1.bf16.msra.mxu0 %v6251
  %7403 = vmatprep.subr.bf16.mxu0 %v6260
  %7404 = vmatpush1.bf16.msra.mxu0 %v6259
  %7405 = vmatprep.subr.bf16.mxu0 %v6268
  %7406 = vmatpush1.bf16.msra.mxu0 %v6267
  %7407 = vmatprep.subr.bf16.mxu0 %v6276
  %7408 = vmatpush1.bf16.msra.mxu0 %v6275
  %7409 = vmatprep.subr.bf16.mxu0 %v6284
  %7410 = vmatpush1.bf16.msra.mxu0 %v6283
  %7411 = vmatprep.subr.bf16.mxu0 %v6292
  %7412 = vmatpush1.bf16.msra.mxu0 %v6291
  %7413 = vmatprep.subr.bf16.mxu0 %v6300
  %7414 = vmatpush1.bf16.msra.mxu0 %v6299
  %7415 = vmatprep.subr.bf16.mxu0 %v6308
  %7416 = vmatpush1.bf16.msra.mxu0 %v6307
  %7417 = vmatprep.subr.bf16.mxu0 %v6316
  %7418 = vmatpush1.bf16.msra.mxu0 %v6315
  %7419 = vmatprep.subr.bf16.mxu0 %v6324
  %7420 = vmatpush1.bf16.msra.mxu0 %v6323
  %7421 = vmatprep.subr.bf16.mxu0 %v6332
  %7422 = vmatpush1.bf16.msra.mxu0 %v6331
  %7423 = vmatprep.subr.bf16.mxu0 %v6340
  %7424 = vmatpush1.bf16.msra.mxu0 %v6339
  %7425 = vmatprep.mubr.bf16.mxu0 %v3866
  %7426 = vmatmul.mubr.bf16.gmra.mrb[0].mxu0 %v3865
  %v7427 = vpop.f32.mrb[0].mxu0
  %v7428 = vadd.f32 %v7387, %v7427
  %v7429 = vpop.f32.mrb[0].mxu0
  %v7430 = vadd.f32 %v7389, %v7429
  %v7431 = vpop.f32.mrb[0].mxu0
  %v7432 = vpop.f32.mrb[0].mxu0
  %7433 = vdwg.mxu0
  %7434 = vmatprep.subr.bf16.mxu0 %v6348
  %7435 = vmatpush1.bf16.msra.mxu0 %v6347
  %7436 = vmatprep.subr.bf16.mxu0 %v6356
  %7437 = vmatpush1.bf16.msra.mxu0 %v6355
  %7438 = vmatprep.subr.bf16.mxu0 %v6364
  %7439 = vmatpush1.bf16.msra.mxu0 %v6363
  %7440 = vmatprep.subr.bf16.mxu0 %v6372
  %7441 = vmatpush1.bf16.msra.mxu0 %v6371
  %7442 = vmatprep.subr.bf16.mxu0 %v6380
  %7443 = vmatpush1.bf16.msra.mxu0 %v6379
  %7444 = vmatprep.subr.bf16.mxu0 %v6388
  %7445 = vmatpush1.bf16.msra.mxu0 %v6387
  %7446 = vmatprep.subr.bf16.mxu0 %v6396
  %7447 = vmatpush1.bf16.msra.mxu0 %v6395
  %7448 = vmatprep.subr.bf16.mxu0 %v6404
  %7449 = vmatpush1.bf16.msra.mxu0 %v6403
  %7450 = vmatprep.subr.bf16.mxu0 %v6412
  %7451 = vmatpush1.bf16.msra.mxu0 %v6411
  %7452 = vmatprep.subr.bf16.mxu0 %v6420
  %7453 = vmatpush1.bf16.msra.mxu0 %v6419
  %7454 = vmatprep.subr.bf16.mxu0 %v6428
  %7455 = vmatpush1.bf16.msra.mxu0 %v6427
  %7456 = vmatprep.subr.bf16.mxu0 %v6436
  %7457 = vmatpush1.bf16.msra.mxu0 %v6435
  %7458 = vmatprep.subr.bf16.mxu0 %v6444
  %7459 = vmatpush1.bf16.msra.mxu0 %v6443
  %7460 = vmatprep.subr.bf16.mxu0 %v6452
  %7461 = vmatpush1.bf16.msra.mxu0 %v6451
  %7462 = vmatprep.subr.bf16.mxu0 %v6460
  %7463 = vmatpush1.bf16.msra.mxu0 %v6459
  %7464 = vmatprep.subr.bf16.mxu0 %v6468
  %7465 = vmatpush1.bf16.msra.mxu0 %v6467
  %7466 = vmatprep.mubr.bf16.mxu0 %v3868
  %7467 = vmatmul.mubr.bf16.gmra.mrb[0].mxu0 %v3867
  %v7468 = vpop.f32.mrb[0].mxu0
  %v7469 = vadd.f32 %v7428, %v7468
  %v7470 = vpop.f32.mrb[0].mxu0
  %v7471 = vadd.f32 %v7430, %v7470
  %v7472 = vpop.f32.mrb[0].mxu0
  %v7473 = vpop.f32.mrb[0].mxu0
  %7474 = vdwg.mxu0
  %7475 = vmatprep.subr.bf16.mxu0 %v5966
  %7476 = vmatpush1.bf16.msra.mxu0 %v5965
  %7477 = vmatprep.subr.bf16.mxu0 %v5974
  %7478 = vmatpush1.bf16.msra.mxu0 %v5973
  %7479 = vmatprep.subr.bf16.mxu0 %v5982
  %7480 = vmatpush1.bf16.msra.mxu0 %v5981
  %7481 = vmatprep.subr.bf16.mxu0 %v5990
  %7482 = vmatpush1.bf16.msra.mxu0 %v5989
  %7483 = vmatprep.subr.bf16.mxu0 %v5998
  %7484 = vmatpush1.bf16.msra.mxu0 %v5997
  %7485 = vmatprep.subr.bf16.mxu0 %v6006
  %7486 = vmatpush1.bf16.msra.mxu0 %v6005
  %7487 = vmatprep.subr.bf16.mxu0 %v6014
  %7488 = vmatpush1.bf16.msra.mxu0 %v6013
  %7489 = vmatprep.subr.bf16.mxu0 %v6022
  %7490 = vmatpush1.bf16.msra.mxu0 %v6021
  %7491 = vmatprep.subr.bf16.mxu0 %v6030
  %7492 = vmatpush1.bf16.msra.mxu0 %v6029
  %7493 = vmatprep.subr.bf16.mxu0 %v6038
  %7494 = vmatpush1.bf16.msra.mxu0 %v6037
  %7495 = vmatprep.subr.bf16.mxu0 %v6046
  %7496 = vmatpush1.bf16.msra.mxu0 %v6045
  %7497 = vmatprep.subr.bf16.mxu0 %v6054
  %7498 = vmatpush1.bf16.msra.mxu0 %v6053
  %7499 = vmatprep.subr.bf16.mxu0 %v6062
  %7500 = vmatpush1.bf16.msra.mxu0 %v6061
  %7501 = vmatprep.subr.bf16.mxu0 %v6070
  %7502 = vmatpush1.bf16.msra.mxu0 %v6069
  %7503 = vmatprep.subr.bf16.mxu0 %v6078
  %7504 = vmatpush1.bf16.msra.mxu0 %v6077
  %7505 = vmatprep.subr.bf16.mxu0 %v6086
  %7506 = vmatpush1.bf16.msra.mxu0 %v6085
  %7507 = vmatprep.mubr.bf16.mxu0 %v3862
  %7508 = vmatmul.mubr.bf16.gmra.mrb[0].mxu0 %v3861
  %v7509 = vpop.f32.mrb[0].mxu0
  %v7510 = vadd.f32 %v4410, %v7509
  %v7511 = vpop.f32.mrb[0].mxu0
  %v7512 = vadd.f32 %v4414, %v7511
  %v7513 = vpop.f32.mrb[0].mxu0
  %v7514 = vpop.f32.mrb[0].mxu0
  %7515 = vdwg.mxu0
  %7516 = vmatprep.subr.bf16.mxu0 %v6094
  %7517 = vmatpush1.bf16.msra.mxu0 %v6093
  %7518 = vmatprep.subr.bf16.mxu0 %v6102
  %7519 = vmatpush1.bf16.msra.mxu0 %v6101
  %7520 = vmatprep.subr.bf16.mxu0 %v6110
  %7521 = vmatpush1.bf16.msra.mxu0 %v6109
  %7522 = vmatprep.subr.bf16.mxu0 %v6118
  %7523 = vmatpush1.bf16.msra.mxu0 %v6117
  %7524 = vmatprep.subr.bf16.mxu0 %v6126
  %7525 = vmatpush1.bf16.msra.mxu0 %v6125
  %7526 = vmatprep.subr.bf16.mxu0 %v6134
  %7527 = vmatpush1.bf16.msra.mxu0 %v6133
  %7528 = vmatprep.subr.bf16.mxu0 %v6142
  %7529 = vmatpush1.bf16.msra.mxu0 %v6141
  %7530 = vmatprep.subr.bf16.mxu0 %v6150
  %7531 = vmatpush1.bf16.msra.mxu0 %v6149
  %7532 = vmatprep.subr.bf16.mxu0 %v6158
  %7533 = vmatpush1.bf16.msra.mxu0 %v6157
  %7534 = vmatprep.subr.bf16.mxu0 %v6166
  %7535 = vmatpush1.bf16.msra.mxu0 %v6165
  %7536 = vmatprep.subr.bf16.mxu0 %v6174
  %7537 = vmatpush1.bf16.msra.mxu0 %v6173
  %7538 = vmatprep.subr.bf16.mxu0 %v6182
  %7539 = vmatpush1.bf16.msra.mxu0 %v6181
  %7540 = vmatprep.subr.bf16.mxu0 %v6190
  %7541 = vmatpush1.bf16.msra.mxu0 %v6189
  %7542 = vmatprep.subr.bf16.mxu0 %v6198
  %7543 = vmatpush1.bf16.msra.mxu0 %v6197
  %7544 = vmatprep.subr.bf16.mxu0 %v6206
  %7545 = vmatpush1.bf16.msra.mxu0 %v6205
  %7546 = vmatprep.subr.bf16.mxu0 %v6214
  %7547 = vmatpush1.bf16.msra.mxu0 %v6213
  %7548 = vmatprep.mubr.bf16.mxu0 %v3864
  %7549 = vmatmul.mubr.bf16.gmra.mrb[0].mxu0 %v3863
  %v7550 = vpop.f32.mrb[0].mxu0
  %v7551 = vadd.f32 %v7510, %v7550
  %v7552 = vpop.f32.mrb[0].mxu0
  %v7553 = vadd.f32 %v7512, %v7552
  %v7554 = vpop.f32.mrb[0].mxu0
  %v7555 = vpop.f32.mrb[0].mxu0
  %7556 = vdwg.mxu0
  %7557 = vmatprep.subr.bf16.mxu0 %v6222
  %7558 = vmatpush1.bf16.msra.mxu0 %v6221
  %7559 = vmatprep.subr.bf16.mxu0 %v6230
  %7560 = vmatpush1.bf16.msra.mxu0 %v6229
  %7561 = vmatprep.subr.bf16.mxu0 %v6238
  %7562 = vmatpush1.bf16.msra.mxu0 %v6237
  %7563 = vmatprep.subr.bf16.mxu0 %v6246
  %7564 = vmatpush1.bf16.msra.mxu0 %v6245
  %7565 = vmatprep.subr.bf16.mxu0 %v6254
  %7566 = vmatpush1.bf16.msra.mxu0 %v6253
  %7567 = vmatprep.subr.bf16.mxu0 %v6262
  %7568 = vmatpush1.bf16.msra.mxu0 %v6261
  %7569 = vmatprep.subr.bf16.mxu0 %v6270
  %7570 = vmatpush1.bf16.msra.mxu0 %v6269
  %7571 = vmatprep.subr.bf16.mxu0 %v6278
  %7572 = vmatpush1.bf16.msra.mxu0 %v6277
  %7573 = vmatprep.subr.bf16.mxu0 %v6286
  %7574 = vmatpush1.bf16.msra.mxu0 %v6285
  %7575 = vmatprep.subr.bf16.mxu0 %v6294
  %7576 = vmatpush1.bf16.msra.mxu0 %v6293
  %7577 = vmatprep.subr.bf16.mxu0 %v6302
  %7578 = vmatpush1.bf16.msra.mxu0 %v6301
  %7579 = vmatprep.subr.bf16.mxu0 %v6310
  %7580 = vmatpush1.bf16.msra.mxu0 %v6309
  %7581 = vmatprep.subr.bf16.mxu0 %v6318
  %7582 = vmatpush1.bf16.msra.mxu0 %v6317
  %7583 = vmatprep.subr.bf16.mxu0 %v6326
  %7584 = vmatpush1.bf16.msra.mxu0 %v6325
  %7585 = vmatprep.subr.bf16.mxu0 %v6334
  %7586 = vmatpush1.bf16.msra.mxu0 %v6333
  %7587 = vmatprep.subr.bf16.mxu0 %v6342
  %7588 = vmatpush1.bf16.msra.mxu0 %v6341
  %7589 = vmatprep.mubr.bf16.mxu0 %v3866
  %7590 = vmatmul.mubr.bf16.gmra.mrb[0].mxu0 %v3865
  %v7591 = vpop.f32.mrb[0].mxu0
  %v7592 = vadd.f32 %v7551, %v7591
  %v7593 = vpop.f32.mrb[0].mxu0
  %v7594 = vadd.f32 %v7553, %v7593
  %v7595 = vpop.f32.mrb[0].mxu0
  %v7596 = vpop.f32.mrb[0].mxu0
  %7597 = vdwg.mxu0
  %7598 = vmatprep.subr.bf16.mxu0 %v6350
  %7599 = vmatpush1.bf16.msra.mxu0 %v6349
  %7600 = vmatprep.subr.bf16.mxu0 %v6358
  %7601 = vmatpush1.bf16.msra.mxu0 %v6357
  %7602 = vmatprep.subr.bf16.mxu0 %v6366
  %7603 = vmatpush1.bf16.msra.mxu0 %v6365
  %7604 = vmatprep.subr.bf16.mxu0 %v6374
  %7605 = vmatpush1.bf16.msra.mxu0 %v6373
  %7606 = vmatprep.subr.bf16.mxu0 %v6382
  %7607 = vmatpush1.bf16.msra.mxu0 %v6381
  %7608 = vmatprep.subr.bf16.mxu0 %v6390
  %7609 = vmatpush1.bf16.msra.mxu0 %v6389
  %7610 = vmatprep.subr.bf16.mxu0 %v6398
  %7611 = vmatpush1.bf16.msra.mxu0 %v6397
  %7612 = vmatprep.subr.bf16.mxu0 %v6406
  %7613 = vmatpush1.bf16.msra.mxu0 %v6405
  %7614 = vmatprep.subr.bf16.mxu0 %v6414
  %7615 = vmatpush1.bf16.msra.mxu0 %v6413
  %7616 = vmatprep.subr.bf16.mxu0 %v6422
  %7617 = vmatpush1.bf16.msra.mxu0 %v6421
  %7618 = vmatprep.subr.bf16.mxu0 %v6430
  %7619 = vmatpush1.bf16.msra.mxu0 %v6429
  %7620 = vmatprep.subr.bf16.mxu0 %v6438
  %7621 = vmatpush1.bf16.msra.mxu0 %v6437
  %7622 = vmatprep.subr.bf16.mxu0 %v6446
  %7623 = vmatpush1.bf16.msra.mxu0 %v6445
  %7624 = vmatprep.subr.bf16.mxu0 %v6454
  %7625 = vmatpush1.bf16.msra.mxu0 %v6453
  %7626 = vmatprep.subr.bf16.mxu0 %v6462
  %7627 = vmatpush1.bf16.msra.mxu0 %v6461
  %7628 = vmatprep.subr.bf16.mxu0 %v6470
  %7629 = vmatpush1.bf16.msra.mxu0 %v6469
  %7630 = vmatprep.mubr.bf16.mxu0 %v3868
  %7631 = vmatmul.mubr.bf16.gmra.mrb[0].mxu0 %v3867
  %v7632 = vpop.f32.mrb[0].mxu0
  %v7633 = vadd.f32 %v7592, %v7632
  %v7634 = vpop.f32.mrb[0].mxu0
  %v7635 = vadd.f32 %v7594, %v7634
  %v7636 = vpop.f32.mrb[0].mxu0
  %v7637 = vpop.f32.mrb[0].mxu0
  %7638 = vdwg.mxu0
  %v7639 = vmax.f32 %v7141, 0.0
  %v7640 = vmax.f32 %v7143, 0.0
  %v7641 = vmax.f32 %v7305, 0.0
  %v7642 = vmax.f32 %v7307, 0.0
  %v7643 = vmax.f32 %v7469, 0.0
  %v7644 = vmax.f32 %v7471, 0.0
  %v7645 = vmax.f32 %v7633, 0.0
  %v7646 = vmax.f32 %v7635, 0.0
  %v7647 = vpack.c.bf16 %v7639, %v7639
  %v7648 = vpack.c.bf16 %v7640, %v7640
  %v7649 = vpack.c.bf16 %v7641, %v7641
  %v7650 = vpack.c.bf16 %v7642, %v7642
  %v7651 = vpack.c.bf16 %v7643, %v7643
  %v7652 = vpack.c.bf16 %v7644, %v7644
  %v7653 = vpack.c.bf16 %v7645, %v7645
  %v7654 = vpack.c.bf16 %v7646, %v7646
  %v7655 = vld [vmem:[%s5] sm:$0xff]
  %v7656 = vld [vmem:[%s5 + $0x8] sm:$0xff]
  %v7657 = vld [vmem:[%s5 + $0x10] sm:$0xff]
  %v7658 = vld [vmem:[%s5 + $0x18] sm:$0xff]
  %v7659 = vld [vmem:[%s5 + $0x20] sm:$0xff]
  %v7660 = vld [vmem:[%s5 + $0x28] sm:$0xff]
  %v7661 = vld [vmem:[%s5 + $0x30] sm:$0xff]
  %v7662 = vld [vmem:[%s5 + $0x38] sm:$0xff]
  %v7663 = vld [vmem:[%s5 + $0x40] sm:$0xff]
  %v7664 = vld [vmem:[%s5 + $0x48] sm:$0xff]
  %v7665 = vld [vmem:[%s5 + $0x50] sm:$0xff]
  %v7666 = vld [vmem:[%s5 + $0x58] sm:$0xff]
  %v7667 = vld [vmem:[%s5 + $0x60] sm:$0xff]
  %v7668 = vld [vmem:[%s5 + $0x68] sm:$0xff]
  %v7669 = vld [vmem:[%s5 + $0x70] sm:$0xff]
  %v7670 = vld [vmem:[%s5 + $0x78] sm:$0xff]
  %v7671 = vld [vmem:[%s5 + $0x80] sm:$0xff]
  %v7672 = vld [vmem:[%s5 + $0x88] sm:$0xff]
  %v7673 = vld [vmem:[%s5 + $0x90] sm:$0xff]
  %v7674 = vld [vmem:[%s5 + $0x98] sm:$0xff]
  %v7675 = vld [vmem:[%s5 + $0xa0] sm:$0xff]
  %v7676 = vld [vmem:[%s5 + $0xa8] sm:$0xff]
  %v7677 = vld [vmem:[%s5 + $0xb0] sm:$0xff]
  %v7678 = vld [vmem:[%s5 + $0xb8] sm:$0xff]
  %v7679 = vld [vmem:[%s5 + $0xc0] sm:$0xff]
  %v7680 = vld [vmem:[%s5 + $0xc8] sm:$0xff]
  %v7681 = vld [vmem:[%s5 + $0xd0] sm:$0xff]
  %v7682 = vld [vmem:[%s5 + $0xd8] sm:$0xff]
  %v7683 = vld [vmem:[%s5 + $0xe0] sm:$0xff]
  %v7684 = vld [vmem:[%s5 + $0xe8] sm:$0xff]
  %v7685 = vld [vmem:[%s5 + $0xf0] sm:$0xff]
  %v7686 = vld [vmem:[%s5 + $0xf8] sm:$0xff]
  %v7687 = vld [vmem:[%s5 + $0x100] sm:$0xff]
  %v7688 = vld [vmem:[%s5 + $0x108] sm:$0xff]
  %v7689 = vld [vmem:[%s5 + $0x110] sm:$0xff]
  %v7690 = vld [vmem:[%s5 + $0x118] sm:$0xff]
  %v7691 = vld [vmem:[%s5 + $0x120] sm:$0xff]
  %v7692 = vld [vmem:[%s5 + $0x128] sm:$0xff]
  %v7693 = vld [vmem:[%s5 + $0x130] sm:$0xff]
  %v7694 = vld [vmem:[%s5 + $0x138] sm:$0xff]
  %v7695 = vld [vmem:[%s5 + $0x140] sm:$0xff]
  %v7696 = vld [vmem:[%s5 + $0x148] sm:$0xff]
  %v7697 = vld [vmem:[%s5 + $0x150] sm:$0xff]
  %v7698 = vld [vmem:[%s5 + $0x158] sm:$0xff]
  %v7699 = vld [vmem:[%s5 + $0x160] sm:$0xff]
  %v7700 = vld [vmem:[%s5 + $0x168] sm:$0xff]
  %v7701 = vld [vmem:[%s5 + $0x170] sm:$0xff]
  %v7702 = vld [vmem:[%s5 + $0x178] sm:$0xff]
  %v7703 = vld [vmem:[%s5 + $0x180] sm:$0xff]
  %v7704 = vld [vmem:[%s5 + $0x188] sm:$0xff]
  %v7705 = vld [vmem:[%s5 + $0x190] sm:$0xff]
  %v7706 = vld [vmem:[%s5 + $0x198] sm:$0xff]
  %v7707 = vld [vmem:[%s5 + $0x1a0] sm:$0xff]
  %v7708 = vld [vmem:[%s5 + $0x1a8] sm:$0xff]
  %v7709 = vld [vmem:[%s5 + $0x1b0] sm:$0xff]
  %v7710 = vld [vmem:[%s5 + $0x1b8] sm:$0xff]
  %v7711 = vld [vmem:[%s5 + $0x1c0] sm:$0xff]
  %v7712 = vld [vmem:[%s5 + $0x1c8] sm:$0xff]
  %v7713 = vld [vmem:[%s5 + $0x1d0] sm:$0xff]
  %v7714 = vld [vmem:[%s5 + $0x1d8] sm:$0xff]
  %v7715 = vld [vmem:[%s5 + $0x1e0] sm:$0xff]
  %v7716 = vld [vmem:[%s5 + $0x1e8] sm:$0xff]
  %v7717 = vld [vmem:[%s5 + $0x1f0] sm:$0xff]
  %v7718 = vld [vmem:[%s5 + $0x1f8] sm:$0xff]
  %v7719 = vld [vmem:[%s5 + $0x200] sm:$0xff]
  %v7720 = vld [vmem:[%s5 + $0x208] sm:$0xff]
  %v7721 = vld [vmem:[%s5 + $0x210] sm:$0xff]
  %v7722 = vld [vmem:[%s5 + $0x218] sm:$0xff]
  %v7723 = vld [vmem:[%s5 + $0x220] sm:$0xff]
  %v7724 = vld [vmem:[%s5 + $0x228] sm:$0xff]
  %v7725 = vld [vmem:[%s5 + $0x230] sm:$0xff]
  %v7726 = vld [vmem:[%s5 + $0x238] sm:$0xff]
  %v7727 = vld [vmem:[%s5 + $0x240] sm:$0xff]
  %v7728 = vld [vmem:[%s5 + $0x248] sm:$0xff]
  %v7729 = vld [vmem:[%s5 + $0x250] sm:$0xff]
  %v7730 = vld [vmem:[%s5 + $0x258] sm:$0xff]
  %v7731 = vld [vmem:[%s5 + $0x260] sm:$0xff]
  %v7732 = vld [vmem:[%s5 + $0x268] sm:$0xff]
  %v7733 = vld [vmem:[%s5 + $0x270] sm:$0xff]
  %v7734 = vld [vmem:[%s5 + $0x278] sm:$0xff]
  %v7735 = vld [vmem:[%s5 + $0x280] sm:$0xff]
  %v7736 = vld [vmem:[%s5 + $0x288] sm:$0xff]
  %v7737 = vld [vmem:[%s5 + $0x290] sm:$0xff]
  %v7738 = vld [vmem:[%s5 + $0x298] sm:$0xff]
  %v7739 = vld [vmem:[%s5 + $0x2a0] sm:$0xff]
  %v7740 = vld [vmem:[%s5 + $0x2a8] sm:$0xff]
  %v7741 = vld [vmem:[%s5 + $0x2b0] sm:$0xff]
  %v7742 = vld [vmem:[%s5 + $0x2b8] sm:$0xff]
  %v7743 = vld [vmem:[%s5 + $0x2c0] sm:$0xff]
  %v7744 = vld [vmem:[%s5 + $0x2c8] sm:$0xff]
  %v7745 = vld [vmem:[%s5 + $0x2d0] sm:$0xff]
  %v7746 = vld [vmem:[%s5 + $0x2d8] sm:$0xff]
  %v7747 = vld [vmem:[%s5 + $0x2e0] sm:$0xff]
  %v7748 = vld [vmem:[%s5 + $0x2e8] sm:$0xff]
  %v7749 = vld [vmem:[%s5 + $0x2f0] sm:$0xff]
  %v7750 = vld [vmem:[%s5 + $0x2f8] sm:$0xff]
  %v7751 = vld [vmem:[%s5 + $0x300] sm:$0xff]
  %v7752 = vld [vmem:[%s5 + $0x308] sm:$0xff]
  %v7753 = vld [vmem:[%s5 + $0x310] sm:$0xff]
  %v7754 = vld [vmem:[%s5 + $0x318] sm:$0xff]
  %v7755 = vld [vmem:[%s5 + $0x320] sm:$0xff]
  %v7756 = vld [vmem:[%s5 + $0x328] sm:$0xff]
  %v7757 = vld [vmem:[%s5 + $0x330] sm:$0xff]
  %v7758 = vld [vmem:[%s5 + $0x338] sm:$0xff]
  %v7759 = vld [vmem:[%s5 + $0x340] sm:$0xff]
  %v7760 = vld [vmem:[%s5 + $0x348] sm:$0xff]
  %v7761 = vld [vmem:[%s5 + $0x350] sm:$0xff]
  %v7762 = vld [vmem:[%s5 + $0x358] sm:$0xff]
  %v7763 = vld [vmem:[%s5 + $0x360] sm:$0xff]
  %v7764 = vld [vmem:[%s5 + $0x368] sm:$0xff]
  %v7765 = vld [vmem:[%s5 + $0x370] sm:$0xff]
  %v7766 = vld [vmem:[%s5 + $0x378] sm:$0xff]
  %v7767 = vld [vmem:[%s5 + $0x380] sm:$0xff]
  %v7768 = vld [vmem:[%s5 + $0x388] sm:$0xff]
  %v7769 = vld [vmem:[%s5 + $0x390] sm:$0xff]
  %v7770 = vld [vmem:[%s5 + $0x398] sm:$0xff]
  %v7771 = vld [vmem:[%s5 + $0x3a0] sm:$0xff]
  %v7772 = vld [vmem:[%s5 + $0x3a8] sm:$0xff]
  %v7773 = vld [vmem:[%s5 + $0x3b0] sm:$0xff]
  %v7774 = vld [vmem:[%s5 + $0x3b8] sm:$0xff]
  %v7775 = vld [vmem:[%s5 + $0x3c0] sm:$0xff]
  %v7776 = vld [vmem:[%s5 + $0x3c8] sm:$0xff]
  %v7777 = vld [vmem:[%s5 + $0x3d0] sm:$0xff]
  %v7778 = vld [vmem:[%s5 + $0x3d8] sm:$0xff]
  %v7779 = vld [vmem:[%s5 + $0x3e0] sm:$0xff]
  %v7780 = vld [vmem:[%s5 + $0x3e8] sm:$0xff]
  %v7781 = vld [vmem:[%s5 + $0x3f0] sm:$0xff]
  %v7782 = vld [vmem:[%s5 + $0x3f8] sm:$0xff]
  %v7783 = vld [vmem:[%s5 + $0x400] sm:$0xff]
  %v7784 = vld [vmem:[%s5 + $0x408] sm:$0xff]
  %v7785 = vld [vmem:[%s5 + $0x410] sm:$0xff]
  %v7786 = vld [vmem:[%s5 + $0x418] sm:$0xff]
  %v7787 = vld [vmem:[%s5 + $0x420] sm:$0xff]
  %v7788 = vld [vmem:[%s5 + $0x428] sm:$0xff]
  %v7789 = vld [vmem:[%s5 + $0x430] sm:$0xff]
  %v7790 = vld [vmem:[%s5 + $0x438] sm:$0xff]
  %v7791 = vld [vmem:[%s5 + $0x440] sm:$0xff]
  %v7792 = vld [vmem:[%s5 + $0x448] sm:$0xff]
  %v7793 = vld [vmem:[%s5 + $0x450] sm:$0xff]
  %v7794 = vld [vmem:[%s5 + $0x458] sm:$0xff]
  %v7795 = vld [vmem:[%s5 + $0x460] sm:$0xff]
  %v7796 = vld [vmem:[%s5 + $0x468] sm:$0xff]
  %v7797 = vld [vmem:[%s5 + $0x470] sm:$0xff]
  %v7798 = vld [vmem:[%s5 + $0x478] sm:$0xff]
  %v7799 = vld [vmem:[%s5 + $0x480] sm:$0xff]
  %v7800 = vld [vmem:[%s5 + $0x488] sm:$0xff]
  %v7801 = vld [vmem:[%s5 + $0x490] sm:$0xff]
  %v7802 = vld [vmem:[%s5 + $0x498] sm:$0xff]
  %v7803 = vld [vmem:[%s5 + $0x4a0] sm:$0xff]
  %v7804 = vld [vmem:[%s5 + $0x4a8] sm:$0xff]
  %v7805 = vld [vmem:[%s5 + $0x4b0] sm:$0xff]
  %v7806 = vld [vmem:[%s5 + $0x4b8] sm:$0xff]
  %v7807 = vld [vmem:[%s5 + $0x4c0] sm:$0xff]
  %v7808 = vld [vmem:[%s5 + $0x4c8] sm:$0xff]
  %v7809 = vld [vmem:[%s5 + $0x4d0] sm:$0xff]
  %v7810 = vld [vmem:[%s5 + $0x4d8] sm:$0xff]
  %v7811 = vld [vmem:[%s5 + $0x4e0] sm:$0xff]
  %v7812 = vld [vmem:[%s5 + $0x4e8] sm:$0xff]
  %v7813 = vld [vmem:[%s5 + $0x4f0] sm:$0xff]
  %v7814 = vld [vmem:[%s5 + $0x4f8] sm:$0xff]
  %v7815 = vld [vmem:[%s5 + $0x500] sm:$0xff]
  %v7816 = vld [vmem:[%s5 + $0x508] sm:$0xff]
  %v7817 = vld [vmem:[%s5 + $0x510] sm:$0xff]
  %v7818 = vld [vmem:[%s5 + $0x518] sm:$0xff]
  %v7819 = vld [vmem:[%s5 + $0x520] sm:$0xff]
  %v7820 = vld [vmem:[%s5 + $0x528] sm:$0xff]
  %v7821 = vld [vmem:[%s5 + $0x530] sm:$0xff]
  %v7822 = vld [vmem:[%s5 + $0x538] sm:$0xff]
  %v7823 = vld [vmem:[%s5 + $0x540] sm:$0xff]
  %v7824 = vld [vmem:[%s5 + $0x548] sm:$0xff]
  %v7825 = vld [vmem:[%s5 + $0x550] sm:$0xff]
  %v7826 = vld [vmem:[%s5 + $0x558] sm:$0xff]
  %v7827 = vld [vmem:[%s5 + $0x560] sm:$0xff]
  %v7828 = vld [vmem:[%s5 + $0x568] sm:$0xff]
  %v7829 = vld [vmem:[%s5 + $0x570] sm:$0xff]
  %v7830 = vld [vmem:[%s5 + $0x578] sm:$0xff]
  %v7831 = vld [vmem:[%s5 + $0x580] sm:$0xff]
  %v7832 = vld [vmem:[%s5 + $0x588] sm:$0xff]
  %v7833 = vld [vmem:[%s5 + $0x590] sm:$0xff]
  %v7834 = vld [vmem:[%s5 + $0x598] sm:$0xff]
  %v7835 = vld [vmem:[%s5 + $0x5a0] sm:$0xff]
  %v7836 = vld [vmem:[%s5 + $0x5a8] sm:$0xff]
  %v7837 = vld [vmem:[%s5 + $0x5b0] sm:$0xff]
  %v7838 = vld [vmem:[%s5 + $0x5b8] sm:$0xff]
  %v7839 = vld [vmem:[%s5 + $0x5c0] sm:$0xff]
  %v7840 = vld [vmem:[%s5 + $0x5c8] sm:$0xff]
  %v7841 = vld [vmem:[%s5 + $0x5d0] sm:$0xff]
  %v7842 = vld [vmem:[%s5 + $0x5d8] sm:$0xff]
  %v7843 = vld [vmem:[%s5 + $0x5e0] sm:$0xff]
  %v7844 = vld [vmem:[%s5 + $0x5e8] sm:$0xff]
  %v7845 = vld [vmem:[%s5 + $0x5f0] sm:$0xff]
  %v7846 = vld [vmem:[%s5 + $0x5f8] sm:$0xff]
  %v7847 = vld [vmem:[%s5 + $0x600] sm:$0xff]
  %v7848 = vld [vmem:[%s5 + $0x608] sm:$0xff]
  %v7849 = vld [vmem:[%s5 + $0x610] sm:$0xff]
  %v7850 = vld [vmem:[%s5 + $0x618] sm:$0xff]
  %v7851 = vld [vmem:[%s5 + $0x620] sm:$0xff]
  %v7852 = vld [vmem:[%s5 + $0x628] sm:$0xff]
  %v7853 = vld [vmem:[%s5 + $0x630] sm:$0xff]
  %v7854 = vld [vmem:[%s5 + $0x638] sm:$0xff]
  %v7855 = vld [vmem:[%s5 + $0x640] sm:$0xff]
  %v7856 = vld [vmem:[%s5 + $0x648] sm:$0xff]
  %v7857 = vld [vmem:[%s5 + $0x650] sm:$0xff]
  %v7858 = vld [vmem:[%s5 + $0x658] sm:$0xff]
  %v7859 = vld [vmem:[%s5 + $0x660] sm:$0xff]
  %v7860 = vld [vmem:[%s5 + $0x668] sm:$0xff]
  %v7861 = vld [vmem:[%s5 + $0x670] sm:$0xff]
  %v7862 = vld [vmem:[%s5 + $0x678] sm:$0xff]
  %v7863 = vld [vmem:[%s5 + $0x680] sm:$0xff]
  %v7864 = vld [vmem:[%s5 + $0x688] sm:$0xff]
  %v7865 = vld [vmem:[%s5 + $0x690] sm:$0xff]
  %v7866 = vld [vmem:[%s5 + $0x698] sm:$0xff]
  %v7867 = vld [vmem:[%s5 + $0x6a0] sm:$0xff]
  %v7868 = vld [vmem:[%s5 + $0x6a8] sm:$0xff]
  %v7869 = vld [vmem:[%s5 + $0x6b0] sm:$0xff]
  %v7870 = vld [vmem:[%s5 + $0x6b8] sm:$0xff]
  %v7871 = vld [vmem:[%s5 + $0x6c0] sm:$0xff]
  %v7872 = vld [vmem:[%s5 + $0x6c8] sm:$0xff]
  %v7873 = vld [vmem:[%s5 + $0x6d0] sm:$0xff]
  %v7874 = vld [vmem:[%s5 + $0x6d8] sm:$0xff]
  %v7875 = vld [vmem:[%s5 + $0x6e0] sm:$0xff]
  %v7876 = vld [vmem:[%s5 + $0x6e8] sm:$0xff]
  %v7877 = vld [vmem:[%s5 + $0x6f0] sm:$0xff]
  %v7878 = vld [vmem:[%s5 + $0x6f8] sm:$0xff]
  %v7879 = vld [vmem:[%s5 + $0x700] sm:$0xff]
  %v7880 = vld [vmem:[%s5 + $0x708] sm:$0xff]
  %v7881 = vld [vmem:[%s5 + $0x710] sm:$0xff]
  %v7882 = vld [vmem:[%s5 + $0x718] sm:$0xff]
  %v7883 = vld [vmem:[%s5 + $0x720] sm:$0xff]
  %v7884 = vld [vmem:[%s5 + $0x728] sm:$0xff]
  %v7885 = vld [vmem:[%s5 + $0x730] sm:$0xff]
  %v7886 = vld [vmem:[%s5 + $0x738] sm:$0xff]
  %v7887 = vld [vmem:[%s5 + $0x740] sm:$0xff]
  %v7888 = vld [vmem:[%s5 + $0x748] sm:$0xff]
  %v7889 = vld [vmem:[%s5 + $0x750] sm:$0xff]
  %v7890 = vld [vmem:[%s5 + $0x758] sm:$0xff]
  %v7891 = vld [vmem:[%s5 + $0x760] sm:$0xff]
  %v7892 = vld [vmem:[%s5 + $0x768] sm:$0xff]
  %v7893 = vld [vmem:[%s5 + $0x770] sm:$0xff]
  %v7894 = vld [vmem:[%s5 + $0x778] sm:$0xff]
  %v7895 = vld [vmem:[%s5 + $0x780] sm:$0xff]
  %v7896 = vld [vmem:[%s5 + $0x788] sm:$0xff]
  %v7897 = vld [vmem:[%s5 + $0x790] sm:$0xff]
  %v7898 = vld [vmem:[%s5 + $0x798] sm:$0xff]
  %v7899 = vld [vmem:[%s5 + $0x7a0] sm:$0xff]
  %v7900 = vld [vmem:[%s5 + $0x7a8] sm:$0xff]
  %v7901 = vld [vmem:[%s5 + $0x7b0] sm:$0xff]
  %v7902 = vld [vmem:[%s5 + $0x7b8] sm:$0xff]
  %v7903 = vld [vmem:[%s5 + $0x7c0] sm:$0xff]
  %v7904 = vld [vmem:[%s5 + $0x7c8] sm:$0xff]
  %v7905 = vld [vmem:[%s5 + $0x7d0] sm:$0xff]
  %v7906 = vld [vmem:[%s5 + $0x7d8] sm:$0xff]
  %v7907 = vld [vmem:[%s5 + $0x7e0] sm:$0xff]
  %v7908 = vld [vmem:[%s5 + $0x7e8] sm:$0xff]
  %v7909 = vld [vmem:[%s5 + $0x7f0] sm:$0xff]
  %v7910 = vld [vmem:[%s5 + $0x7f8] sm:$0xff]
  %v7911 = vld [vmem:[%s6] sm:$0xf]
  %v7913 = vlaneseq
  %v7914 = vshrl.u32 %v7913, 7
  %v7915 = vsub.s32 0, %v7914
  %v7916 = vrot.slane %v7911, %v7915
  %v7917 = vlaneseq
  %v7918 = vshrl.u32 %v7917, 7
  %v7919 = vsub.s32 1, %v7918
  %v7920 = vrot.slane %v7911, %v7919
  %v7921 = vlaneseq
  %v7922 = vshrl.u32 %v7921, 7
  %v7923 = vsub.s32 2, %v7922
  %v7924 = vrot.slane %v7911, %v7923
  %v7925 = vlaneseq
  %v7926 = vshrl.u32 %v7925, 7
  %v7927 = vsub.s32 3, %v7926
  %v7928 = vrot.slane %v7911, %v7927
  %v8189 = vunpack.c.l.b16 %v7655
  %v8190 = vunpack.c.h.b16 %v7655
  %v8191 = vunpack.c.l.b16 %v7656
  %v8192 = vunpack.c.h.b16 %v7656
  %v8193 = vunpack.c.l.b16 %v7657
  %v8194 = vunpack.c.h.b16 %v7657
  %v8195 = vunpack.c.l.b16 %v7658
  %v8196 = vunpack.c.h.b16 %v7658
  %v8197 = vunpack.c.l.b16 %v7659
  %v8198 = vunpack.c.h.b16 %v7659
  %v8199 = vunpack.c.l.b16 %v7660
  %v8200 = vunpack.c.h.b16 %v7660
  %v8201 = vunpack.c.l.b16 %v7661
  %v8202 = vunpack.c.h.b16 %v7661
  %v8203 = vunpack.c.l.b16 %v7662
  %v8204 = vunpack.c.h.b16 %v7662
  %v8205 = vunpack.c.l.b16 %v7663
  %v8206 = vunpack.c.h.b16 %v7663
  %v8207 = vunpack.c.l.b16 %v7664
  %v8208 = vunpack.c.h.b16 %v7664
  %v8209 = vunpack.c.l.b16 %v7665
  %v8210 = vunpack.c.h.b16 %v7665
  %v8211 = vunpack.c.l.b16 %v7666
  %v8212 = vunpack.c.h.b16 %v7666
  %v8213 = vunpack.c.l.b16 %v7667
  %v8214 = vunpack.c.h.b16 %v7667
  %v8215 = vunpack.c.l.b16 %v7668
  %v8216 = vunpack.c.h.b16 %v7668
  %v8217 = vunpack.c.l.b16 %v7669
  %v8218 = vunpack.c.h.b16 %v7669
  %v8219 = vunpack.c.l.b16 %v7670
  %v8220 = vunpack.c.h.b16 %v7670
  %v8221 = vunpack.c.l.b16 %v7671
  %v8222 = vunpack.c.h.b16 %v7671
  %v8223 = vunpack.c.l.b16 %v7672
  %v8224 = vunpack.c.h.b16 %v7672
  %v8225 = vunpack.c.l.b16 %v7673
  %v8226 = vunpack.c.h.b16 %v7673
  %v8227 = vunpack.c.l.b16 %v7674
  %v8228 = vunpack.c.h.b16 %v7674
  %v8229 = vunpack.c.l.b16 %v7675
  %v8230 = vunpack.c.h.b16 %v7675
  %v8231 = vunpack.c.l.b16 %v7676
  %v8232 = vunpack.c.h.b16 %v7676
  %v8233 = vunpack.c.l.b16 %v7677
  %v8234 = vunpack.c.h.b16 %v7677
  %v8235 = vunpack.c.l.b16 %v7678
  %v8236 = vunpack.c.h.b16 %v7678
  %v8237 = vunpack.c.l.b16 %v7679
  %v8238 = vunpack.c.h.b16 %v7679
  %v8239 = vunpack.c.l.b16 %v7680
  %v8240 = vunpack.c.h.b16 %v7680
  %v8241 = vunpack.c.l.b16 %v7681
  %v8242 = vunpack.c.h.b16 %v7681
  %v8243 = vunpack.c.l.b16 %v7682
  %v8244 = vunpack.c.h.b16 %v7682
  %v8245 = vunpack.c.l.b16 %v7683
  %v8246 = vunpack.c.h.b16 %v7683
  %v8247 = vunpack.c.l.b16 %v7684
  %v8248 = vunpack.c.h.b16 %v7684
  %v8249 = vunpack.c.l.b16 %v7685
  %v8250 = vunpack.c.h.b16 %v7685
  %v8251 = vunpack.c.l.b16 %v7686
  %v8252 = vunpack.c.h.b16 %v7686
  %v8253 = vunpack.c.l.b16 %v7687
  %v8254 = vunpack.c.h.b16 %v7687
  %v8255 = vunpack.c.l.b16 %v7688
  %v8256 = vunpack.c.h.b16 %v7688
  %v8257 = vunpack.c.l.b16 %v7689
  %v8258 = vunpack.c.h.b16 %v7689
  %v8259 = vunpack.c.l.b16 %v7690
  %v8260 = vunpack.c.h.b16 %v7690
  %v8261 = vunpack.c.l.b16 %v7691
  %v8262 = vunpack.c.h.b16 %v7691
  %v8263 = vunpack.c.l.b16 %v7692
  %v8264 = vunpack.c.h.b16 %v7692
  %v8265 = vunpack.c.l.b16 %v7693
  %v8266 = vunpack.c.h.b16 %v7693
  %v8267 = vunpack.c.l.b16 %v7694
  %v8268 = vunpack.c.h.b16 %v7694
  %v8269 = vunpack.c.l.b16 %v7695
  %v8270 = vunpack.c.h.b16 %v7695
  %v8271 = vunpack.c.l.b16 %v7696
  %v8272 = vunpack.c.h.b16 %v7696
  %v8273 = vunpack.c.l.b16 %v7697
  %v8274 = vunpack.c.h.b16 %v7697
  %v8275 = vunpack.c.l.b16 %v7698
  %v8276 = vunpack.c.h.b16 %v7698
  %v8277 = vunpack.c.l.b16 %v7699
  %v8278 = vunpack.c.h.b16 %v7699
  %v8279 = vunpack.c.l.b16 %v7700
  %v8280 = vunpack.c.h.b16 %v7700
  %v8281 = vunpack.c.l.b16 %v7701
  %v8282 = vunpack.c.h.b16 %v7701
  %v8283 = vunpack.c.l.b16 %v7702
  %v8284 = vunpack.c.h.b16 %v7702
  %v8285 = vunpack.c.l.b16 %v7703
  %v8286 = vunpack.c.h.b16 %v7703
  %v8287 = vunpack.c.l.b16 %v7704
  %v8288 = vunpack.c.h.b16 %v7704
  %v8289 = vunpack.c.l.b16 %v7705
  %v8290 = vunpack.c.h.b16 %v7705
  %v8291 = vunpack.c.l.b16 %v7706
  %v8292 = vunpack.c.h.b16 %v7706
  %v8293 = vunpack.c.l.b16 %v7707
  %v8294 = vunpack.c.h.b16 %v7707
  %v8295 = vunpack.c.l.b16 %v7708
  %v8296 = vunpack.c.h.b16 %v7708
  %v8297 = vunpack.c.l.b16 %v7709
  %v8298 = vunpack.c.h.b16 %v7709
  %v8299 = vunpack.c.l.b16 %v7710
  %v8300 = vunpack.c.h.b16 %v7710
  %v8301 = vunpack.c.l.b16 %v7711
  %v8302 = vunpack.c.h.b16 %v7711
  %v8303 = vunpack.c.l.b16 %v7712
  %v8304 = vunpack.c.h.b16 %v7712
  %v8305 = vunpack.c.l.b16 %v7713
  %v8306 = vunpack.c.h.b16 %v7713
  %v8307 = vunpack.c.l.b16 %v7714
  %v8308 = vunpack.c.h.b16 %v7714
  %v8309 = vunpack.c.l.b16 %v7715
  %v8310 = vunpack.c.h.b16 %v7715
  %v8311 = vunpack.c.l.b16 %v7716
  %v8312 = vunpack.c.h.b16 %v7716
  %v8313 = vunpack.c.l.b16 %v7717
  %v8314 = vunpack.c.h.b16 %v7717
  %v8315 = vunpack.c.l.b16 %v7718
  %v8316 = vunpack.c.h.b16 %v7718
  %v8317 = vunpack.c.l.b16 %v7719
  %v8318 = vunpack.c.h.b16 %v7719
  %v8319 = vunpack.c.l.b16 %v7720
  %v8320 = vunpack.c.h.b16 %v7720
  %v8321 = vunpack.c.l.b16 %v7721
  %v8322 = vunpack.c.h.b16 %v7721
  %v8323 = vunpack.c.l.b16 %v7722
  %v8324 = vunpack.c.h.b16 %v7722
  %v8325 = vunpack.c.l.b16 %v7723
  %v8326 = vunpack.c.h.b16 %v7723
  %v8327 = vunpack.c.l.b16 %v7724
  %v8328 = vunpack.c.h.b16 %v7724
  %v8329 = vunpack.c.l.b16 %v7725
  %v8330 = vunpack.c.h.b16 %v7725
  %v8331 = vunpack.c.l.b16 %v7726
  %v8332 = vunpack.c.h.b16 %v7726
  %v8333 = vunpack.c.l.b16 %v7727
  %v8334 = vunpack.c.h.b16 %v7727
  %v8335 = vunpack.c.l.b16 %v7728
  %v8336 = vunpack.c.h.b16 %v7728
  %v8337 = vunpack.c.l.b16 %v7729
  %v8338 = vunpack.c.h.b16 %v7729
  %v8339 = vunpack.c.l.b16 %v7730
  %v8340 = vunpack.c.h.b16 %v7730
  %v8341 = vunpack.c.l.b16 %v7731
  %v8342 = vunpack.c.h.b16 %v7731
  %v8343 = vunpack.c.l.b16 %v7732
  %v8344 = vunpack.c.h.b16 %v7732
  %v8345 = vunpack.c.l.b16 %v7733
  %v8346 = vunpack.c.h.b16 %v7733
  %v8347 = vunpack.c.l.b16 %v7734
  %v8348 = vunpack.c.h.b16 %v7734
  %v8349 = vunpack.c.l.b16 %v7735
  %v8350 = vunpack.c.h.b16 %v7735
  %v8351 = vunpack.c.l.b16 %v7736
  %v8352 = vunpack.c.h.b16 %v7736
  %v8353 = vunpack.c.l.b16 %v7737
  %v8354 = vunpack.c.h.b16 %v7737
  %v8355 = vunpack.c.l.b16 %v7738
  %v8356 = vunpack.c.h.b16 %v7738
  %v8357 = vunpack.c.l.b16 %v7739
  %v8358 = vunpack.c.h.b16 %v7739
  %v8359 = vunpack.c.l.b16 %v7740
  %v8360 = vunpack.c.h.b16 %v7740
  %v8361 = vunpack.c.l.b16 %v7741
  %v8362 = vunpack.c.h.b16 %v7741
  %v8363 = vunpack.c.l.b16 %v7742
  %v8364 = vunpack.c.h.b16 %v7742
  %v8365 = vunpack.c.l.b16 %v7743
  %v8366 = vunpack.c.h.b16 %v7743
  %v8367 = vunpack.c.l.b16 %v7744
  %v8368 = vunpack.c.h.b16 %v7744
  %v8369 = vunpack.c.l.b16 %v7745
  %v8370 = vunpack.c.h.b16 %v7745
  %v8371 = vunpack.c.l.b16 %v7746
  %v8372 = vunpack.c.h.b16 %v7746
  %v8373 = vunpack.c.l.b16 %v7747
  %v8374 = vunpack.c.h.b16 %v7747
  %v8375 = vunpack.c.l.b16 %v7748
  %v8376 = vunpack.c.h.b16 %v7748
  %v8377 = vunpack.c.l.b16 %v7749
  %v8378 = vunpack.c.h.b16 %v7749
  %v8379 = vunpack.c.l.b16 %v7750
  %v8380 = vunpack.c.h.b16 %v7750
  %v8381 = vunpack.c.l.b16 %v7751
  %v8382 = vunpack.c.h.b16 %v7751
  %v8383 = vunpack.c.l.b16 %v7752
  %v8384 = vunpack.c.h.b16 %v7752
  %v8385 = vunpack.c.l.b16 %v7753
  %v8386 = vunpack.c.h.b16 %v7753
  %v8387 = vunpack.c.l.b16 %v7754
  %v8388 = vunpack.c.h.b16 %v7754
  %v8389 = vunpack.c.l.b16 %v7755
  %v8390 = vunpack.c.h.b16 %v7755
  %v8391 = vunpack.c.l.b16 %v7756
  %v8392 = vunpack.c.h.b16 %v7756
  %v8393 = vunpack.c.l.b16 %v7757
  %v8394 = vunpack.c.h.b16 %v7757
  %v8395 = vunpack.c.l.b16 %v7758
  %v8396 = vunpack.c.h.b16 %v7758
  %v8397 = vunpack.c.l.b16 %v7759
  %v8398 = vunpack.c.h.b16 %v7759
  %v8399 = vunpack.c.l.b16 %v7760
  %v8400 = vunpack.c.h.b16 %v7760
  %v8401 = vunpack.c.l.b16 %v7761
  %v8402 = vunpack.c.h.b16 %v7761
  %v8403 = vunpack.c.l.b16 %v7762
  %v8404 = vunpack.c.h.b16 %v7762
  %v8405 = vunpack.c.l.b16 %v7763
  %v8406 = vunpack.c.h.b16 %v7763
  %v8407 = vunpack.c.l.b16 %v7764
  %v8408 = vunpack.c.h.b16 %v7764
  %v8409 = vunpack.c.l.b16 %v7765
  %v8410 = vunpack.c.h.b16 %v7765
  %v8411 = vunpack.c.l.b16 %v7766
  %v8412 = vunpack.c.h.b16 %v7766
  %v8413 = vunpack.c.l.b16 %v7767
  %v8414 = vunpack.c.h.b16 %v7767
  %v8415 = vunpack.c.l.b16 %v7768
  %v8416 = vunpack.c.h.b16 %v7768
  %v8417 = vunpack.c.l.b16 %v7769
  %v8418 = vunpack.c.h.b16 %v7769
  %v8419 = vunpack.c.l.b16 %v7770
  %v8420 = vunpack.c.h.b16 %v7770
  %v8421 = vunpack.c.l.b16 %v7771
  %v8422 = vunpack.c.h.b16 %v7771
  %v8423 = vunpack.c.l.b16 %v7772
  %v8424 = vunpack.c.h.b16 %v7772
  %v8425 = vunpack.c.l.b16 %v7773
  %v8426 = vunpack.c.h.b16 %v7773
  %v8427 = vunpack.c.l.b16 %v7774
  %v8428 = vunpack.c.h.b16 %v7774
  %v8429 = vunpack.c.l.b16 %v7775
  %v8430 = vunpack.c.h.b16 %v7775
  %v8431 = vunpack.c.l.b16 %v7776
  %v8432 = vunpack.c.h.b16 %v7776
  %v8433 = vunpack.c.l.b16 %v7777
  %v8434 = vunpack.c.h.b16 %v7777
  %v8435 = vunpack.c.l.b16 %v7778
  %v8436 = vunpack.c.h.b16 %v7778
  %v8437 = vunpack.c.l.b16 %v7779
  %v8438 = vunpack.c.h.b16 %v7779
  %v8439 = vunpack.c.l.b16 %v7780
  %v8440 = vunpack.c.h.b16 %v7780
  %v8441 = vunpack.c.l.b16 %v7781
  %v8442 = vunpack.c.h.b16 %v7781
  %v8443 = vunpack.c.l.b16 %v7782
  %v8444 = vunpack.c.h.b16 %v7782
  %v8445 = vunpack.c.l.b16 %v7783
  %v8446 = vunpack.c.h.b16 %v7783
  %v8447 = vunpack.c.l.b16 %v7784
  %v8448 = vunpack.c.h.b16 %v7784
  %v8449 = vunpack.c.l.b16 %v7785
  %v8450 = vunpack.c.h.b16 %v7785
  %v8451 = vunpack.c.l.b16 %v7786
  %v8452 = vunpack.c.h.b16 %v7786
  %v8453 = vunpack.c.l.b16 %v7787
  %v8454 = vunpack.c.h.b16 %v7787
  %v8455 = vunpack.c.l.b16 %v7788
  %v8456 = vunpack.c.h.b16 %v7788
  %v8457 = vunpack.c.l.b16 %v7789
  %v8458 = vunpack.c.h.b16 %v7789
  %v8459 = vunpack.c.l.b16 %v7790
  %v8460 = vunpack.c.h.b16 %v7790
  %v8461 = vunpack.c.l.b16 %v7791
  %v8462 = vunpack.c.h.b16 %v7791
  %v8463 = vunpack.c.l.b16 %v7792
  %v8464 = vunpack.c.h.b16 %v7792
  %v8465 = vunpack.c.l.b16 %v7793
  %v8466 = vunpack.c.h.b16 %v7793
  %v8467 = vunpack.c.l.b16 %v7794
  %v8468 = vunpack.c.h.b16 %v7794
  %v8469 = vunpack.c.l.b16 %v7795
  %v8470 = vunpack.c.h.b16 %v7795
  %v8471 = vunpack.c.l.b16 %v7796
  %v8472 = vunpack.c.h.b16 %v7796
  %v8473 = vunpack.c.l.b16 %v7797
  %v8474 = vunpack.c.h.b16 %v7797
  %v8475 = vunpack.c.l.b16 %v7798
  %v8476 = vunpack.c.h.b16 %v7798
  %v8477 = vunpack.c.l.b16 %v7799
  %v8478 = vunpack.c.h.b16 %v7799
  %v8479 = vunpack.c.l.b16 %v7800
  %v8480 = vunpack.c.h.b16 %v7800
  %v8481 = vunpack.c.l.b16 %v7801
  %v8482 = vunpack.c.h.b16 %v7801
  %v8483 = vunpack.c.l.b16 %v7802
  %v8484 = vunpack.c.h.b16 %v7802
  %v8485 = vunpack.c.l.b16 %v7803
  %v8486 = vunpack.c.h.b16 %v7803
  %v8487 = vunpack.c.l.b16 %v7804
  %v8488 = vunpack.c.h.b16 %v7804
  %v8489 = vunpack.c.l.b16 %v7805
  %v8490 = vunpack.c.h.b16 %v7805
  %v8491 = vunpack.c.l.b16 %v7806
  %v8492 = vunpack.c.h.b16 %v7806
  %v8493 = vunpack.c.l.b16 %v7807
  %v8494 = vunpack.c.h.b16 %v7807
  %v8495 = vunpack.c.l.b16 %v7808
  %v8496 = vunpack.c.h.b16 %v7808
  %v8497 = vunpack.c.l.b16 %v7809
  %v8498 = vunpack.c.h.b16 %v7809
  %v8499 = vunpack.c.l.b16 %v7810
  %v8500 = vunpack.c.h.b16 %v7810
  %v8501 = vunpack.c.l.b16 %v7811
  %v8502 = vunpack.c.h.b16 %v7811
  %v8503 = vunpack.c.l.b16 %v7812
  %v8504 = vunpack.c.h.b16 %v7812
  %v8505 = vunpack.c.l.b16 %v7813
  %v8506 = vunpack.c.h.b16 %v7813
  %v8507 = vunpack.c.l.b16 %v7814
  %v8508 = vunpack.c.h.b16 %v7814
  %v8509 = vunpack.c.l.b16 %v7815
  %v8510 = vunpack.c.h.b16 %v7815
  %v8511 = vunpack.c.l.b16 %v7816
  %v8512 = vunpack.c.h.b16 %v7816
  %v8513 = vunpack.c.l.b16 %v7817
  %v8514 = vunpack.c.h.b16 %v7817
  %v8515 = vunpack.c.l.b16 %v7818
  %v8516 = vunpack.c.h.b16 %v7818
  %v8517 = vunpack.c.l.b16 %v7819
  %v8518 = vunpack.c.h.b16 %v7819
  %v8519 = vunpack.c.l.b16 %v7820
  %v8520 = vunpack.c.h.b16 %v7820
  %v8521 = vunpack.c.l.b16 %v7821
  %v8522 = vunpack.c.h.b16 %v7821
  %v8523 = vunpack.c.l.b16 %v7822
  %v8524 = vunpack.c.h.b16 %v7822
  %v8525 = vunpack.c.l.b16 %v7823
  %v8526 = vunpack.c.h.b16 %v7823
  %v8527 = vunpack.c.l.b16 %v7824
  %v8528 = vunpack.c.h.b16 %v7824
  %v8529 = vunpack.c.l.b16 %v7825
  %v8530 = vunpack.c.h.b16 %v7825
  %v8531 = vunpack.c.l.b16 %v7826
  %v8532 = vunpack.c.h.b16 %v7826
  %v8533 = vunpack.c.l.b16 %v7827
  %v8534 = vunpack.c.h.b16 %v7827
  %v8535 = vunpack.c.l.b16 %v7828
  %v8536 = vunpack.c.h.b16 %v7828
  %v8537 = vunpack.c.l.b16 %v7829
  %v8538 = vunpack.c.h.b16 %v7829
  %v8539 = vunpack.c.l.b16 %v7830
  %v8540 = vunpack.c.h.b16 %v7830
  %v8541 = vunpack.c.l.b16 %v7831
  %v8542 = vunpack.c.h.b16 %v7831
  %v8543 = vunpack.c.l.b16 %v7832
  %v8544 = vunpack.c.h.b16 %v7832
  %v8545 = vunpack.c.l.b16 %v7833
  %v8546 = vunpack.c.h.b16 %v7833
  %v8547 = vunpack.c.l.b16 %v7834
  %v8548 = vunpack.c.h.b16 %v7834
  %v8549 = vunpack.c.l.b16 %v7835
  %v8550 = vunpack.c.h.b16 %v7835
  %v8551 = vunpack.c.l.b16 %v7836
  %v8552 = vunpack.c.h.b16 %v7836
  %v8553 = vunpack.c.l.b16 %v7837
  %v8554 = vunpack.c.h.b16 %v7837
  %v8555 = vunpack.c.l.b16 %v7838
  %v8556 = vunpack.c.h.b16 %v7838
  %v8557 = vunpack.c.l.b16 %v7839
  %v8558 = vunpack.c.h.b16 %v7839
  %v8559 = vunpack.c.l.b16 %v7840
  %v8560 = vunpack.c.h.b16 %v7840
  %v8561 = vunpack.c.l.b16 %v7841
  %v8562 = vunpack.c.h.b16 %v7841
  %v8563 = vunpack.c.l.b16 %v7842
  %v8564 = vunpack.c.h.b16 %v7842
  %v8565 = vunpack.c.l.b16 %v7843
  %v8566 = vunpack.c.h.b16 %v7843
  %v8567 = vunpack.c.l.b16 %v7844
  %v8568 = vunpack.c.h.b16 %v7844
  %v8569 = vunpack.c.l.b16 %v7845
  %v8570 = vunpack.c.h.b16 %v7845
  %v8571 = vunpack.c.l.b16 %v7846
  %v8572 = vunpack.c.h.b16 %v7846
  %v8573 = vunpack.c.l.b16 %v7847
  %v8574 = vunpack.c.h.b16 %v7847
  %v8575 = vunpack.c.l.b16 %v7848
  %v8576 = vunpack.c.h.b16 %v7848
  %v8577 = vunpack.c.l.b16 %v7849
  %v8578 = vunpack.c.h.b16 %v7849
  %v8579 = vunpack.c.l.b16 %v7850
  %v8580 = vunpack.c.h.b16 %v7850
  %v8581 = vunpack.c.l.b16 %v7851
  %v8582 = vunpack.c.h.b16 %v7851
  %v8583 = vunpack.c.l.b16 %v7852
  %v8584 = vunpack.c.h.b16 %v7852
  %v8585 = vunpack.c.l.b16 %v7853
  %v8586 = vunpack.c.h.b16 %v7853
  %v8587 = vunpack.c.l.b16 %v7854
  %v8588 = vunpack.c.h.b16 %v7854
  %v8589 = vunpack.c.l.b16 %v7855
  %v8590 = vunpack.c.h.b16 %v7855
  %v8591 = vunpack.c.l.b16 %v7856
  %v8592 = vunpack.c.h.b16 %v7856
  %v8593 = vunpack.c.l.b16 %v7857
  %v8594 = vunpack.c.h.b16 %v7857
  %v8595 = vunpack.c.l.b16 %v7858
  %v8596 = vunpack.c.h.b16 %v7858
  %v8597 = vunpack.c.l.b16 %v7859
  %v8598 = vunpack.c.h.b16 %v7859
  %v8599 = vunpack.c.l.b16 %v7860
  %v8600 = vunpack.c.h.b16 %v7860
  %v8601 = vunpack.c.l.b16 %v7861
  %v8602 = vunpack.c.h.b16 %v7861
  %v8603 = vunpack.c.l.b16 %v7862
  %v8604 = vunpack.c.h.b16 %v7862
  %v8605 = vunpack.c.l.b16 %v7863
  %v8606 = vunpack.c.h.b16 %v7863
  %v8607 = vunpack.c.l.b16 %v7864
  %v8608 = vunpack.c.h.b16 %v7864
  %v8609 = vunpack.c.l.b16 %v7865
  %v8610 = vunpack.c.h.b16 %v7865
  %v8611 = vunpack.c.l.b16 %v7866
  %v8612 = vunpack.c.h.b16 %v7866
  %v8613 = vunpack.c.l.b16 %v7867
  %v8614 = vunpack.c.h.b16 %v7867
  %v8615 = vunpack.c.l.b16 %v7868
  %v8616 = vunpack.c.h.b16 %v7868
  %v8617 = vunpack.c.l.b16 %v7869
  %v8618 = vunpack.c.h.b16 %v7869
  %v8619 = vunpack.c.l.b16 %v7870
  %v8620 = vunpack.c.h.b16 %v7870
  %v8621 = vunpack.c.l.b16 %v7871
  %v8622 = vunpack.c.h.b16 %v7871
  %v8623 = vunpack.c.l.b16 %v7872
  %v8624 = vunpack.c.h.b16 %v7872
  %v8625 = vunpack.c.l.b16 %v7873
  %v8626 = vunpack.c.h.b16 %v7873
  %v8627 = vunpack.c.l.b16 %v7874
  %v8628 = vunpack.c.h.b16 %v7874
  %v8629 = vunpack.c.l.b16 %v7875
  %v8630 = vunpack.c.h.b16 %v7875
  %v8631 = vunpack.c.l.b16 %v7876
  %v8632 = vunpack.c.h.b16 %v7876
  %v8633 = vunpack.c.l.b16 %v7877
  %v8634 = vunpack.c.h.b16 %v7877
  %v8635 = vunpack.c.l.b16 %v7878
  %v8636 = vunpack.c.h.b16 %v7878
  %v8637 = vunpack.c.l.b16 %v7879
  %v8638 = vunpack.c.h.b16 %v7879
  %v8639 = vunpack.c.l.b16 %v7880
  %v8640 = vunpack.c.h.b16 %v7880
  %v8641 = vunpack.c.l.b16 %v7881
  %v8642 = vunpack.c.h.b16 %v7881
  %v8643 = vunpack.c.l.b16 %v7882
  %v8644 = vunpack.c.h.b16 %v7882
  %v8645 = vunpack.c.l.b16 %v7883
  %v8646 = vunpack.c.h.b16 %v7883
  %v8647 = vunpack.c.l.b16 %v7884
  %v8648 = vunpack.c.h.b16 %v7884
  %v8649 = vunpack.c.l.b16 %v7885
  %v8650 = vunpack.c.h.b16 %v7885
  %v8651 = vunpack.c.l.b16 %v7886
  %v8652 = vunpack.c.h.b16 %v7886
  %v8653 = vunpack.c.l.b16 %v7887
  %v8654 = vunpack.c.h.b16 %v7887
  %v8655 = vunpack.c.l.b16 %v7888
  %v8656 = vunpack.c.h.b16 %v7888
  %v8657 = vunpack.c.l.b16 %v7889
  %v8658 = vunpack.c.h.b16 %v7889
  %v8659 = vunpack.c.l.b16 %v7890
  %v8660 = vunpack.c.h.b16 %v7890
  %v8661 = vunpack.c.l.b16 %v7891
  %v8662 = vunpack.c.h.b16 %v7891
  %v8663 = vunpack.c.l.b16 %v7892
  %v8664 = vunpack.c.h.b16 %v7892
  %v8665 = vunpack.c.l.b16 %v7893
  %v8666 = vunpack.c.h.b16 %v7893
  %v8667 = vunpack.c.l.b16 %v7894
  %v8668 = vunpack.c.h.b16 %v7894
  %v8669 = vunpack.c.l.b16 %v7895
  %v8670 = vunpack.c.h.b16 %v7895
  %v8671 = vunpack.c.l.b16 %v7896
  %v8672 = vunpack.c.h.b16 %v7896
  %v8673 = vunpack.c.l.b16 %v7897
  %v8674 = vunpack.c.h.b16 %v7897
  %v8675 = vunpack.c.l.b16 %v7898
  %v8676 = vunpack.c.h.b16 %v7898
  %v8677 = vunpack.c.l.b16 %v7899
  %v8678 = vunpack.c.h.b16 %v7899
  %v8679 = vunpack.c.l.b16 %v7900
  %v8680 = vunpack.c.h.b16 %v7900
  %v8681 = vunpack.c.l.b16 %v7901
  %v8682 = vunpack.c.h.b16 %v7901
  %v8683 = vunpack.c.l.b16 %v7902
  %v8684 = vunpack.c.h.b16 %v7902
  %v8685 = vunpack.c.l.b16 %v7903
  %v8686 = vunpack.c.h.b16 %v7903
  %v8687 = vunpack.c.l.b16 %v7904
  %v8688 = vunpack.c.h.b16 %v7904
  %v8689 = vunpack.c.l.b16 %v7905
  %v8690 = vunpack.c.h.b16 %v7905
  %v8691 = vunpack.c.l.b16 %v7906
  %v8692 = vunpack.c.h.b16 %v7906
  %v8693 = vunpack.c.l.b16 %v7907
  %v8694 = vunpack.c.h.b16 %v7907
  %v8695 = vunpack.c.l.b16 %v7908
  %v8696 = vunpack.c.h.b16 %v7908
  %v8697 = vunpack.c.l.b16 %v7909
  %v8698 = vunpack.c.h.b16 %v7909
  %v8699 = vunpack.c.l.b16 %v7910
  %v8700 = vunpack.c.h.b16 %v7910
  %v8701 = vpack.c.b16 %v8193, %v8189
  %v8702 = vpack.c.b16 %v8194, %v8190
  %v8703 = vpack.c.b16 %v8195, %v8191
  %v8704 = vpack.c.b16 %v8196, %v8192
  %v8705 = vpack.c.b16 %v8201, %v8197
  %v8706 = vpack.c.b16 %v8202, %v8198
  %v8707 = vpack.c.b16 %v8203, %v8199
  %v8708 = vpack.c.b16 %v8204, %v8200
  %v8709 = vpack.c.b16 %v8209, %v8205
  %v8710 = vpack.c.b16 %v8210, %v8206
  %v8711 = vpack.c.b16 %v8211, %v8207
  %v8712 = vpack.c.b16 %v8212, %v8208
  %v8713 = vpack.c.b16 %v8217, %v8213
  %v8714 = vpack.c.b16 %v8218, %v8214
  %v8715 = vpack.c.b16 %v8219, %v8215
  %v8716 = vpack.c.b16 %v8220, %v8216
  %v8717 = vpack.c.b16 %v8225, %v8221
  %v8718 = vpack.c.b16 %v8226, %v8222
  %v8719 = vpack.c.b16 %v8227, %v8223
  %v8720 = vpack.c.b16 %v8228, %v8224
  %v8721 = vpack.c.b16 %v8233, %v8229
  %v8722 = vpack.c.b16 %v8234, %v8230
  %v8723 = vpack.c.b16 %v8235, %v8231
  %v8724 = vpack.c.b16 %v8236, %v8232
  %v8725 = vpack.c.b16 %v8241, %v8237
  %v8726 = vpack.c.b16 %v8242, %v8238
  %v8727 = vpack.c.b16 %v8243, %v8239
  %v8728 = vpack.c.b16 %v8244, %v8240
  %v8729 = vpack.c.b16 %v8249, %v8245
  %v8730 = vpack.c.b16 %v8250, %v8246
  %v8731 = vpack.c.b16 %v8251, %v8247
  %v8732 = vpack.c.b16 %v8252, %v8248
  %v8733 = vpack.c.b16 %v8257, %v8253
  %v8734 = vpack.c.b16 %v8258, %v8254
  %v8735 = vpack.c.b16 %v8259, %v8255
  %v8736 = vpack.c.b16 %v8260, %v8256
  %v8737 = vpack.c.b16 %v8265, %v8261
  %v8738 = vpack.c.b16 %v8266, %v8262
  %v8739 = vpack.c.b16 %v8267, %v8263
  %v8740 = vpack.c.b16 %v8268, %v8264
  %v8741 = vpack.c.b16 %v8273, %v8269
  %v8742 = vpack.c.b16 %v8274, %v8270
  %v8743 = vpack.c.b16 %v8275, %v8271
  %v8744 = vpack.c.b16 %v8276, %v8272
  %v8745 = vpack.c.b16 %v8281, %v8277
  %v8746 = vpack.c.b16 %v8282, %v8278
  %v8747 = vpack.c.b16 %v8283, %v8279
  %v8748 = vpack.c.b16 %v8284, %v8280
  %v8749 = vpack.c.b16 %v8289, %v8285
  %v8750 = vpack.c.b16 %v8290, %v8286
  %v8751 = vpack.c.b16 %v8291, %v8287
  %v8752 = vpack.c.b16 %v8292, %v8288
  %v8753 = vpack.c.b16 %v8297, %v8293
  %v8754 = vpack.c.b16 %v8298, %v8294
  %v8755 = vpack.c.b16 %v8299, %v8295
  %v8756 = vpack.c.b16 %v8300, %v8296
  %v8757 = vpack.c.b16 %v8305, %v8301
  %v8758 = vpack.c.b16 %v8306, %v8302
  %v8759 = vpack.c.b16 %v8307, %v8303
  %v8760 = vpack.c.b16 %v8308, %v8304
  %v8761 = vpack.c.b16 %v8313, %v8309
  %v8762 = vpack.c.b16 %v8314, %v8310
  %v8763 = vpack.c.b16 %v8315, %v8311
  %v8764 = vpack.c.b16 %v8316, %v8312
  %v8765 = vpack.c.b16 %v8321, %v8317
  %v8766 = vpack.c.b16 %v8322, %v8318
  %v8767 = vpack.c.b16 %v8323, %v8319
  %v8768 = vpack.c.b16 %v8324, %v8320
  %v8769 = vpack.c.b16 %v8329, %v8325
  %v8770 = vpack.c.b16 %v8330, %v8326
  %v8771 = vpack.c.b16 %v8331, %v8327
  %v8772 = vpack.c.b16 %v8332, %v8328
  %v8773 = vpack.c.b16 %v8337, %v8333
  %v8774 = vpack.c.b16 %v8338, %v8334
  %v8775 = vpack.c.b16 %v8339, %v8335
  %v8776 = vpack.c.b16 %v8340, %v8336
  %v8777 = vpack.c.b16 %v8345, %v8341
  %v8778 = vpack.c.b16 %v8346, %v8342
  %v8779 = vpack.c.b16 %v8347, %v8343
  %v8780 = vpack.c.b16 %v8348, %v8344
  %v8781 = vpack.c.b16 %v8353, %v8349
  %v8782 = vpack.c.b16 %v8354, %v8350
  %v8783 = vpack.c.b16 %v8355, %v8351
  %v8784 = vpack.c.b16 %v8356, %v8352
  %v8785 = vpack.c.b16 %v8361, %v8357
  %v8786 = vpack.c.b16 %v8362, %v8358
  %v8787 = vpack.c.b16 %v8363, %v8359
  %v8788 = vpack.c.b16 %v8364, %v8360
  %v8789 = vpack.c.b16 %v8369, %v8365
  %v8790 = vpack.c.b16 %v8370, %v8366
  %v8791 = vpack.c.b16 %v8371, %v8367
  %v8792 = vpack.c.b16 %v8372, %v8368
  %v8793 = vpack.c.b16 %v8377, %v8373
  %v8794 = vpack.c.b16 %v8378, %v8374
  %v8795 = vpack.c.b16 %v8379, %v8375
  %v8796 = vpack.c.b16 %v8380, %v8376
  %v8797 = vpack.c.b16 %v8385, %v8381
  %v8798 = vpack.c.b16 %v8386, %v8382
  %v8799 = vpack.c.b16 %v8387, %v8383
  %v8800 = vpack.c.b16 %v8388, %v8384
  %v8801 = vpack.c.b16 %v8393, %v8389
  %v8802 = vpack.c.b16 %v8394, %v8390
  %v8803 = vpack.c.b16 %v8395, %v8391
  %v8804 = vpack.c.b16 %v8396, %v8392
  %v8805 = vpack.c.b16 %v8401, %v8397
  %v8806 = vpack.c.b16 %v8402, %v8398
  %v8807 = vpack.c.b16 %v8403, %v8399
  %v8808 = vpack.c.b16 %v8404, %v8400
  %v8809 = vpack.c.b16 %v8409, %v8405
  %v8810 = vpack.c.b16 %v8410, %v8406
  %v8811 = vpack.c.b16 %v8411, %v8407
  %v8812 = vpack.c.b16 %v8412, %v8408
  %v8813 = vpack.c.b16 %v8417, %v8413
  %v8814 = vpack.c.b16 %v8418, %v8414
  %v8815 = vpack.c.b16 %v8419, %v8415
  %v8816 = vpack.c.b16 %v8420, %v8416
  %v8817 = vpack.c.b16 %v8425, %v8421
  %v8818 = vpack.c.b16 %v8426, %v8422
  %v8819 = vpack.c.b16 %v8427, %v8423
  %v8820 = vpack.c.b16 %v8428, %v8424
  %v8821 = vpack.c.b16 %v8433, %v8429
  %v8822 = vpack.c.b16 %v8434, %v8430
  %v8823 = vpack.c.b16 %v8435, %v8431
  %v8824 = vpack.c.b16 %v8436, %v8432
  %v8825 = vpack.c.b16 %v8441, %v8437
  %v8826 = vpack.c.b16 %v8442, %v8438
  %v8827 = vpack.c.b16 %v8443, %v8439
  %v8828 = vpack.c.b16 %v8444, %v8440
  %v8829 = vpack.c.b16 %v8449, %v8445
  %v8830 = vpack.c.b16 %v8450, %v8446
  %v8831 = vpack.c.b16 %v8451, %v8447
  %v8832 = vpack.c.b16 %v8452, %v8448
  %v8833 = vpack.c.b16 %v8457, %v8453
  %v8834 = vpack.c.b16 %v8458, %v8454
  %v8835 = vpack.c.b16 %v8459, %v8455
  %v8836 = vpack.c.b16 %v8460, %v8456
  %v8837 = vpack.c.b16 %v8465, %v8461
  %v8838 = vpack.c.b16 %v8466, %v8462
  %v8839 = vpack.c.b16 %v8467, %v8463
  %v8840 = vpack.c.b16 %v8468, %v8464
  %v8841 = vpack.c.b16 %v8473, %v8469
  %v8842 = vpack.c.b16 %v8474, %v8470
  %v8843 = vpack.c.b16 %v8475, %v8471
  %v8844 = vpack.c.b16 %v8476, %v8472
  %v8845 = vpack.c.b16 %v8481, %v8477
  %v8846 = vpack.c.b16 %v8482, %v8478
  %v8847 = vpack.c.b16 %v8483, %v8479
  %v8848 = vpack.c.b16 %v8484, %v8480
  %v8849 = vpack.c.b16 %v8489, %v8485
  %v8850 = vpack.c.b16 %v8490, %v8486
  %v8851 = vpack.c.b16 %v8491, %v8487
  %v8852 = vpack.c.b16 %v8492, %v8488
  %v8853 = vpack.c.b16 %v8497, %v8493
  %v8854 = vpack.c.b16 %v8498, %v8494
  %v8855 = vpack.c.b16 %v8499, %v8495
  %v8856 = vpack.c.b16 %v8500, %v8496
  %v8857 = vpack.c.b16 %v8505, %v8501
  %v8858 = vpack.c.b16 %v8506, %v8502
  %v8859 = vpack.c.b16 %v8507, %v8503
  %v8860 = vpack.c.b16 %v8508, %v8504
  %v8861 = vpack.c.b16 %v8513, %v8509
  %v8862 = vpack.c.b16 %v8514, %v8510
  %v8863 = vpack.c.b16 %v8515, %v8511
  %v8864 = vpack.c.b16 %v8516, %v8512
  %v8865 = vpack.c.b16 %v8521, %v8517
  %v8866 = vpack.c.b16 %v8522, %v8518
  %v8867 = vpack.c.b16 %v8523, %v8519
  %v8868 = vpack.c.b16 %v8524, %v8520
  %v8869 = vpack.c.b16 %v8529, %v8525
  %v8870 = vpack.c.b16 %v8530, %v8526
  %v8871 = vpack.c.b16 %v8531, %v8527
  %v8872 = vpack.c.b16 %v8532, %v8528
  %v8873 = vpack.c.b16 %v8537, %v8533
  %v8874 = vpack.c.b16 %v8538, %v8534
  %v8875 = vpack.c.b16 %v8539, %v8535
  %v8876 = vpack.c.b16 %v8540, %v8536
  %v8877 = vpack.c.b16 %v8545, %v8541
  %v8878 = vpack.c.b16 %v8546, %v8542
  %v8879 = vpack.c.b16 %v8547, %v8543
  %v8880 = vpack.c.b16 %v8548, %v8544
  %v8881 = vpack.c.b16 %v8553, %v8549
  %v8882 = vpack.c.b16 %v8554, %v8550
  %v8883 = vpack.c.b16 %v8555, %v8551
  %v8884 = vpack.c.b16 %v8556, %v8552
  %v8885 = vpack.c.b16 %v8561, %v8557
  %v8886 = vpack.c.b16 %v8562, %v8558
  %v8887 = vpack.c.b16 %v8563, %v8559
  %v8888 = vpack.c.b16 %v8564, %v8560
  %v8889 = vpack.c.b16 %v8569, %v8565
  %v8890 = vpack.c.b16 %v8570, %v8566
  %v8891 = vpack.c.b16 %v8571, %v8567
  %v8892 = vpack.c.b16 %v8572, %v8568
  %v8893 = vpack.c.b16 %v8577, %v8573
  %v8894 = vpack.c.b16 %v8578, %v8574
  %v8895 = vpack.c.b16 %v8579, %v8575
  %v8896 = vpack.c.b16 %v8580, %v8576
  %v8897 = vpack.c.b16 %v8585, %v8581
  %v8898 = vpack.c.b16 %v8586, %v8582
  %v8899 = vpack.c.b16 %v8587, %v8583
  %v8900 = vpack.c.b16 %v8588, %v8584
  %v8901 = vpack.c.b16 %v8593, %v8589
  %v8902 = vpack.c.b16 %v8594, %v8590
  %v8903 = vpack.c.b16 %v8595, %v8591
  %v8904 = vpack.c.b16 %v8596, %v8592
  %v8905 = vpack.c.b16 %v8601, %v8597
  %v8906 = vpack.c.b16 %v8602, %v8598
  %v8907 = vpack.c.b16 %v8603, %v8599
  %v8908 = vpack.c.b16 %v8604, %v8600
  %v8909 = vpack.c.b16 %v8609, %v8605
  %v8910 = vpack.c.b16 %v8610, %v8606
  %v8911 = vpack.c.b16 %v8611, %v8607
  %v8912 = vpack.c.b16 %v8612, %v8608
  %v8913 = vpack.c.b16 %v8617, %v8613
  %v8914 = vpack.c.b16 %v8618, %v8614
  %v8915 = vpack.c.b16 %v8619, %v8615
  %v8916 = vpack.c.b16 %v8620, %v8616
  %v8917 = vpack.c.b16 %v8625, %v8621
  %v8918 = vpack.c.b16 %v8626, %v8622
  %v8919 = vpack.c.b16 %v8627, %v8623
  %v8920 = vpack.c.b16 %v8628, %v8624
  %v8921 = vpack.c.b16 %v8633, %v8629
  %v8922 = vpack.c.b16 %v8634, %v8630
  %v8923 = vpack.c.b16 %v8635, %v8631
  %v8924 = vpack.c.b16 %v8636, %v8632
  %v8925 = vpack.c.b16 %v8641, %v8637
  %v8926 = vpack.c.b16 %v8642, %v8638
  %v8927 = vpack.c.b16 %v8643, %v8639
  %v8928 = vpack.c.b16 %v8644, %v8640
  %v8929 = vpack.c.b16 %v8649, %v8645
  %v8930 = vpack.c.b16 %v8650, %v8646
  %v8931 = vpack.c.b16 %v8651, %v8647
  %v8932 = vpack.c.b16 %v8652, %v8648
  %v8933 = vpack.c.b16 %v8657, %v8653
  %v8934 = vpack.c.b16 %v8658, %v8654
  %v8935 = vpack.c.b16 %v8659, %v8655
  %v8936 = vpack.c.b16 %v8660, %v8656
  %v8937 = vpack.c.b16 %v8665, %v8661
  %v8938 = vpack.c.b16 %v8666, %v8662
  %v8939 = vpack.c.b16 %v8667, %v8663
  %v8940 = vpack.c.b16 %v8668, %v8664
  %v8941 = vpack.c.b16 %v8673, %v8669
  %v8942 = vpack.c.b16 %v8674, %v8670
  %v8943 = vpack.c.b16 %v8675, %v8671
  %v8944 = vpack.c.b16 %v8676, %v8672
  %v8945 = vpack.c.b16 %v8681, %v8677
  %v8946 = vpack.c.b16 %v8682, %v8678
  %v8947 = vpack.c.b16 %v8683, %v8679
  %v8948 = vpack.c.b16 %v8684, %v8680
  %v8949 = vpack.c.b16 %v8689, %v8685
  %v8950 = vpack.c.b16 %v8690, %v8686
  %v8951 = vpack.c.b16 %v8691, %v8687
  %v8952 = vpack.c.b16 %v8692, %v8688
  %v8953 = vpack.c.b16 %v8697, %v8693
  %v8954 = vpack.c.b16 %v8698, %v8694
  %v8955 = vpack.c.b16 %v8699, %v8695
  %v8956 = vpack.c.b16 %v8700, %v8696
  %9213 = vmatprep.subr.bf16.mxu0 %v8702
  %9214 = vmatpush1.bf16.msra.mxu0 %v8701
  %9215 = vmatprep.subr.bf16.mxu0 %v8706
  %9216 = vmatpush1.bf16.msra.mxu0 %v8705
  %9217 = vmatprep.subr.bf16.mxu0 %v8710
  %9218 = vmatpush1.bf16.msra.mxu0 %v8709
  %9219 = vmatprep.subr.bf16.mxu0 %v8714
  %9220 = vmatpush1.bf16.msra.mxu0 %v8713
  %9221 = vmatprep.subr.bf16.mxu0 %v8718
  %9222 = vmatpush1.bf16.msra.mxu0 %v8717
  %9223 = vmatprep.subr.bf16.mxu0 %v8722
  %9224 = vmatpush1.bf16.msra.mxu0 %v8721
  %9225 = vmatprep.subr.bf16.mxu0 %v8726
  %9226 = vmatpush1.bf16.msra.mxu0 %v8725
  %9227 = vmatprep.subr.bf16.mxu0 %v8730
  %9228 = vmatpush1.bf16.msra.mxu0 %v8729
  %9229 = vmatprep.subr.bf16.mxu0 %v8734
  %9230 = vmatpush1.bf16.msra.mxu0 %v8733
  %9231 = vmatprep.subr.bf16.mxu0 %v8738
  %9232 = vmatpush1.bf16.msra.mxu0 %v8737
  %9233 = vmatprep.subr.bf16.mxu0 %v8742
  %9234 = vmatpush1.bf16.msra.mxu0 %v8741
  %9235 = vmatprep.subr.bf16.mxu0 %v8746
  %9236 = vmatpush1.bf16.msra.mxu0 %v8745
  %9237 = vmatprep.subr.bf16.mxu0 %v8750
  %9238 = vmatpush1.bf16.msra.mxu0 %v8749
  %9239 = vmatprep.subr.bf16.mxu0 %v8754
  %9240 = vmatpush1.bf16.msra.mxu0 %v8753
  %9241 = vmatprep.subr.bf16.mxu0 %v8758
  %9242 = vmatpush1.bf16.msra.mxu0 %v8757
  %9243 = vmatprep.subr.bf16.mxu0 %v8762
  %9244 = vmatpush1.bf16.msra.mxu0 %v8761
  %9245 = vmatprep.mubr.bf16.mxu0 %v7648
  %9246 = vmatmul.mubr.bf16.gmra.mrb[0].mxu0 %v7647
  %v9247 = vpop.f32.mrb[0].mxu0
  %v9248 = vadd.f32 %v7916, %v9247
  %v9249 = vpop.f32.mrb[0].mxu0
  %v9250 = vadd.f32 %v7920, %v9249
  %v9251 = vpop.f32.mrb[0].mxu0
  %v9252 = vpop.f32.mrb[0].mxu0
  %9253 = vdwg.mxu0
  %9254 = vmatprep.subr.bf16.mxu0 %v8766
  %9255 = vmatpush1.bf16.msra.mxu0 %v8765
  %9256 = vmatprep.subr.bf16.mxu0 %v8770
  %9257 = vmatpush1.bf16.msra.mxu0 %v8769
  %9258 = vmatprep.subr.bf16.mxu0 %v8774
  %9259 = vmatpush1.bf16.msra.mxu0 %v8773
  %9260 = vmatprep.subr.bf16.mxu0 %v8778
  %9261 = vmatpush1.bf16.msra.mxu0 %v8777
  %9262 = vmatprep.subr.bf16.mxu0 %v8782
  %9263 = vmatpush1.bf16.msra.mxu0 %v8781
  %9264 = vmatprep.subr.bf16.mxu0 %v8786
  %9265 = vmatpush1.bf16.msra.mxu0 %v8785
  %9266 = vmatprep.subr.bf16.mxu0 %v8790
  %9267 = vmatpush1.bf16.msra.mxu0 %v8789
  %9268 = vmatprep.subr.bf16.mxu0 %v8794
  %9269 = vmatpush1.bf16.msra.mxu0 %v8793
  %9270 = vmatprep.subr.bf16.mxu0 %v8798
  %9271 = vmatpush1.bf16.msra.mxu0 %v8797
  %9272 = vmatprep.subr.bf16.mxu0 %v8802
  %9273 = vmatpush1.bf16.msra.mxu0 %v8801
  %9274 = vmatprep.subr.bf16.mxu0 %v8806
  %9275 = vmatpush1.bf16.msra.mxu0 %v8805
  %9276 = vmatprep.subr.bf16.mxu0 %v8810
  %9277 = vmatpush1.bf16.msra.mxu0 %v8809
  %9278 = vmatprep.subr.bf16.mxu0 %v8814
  %9279 = vmatpush1.bf16.msra.mxu0 %v8813
  %9280 = vmatprep.subr.bf16.mxu0 %v8818
  %9281 = vmatpush1.bf16.msra.mxu0 %v8817
  %9282 = vmatprep.subr.bf16.mxu0 %v8822
  %9283 = vmatpush1.bf16.msra.mxu0 %v8821
  %9284 = vmatprep.subr.bf16.mxu0 %v8826
  %9285 = vmatpush1.bf16.msra.mxu0 %v8825
  %9286 = vmatprep.mubr.bf16.mxu0 %v7650
  %9287 = vmatmul.mubr.bf16.gmra.mrb[0].mxu0 %v7649
  %v9288 = vpop.f32.mrb[0].mxu0
  %v9289 = vadd.f32 %v9248, %v9288
  %v9290 = vpop.f32.mrb[0].mxu0
  %v9291 = vadd.f32 %v9250, %v9290
  %v9292 = vpop.f32.mrb[0].mxu0
  %v9293 = vpop.f32.mrb[0].mxu0
  %9294 = vdwg.mxu0
  %9295 = vmatprep.subr.bf16.mxu0 %v8830
  %9296 = vmatpush1.bf16.msra.mxu0 %v8829
  %9297 = vmatprep.subr.bf16.mxu0 %v8834
  %9298 = vmatpush1.bf16.msra.mxu0 %v8833
  %9299 = vmatprep.subr.bf16.mxu0 %v8838
  %9300 = vmatpush1.bf16.msra.mxu0 %v8837
  %9301 = vmatprep.subr.bf16.mxu0 %v8842
  %9302 = vmatpush1.bf16.msra.mxu0 %v8841
  %9303 = vmatprep.subr.bf16.mxu0 %v8846
  %9304 = vmatpush1.bf16.msra.mxu0 %v8845
  %9305 = vmatprep.subr.bf16.mxu0 %v8850
  %9306 = vmatpush1.bf16.msra.mxu0 %v8849
  %9307 = vmatprep.subr.bf16.mxu0 %v8854
  %9308 = vmatpush1.bf16.msra.mxu0 %v8853
  %9309 = vmatprep.subr.bf16.mxu0 %v8858
  %9310 = vmatpush1.bf16.msra.mxu0 %v8857
  %9311 = vmatprep.subr.bf16.mxu0 %v8862
  %9312 = vmatpush1.bf16.msra.mxu0 %v8861
  %9313 = vmatprep.subr.bf16.mxu0 %v8866
  %9314 = vmatpush1.bf16.msra.mxu0 %v8865
  %9315 = vmatprep.subr.bf16.mxu0 %v8870
  %9316 = vmatpush1.bf16.msra.mxu0 %v8869
  %9317 = vmatprep.subr.bf16.mxu0 %v8874
  %9318 = vmatpush1.bf16.msra.mxu0 %v8873
  %9319 = vmatprep.subr.bf16.mxu0 %v8878
  %9320 = vmatpush1.bf16.msra.mxu0 %v8877
  %9321 = vmatprep.subr.bf16.mxu0 %v8882
  %9322 = vmatpush1.bf16.msra.mxu0 %v8881
  %9323 = vmatprep.subr.bf16.mxu0 %v8886
  %9324 = vmatpush1.bf16.msra.mxu0 %v8885
  %9325 = vmatprep.subr.bf16.mxu0 %v8890
  %9326 = vmatpush1.bf16.msra.mxu0 %v8889
  %9327 = vmatprep.mubr.bf16.mxu0 %v7652
  %9328 = vmatmul.mubr.bf16.gmra.mrb[0].mxu0 %v7651
  %v9329 = vpop.f32.mrb[0].mxu0
  %v9330 = vadd.f32 %v9289, %v9329
  %v9331 = vpop.f32.mrb[0].mxu0
  %v9332 = vadd.f32 %v9291, %v9331
  %v9333 = vpop.f32.mrb[0].mxu0
  %v9334 = vpop.f32.mrb[0].mxu0
  %9335 = vdwg.mxu0
  %9336 = vmatprep.subr.bf16.mxu0 %v8894
  %9337 = vmatpush1.bf16.msra.mxu0 %v8893
  %9338 = vmatprep.subr.bf16.mxu0 %v8898
  %9339 = vmatpush1.bf16.msra.mxu0 %v8897
  %9340 = vmatprep.subr.bf16.mxu0 %v8902
  %9341 = vmatpush1.bf16.msra.mxu0 %v8901
  %9342 = vmatprep.subr.bf16.mxu0 %v8906
  %9343 = vmatpush1.bf16.msra.mxu0 %v8905
  %9344 = vmatprep.subr.bf16.mxu0 %v8910
  %9345 = vmatpush1.bf16.msra.mxu0 %v8909
  %9346 = vmatprep.subr.bf16.mxu0 %v8914
  %9347 = vmatpush1.bf16.msra.mxu0 %v8913
  %9348 = vmatprep.subr.bf16.mxu0 %v8918
  %9349 = vmatpush1.bf16.msra.mxu0 %v8917
  %9350 = vmatprep.subr.bf16.mxu0 %v8922
  %9351 = vmatpush1.bf16.msra.mxu0 %v8921
  %9352 = vmatprep.subr.bf16.mxu0 %v8926
  %9353 = vmatpush1.bf16.msra.mxu0 %v8925
  %9354 = vmatprep.subr.bf16.mxu0 %v8930
  %9355 = vmatpush1.bf16.msra.mxu0 %v8929
  %9356 = vmatprep.subr.bf16.mxu0 %v8934
  %9357 = vmatpush1.bf16.msra.mxu0 %v8933
  %9358 = vmatprep.subr.bf16.mxu0 %v8938
  %9359 = vmatpush1.bf16.msra.mxu0 %v8937
  %9360 = vmatprep.subr.bf16.mxu0 %v8942
  %9361 = vmatpush1.bf16.msra.mxu0 %v8941
  %9362 = vmatprep.subr.bf16.mxu0 %v8946
  %9363 = vmatpush1.bf16.msra.mxu0 %v8945
  %9364 = vmatprep.subr.bf16.mxu0 %v8950
  %9365 = vmatpush1.bf16.msra.mxu0 %v8949
  %9366 = vmatprep.subr.bf16.mxu0 %v8954
  %9367 = vmatpush1.bf16.msra.mxu0 %v8953
  %9368 = vmatprep.mubr.bf16.mxu0 %v7654
  %9369 = vmatmul.mubr.bf16.gmra.mrb[0].mxu0 %v7653
  %v9370 = vpop.f32.mrb[0].mxu0
  %v9371 = vadd.f32 %v9330, %v9370
  %v9372 = vpop.f32.mrb[0].mxu0
  %v9373 = vadd.f32 %v9332, %v9372
  %v9374 = vpop.f32.mrb[0].mxu0
  %v9375 = vpop.f32.mrb[0].mxu0
  %9376 = vdwg.mxu0
  %9377 = vmatprep.subr.bf16.mxu0 %v8704
  %9378 = vmatpush1.bf16.msra.mxu0 %v8703
  %9379 = vmatprep.subr.bf16.mxu0 %v8708
  %9380 = vmatpush1.bf16.msra.mxu0 %v8707
  %9381 = vmatprep.subr.bf16.mxu0 %v8712
  %9382 = vmatpush1.bf16.msra.mxu0 %v8711
  %9383 = vmatprep.subr.bf16.mxu0 %v8716
  %9384 = vmatpush1.bf16.msra.mxu0 %v8715
  %9385 = vmatprep.subr.bf16.mxu0 %v8720
  %9386 = vmatpush1.bf16.msra.mxu0 %v8719
  %9387 = vmatprep.subr.bf16.mxu0 %v8724
  %9388 = vmatpush1.bf16.msra.mxu0 %v8723
  %9389 = vmatprep.subr.bf16.mxu0 %v8728
  %9390 = vmatpush1.bf16.msra.mxu0 %v8727
  %9391 = vmatprep.subr.bf16.mxu0 %v8732
  %9392 = vmatpush1.bf16.msra.mxu0 %v8731
  %9393 = vmatprep.subr.bf16.mxu0 %v8736
  %9394 = vmatpush1.bf16.msra.mxu0 %v8735
  %9395 = vmatprep.subr.bf16.mxu0 %v8740
  %9396 = vmatpush1.bf16.msra.mxu0 %v8739
  %9397 = vmatprep.subr.bf16.mxu0 %v8744
  %9398 = vmatpush1.bf16.msra.mxu0 %v8743
  %9399 = vmatprep.subr.bf16.mxu0 %v8748
  %9400 = vmatpush1.bf16.msra.mxu0 %v8747
  %9401 = vmatprep.subr.bf16.mxu0 %v8752
  %9402 = vmatpush1.bf16.msra.mxu0 %v8751
  %9403 = vmatprep.subr.bf16.mxu0 %v8756
  %9404 = vmatpush1.bf16.msra.mxu0 %v8755
  %9405 = vmatprep.subr.bf16.mxu0 %v8760
  %9406 = vmatpush1.bf16.msra.mxu0 %v8759
  %9407 = vmatprep.subr.bf16.mxu0 %v8764
  %9408 = vmatpush1.bf16.msra.mxu0 %v8763
  %9409 = vmatprep.mubr.bf16.mxu0 %v7648
  %9410 = vmatmul.mubr.bf16.gmra.mrb[0].mxu0 %v7647
  %v9411 = vpop.f32.mrb[0].mxu0
  %v9412 = vadd.f32 %v7924, %v9411
  %v9413 = vpop.f32.mrb[0].mxu0
  %v9414 = vadd.f32 %v7928, %v9413
  %v9415 = vpop.f32.mrb[0].mxu0
  %v9416 = vpop.f32.mrb[0].mxu0
  %9417 = vdwg.mxu0
  %9418 = vmatprep.subr.bf16.mxu0 %v8768
  %9419 = vmatpush1.bf16.msra.mxu0 %v8767
  %9420 = vmatprep.subr.bf16.mxu0 %v8772
  %9421 = vmatpush1.bf16.msra.mxu0 %v8771
  %9422 = vmatprep.subr.bf16.mxu0 %v8776
  %9423 = vmatpush1.bf16.msra.mxu0 %v8775
  %9424 = vmatprep.subr.bf16.mxu0 %v8780
  %9425 = vmatpush1.bf16.msra.mxu0 %v8779
  %9426 = vmatprep.subr.bf16.mxu0 %v8784
  %9427 = vmatpush1.bf16.msra.mxu0 %v8783
  %9428 = vmatprep.subr.bf16.mxu0 %v8788
  %9429 = vmatpush1.bf16.msra.mxu0 %v8787
  %9430 = vmatprep.subr.bf16.mxu0 %v8792
  %9431 = vmatpush1.bf16.msra.mxu0 %v8791
  %9432 = vmatprep.subr.bf16.mxu0 %v8796
  %9433 = vmatpush1.bf16.msra.mxu0 %v8795
  %9434 = vmatprep.subr.bf16.mxu0 %v8800
  %9435 = vmatpush1.bf16.msra.mxu0 %v8799
  %9436 = vmatprep.subr.bf16.mxu0 %v8804
  %9437 = vmatpush1.bf16.msra.mxu0 %v8803
  %9438 = vmatprep.subr.bf16.mxu0 %v8808
  %9439 = vmatpush1.bf16.msra.mxu0 %v8807
  %9440 = vmatprep.subr.bf16.mxu0 %v8812
  %9441 = vmatpush1.bf16.msra.mxu0 %v8811
  %9442 = vmatprep.subr.bf16.mxu0 %v8816
  %9443 = vmatpush1.bf16.msra.mxu0 %v8815
  %9444 = vmatprep.subr.bf16.mxu0 %v8820
  %9445 = vmatpush1.bf16.msra.mxu0 %v8819
  %9446 = vmatprep.subr.bf16.mxu0 %v8824
  %9447 = vmatpush1.bf16.msra.mxu0 %v8823
  %9448 = vmatprep.subr.bf16.mxu0 %v8828
  %9449 = vmatpush1.bf16.msra.mxu0 %v8827
  %9450 = vmatprep.mubr.bf16.mxu0 %v7650
  %9451 = vmatmul.mubr.bf16.gmra.mrb[0].mxu0 %v7649
  %v9452 = vpop.f32.mrb[0].mxu0
  %v9453 = vadd.f32 %v9412, %v9452
  %v9454 = vpop.f32.mrb[0].mxu0
  %v9455 = vadd.f32 %v9414, %v9454
  %v9456 = vpop.f32.mrb[0].mxu0
  %v9457 = vpop.f32.mrb[0].mxu0
  %9458 = vdwg.mxu0
  %9459 = vmatprep.subr.bf16.mxu0 %v8832
  %9460 = vmatpush1.bf16.msra.mxu0 %v8831
  %9461 = vmatprep.subr.bf16.mxu0 %v8836
  %9462 = vmatpush1.bf16.msra.mxu0 %v8835
  %9463 = vmatprep.subr.bf16.mxu0 %v8840
  %9464 = vmatpush1.bf16.msra.mxu0 %v8839
  %9465 = vmatprep.subr.bf16.mxu0 %v8844
  %9466 = vmatpush1.bf16.msra.mxu0 %v8843
  %9467 = vmatprep.subr.bf16.mxu0 %v8848
  %9468 = vmatpush1.bf16.msra.mxu0 %v8847
  %9469 = vmatprep.subr.bf16.mxu0 %v8852
  %9470 = vmatpush1.bf16.msra.mxu0 %v8851
  %9471 = vmatprep.subr.bf16.mxu0 %v8856
  %9472 = vmatpush1.bf16.msra.mxu0 %v8855
  %9473 = vmatprep.subr.bf16.mxu0 %v8860
  %9474 = vmatpush1.bf16.msra.mxu0 %v8859
  %9475 = vmatprep.subr.bf16.mxu0 %v8864
  %9476 = vmatpush1.bf16.msra.mxu0 %v8863
  %9477 = vmatprep.subr.bf16.mxu0 %v8868
  %9478 = vmatpush1.bf16.msra.mxu0 %v8867
  %9479 = vmatprep.subr.bf16.mxu0 %v8872
  %9480 = vmatpush1.bf16.msra.mxu0 %v8871
  %9481 = vmatprep.subr.bf16.mxu0 %v8876
  %9482 = vmatpush1.bf16.msra.mxu0 %v8875
  %9483 = vmatprep.subr.bf16.mxu0 %v8880
  %9484 = vmatpush1.bf16.msra.mxu0 %v8879
  %9485 = vmatprep.subr.bf16.mxu0 %v8884
  %9486 = vmatpush1.bf16.msra.mxu0 %v8883
  %9487 = vmatprep.subr.bf16.mxu0 %v8888
  %9488 = vmatpush1.bf16.msra.mxu0 %v8887
  %9489 = vmatprep.subr.bf16.mxu0 %v8892
  %9490 = vmatpush1.bf16.msra.mxu0 %v8891
  %9491 = vmatprep.mubr.bf16.mxu0 %v7652
  %9492 = vmatmul.mubr.bf16.gmra.mrb[0].mxu0 %v7651
  %v9493 = vpop.f32.mrb[0].mxu0
  %v9494 = vadd.f32 %v9453, %v9493
  %v9495 = vpop.f32.mrb[0].mxu0
  %v9496 = vadd.f32 %v9455, %v9495
  %v9497 = vpop.f32.mrb[0].mxu0
  %v9498 = vpop.f32.mrb[0].mxu0
  %9499 = vdwg.mxu0
  %9500 = vmatprep.subr.bf16.mxu0 %v8896
  %9501 = vmatpush1.bf16.msra.mxu0 %v8895
  %9502 = vmatprep.subr.bf16.mxu0 %v8900
  %9503 = vmatpush1.bf16.msra.mxu0 %v8899
  %9504 = vmatprep.subr.bf16.mxu0 %v8904
  %9505 = vmatpush1.bf16.msra.mxu0 %v8903
  %9506 = vmatprep.subr.bf16.mxu0 %v8908
  %9507 = vmatpush1.bf16.msra.mxu0 %v8907
  %9508 = vmatprep.subr.bf16.mxu0 %v8912
  %9509 = vmatpush1.bf16.msra.mxu0 %v8911
  %9510 = vmatprep.subr.bf16.mxu0 %v8916
  %9511 = vmatpush1.bf16.msra.mxu0 %v8915
  %9512 = vmatprep.subr.bf16.mxu0 %v8920
  %9513 = vmatpush1.bf16.msra.mxu0 %v8919
  %9514 = vmatprep.subr.bf16.mxu0 %v8924
  %9515 = vmatpush1.bf16.msra.mxu0 %v8923
  %9516 = vmatprep.subr.bf16.mxu0 %v8928
  %9517 = vmatpush1.bf16.msra.mxu0 %v8927
  %9518 = vmatprep.subr.bf16.mxu0 %v8932
  %9519 = vmatpush1.bf16.msra.mxu0 %v8931
  %9520 = vmatprep.subr.bf16.mxu0 %v8936
  %9521 = vmatpush1.bf16.msra.mxu0 %v8935
  %9522 = vmatprep.subr.bf16.mxu0 %v8940
  %9523 = vmatpush1.bf16.msra.mxu0 %v8939
  %9524 = vmatprep.subr.bf16.mxu0 %v8944
  %9525 = vmatpush1.bf16.msra.mxu0 %v8943
  %9526 = vmatprep.subr.bf16.mxu0 %v8948
  %9527 = vmatpush1.bf16.msra.mxu0 %v8947
  %9528 = vmatprep.subr.bf16.mxu0 %v8952
  %9529 = vmatpush1.bf16.msra.mxu0 %v8951
  %9530 = vmatprep.subr.bf16.mxu0 %v8956
  %9531 = vmatpush1.bf16.msra.mxu0 %v8955
  %9532 = vmatprep.mubr.bf16.mxu0 %v7654
  %9533 = vmatmul.mubr.bf16.gmra.mrb[0].mxu0 %v7653
  %v9534 = vpop.f32.mrb[0].mxu0
  %v9535 = vadd.f32 %v9494, %v9534
  %v9536 = vpop.f32.mrb[0].mxu0
  %v9537 = vadd.f32 %v9496, %v9536
  %v9538 = vpop.f32.mrb[0].mxu0
  %v9539 = vpop.f32.mrb[0].mxu0
  %9540 = vdwg.mxu0
  %v9541 = vld [vmem:[%s7] sm:$0xf]
  %v9543 = vlaneseq
  %v9544 = vshrl.u32 %v9543, 7
  %v9545 = vsub.s32 0, %v9544
  %v9546 = vrot.slane %v9541, %v9545
  %v9547 = vlaneseq
  %v9548 = vshrl.u32 %v9547, 7
  %v9549 = vsub.s32 1, %v9548
  %v9550 = vrot.slane %v9541, %v9549
  %v9551 = vlaneseq
  %v9552 = vshrl.u32 %v9551, 7
  %v9553 = vsub.s32 2, %v9552
  %v9554 = vrot.slane %v9541, %v9553
  %v9555 = vlaneseq
  %v9556 = vshrl.u32 %v9555, 7
  %v9557 = vsub.s32 3, %v9556
  %v9558 = vrot.slane %v9541, %v9557
  %v9563 = vmul.f32 %v9371, %v9546
  %v9564 = vmul.f32 %v9373, %v9550
  %v9565 = vmul.f32 %v9535, %v9554
  %v9566 = vmul.f32 %v9537, %v9558
  %vm9567 = vcmask 1041408
  %v9568 = vsel %vm9567, %v9563, 0.0
  %v9569 = vsel %vm9567, %v9564, 0.0
  %v9570 = vadd.f32 %v9568, %v9569
  %v9571 = vsel %vm9567, %v9565, 0.0
  %v9572 = vadd.f32 %v9570, %v9571
  %v9573 = vsel %vm9567, %v9566, 0.0
  %v9574 = vadd.f32 %v9572, %v9573
  %9575 = vadd.xlane.f32.xlu0 %v9574
  %v9576 = vpop.xlane.xlu0 %9575
  %vm9577 = vcmask 1024
  %9578 = vst.msk [vmem:[%s8] sm:$0x3] %vm9577, %v9576
  // Predicated region
  $region34: #{mlp_forward.1} parent=0 // pred_check
    _
  $region35: #{mlp_forward.1} parent=0 // pred_check_branch
    %9580 = sbr.rel (0) target = $region37
  $region36: #{mlp_forward.1} parent=0 // pred_region
    _
  $region37: #{mlp_forward.1} parent=0 // pred_fallthru
    _
  // Predicated region
  $region38: #{mlp_forward.1} parent=0 // pred_check
    _
  $region39: #{mlp_forward.1} parent=0 // pred_check_branch
    %9582 = sbr.rel (0) target = $region41
  $region40: #{mlp_forward.1} parent=0 // pred_region
    _
  $region41: #{mlp_forward.1} parent=0 // pred_fallthru
    _

</llo_original>
